<compile_context>
chip_gen: v6e
topology: v6e:2x2x1
jax: 0.10.0
libtpu: 0.0.40
codegen_flags: <defaults>
</compile_context>

<pallas_src>
import jax
import jax.numpy as jnp
from jax.experimental import pallas as pl
from jax.experimental.pallas import tpu as pltpu

# ----------------------- model hyper-parameters (small) -----------------------
BS        = 2    # batch size
N_VARS    = 4    # c_in
NUM_PATCH = 8    # num_patch (q_len)
PATCH_LEN = 16   # patch_len
D_MODEL   = 32
N_HEADS   = 4
D_FF      = 64
N_LAYERS  = 2
D_K       = D_MODEL // N_HEADS
BN_EPS    = 1e-5


# --------------------------- in-kernel math helpers ---------------------------
def _gelu_tanh(x):
    # tanh-approximate GELU (EUP tanh); error vs exact GELU ~1e-3, well inside
    # the 3e-2 tolerance.
    c = 0.7978845608028654  # sqrt(2/pi)
    return 0.5 * x * (1.0 + jnp.tanh(c * (x + 0.044715 * x * x * x)))


def _batchnorm(t, g, b):
    # nn.BatchNorm1d(d_model) in training mode: statistics over all tokens
    # (axis 0 of the [BN*L, D] token matrix).  One-pass stats: E[x^2]-mean^2.
    inv_n = 1.0 / t.shape[0]
    s1 = jnp.sum(t, axis=0, keepdims=True)
    s2 = jnp.sum(t * t, axis=0, keepdims=True)
    mean = s1 * inv_n
    var = s2 * inv_n - mean * mean
    return (t - mean) * jax.lax.rsqrt(var + BN_EPS) * g + b


# ------------------------------ fused layer math -------------------------------
def _layer_compute(x, prev, hm, wqkv, bqkv, wo, bo,
                   g1, be1, w1, bf1, w2, bf2, g2, be2):
    """One TSTEncoderLayer on token-major x [BN*L, D] (f32).

    prev: lane-replicated pre-softmax scores [BN, L, L, D] from the previous
    layer (res_attention carry), or None for layer 0.
    hm:   [D, D] bf16 block-diagonal head mask (1 where lanes share a head).
    Weights wqkv/wo/w1/w2 are bf16; biases / BN params are f32.
    Returns (new_x, new_scores)."""
    BNL, D = x.shape
    L = NUM_PATCH
    BN = BNL // L
    scale = 1.0 / float(D_K) ** 0.5

    # --- fused QKV projection: one [BNL, D] x [D, 3D] bf16 MXU matmul --------
    qkv = jnp.dot(x.astype(jnp.bfloat16), wqkv,
                  preferred_element_type=jnp.float32) + bqkv        # [BNL, 3D]
    q = qkv[:, :D].reshape(BN, L, D)
    k = qkv[:, D:2 * D].reshape(BN, L, D)
    v = qkv[:, 2 * D:].reshape(BN, L, D)

    # --- per-head scores, lane-replicated across each head's dk lanes --------
    # prod[b,l,m,:] = q[b,l,:] * k[b,m,:]     (VPU, lane-dense in D)
    prod = q[:, :, None, :] * k[:, None, :, :]                      # [BN,L,L,D]
    # head-group sum + replicate-back via one [BN*L*L, D] x [D, D] mask matmul
    s = jnp.dot(prod.reshape(BN * L * L, D).astype(jnp.bfloat16), hm,
                preferred_element_type=jnp.float32)
    s = s.reshape(BN, L, L, D) * scale
    if prev is not None:                      # res_attention: add prev scores
        s = s + prev
    new_scores = s

    # softmax over keys (axis 2); replicated lanes give exact per-head softmax.
    m = jnp.max(s, axis=2, keepdims=True)
    e = jnp.exp(s - m)
    a = e * pl.reciprocal(jnp.sum(e, axis=2, keepdims=True), approx=True)

    # --- A @ V : broadcast-multiply + sublane reduce (VPU/XLU, no MXU) -------
    ctx = jnp.sum(a * v[:, None, :, :], axis=2).reshape(BNL, D)     # [BNL, D]
    attn_out = jnp.dot(ctx.astype(jnp.bfloat16), wo,
                       preferred_element_type=jnp.float32) + bo

    # --- residual + BatchNorm + position-wise FFN + residual + BatchNorm -----
    x = _batchnorm(x + attn_out, g1, be1)          # dropout p=0 -> identity
    h1 = _gelu_tanh(jnp.dot(x.astype(jnp.bfloat16), w1,
                            preferred_element_type=jnp.float32) + bf1)
    ff = jnp.dot(h1.astype(jnp.bfloat16), w2,
                 preferred_element_type=jnp.float32) + bf2
    x = _batchnorm(x + ff, g2, be2)
    return x, new_scores


# --------------------------- single fused forward kernel ----------------------
def _fused_forward_kernel(x_ref, wp_ref, posb_ref, hm_ref,
                          wqkv_ref, bqkv_ref, wo_ref, bo_ref,
                          g1_ref, be1_ref, w1_ref, bf1_ref,
                          w2_ref, bf2_ref, g2_ref, be2_ref,
                          out_ref):
    # patch embedding (bf16 MXU) + fused (b_p + W_pos) bias slab
    x = jnp.dot(x_ref[...].astype(jnp.bfloat16), wp_ref[...],
                preferred_element_type=jnp.float32)
    x = x + posb_ref[...]
    hm = hm_ref[...]

    # all encoder layers unrolled in one kernel; residual-attention scores are
    # plain traced values carried layer-to-layer (no HBM round trips).
    prev = None
    for li in range(N_LAYERS):
        x, prev = _layer_compute(
            x, prev, hm,
            wqkv_ref[li], bqkv_ref[li], wo_ref[li], bo_ref[li],
            g1_ref[li], be1_ref[li], w1_ref[li], bf1_ref[li],
            w2_ref[li], bf2_ref[li], g2_ref[li], be2_ref[li])

    # TODO(synk): last dim is 32 (<128) -> lane-masked store; negligible at
    # 8 KiB, present a lane-dense slab from the wrapper only if the model grows.
    out_ref[...] = x


# --------------------- one-time packing of kernel constants -------------------
def pack_params(params, bs, n_vars):
    """Build kernel-ready stacked/cast tensors ONCE (outside the per-call jit)."""
    BN = bs * n_vars
    bf16 = jnp.bfloat16
    layers = params['layers']
    stack_f32 = lambda n: jnp.stack([lp[n] for lp in layers])
    stack_b16 = lambda n: jnp.stack([lp[n] for lp in layers]).astype(bf16)

    wqkv = jnp.stack([jnp.concatenate([lp['wq'], lp['wk'], lp['wv']], axis=1)
                      for lp in layers]).astype(bf16)               # [NL, D, 3D]
    bqkv = jnp.stack([jnp.concatenate([lp['bq'], lp['bk'], lp['bv']], axis=1)
                      for lp in layers])                            # [NL, 1, 3D]

    # fused patch-embedding bias + positional encoding: one [BN*L, D] slab
    posb = jnp.tile(params['b_p'] + params['w_pos'], (BN, 1))       # [BN*L, D]

    # block-diagonal head mask: per-head group-sum + lane replication
    head = jnp.arange(D_MODEL) // D_K
    hm = (head[:, None] == head[None, :]).astype(bf16)              # [D, D]

    return (params['w_p'].astype(bf16), posb, hm,
            wqkv, bqkv, stack_b16('wo'), stack_f32('bo'),
            stack_f32('g1'), stack_f32('be1'), stack_b16('w1'), stack_f32('bf1'),
            stack_b16('w2'), stack_f32('bf2'), stack_f32('g2'), stack_f32('be2'))


# --------------------------------- full model ---------------------------------
_COST = pl.CostEstimate(flops=4_600_000, transcendentals=45_000,
                        bytes_accessed=60_000)


@jax.jit
def patchtst_encoder_forward(x, packed):
    bs, num_patch, n_vars, patch_len = x.shape
    BN = bs * n_vars
    BNL = BN * num_patch

    # glue (once, outside the kernel):
    # [bs, num_patch, n_vars, patch_len] -> token-major [bs*n_vars*num_patch, patch_len]
    xt = jnp.transpose(x, (0, 2, 1, 3)).reshape(BNL, patch_len)

    vmem = pl.BlockSpec(memory_space=pltpu.MemorySpace.VMEM)
    out = pl.pallas_call(
        _fused_forward_kernel,
        in_specs=[vmem] * 16,
        out_specs=vmem,
        out_shape=jax.ShapeDtypeStruct((BNL, D_MODEL), jnp.float32),
        cost_estimate=_COST,
    )(xt, *packed)

    z = out.reshape(bs, n_vars, num_patch, D_MODEL)
    return jnp.transpose(z, (0, 1, 3, 2))    # [bs, n_vars, d_model, num_patch]


# -------------------------- deterministic parameters --------------------------
def init_params(key):
    ks = jax.random.split(key, 2 + N_LAYERS)

    def linear(k, fan_in, fan_out):
        k1, k2 = jax.random.split(k)
        bound = 1.0 / (fan_in ** 0.5)
        w = jax.random.uniform(k1, (fan_in, fan_out), jnp.float32, -bound, bound)
        b = jax.random.uniform(k2, (1, fan_out), jnp.float32, -bound, bound)
        return w, b

    w_p, b_p = linear(ks[0], PATCH_LEN, D_MODEL)
    w_pos = jax.random.uniform(ks[1], (NUM_PATCH, D_MODEL), jnp.float32, -0.02, 0.02)

    layers = []
    for i in range(N_LAYERS):
        lk = jax.random.split(ks[2 + i], 6)
        wq, bq = linear(lk[0], D_MODEL, D_MODEL)
        wk, bk = linear(lk[1], D_MODEL, D_MODEL)
        wv, bv = linear(lk[2], D_MODEL, D_MODEL)
        wo, bo = linear(lk[3], D_MODEL, D_MODEL)
        w1, bf1 = linear(lk[4], D_MODEL, D_FF)
        w2, bf2 = linear(lk[5], D_FF, D_MODEL)
        layers.append(dict(
            wq=wq, bq=bq, wk=wk, bk=bk, wv=wv, bv=bv, wo=wo, bo=bo,
            w1=w1, bf1=bf1, w2=w2, bf2=bf2,
            g1=jnp.ones((1, D_MODEL), jnp.float32),
            be1=jnp.zeros((1, D_MODEL), jnp.float32),
            g2=jnp.ones((1, D_MODEL), jnp.float32),
            be2=jnp.zeros((1, D_MODEL), jnp.float32),
        ))
    return dict(w_p=w_p, b_p=b_p, w_pos=w_pos, layers=layers)


# ----------------------------- pure-JAX reference ------------------------------
HIGH = jax.lax.Precision.HIGHEST


def _layer_reference(src, prev, p):
    BN, L, D = src.shape
    q = jnp.dot(src, p['wq'], precision=HIGH) + p['bq'][0]
    k = jnp.dot(src, p['wk'], precision=HIGH) + p['bk'][0]
    v = jnp.dot(src, p['wv'], precision=HIGH) + p['bv'][0]
    qh = q.reshape(BN, L, N_HEADS, D_K).transpose(0, 2, 1, 3)
    kh = k.reshape(BN, L, N_HEADS, D_K).transpose(0, 2, 1, 3)
    vh = v.reshape(BN, L, N_HEADS, D_K).transpose(0, 2, 1, 3)
    scores = jnp.einsum('bhld,bhmd->bhlm', qh, kh, precision=HIGH) * (D_K ** -0.5)
    if prev is not None:
        scores = scores + prev
    attn = jax.nn.softmax(scores, axis=-1)
    ctx = jnp.einsum('bhlm,bhmd->bhld', attn, vh, precision=HIGH)
    ctx = ctx.transpose(0, 2, 1, 3).reshape(BN, L, D)
    x = src + jnp.dot(ctx, p['wo'], precision=HIGH) + p['bo'][0]

    def bn(t, g, b):
        flat = t.reshape(-1, D)
        mean = flat.mean(axis=0)
        var = ((flat - mean) ** 2).mean(axis=0)
        return (t - mean) * jax.lax.rsqrt(var + BN_EPS) * g[0] + b[0]

    x = bn(x, p['g1'], p['be1'])
    h1 = jax.nn.gelu(jnp.dot(x, p['w1'], precision=HIGH) + p['bf1'][0],
                     approximate=False)
    ff = jnp.dot(h1, p['w2'], precision=HIGH) + p['bf2'][0]
    x = bn(x + ff, p['g2'], p['be2'])
    return x, scores


def forward_reference(x, params):
    bs, num_patch, n_vars, patch_len = x.shape
    x1 = jnp.einsum('bpvl,ld->bpvd', x, params['w_p'], precision=HIGH) + params['b_p'][0]
    x1 = jnp.transpose(x1, (0, 2, 1, 3))
    u = x1.reshape(bs * n_vars, num_patch, D_MODEL) + params['w_pos']
    out, prev = u, None
    for lp in params['layers']:
        out, prev = _layer_reference(out, prev, lp)
    z = out.reshape(bs, n_vars, num_patch, D_MODEL)
    return jnp.transpose(z, (0, 1, 3, 2))


# ------------------------------------ main -------------------------------------
if __name__ == "__main__":
    key = jax.random.PRNGKey(0)
    kx, kp = jax.random.split(key)
    x = jax.random.normal(kx, (BS, NUM_PATCH, N_VARS, PATCH_LEN), jnp.float32)
    params = init_params(kp)
    packed = pack_params(params, BS, N_VARS)       # one-time weight packing

    z = patchtst_encoder_forward(x, packed)
    z = jax.block_until_ready(z)
    assert z.shape == (BS, N_VARS, D_MODEL, NUM_PATCH), z.shape

    z_ref = forward_reference(x, params)
    err = float(jnp.max(jnp.abs(z - z_ref)))
    tol = 3e-2 * max(1.0, float(jnp.max(jnp.abs(z_ref))))
    assert err <= tol, f"max abs error {err} > tol {tol}"

    print("KERNEL_OK")
</pallas_src>

<mosaic_0001>
module attributes {stable_mosaic.version = 11 : i64} {
  func.func @_fused_forward_kernel(%arg0: memref<64x16xf32, #tpu.memory_space<vmem>>, %arg1: memref<16x32xbf16, #tpu.memory_space<vmem>>, %arg2: memref<64x32xf32, #tpu.memory_space<vmem>>, %arg3: memref<32x32xbf16, #tpu.memory_space<vmem>>, %arg4: memref<2x32x96xbf16, #tpu.memory_space<vmem>>, %arg5: memref<2x1x96xf32, #tpu.memory_space<vmem>>, %arg6: memref<2x32x32xbf16, #tpu.memory_space<vmem>>, %arg7: memref<2x1x32xf32, #tpu.memory_space<vmem>>, %arg8: memref<2x1x32xf32, #tpu.memory_space<vmem>>, %arg9: memref<2x1x32xf32, #tpu.memory_space<vmem>>, %arg10: memref<2x32x64xbf16, #tpu.memory_space<vmem>>, %arg11: memref<2x1x64xf32, #tpu.memory_space<vmem>>, %arg12: memref<2x64x32xbf16, #tpu.memory_space<vmem>>, %arg13: memref<2x1x32xf32, #tpu.memory_space<vmem>>, %arg14: memref<2x1x32xf32, #tpu.memory_space<vmem>>, %arg15: memref<2x1x32xf32, #tpu.memory_space<vmem>>, %arg16: memref<64x32xf32, #tpu.memory_space<vmem>>) attributes {dimension_semantics = [], scalar_prefetch = 0 : i64, scratch_operands = 0 : i64, tpu.core_type = #tpu.core_type<tc>} {
    %c0 = arith.constant 0 : index
    %c0_0 = arith.constant 0 : index
    %0 = vector.load %arg0[%c0, %c0_0] : memref<64x16xf32, #tpu.memory_space<vmem>>, vector<64x16xf32>
    %1 = arith.truncf %0 : vector<64x16xf32> to vector<64x16xbf16>
    %c0_1 = arith.constant 0 : index
    %c0_2 = arith.constant 0 : index
    %2 = vector.load %arg1[%c0_1, %c0_2] : memref<16x32xbf16, #tpu.memory_space<vmem>>, vector<16x32xbf16>
    %cst = arith.constant dense<0.000000e+00> : vector<64x32xf32>
    %3 = tpu.matmul %1, %2, %cst {dimension_numbers = #tpu.dot_dimension_numbers<[1], [0], [0], [1], [0, 0, 1, 1], [], []>} : vector<64x16xbf16>, vector<16x32xbf16>, vector<64x32xf32> -> vector<64x32xf32>
    %c0_3 = arith.constant 0 : index
    %c0_4 = arith.constant 0 : index
    %4 = vector.load %arg2[%c0_3, %c0_4] : memref<64x32xf32, #tpu.memory_space<vmem>>, vector<64x32xf32>
    %5 = arith.addf %3, %4 : vector<64x32xf32>
    %c0_5 = arith.constant 0 : index
    %c0_6 = arith.constant 0 : index
    %6 = vector.load %arg3[%c0_5, %c0_6] : memref<32x32xbf16, #tpu.memory_space<vmem>>, vector<32x32xbf16>
    %c0_7 = arith.constant 0 : index
    %c0_8 = arith.constant 0 : index
    %c0_9 = arith.constant 0 : index
    %7 = vector.load %arg4[%c0_7, %c0_8, %c0_9] : memref<2x32x96xbf16, #tpu.memory_space<vmem>>, vector<1x32x96xbf16>
    %8 = vector.shape_cast %7 : vector<1x32x96xbf16> to vector<32x96xbf16>
    %c0_10 = arith.constant 0 : index
    %c0_11 = arith.constant 0 : index
    %c0_12 = arith.constant 0 : index
    %9 = vector.load %arg5[%c0_10, %c0_11, %c0_12] : memref<2x1x96xf32, #tpu.memory_space<vmem>>, vector<1x1x96xf32>
    %10 = vector.shape_cast %9 : vector<1x1x96xf32> to vector<1x96xf32>
    %c0_13 = arith.constant 0 : index
    %c0_14 = arith.constant 0 : index
    %c0_15 = arith.constant 0 : index
    %11 = vector.load %arg6[%c0_13, %c0_14, %c0_15] : memref<2x32x32xbf16, #tpu.memory_space<vmem>>, vector<1x32x32xbf16>
    %12 = vector.shape_cast %11 : vector<1x32x32xbf16> to vector<32x32xbf16>
    %c0_16 = arith.constant 0 : index
    %c0_17 = arith.constant 0 : index
    %c0_18 = arith.constant 0 : index
    %13 = vector.load %arg7[%c0_16, %c0_17, %c0_18] : memref<2x1x32xf32, #tpu.memory_space<vmem>>, vector<1x1x32xf32>
    %14 = vector.shape_cast %13 : vector<1x1x32xf32> to vector<1x32xf32>
    %c0_19 = arith.constant 0 : index
    %c0_20 = arith.constant 0 : index
    %c0_21 = arith.constant 0 : index
    %15 = vector.load %arg8[%c0_19, %c0_20, %c0_21] : memref<2x1x32xf32, #tpu.memory_space<vmem>>, vector<1x1x32xf32>
    %16 = vector.shape_cast %15 : vector<1x1x32xf32> to vector<1x32xf32>
    %c0_22 = arith.constant 0 : index
    %c0_23 = arith.constant 0 : index
    %c0_24 = arith.constant 0 : index
    %17 = vector.load %arg9[%c0_22, %c0_23, %c0_24] : memref<2x1x32xf32, #tpu.memory_space<vmem>>, vector<1x1x32xf32>
    %18 = vector.shape_cast %17 : vector<1x1x32xf32> to vector<1x32xf32>
    %c0_25 = arith.constant 0 : index
    %c0_26 = arith.constant 0 : index
    %c0_27 = arith.constant 0 : index
    %19 = vector.load %arg10[%c0_25, %c0_26, %c0_27] : memref<2x32x64xbf16, #tpu.memory_space<vmem>>, vector<1x32x64xbf16>
    %20 = vector.shape_cast %19 : vector<1x32x64xbf16> to vector<32x64xbf16>
    %c0_28 = arith.constant 0 : index
    %c0_29 = arith.constant 0 : index
    %c0_30 = arith.constant 0 : index
    %21 = vector.load %arg11[%c0_28, %c0_29, %c0_30] : memref<2x1x64xf32, #tpu.memory_space<vmem>>, vector<1x1x64xf32>
    %22 = vector.shape_cast %21 : vector<1x1x64xf32> to vector<1x64xf32>
    %c0_31 = arith.constant 0 : index
    %c0_32 = arith.constant 0 : index
    %c0_33 = arith.constant 0 : index
    %23 = vector.load %arg12[%c0_31, %c0_32, %c0_33] : memref<2x64x32xbf16, #tpu.memory_space<vmem>>, vector<1x64x32xbf16>
    %24 = vector.shape_cast %23 : vector<1x64x32xbf16> to vector<64x32xbf16>
    %c0_34 = arith.constant 0 : index
    %c0_35 = arith.constant 0 : index
    %c0_36 = arith.constant 0 : index
    %25 = vector.load %arg13[%c0_34, %c0_35, %c0_36] : memref<2x1x32xf32, #tpu.memory_space<vmem>>, vector<1x1x32xf32>
    %26 = vector.shape_cast %25 : vector<1x1x32xf32> to vector<1x32xf32>
    %c0_37 = arith.constant 0 : index
    %c0_38 = arith.constant 0 : index
    %c0_39 = arith.constant 0 : index
    %27 = vector.load %arg14[%c0_37, %c0_38, %c0_39] : memref<2x1x32xf32, #tpu.memory_space<vmem>>, vector<1x1x32xf32>
    %28 = vector.shape_cast %27 : vector<1x1x32xf32> to vector<1x32xf32>
    %c0_40 = arith.constant 0 : index
    %c0_41 = arith.constant 0 : index
    %c0_42 = arith.constant 0 : index
    %29 = vector.load %arg15[%c0_40, %c0_41, %c0_42] : memref<2x1x32xf32, #tpu.memory_space<vmem>>, vector<1x1x32xf32>
    %30 = vector.shape_cast %29 : vector<1x1x32xf32> to vector<1x32xf32>
    %31 = arith.truncf %5 : vector<64x32xf32> to vector<64x32xbf16>
    %cst_43 = arith.constant dense<0.000000e+00> : vector<64x96xf32>
    %32 = tpu.matmul %31, %8, %cst_43 {dimension_numbers = #tpu.dot_dimension_numbers<[1], [0], [0], [1], [0, 0, 1, 1], [], []>} : vector<64x32xbf16>, vector<32x96xbf16>, vector<64x96xf32> -> vector<64x96xf32>
    %33 = vector.broadcast %10 : vector<1x96xf32> to vector<64x96xf32>
    %34 = arith.addf %32, %33 : vector<64x96xf32>
    %35 = vector.extract_strided_slice %34 {offsets = [0, 0], sizes = [64, 32], strides = [1, 1]} : vector<64x96xf32> to vector<64x32xf32>
    %36 = vector.shape_cast %35 : vector<64x32xf32> to vector<8x8x32xf32>
    %37 = vector.extract_strided_slice %34 {offsets = [0, 32], sizes = [64, 32], strides = [1, 1]} : vector<64x96xf32> to vector<64x32xf32>
    %38 = vector.shape_cast %37 : vector<64x32xf32> to vector<8x8x32xf32>
    %39 = vector.extract_strided_slice %34 {offsets = [0, 64], sizes = [64, 32], strides = [1, 1]} : vector<64x96xf32> to vector<64x32xf32>
    %40 = vector.shape_cast %39 : vector<64x32xf32> to vector<8x8x32xf32>
    %41 = vector.shape_cast %36 : vector<8x8x32xf32> to vector<8x8x1x32xf32>
    %42 = vector.shape_cast %38 : vector<8x8x32xf32> to vector<8x1x8x32xf32>
    %43 = vector.broadcast %41 : vector<8x8x1x32xf32> to vector<8x8x8x32xf32>
    %44 = vector.broadcast %42 : vector<8x1x8x32xf32> to vector<8x8x8x32xf32>
    %45 = arith.mulf %43, %44 : vector<8x8x8x32xf32>
    %46 = vector.shape_cast %45 : vector<8x8x8x32xf32> to vector<512x32xf32>
    %47 = arith.truncf %46 : vector<512x32xf32> to vector<512x32xbf16>
    %cst_44 = arith.constant dense<0.000000e+00> : vector<512x32xf32>
    %48 = tpu.matmul %47, %6, %cst_44 {dimension_numbers = #tpu.dot_dimension_numbers<[1], [0], [0], [1], [0, 0, 1, 1], [], []>} : vector<512x32xbf16>, vector<32x32xbf16>, vector<512x32xf32> -> vector<512x32xf32>
    %49 = vector.shape_cast %48 : vector<512x32xf32> to vector<8x8x8x32xf32>
    %cst_45 = arith.constant 0.353553385 : f32
    %50 = vector.broadcast %cst_45 : f32 to vector<8x8x8x32xf32>
    %51 = arith.mulf %49, %50 : vector<8x8x8x32xf32>
    %cst_46 = arith.constant dense<0xFF800000> : vector<8x8x32xf32>
    %52 = vector.multi_reduction <maximumf>, %51, %cst_46 [2] : vector<8x8x8x32xf32> to vector<8x8x32xf32>
    %53 = vector.shape_cast %52 : vector<8x8x32xf32> to vector<8x8x1x32xf32>
    %54 = vector.broadcast %53 : vector<8x8x1x32xf32> to vector<8x8x8x32xf32>
    %55 = arith.subf %51, %54 : vector<8x8x8x32xf32>
    %56 = math.exp %55 : vector<8x8x8x32xf32>
    %cst_47 = arith.constant dense<0.000000e+00> : vector<8x8x32xf32>
    %57 = vector.multi_reduction <add>, %56, %cst_47 [2] : vector<8x8x8x32xf32> to vector<8x8x32xf32>
    %58 = vector.shape_cast %57 : vector<8x8x32xf32> to vector<8x8x1x32xf32>
    %59 = tpu.reciprocal %58 {approx = true} : vector<8x8x1x32xf32> -> vector<8x8x1x32xf32>
    %60 = vector.broadcast %59 : vector<8x8x1x32xf32> to vector<8x8x8x32xf32>
    %61 = arith.mulf %56, %60 : vector<8x8x8x32xf32>
    %62 = vector.shape_cast %40 : vector<8x8x32xf32> to vector<8x1x8x32xf32>
    %63 = vector.broadcast %62 : vector<8x1x8x32xf32> to vector<8x8x8x32xf32>
    %64 = arith.mulf %61, %63 : vector<8x8x8x32xf32>
    %cst_48 = arith.constant dense<0.000000e+00> : vector<8x8x32xf32>
    %65 = vector.multi_reduction <add>, %64, %cst_48 [2] : vector<8x8x8x32xf32> to vector<8x8x32xf32>
    %66 = vector.shape_cast %65 : vector<8x8x32xf32> to vector<64x32xf32>
    %67 = arith.truncf %66 : vector<64x32xf32> to vector<64x32xbf16>
    %cst_49 = arith.constant dense<0.000000e+00> : vector<64x32xf32>
    %68 = tpu.matmul %67, %12, %cst_49 {dimension_numbers = #tpu.dot_dimension_numbers<[1], [0], [0], [1], [0, 0, 1, 1], [], []>} : vector<64x32xbf16>, vector<32x32xbf16>, vector<64x32xf32> -> vector<64x32xf32>
    %69 = vector.broadcast %14 : vector<1x32xf32> to vector<64x32xf32>
    %70 = arith.addf %68, %69 : vector<64x32xf32>
    %71 = arith.addf %5, %70 : vector<64x32xf32>
    %cst_50 = arith.constant dense<0.000000e+00> : vector<32xf32>
    %72 = vector.multi_reduction <add>, %71, %cst_50 [0] : vector<64x32xf32> to vector<32xf32>
    %73 = vector.shape_cast %72 : vector<32xf32> to vector<1x32xf32>
    %74 = arith.mulf %71, %71 : vector<64x32xf32>
    %cst_51 = arith.constant dense<0.000000e+00> : vector<32xf32>
    %75 = vector.multi_reduction <add>, %74, %cst_51 [0] : vector<64x32xf32> to vector<32xf32>
    %76 = vector.shape_cast %75 : vector<32xf32> to vector<1x32xf32>
    %cst_52 = arith.constant 1.562500e-02 : f32
    %77 = vector.broadcast %cst_52 : f32 to vector<1x32xf32>
    %78 = arith.mulf %73, %77 : vector<1x32xf32>
    %cst_53 = arith.constant 1.562500e-02 : f32
    %79 = vector.broadcast %cst_53 : f32 to vector<1x32xf32>
    %80 = arith.mulf %76, %79 : vector<1x32xf32>
    %81 = arith.mulf %78, %78 : vector<1x32xf32>
    %82 = arith.subf %80, %81 : vector<1x32xf32>
    %83 = vector.broadcast %78 : vector<1x32xf32> to vector<64x32xf32>
    %84 = arith.subf %71, %83 : vector<64x32xf32>
    %cst_54 = arith.constant 9.99999974E-6 : f32
    %85 = vector.broadcast %cst_54 : f32 to vector<1x32xf32>
    %86 = arith.addf %82, %85 : vector<1x32xf32>
    %87 = math.rsqrt %86 : vector<1x32xf32>
    %88 = vector.broadcast %87 : vector<1x32xf32> to vector<64x32xf32>
    %89 = arith.mulf %84, %88 : vector<64x32xf32>
    %90 = vector.broadcast %16 : vector<1x32xf32> to vector<64x32xf32>
    %91 = arith.mulf %89, %90 : vector<64x32xf32>
    %92 = vector.broadcast %18 : vector<1x32xf32> to vector<64x32xf32>
    %93 = arith.addf %91, %92 : vector<64x32xf32>
    %94 = arith.truncf %93 : vector<64x32xf32> to vector<64x32xbf16>
    %cst_55 = arith.constant dense<0.000000e+00> : vector<64x64xf32>
    %95 = tpu.matmul %94, %20, %cst_55 {dimension_numbers = #tpu.dot_dimension_numbers<[1], [0], [0], [1], [0, 0, 1, 1], [], []>} : vector<64x32xbf16>, vector<32x64xbf16>, vector<64x64xf32> -> vector<64x64xf32>
    %96 = vector.broadcast %22 : vector<1x64xf32> to vector<64x64xf32>
    %97 = arith.addf %95, %96 : vector<64x64xf32>
    %cst_56 = arith.constant 5.000000e-01 : f32
    %98 = vector.broadcast %cst_56 : f32 to vector<64x64xf32>
    %99 = arith.mulf %98, %97 : vector<64x64xf32>
    %cst_57 = arith.constant 4.471500e-02 : f32
    %100 = vector.broadcast %cst_57 : f32 to vector<64x64xf32>
    %101 = arith.mulf %100, %97 : vector<64x64xf32>
    %102 = arith.mulf %101, %97 : vector<64x64xf32>
    %103 = arith.mulf %102, %97 : vector<64x64xf32>
    %104 = arith.addf %97, %103 : vector<64x64xf32>
    %cst_58 = arith.constant 0.797884583 : f32
    %105 = vector.broadcast %cst_58 : f32 to vector<64x64xf32>
    %106 = arith.mulf %105, %104 : vector<64x64xf32>
    %107 = math.tanh %106 : vector<64x64xf32>
    %cst_59 = arith.constant 1.000000e+00 : f32
    %108 = vector.broadcast %cst_59 : f32 to vector<64x64xf32>
    %109 = arith.addf %108, %107 : vector<64x64xf32>
    %110 = arith.mulf %99, %109 : vector<64x64xf32>
    %111 = arith.truncf %110 : vector<64x64xf32> to vector<64x64xbf16>
    %cst_60 = arith.constant dense<0.000000e+00> : vector<64x32xf32>
    %112 = tpu.matmul %111, %24, %cst_60 {dimension_numbers = #tpu.dot_dimension_numbers<[1], [0], [0], [1], [0, 0, 1, 1], [], []>} : vector<64x64xbf16>, vector<64x32xbf16>, vector<64x32xf32> -> vector<64x32xf32>
    %113 = vector.broadcast %26 : vector<1x32xf32> to vector<64x32xf32>
    %114 = arith.addf %112, %113 : vector<64x32xf32>
    %115 = arith.addf %93, %114 : vector<64x32xf32>
    %cst_61 = arith.constant dense<0.000000e+00> : vector<32xf32>
    %116 = vector.multi_reduction <add>, %115, %cst_61 [0] : vector<64x32xf32> to vector<32xf32>
    %117 = vector.shape_cast %116 : vector<32xf32> to vector<1x32xf32>
    %118 = arith.mulf %115, %115 : vector<64x32xf32>
    %cst_62 = arith.constant dense<0.000000e+00> : vector<32xf32>
    %119 = vector.multi_reduction <add>, %118, %cst_62 [0] : vector<64x32xf32> to vector<32xf32>
    %120 = vector.shape_cast %119 : vector<32xf32> to vector<1x32xf32>
    %cst_63 = arith.constant 1.562500e-02 : f32
    %121 = vector.broadcast %cst_63 : f32 to vector<1x32xf32>
    %122 = arith.mulf %117, %121 : vector<1x32xf32>
    %cst_64 = arith.constant 1.562500e-02 : f32
    %123 = vector.broadcast %cst_64 : f32 to vector<1x32xf32>
    %124 = arith.mulf %120, %123 : vector<1x32xf32>
    %125 = arith.mulf %122, %122 : vector<1x32xf32>
    %126 = arith.subf %124, %125 : vector<1x32xf32>
    %127 = vector.broadcast %122 : vector<1x32xf32> to vector<64x32xf32>
    %128 = arith.subf %115, %127 : vector<64x32xf32>
    %cst_65 = arith.constant 9.99999974E-6 : f32
    %129 = vector.broadcast %cst_65 : f32 to vector<1x32xf32>
    %130 = arith.addf %126, %129 : vector<1x32xf32>
    %131 = math.rsqrt %130 : vector<1x32xf32>
    %132 = vector.broadcast %131 : vector<1x32xf32> to vector<64x32xf32>
    %133 = arith.mulf %128, %132 : vector<64x32xf32>
    %134 = vector.broadcast %28 : vector<1x32xf32> to vector<64x32xf32>
    %135 = arith.mulf %133, %134 : vector<64x32xf32>
    %136 = vector.broadcast %30 : vector<1x32xf32> to vector<64x32xf32>
    %137 = arith.addf %135, %136 : vector<64x32xf32>
    %c1 = arith.constant 1 : index
    %c0_66 = arith.constant 0 : index
    %c0_67 = arith.constant 0 : index
    %138 = vector.load %arg4[%c1, %c0_66, %c0_67] : memref<2x32x96xbf16, #tpu.memory_space<vmem>>, vector<1x32x96xbf16>
    %139 = vector.shape_cast %138 : vector<1x32x96xbf16> to vector<32x96xbf16>
    %c1_68 = arith.constant 1 : index
    %c0_69 = arith.constant 0 : index
    %c0_70 = arith.constant 0 : index
    %140 = vector.load %arg5[%c1_68, %c0_69, %c0_70] : memref<2x1x96xf32, #tpu.memory_space<vmem>>, vector<1x1x96xf32>
    %141 = vector.shape_cast %140 : vector<1x1x96xf32> to vector<1x96xf32>
    %c1_71 = arith.constant 1 : index
    %c0_72 = arith.constant 0 : index
    %c0_73 = arith.constant 0 : index
    %142 = vector.load %arg6[%c1_71, %c0_72, %c0_73] : memref<2x32x32xbf16, #tpu.memory_space<vmem>>, vector<1x32x32xbf16>
    %143 = vector.shape_cast %142 : vector<1x32x32xbf16> to vector<32x32xbf16>
    %c1_74 = arith.constant 1 : index
    %c0_75 = arith.constant 0 : index
    %c0_76 = arith.constant 0 : index
    %144 = vector.load %arg7[%c1_74, %c0_75, %c0_76] : memref<2x1x32xf32, #tpu.memory_space<vmem>>, vector<1x1x32xf32>
    %145 = vector.shape_cast %144 : vector<1x1x32xf32> to vector<1x32xf32>
    %c1_77 = arith.constant 1 : index
    %c0_78 = arith.constant 0 : index
    %c0_79 = arith.constant 0 : index
    %146 = vector.load %arg8[%c1_77, %c0_78, %c0_79] : memref<2x1x32xf32, #tpu.memory_space<vmem>>, vector<1x1x32xf32>
    %147 = vector.shape_cast %146 : vector<1x1x32xf32> to vector<1x32xf32>
    %c1_80 = arith.constant 1 : index
    %c0_81 = arith.constant 0 : index
    %c0_82 = arith.constant 0 : index
    %148 = vector.load %arg9[%c1_80, %c0_81, %c0_82] : memref<2x1x32xf32, #tpu.memory_space<vmem>>, vector<1x1x32xf32>
    %149 = vector.shape_cast %148 : vector<1x1x32xf32> to vector<1x32xf32>
    %c1_83 = arith.constant 1 : index
    %c0_84 = arith.constant 0 : index
    %c0_85 = arith.constant 0 : index
    %150 = vector.load %arg10[%c1_83, %c0_84, %c0_85] : memref<2x32x64xbf16, #tpu.memory_space<vmem>>, vector<1x32x64xbf16>
    %151 = vector.shape_cast %150 : vector<1x32x64xbf16> to vector<32x64xbf16>
    %c1_86 = arith.constant 1 : index
    %c0_87 = arith.constant 0 : index
    %c0_88 = arith.constant 0 : index
    %152 = vector.load %arg11[%c1_86, %c0_87, %c0_88] : memref<2x1x64xf32, #tpu.memory_space<vmem>>, vector<1x1x64xf32>
    %153 = vector.shape_cast %152 : vector<1x1x64xf32> to vector<1x64xf32>
    %c1_89 = arith.constant 1 : index
    %c0_90 = arith.constant 0 : index
    %c0_91 = arith.constant 0 : index
    %154 = vector.load %arg12[%c1_89, %c0_90, %c0_91] : memref<2x64x32xbf16, #tpu.memory_space<vmem>>, vector<1x64x32xbf16>
    %155 = vector.shape_cast %154 : vector<1x64x32xbf16> to vector<64x32xbf16>
    %c1_92 = arith.constant 1 : index
    %c0_93 = arith.constant 0 : index
    %c0_94 = arith.constant 0 : index
    %156 = vector.load %arg13[%c1_92, %c0_93, %c0_94] : memref<2x1x32xf32, #tpu.memory_space<vmem>>, vector<1x1x32xf32>
    %157 = vector.shape_cast %156 : vector<1x1x32xf32> to vector<1x32xf32>
    %c1_95 = arith.constant 1 : index
    %c0_96 = arith.constant 0 : index
    %c0_97 = arith.constant 0 : index
    %158 = vector.load %arg14[%c1_95, %c0_96, %c0_97] : memref<2x1x32xf32, #tpu.memory_space<vmem>>, vector<1x1x32xf32>
    %159 = vector.shape_cast %158 : vector<1x1x32xf32> to vector<1x32xf32>
    %c1_98 = arith.constant 1 : index
    %c0_99 = arith.constant 0 : index
    %c0_100 = arith.constant 0 : index
    %160 = vector.load %arg15[%c1_98, %c0_99, %c0_100] : memref<2x1x32xf32, #tpu.memory_space<vmem>>, vector<1x1x32xf32>
    %161 = vector.shape_cast %160 : vector<1x1x32xf32> to vector<1x32xf32>
    %162 = arith.truncf %137 : vector<64x32xf32> to vector<64x32xbf16>
    %cst_101 = arith.constant dense<0.000000e+00> : vector<64x96xf32>
    %163 = tpu.matmul %162, %139, %cst_101 {dimension_numbers = #tpu.dot_dimension_numbers<[1], [0], [0], [1], [0, 0, 1, 1], [], []>} : vector<64x32xbf16>, vector<32x96xbf16>, vector<64x96xf32> -> vector<64x96xf32>
    %164 = vector.broadcast %141 : vector<1x96xf32> to vector<64x96xf32>
    %165 = arith.addf %163, %164 : vector<64x96xf32>
    %166 = vector.extract_strided_slice %165 {offsets = [0, 0], sizes = [64, 32], strides = [1, 1]} : vector<64x96xf32> to vector<64x32xf32>
    %167 = vector.shape_cast %166 : vector<64x32xf32> to vector<8x8x32xf32>
    %168 = vector.extract_strided_slice %165 {offsets = [0, 32], sizes = [64, 32], strides = [1, 1]} : vector<64x96xf32> to vector<64x32xf32>
    %169 = vector.shape_cast %168 : vector<64x32xf32> to vector<8x8x32xf32>
    %170 = vector.extract_strided_slice %165 {offsets = [0, 64], sizes = [64, 32], strides = [1, 1]} : vector<64x96xf32> to vector<64x32xf32>
    %171 = vector.shape_cast %170 : vector<64x32xf32> to vector<8x8x32xf32>
    %172 = vector.shape_cast %167 : vector<8x8x32xf32> to vector<8x8x1x32xf32>
    %173 = vector.shape_cast %169 : vector<8x8x32xf32> to vector<8x1x8x32xf32>
    %174 = vector.broadcast %172 : vector<8x8x1x32xf32> to vector<8x8x8x32xf32>
    %175 = vector.broadcast %173 : vector<8x1x8x32xf32> to vector<8x8x8x32xf32>
    %176 = arith.mulf %174, %175 : vector<8x8x8x32xf32>
    %177 = vector.shape_cast %176 : vector<8x8x8x32xf32> to vector<512x32xf32>
    %178 = arith.truncf %177 : vector<512x32xf32> to vector<512x32xbf16>
    %cst_102 = arith.constant dense<0.000000e+00> : vector<512x32xf32>
    %179 = tpu.matmul %178, %6, %cst_102 {dimension_numbers = #tpu.dot_dimension_numbers<[1], [0], [0], [1], [0, 0, 1, 1], [], []>} : vector<512x32xbf16>, vector<32x32xbf16>, vector<512x32xf32> -> vector<512x32xf32>
    %180 = vector.shape_cast %179 : vector<512x32xf32> to vector<8x8x8x32xf32>
    %cst_103 = arith.constant 0.353553385 : f32
    %181 = vector.broadcast %cst_103 : f32 to vector<8x8x8x32xf32>
    %182 = arith.mulf %180, %181 : vector<8x8x8x32xf32>
    %183 = arith.addf %182, %51 : vector<8x8x8x32xf32>
    %cst_104 = arith.constant dense<0xFF800000> : vector<8x8x32xf32>
    %184 = vector.multi_reduction <maximumf>, %183, %cst_104 [2] : vector<8x8x8x32xf32> to vector<8x8x32xf32>
    %185 = vector.shape_cast %184 : vector<8x8x32xf32> to vector<8x8x1x32xf32>
    %186 = vector.broadcast %185 : vector<8x8x1x32xf32> to vector<8x8x8x32xf32>
    %187 = arith.subf %183, %186 : vector<8x8x8x32xf32>
    %188 = math.exp %187 : vector<8x8x8x32xf32>
    %cst_105 = arith.constant dense<0.000000e+00> : vector<8x8x32xf32>
    %189 = vector.multi_reduction <add>, %188, %cst_105 [2] : vector<8x8x8x32xf32> to vector<8x8x32xf32>
    %190 = vector.shape_cast %189 : vector<8x8x32xf32> to vector<8x8x1x32xf32>
    %191 = tpu.reciprocal %190 {approx = true} : vector<8x8x1x32xf32> -> vector<8x8x1x32xf32>
    %192 = vector.broadcast %191 : vector<8x8x1x32xf32> to vector<8x8x8x32xf32>
    %193 = arith.mulf %188, %192 : vector<8x8x8x32xf32>
    %194 = vector.shape_cast %171 : vector<8x8x32xf32> to vector<8x1x8x32xf32>
    %195 = vector.broadcast %194 : vector<8x1x8x32xf32> to vector<8x8x8x32xf32>
    %196 = arith.mulf %193, %195 : vector<8x8x8x32xf32>
    %cst_106 = arith.constant dense<0.000000e+00> : vector<8x8x32xf32>
    %197 = vector.multi_reduction <add>, %196, %cst_106 [2] : vector<8x8x8x32xf32> to vector<8x8x32xf32>
    %198 = vector.shape_cast %197 : vector<8x8x32xf32> to vector<64x32xf32>
    %199 = arith.truncf %198 : vector<64x32xf32> to vector<64x32xbf16>
    %cst_107 = arith.constant dense<0.000000e+00> : vector<64x32xf32>
    %200 = tpu.matmul %199, %143, %cst_107 {dimension_numbers = #tpu.dot_dimension_numbers<[1], [0], [0], [1], [0, 0, 1, 1], [], []>} : vector<64x32xbf16>, vector<32x32xbf16>, vector<64x32xf32> -> vector<64x32xf32>
    %201 = vector.broadcast %145 : vector<1x32xf32> to vector<64x32xf32>
    %202 = arith.addf %200, %201 : vector<64x32xf32>
    %203 = arith.addf %137, %202 : vector<64x32xf32>
    %cst_108 = arith.constant dense<0.000000e+00> : vector<32xf32>
    %204 = vector.multi_reduction <add>, %203, %cst_108 [0] : vector<64x32xf32> to vector<32xf32>
    %205 = vector.shape_cast %204 : vector<32xf32> to vector<1x32xf32>
    %206 = arith.mulf %203, %203 : vector<64x32xf32>
    %cst_109 = arith.constant dense<0.000000e+00> : vector<32xf32>
    %207 = vector.multi_reduction <add>, %206, %cst_109 [0] : vector<64x32xf32> to vector<32xf32>
    %208 = vector.shape_cast %207 : vector<32xf32> to vector<1x32xf32>
    %cst_110 = arith.constant 1.562500e-02 : f32
    %209 = vector.broadcast %cst_110 : f32 to vector<1x32xf32>
    %210 = arith.mulf %205, %209 : vector<1x32xf32>
    %cst_111 = arith.constant 1.562500e-02 : f32
    %211 = vector.broadcast %cst_111 : f32 to vector<1x32xf32>
    %212 = arith.mulf %208, %211 : vector<1x32xf32>
    %213 = arith.mulf %210, %210 : vector<1x32xf32>
    %214 = arith.subf %212, %213 : vector<1x32xf32>
    %215 = vector.broadcast %210 : vector<1x32xf32> to vector<64x32xf32>
    %216 = arith.subf %203, %215 : vector<64x32xf32>
    %cst_112 = arith.constant 9.99999974E-6 : f32
    %217 = vector.broadcast %cst_112 : f32 to vector<1x32xf32>
    %218 = arith.addf %214, %217 : vector<1x32xf32>
    %219 = math.rsqrt %218 : vector<1x32xf32>
    %220 = vector.broadcast %219 : vector<1x32xf32> to vector<64x32xf32>
    %221 = arith.mulf %216, %220 : vector<64x32xf32>
    %222 = vector.broadcast %147 : vector<1x32xf32> to vector<64x32xf32>
    %223 = arith.mulf %221, %222 : vector<64x32xf32>
    %224 = vector.broadcast %149 : vector<1x32xf32> to vector<64x32xf32>
    %225 = arith.addf %223, %224 : vector<64x32xf32>
    %226 = arith.truncf %225 : vector<64x32xf32> to vector<64x32xbf16>
    %cst_113 = arith.constant dense<0.000000e+00> : vector<64x64xf32>
    %227 = tpu.matmul %226, %151, %cst_113 {dimension_numbers = #tpu.dot_dimension_numbers<[1], [0], [0], [1], [0, 0, 1, 1], [], []>} : vector<64x32xbf16>, vector<32x64xbf16>, vector<64x64xf32> -> vector<64x64xf32>
    %228 = vector.broadcast %153 : vector<1x64xf32> to vector<64x64xf32>
    %229 = arith.addf %227, %228 : vector<64x64xf32>
    %cst_114 = arith.constant 5.000000e-01 : f32
    %230 = vector.broadcast %cst_114 : f32 to vector<64x64xf32>
    %231 = arith.mulf %230, %229 : vector<64x64xf32>
    %cst_115 = arith.constant 4.471500e-02 : f32
    %232 = vector.broadcast %cst_115 : f32 to vector<64x64xf32>
    %233 = arith.mulf %232, %229 : vector<64x64xf32>
    %234 = arith.mulf %233, %229 : vector<64x64xf32>
    %235 = arith.mulf %234, %229 : vector<64x64xf32>
    %236 = arith.addf %229, %235 : vector<64x64xf32>
    %cst_116 = arith.constant 0.797884583 : f32
    %237 = vector.broadcast %cst_116 : f32 to vector<64x64xf32>
    %238 = arith.mulf %237, %236 : vector<64x64xf32>
    %239 = math.tanh %238 : vector<64x64xf32>
    %cst_117 = arith.constant 1.000000e+00 : f32
    %240 = vector.broadcast %cst_117 : f32 to vector<64x64xf32>
    %241 = arith.addf %240, %239 : vector<64x64xf32>
    %242 = arith.mulf %231, %241 : vector<64x64xf32>
    %243 = arith.truncf %242 : vector<64x64xf32> to vector<64x64xbf16>
    %cst_118 = arith.constant dense<0.000000e+00> : vector<64x32xf32>
    %244 = tpu.matmul %243, %155, %cst_118 {dimension_numbers = #tpu.dot_dimension_numbers<[1], [0], [0], [1], [0, 0, 1, 1], [], []>} : vector<64x64xbf16>, vector<64x32xbf16>, vector<64x32xf32> -> vector<64x32xf32>
    %245 = vector.broadcast %157 : vector<1x32xf32> to vector<64x32xf32>
    %246 = arith.addf %244, %245 : vector<64x32xf32>
    %247 = arith.addf %225, %246 : vector<64x32xf32>
    %cst_119 = arith.constant dense<0.000000e+00> : vector<32xf32>
    %248 = vector.multi_reduction <add>, %247, %cst_119 [0] : vector<64x32xf32> to vector<32xf32>
    %249 = vector.shape_cast %248 : vector<32xf32> to vector<1x32xf32>
    %250 = arith.mulf %247, %247 : vector<64x32xf32>
    %cst_120 = arith.constant dense<0.000000e+00> : vector<32xf32>
    %251 = vector.multi_reduction <add>, %250, %cst_120 [0] : vector<64x32xf32> to vector<32xf32>
    %252 = vector.shape_cast %251 : vector<32xf32> to vector<1x32xf32>
    %cst_121 = arith.constant 1.562500e-02 : f32
    %253 = vector.broadcast %cst_121 : f32 to vector<1x32xf32>
    %254 = arith.mulf %249, %253 : vector<1x32xf32>
    %cst_122 = arith.constant 1.562500e-02 : f32
    %255 = vector.broadcast %cst_122 : f32 to vector<1x32xf32>
    %256 = arith.mulf %252, %255 : vector<1x32xf32>
    %257 = arith.mulf %254, %254 : vector<1x32xf32>
    %258 = arith.subf %256, %257 : vector<1x32xf32>
    %259 = vector.broadcast %254 : vector<1x32xf32> to vector<64x32xf32>
    %260 = arith.subf %247, %259 : vector<64x32xf32>
    %cst_123 = arith.constant 9.99999974E-6 : f32
    %261 = vector.broadcast %cst_123 : f32 to vector<1x32xf32>
    %262 = arith.addf %258, %261 : vector<1x32xf32>
    %263 = math.rsqrt %262 : vector<1x32xf32>
    %264 = vector.broadcast %263 : vector<1x32xf32> to vector<64x32xf32>
    %265 = arith.mulf %260, %264 : vector<64x32xf32>
    %266 = vector.broadcast %159 : vector<1x32xf32> to vector<64x32xf32>
    %267 = arith.mulf %265, %266 : vector<64x32xf32>
    %268 = vector.broadcast %161 : vector<1x32xf32> to vector<64x32xf32>
    %269 = arith.addf %267, %268 : vector<64x32xf32>
    %c0_124 = arith.constant 0 : index
    %c0_125 = arith.constant 0 : index
    %270 = vector.load %arg16[%c0_124, %c0_125] : memref<64x32xf32, #tpu.memory_space<vmem>>, vector<64x32xf32>
    tpu.vector_store %arg16[%c0_124, %c0_125], %269 {strides = array<i32>} : memref<64x32xf32, #tpu.memory_space<vmem>>, vector<64x32xf32>,
    return
  }
}

</mosaic_0001>

<llo_original>
// kernel: patchtst_encoder_forward.1
$region0: #{patchtst_encoder_forward.1}
  #allocation0 [shape = 'u32[]', space=smem, size = 0x4, offset = 0x4, fixed_abs, tag = 'smem constant byte address 0x4 - core index']
  #allocation1 [shape = 'u32[144,128]{1,0:T(1,128)}', space=vmem, size = 0x12000, scoped, tag = 'internal scratch']
  %s0 = inlined_call_operand.vmem [shape: f32[64,16], index: 0, kind: input, shape index: {}]
  %s1 = inlined_call_operand.vmem [shape: bf16[16,32], index: 1, kind: input, shape index: {}]
  %s2 = inlined_call_operand.vmem [shape: f32[64,32], index: 2, kind: input, shape index: {}]
  %s3 = inlined_call_operand.vmem [shape: bf16[32,32], index: 3, kind: input, shape index: {}]
  %s4 = inlined_call_operand.vmem [shape: bf16[2,32,96], index: 4, kind: input, shape index: {}]
  %s5 = inlined_call_operand.vmem [shape: f32[2,1,96], index: 5, kind: input, shape index: {}]
  %s6 = inlined_call_operand.vmem [shape: bf16[2,32,32], index: 6, kind: input, shape index: {}]
  %s7 = inlined_call_operand.vmem [shape: f32[2,1,32], index: 7, kind: input, shape index: {}]
  %s8 = inlined_call_operand.vmem [shape: f32[2,1,32], index: 8, kind: input, shape index: {}]
  %s9 = inlined_call_operand.vmem [shape: f32[2,1,32], index: 9, kind: input, shape index: {}]
  %s10 = inlined_call_operand.vmem [shape: bf16[2,32,64], index: 10, kind: input, shape index: {}]
  %s11 = inlined_call_operand.vmem [shape: f32[2,1,64], index: 11, kind: input, shape index: {}]
  %s12 = inlined_call_operand.vmem [shape: bf16[2,64,32], index: 12, kind: input, shape index: {}]
  %s13 = inlined_call_operand.vmem [shape: f32[2,1,32], index: 13, kind: input, shape index: {}]
  %s14 = inlined_call_operand.vmem [shape: f32[2,1,32], index: 14, kind: input, shape index: {}]
  %s15 = inlined_call_operand.vmem [shape: f32[2,1,32], index: 15, kind: input, shape index: {}]
  %s16 = inlined_call_operand.hbm [shape: f32[64,32], index: 16, kind: output, shape index: {}]
  %s17 = sld [smem:[#allocation0]]
  $region74: #{patchtst_encoder_forward.1} parent=0
    _
  %s19 = ssub.s32 1, %s17
  %s20 = scalar_select 0, %s19, %s17
  $region1: #{patchtst_encoder_forward.1} parent=0
    #allocation2 [shape = 'u8[32768]{0}', space=vmem, size = 0x8000, scoped, tag = 'output window, operand 0, single buffered']
    #allocation3 [shape = 's32[1]{0}', space=sflag, size = 0x4, scoped, tag = 'scoped memory for patchtst_encoder_forward.1']
    %21 = vsyncpa [#allocation3], 0
    // Predicated region
    $region2: #{patchtst_encoder_forward.1} parent=1 // pred_check
      _
    $region3: #{patchtst_encoder_forward.1} parent=1 // pred_check_branch
      %23 = sbr.rel (0) target = $region5
    $region4: #{patchtst_encoder_forward.1} parent=1 // pred_region
      _
    $region5: #{patchtst_encoder_forward.1} parent=1 // pred_fallthru
      _
    // Predicated region
    $region6: #{patchtst_encoder_forward.1} parent=1 // pred_check
      _
    $region7: #{patchtst_encoder_forward.1} parent=1 // pred_check_branch
      %25 = sbr.rel (0) target = $region9
    $region8: #{patchtst_encoder_forward.1} parent=1 // pred_region
      _
    $region9: #{patchtst_encoder_forward.1} parent=1 // pred_fallthru
      _
    // Predicated region
    $region10: #{patchtst_encoder_forward.1} parent=1 // pred_check
      _
    $region11: #{patchtst_encoder_forward.1} parent=1 // pred_check_branch
      %27 = sbr.rel (0) target = $region13
    $region12: #{patchtst_encoder_forward.1} parent=1 // pred_region
      _
    $region13: #{patchtst_encoder_forward.1} parent=1 // pred_fallthru
      _
    // Predicated region
    $region14: #{patchtst_encoder_forward.1} parent=1 // pred_check
      _
    $region15: #{patchtst_encoder_forward.1} parent=1 // pred_check_branch
      %29 = sbr.rel (0) target = $region17
    $region16: #{patchtst_encoder_forward.1} parent=1 // pred_region
      _
    $region17: #{patchtst_encoder_forward.1} parent=1 // pred_fallthru
      _
    // Predicated region
    $region18: #{patchtst_encoder_forward.1} parent=1 // pred_check
      _
    $region19: #{patchtst_encoder_forward.1} parent=1 // pred_check_branch
      %31 = sbr.rel (0) target = $region21
    $region20: #{patchtst_encoder_forward.1} parent=1 // pred_region
      _
    $region21: #{patchtst_encoder_forward.1} parent=1 // pred_fallthru
      _
    // Predicated region
    $region22: #{patchtst_encoder_forward.1} parent=1 // pred_check
      _
    $region23: #{patchtst_encoder_forward.1} parent=1 // pred_check_branch
      %33 = sbr.rel (0) target = $region25
    $region24: #{patchtst_encoder_forward.1} parent=1 // pred_region
      _
    $region25: #{patchtst_encoder_forward.1} parent=1 // pred_fallthru
      _
    // Predicated region
    $region26: #{patchtst_encoder_forward.1} parent=1 // pred_check
      _
    $region27: #{patchtst_encoder_forward.1} parent=1 // pred_check_branch
      %35 = sbr.rel (0) target = $region29
    $region28: #{patchtst_encoder_forward.1} parent=1 // pred_region
      _
    $region29: #{patchtst_encoder_forward.1} parent=1 // pred_fallthru
      _
    // Predicated region
    $region30: #{patchtst_encoder_forward.1} parent=1 // pred_check
      _
    $region31: #{patchtst_encoder_forward.1} parent=1 // pred_check_branch
      %37 = sbr.rel (0) target = $region33
    $region32: #{patchtst_encoder_forward.1} parent=1 // pred_region
      _
    $region33: #{patchtst_encoder_forward.1} parent=1 // pred_fallthru
      _
    // Predicated region
    $region34: #{patchtst_encoder_forward.1} parent=1 // pred_check
      _
    $region35: #{patchtst_encoder_forward.1} parent=1 // pred_check_branch
      %39 = sbr.rel (0) target = $region37
    $region36: #{patchtst_encoder_forward.1} parent=1 // pred_region
      _
    $region37: #{patchtst_encoder_forward.1} parent=1 // pred_fallthru
      _
    // Predicated region
    $region38: #{patchtst_encoder_forward.1} parent=1 // pred_check
      _
    $region39: #{patchtst_encoder_forward.1} parent=1 // pred_check_branch
      %41 = sbr.rel (0) target = $region41
    $region40: #{patchtst_encoder_forward.1} parent=1 // pred_region
      _
    $region41: #{patchtst_encoder_forward.1} parent=1 // pred_fallthru
      _
    // Predicated region
    $region42: #{patchtst_encoder_forward.1} parent=1 // pred_check
      _
    $region43: #{patchtst_encoder_forward.1} parent=1 // pred_check_branch
      %43 = sbr.rel (0) target = $region45
    $region44: #{patchtst_encoder_forward.1} parent=1 // pred_region
      _
    $region45: #{patchtst_encoder_forward.1} parent=1 // pred_fallthru
      _
    // Predicated region
    $region46: #{patchtst_encoder_forward.1} parent=1 // pred_check
      _
    $region47: #{patchtst_encoder_forward.1} parent=1 // pred_check_branch
      %45 = sbr.rel (0) target = $region49
    $region48: #{patchtst_encoder_forward.1} parent=1 // pred_region
      _
    $region49: #{patchtst_encoder_forward.1} parent=1 // pred_fallthru
      _
    // Predicated region
    $region50: #{patchtst_encoder_forward.1} parent=1 // pred_check
      _
    $region51: #{patchtst_encoder_forward.1} parent=1 // pred_check_branch
      %47 = sbr.rel (0) target = $region53
    $region52: #{patchtst_encoder_forward.1} parent=1 // pred_region
      _
    $region53: #{patchtst_encoder_forward.1} parent=1 // pred_fallthru
      _
    // Predicated region
    $region54: #{patchtst_encoder_forward.1} parent=1 // pred_check
      _
    $region55: #{patchtst_encoder_forward.1} parent=1 // pred_check_branch
      %49 = sbr.rel (0) target = $region57
    $region56: #{patchtst_encoder_forward.1} parent=1 // pred_region
      _
    $region57: #{patchtst_encoder_forward.1} parent=1 // pred_fallthru
      _
    // Predicated region
    $region58: #{patchtst_encoder_forward.1} parent=1 // pred_check
      _
    $region59: #{patchtst_encoder_forward.1} parent=1 // pred_check_branch
      %51 = sbr.rel (0) target = $region61
    $region60: #{patchtst_encoder_forward.1} parent=1 // pred_region
      _
    $region61: #{patchtst_encoder_forward.1} parent=1 // pred_fallthru
      _
    // Predicated region
    $region62: #{patchtst_encoder_forward.1} parent=1 // pred_check
      _
    $region63: #{patchtst_encoder_forward.1} parent=1 // pred_check_branch
      %53 = sbr.rel (0) target = $region65
    $region64: #{patchtst_encoder_forward.1} parent=1 // pred_region
      _
    $region65: #{patchtst_encoder_forward.1} parent=1 // pred_fallthru
      _
    %v55 = vld [vmem:[%s0] sm:$0xff]
    %v56 = vld [vmem:[%s0 + $0x8] sm:$0xff]
    %v57 = vld [vmem:[%s0 + $0x10] sm:$0xff]
    %v58 = vld [vmem:[%s0 + $0x18] sm:$0xff]
    %v59 = vld [vmem:[%s0 + $0x20] sm:$0xff]
    %v60 = vld [vmem:[%s0 + $0x28] sm:$0xff]
    %v61 = vld [vmem:[%s0 + $0x30] sm:$0xff]
    %v62 = vld [vmem:[%s0 + $0x38] sm:$0xff]
    %v63 = vpack.c.bf16 %v56, %v55
    %v64 = vpack.c.bf16 %v58, %v57
    %v65 = vpack.c.bf16 %v60, %v59
    %v66 = vpack.c.bf16 %v62, %v61
    %v67 = vld [vmem:[%s1] sm:$0xf]
    %v68 = vld [vmem:[%s1 + $0x4] sm:$0xf]
    %v69 = vld [vmem:[%s2] sm:$0xff]
    %v70 = vld [vmem:[%s2 + $0x8] sm:$0xff]
    %v71 = vld [vmem:[%s2 + $0x10] sm:$0xff]
    %v72 = vld [vmem:[%s2 + $0x18] sm:$0xff]
    %v73 = vld [vmem:[%s2 + $0x20] sm:$0xff]
    %v74 = vld [vmem:[%s2 + $0x28] sm:$0xff]
    %v75 = vld [vmem:[%s2 + $0x30] sm:$0xff]
    %v76 = vld [vmem:[%s2 + $0x38] sm:$0xff]
    %v79 = vunpack.c.l.b16 %v67
    %v80 = vunpack.c.l.b16 %v68
    %v81 = vpack.c.b16 %v80, %v79
    %vm83 = vcmask 130048
    %v85 = vsel %vm83, %v63, 0
    %v88 = vsel %vm83, %v64, 0
    %v91 = vsel %vm83, %v65, 0
    %v94 = vsel %vm83, %v66, 0
    %96 = vmatprep.subr.bf16.mxu0 0
    %97 = vmatpush1.bf16.msra.mxu0 0
    %98 = vmatprep.subr.bf16.mxu0 0
    %99 = vmatpush1.bf16.msra.mxu0 0
    %100 = vmatprep.subr.bf16.mxu0 0
    %101 = vmatpush1.bf16.msra.mxu0 0
    %102 = vmatprep.subr.bf16.mxu0 0
    %103 = vmatpush1.bf16.msra.mxu0 0
    %104 = vmatprep.subr.bf16.mxu0 0
    %105 = vmatpush1.bf16.msra.mxu0 0
    %106 = vmatprep.subr.bf16.mxu0 0
    %107 = vmatpush1.bf16.msra.mxu0 0
    %108 = vmatprep.subr.bf16.mxu0 0
    %109 = vmatpush1.bf16.msra.mxu0 0
    %110 = vmatprep.subr.bf16.mxu0 0
    %111 = vmatpush1.bf16.msra.mxu0 %v81
    %112 = vmatprep.subr.bf16.mxu0 0
    %113 = vmatpush2.bf16.msra.mxu0 0
    %114 = vmatprep.subr.bf16.mxu0 0
    %115 = vmatpush2.bf16.msra.mxu0 0
    %116 = vmatprep.subr.bf16.mxu0 0
    %117 = vmatpush2.bf16.msra.mxu0 0
    %118 = vmatprep.subr.bf16.mxu0 0
    %119 = vmatpush2.bf16.msra.mxu0 0
    %120 = vmatprep.subr.bf16.mxu0 0
    %121 = vmatpush2.bf16.msra.mxu0 0
    %122 = vmatprep.subr.bf16.mxu0 0
    %123 = vmatpush2.bf16.msra.mxu0 0
    %124 = vmatprep.subr.bf16.mxu0 0
    %125 = vmatpush2.bf16.msra.mxu0 0
    %126 = vmatprep.subr.bf16.mxu0 0
    %127 = vmatpush2.bf16.msra.mxu0 0
    %128 = vmatprep.mubr.bf16.mxu0 0
    %129 = vmatmul.mubr.bf16.gmra.mxu0 %v85
    %v130 = vpop.f32.mrf.mxu0
    %v131 = vadd.f32 %v69, %v130
    %v132 = vpop.f32.mrf.mxu0
    %v133 = vpop.f32.mrf.mxu0
    %v134 = vadd.f32 %v70, %v133
    %v135 = vpop.f32.mrf.mxu0
    %136 = vmatprep.mubr.bf16.mxu0 0
    %137 = vmatmul.mubr.bf16.gmra.mxu0 %v88
    %v138 = vpop.f32.mrf.mxu0
    %v139 = vadd.f32 %v71, %v138
    %v140 = vpop.f32.mrf.mxu0
    %v141 = vpop.f32.mrf.mxu0
    %v142 = vadd.f32 %v72, %v141
    %v143 = vpop.f32.mrf.mxu0
    %144 = vmatprep.mubr.bf16.mxu0 0
    %145 = vmatmul.mubr.bf16.gmra.mxu0 %v91
    %v146 = vpop.f32.mrf.mxu0
    %v147 = vadd.f32 %v73, %v146
    %v148 = vpop.f32.mrf.mxu0
    %v149 = vpop.f32.mrf.mxu0
    %v150 = vadd.f32 %v74, %v149
    %v151 = vpop.f32.mrf.mxu0
    %152 = vmatprep.mubr.bf16.mxu0 0
    %153 = vmatmul.mubr.bf16.gmra.mxu0 %v94
    %v154 = vpop.f32.mrf.mxu0
    %v155 = vadd.f32 %v75, %v154
    %v156 = vpop.f32.mrf.mxu0
    %v157 = vpop.f32.mrf.mxu0
    %v158 = vadd.f32 %v76, %v157
    %v159 = vpop.f32.mrf.mxu0
    %160 = vdwg.mxu0
    %v161 = vld [vmem:[%s3] sm:$0xf]
    %v162 = vld [vmem:[%s3 + $0x4] sm:$0xf]
    %v163 = vld [vmem:[%s3 + $0x8] sm:$0xf]
    %v164 = vld [vmem:[%s3 + $0xc] sm:$0xf]
    %v165 = vld [vmem:[%s4] sm:$0xf]
    %v166 = vld [vmem:[%s4 + $0x4] sm:$0xf]
    %v167 = vld [vmem:[%s4 + $0x8] sm:$0xf]
    %v168 = vld [vmem:[%s4 + $0xc] sm:$0xf]
    %v169 = vld [vmem:[%s5] sm:$0x1]
    %v170 = vld [vmem:[%s6] sm:$0xf]
    %v171 = vld [vmem:[%s6 + $0x4] sm:$0xf]
    %v172 = vld [vmem:[%s6 + $0x8] sm:$0xf]
    %v173 = vld [vmem:[%s6 + $0xc] sm:$0xf]
    %v174 = vld [vmem:[%s7] sm:$0x1]
    %v175 = vld [vmem:[%s8] sm:$0x1]
    %v176 = vld [vmem:[%s9] sm:$0x1]
    %v177 = vld [vmem:[%s10] sm:$0xf]
    %v178 = vld [vmem:[%s10 + $0x4] sm:$0xf]
    %v179 = vld [vmem:[%s10 + $0x8] sm:$0xf]
    %v180 = vld [vmem:[%s10 + $0xc] sm:$0xf]
    %v181 = vld [vmem:[%s11] sm:$0x1]
    %v182 = vld [vmem:[%s12] sm:$0xf]
    %v183 = vld [vmem:[%s12 + $0x4] sm:$0xf]
    %v184 = vld [vmem:[%s12 + $0x8] sm:$0xf]
    %v185 = vld [vmem:[%s12 + $0xc] sm:$0xf]
    %v186 = vld [vmem:[%s12 + $0x10] sm:$0xf]
    %v187 = vld [vmem:[%s12 + $0x14] sm:$0xf]
    %v188 = vld [vmem:[%s12 + $0x18] sm:$0xf]
    %v189 = vld [vmem:[%s12 + $0x1c] sm:$0xf]
    %v190 = vld [vmem:[%s13] sm:$0x1]
    %v191 = vld [vmem:[%s14] sm:$0x1]
    %v192 = vld [vmem:[%s15] sm:$0x1]
    %v193 = vpack.c.bf16 %v134, %v131
    %v194 = vpack.c.bf16 %v142, %v139
    %v195 = vpack.c.bf16 %v150, %v147
    %v196 = vpack.c.bf16 %v158, %v155
    %v198 = vlaneseq
    %v199 = vshrl.u32 %v198, 7
    %v200 = vsub.s32 0, %v199
    %v201 = vrot.slane %v169, %v200
    %v207 = vunpack.c.l.b16 %v165
    %v208 = vunpack.c.l.b16 %v166
    %v209 = vunpack.c.l.b16 %v167
    %v210 = vunpack.c.l.b16 %v168
    %v211 = vpack.c.b16 %v208, %v207
    %v212 = vpack.c.b16 %v210, %v209
    %vm215 = vcmask 261120
    %v217 = vsel %vm215, %v193, 0
    %v220 = vsel %vm215, %v194, 0
    %v223 = vsel %vm215, %v195, 0
    %v226 = vsel %vm215, %v196, 0
    %228 = vmatprep.subr.bf16.mxu0 0
    %229 = vmatpush1.bf16.msra.mxu0 0
    %230 = vmatprep.subr.bf16.mxu0 0
    %231 = vmatpush1.bf16.msra.mxu0 0
    %232 = vmatprep.subr.bf16.mxu0 0
    %233 = vmatpush1.bf16.msra.mxu0 0
    %234 = vmatprep.subr.bf16.mxu0 0
    %235 = vmatpush1.bf16.msra.mxu0 0
    %236 = vmatprep.subr.bf16.mxu0 0
    %237 = vmatpush1.bf16.msra.mxu0 0
    %238 = vmatprep.subr.bf16.mxu0 0
    %239 = vmatpush1.bf16.msra.mxu0 0
    %240 = vmatprep.subr.bf16.mxu0 0
    %241 = vmatpush1.bf16.msra.mxu0 %v212
    %242 = vmatprep.subr.bf16.mxu0 0
    %243 = vmatpush1.bf16.msra.mxu0 %v211
    %244 = vmatprep.subr.bf16.mxu0 0
    %245 = vmatpush2.bf16.msra.mxu0 0
    %246 = vmatprep.subr.bf16.mxu0 0
    %247 = vmatpush2.bf16.msra.mxu0 0
    %248 = vmatprep.subr.bf16.mxu0 0
    %249 = vmatpush2.bf16.msra.mxu0 0
    %250 = vmatprep.subr.bf16.mxu0 0
    %251 = vmatpush2.bf16.msra.mxu0 0
    %252 = vmatprep.subr.bf16.mxu0 0
    %253 = vmatpush2.bf16.msra.mxu0 0
    %254 = vmatprep.subr.bf16.mxu0 0
    %255 = vmatpush2.bf16.msra.mxu0 0
    %256 = vmatprep.subr.bf16.mxu0 0
    %257 = vmatpush2.bf16.msra.mxu0 0
    %258 = vmatprep.subr.bf16.mxu0 0
    %259 = vmatpush2.bf16.msra.mxu0 0
    %260 = vmatprep.mubr.bf16.mxu0 0
    %261 = vmatmul.mubr.bf16.gmra.mxu0 %v217
    %v262 = vpop.f32.mrf.mxu0
    %v263 = vadd.f32 %v201, %v262
    %v264 = vpop.f32.mrf.mxu0
    %v265 = vpop.f32.mrf.mxu0
    %v266 = vadd.f32 %v201, %v265
    %v267 = vpop.f32.mrf.mxu0
    %268 = vmatprep.mubr.bf16.mxu0 0
    %269 = vmatmul.mubr.bf16.gmra.mxu0 %v220
    %v270 = vpop.f32.mrf.mxu0
    %v271 = vadd.f32 %v201, %v270
    %v272 = vpop.f32.mrf.mxu0
    %v273 = vpop.f32.mrf.mxu0
    %v274 = vadd.f32 %v201, %v273
    %v275 = vpop.f32.mrf.mxu0
    %276 = vmatprep.mubr.bf16.mxu0 0
    %277 = vmatmul.mubr.bf16.gmra.mxu0 %v223
    %v278 = vpop.f32.mrf.mxu0
    %v279 = vadd.f32 %v201, %v278
    %v280 = vpop.f32.mrf.mxu0
    %v281 = vpop.f32.mrf.mxu0
    %v282 = vadd.f32 %v201, %v281
    %v283 = vpop.f32.mrf.mxu0
    %284 = vmatprep.mubr.bf16.mxu0 0
    %285 = vmatmul.mubr.bf16.gmra.mxu0 %v226
    %v286 = vpop.f32.mrf.mxu0
    %v287 = vadd.f32 %v201, %v286
    %v288 = vpop.f32.mrf.mxu0
    %v289 = vpop.f32.mrf.mxu0
    %v290 = vadd.f32 %v201, %v289
    %v291 = vpop.f32.mrf.mxu0
    %292 = vdwg.mxu0
    %v301 = vcombine.high %v263, %v263
    %v303 = vunpack.c.l.s4 1966171168
    %v304 = vunpack.c.0.s8 %v303
    %v305 = vlaneseq
    %v306 = vshrl.u32 %v305, 7
    %v307 = vsub.s32 %v304, %v306
    %v308 = vrot.slane %v263, %v307
    %v310 = vunpack.c.l.s4 1966171168
    %v311 = vunpack.c.0.s8 %v310
    %v312 = vlaneseq
    %v313 = vshrl.u32 %v312, 7
    %v314 = vsub.s32 %v311, %v313
    %v315 = vrot.slane %v301, %v314
    %v316 = vcombine.high %v308, %v308
    %v317 = vcombine.high %v315, %v315
    %v319 = vunpack.c.l.s4 1966171168
    %v320 = vunpack.c.0.s8 %v319
    %v321 = vlaneseq
    %v322 = vshrl.u32 %v321, 7
    %v323 = vsub.s32 %v320, %v322
    %v324 = vrot.slane %v308, %v323
    %v326 = vunpack.c.l.s4 1966171168
    %v327 = vunpack.c.0.s8 %v326
    %v328 = vlaneseq
    %v329 = vshrl.u32 %v328, 7
    %v330 = vsub.s32 %v327, %v329
    %v331 = vrot.slane %v315, %v330
    %v333 = vunpack.c.l.s4 1966171168
    %v334 = vunpack.c.0.s8 %v333
    %v335 = vlaneseq
    %v336 = vshrl.u32 %v335, 7
    %v337 = vsub.s32 %v334, %v336
    %v338 = vrot.slane %v316, %v337
    %v340 = vunpack.c.l.s4 1966171168
    %v341 = vunpack.c.0.s8 %v340
    %v342 = vlaneseq
    %v343 = vshrl.u32 %v342, 7
    %v344 = vsub.s32 %v341, %v343
    %v345 = vrot.slane %v317, %v344
    %v346 = vcombine.high %v324, %v324
    %v347 = vcombine.high %v331, %v331
    %v348 = vcombine.high %v338, %v338
    %v349 = vcombine.high %v345, %v345
    %v350 = vcombine.high %v266, %v266
    %v352 = vunpack.c.l.s4 1966171168
    %v353 = vunpack.c.0.s8 %v352
    %v354 = vlaneseq
    %v355 = vshrl.u32 %v354, 7
    %v356 = vsub.s32 %v353, %v355
    %v357 = vrot.slane %v266, %v356
    %v359 = vunpack.c.l.s4 1966171168
    %v360 = vunpack.c.0.s8 %v359
    %v361 = vlaneseq
    %v362 = vshrl.u32 %v361, 7
    %v363 = vsub.s32 %v360, %v362
    %v364 = vrot.slane %v350, %v363
    %v365 = vcombine.high %v357, %v357
    %v366 = vcombine.high %v364, %v364
    %v368 = vunpack.c.l.s4 1966171168
    %v369 = vunpack.c.0.s8 %v368
    %v370 = vlaneseq
    %v371 = vshrl.u32 %v370, 7
    %v372 = vsub.s32 %v369, %v371
    %v373 = vrot.slane %v357, %v372
    %v375 = vunpack.c.l.s4 1966171168
    %v376 = vunpack.c.0.s8 %v375
    %v377 = vlaneseq
    %v378 = vshrl.u32 %v377, 7
    %v379 = vsub.s32 %v376, %v378
    %v380 = vrot.slane %v364, %v379
    %v382 = vunpack.c.l.s4 1966171168
    %v383 = vunpack.c.0.s8 %v382
    %v384 = vlaneseq
    %v385 = vshrl.u32 %v384, 7
    %v386 = vsub.s32 %v383, %v385
    %v387 = vrot.slane %v365, %v386
    %v389 = vunpack.c.l.s4 1966171168
    %v390 = vunpack.c.0.s8 %v389
    %v391 = vlaneseq
    %v392 = vshrl.u32 %v391, 7
    %v393 = vsub.s32 %v390, %v392
    %v394 = vrot.slane %v366, %v393
    %v395 = vcombine.high %v373, %v373
    %v396 = vcombine.high %v380, %v380
    %v397 = vcombine.high %v387, %v387
    %v398 = vcombine.high %v394, %v394
    %v399 = vcombine.high %v271, %v271
    %v401 = vunpack.c.l.s4 1966171168
    %v402 = vunpack.c.0.s8 %v401
    %v403 = vlaneseq
    %v404 = vshrl.u32 %v403, 7
    %v405 = vsub.s32 %v402, %v404
    %v406 = vrot.slane %v271, %v405
    %v408 = vunpack.c.l.s4 1966171168
    %v409 = vunpack.c.0.s8 %v408
    %v410 = vlaneseq
    %v411 = vshrl.u32 %v410, 7
    %v412 = vsub.s32 %v409, %v411
    %v413 = vrot.slane %v399, %v412
    %v414 = vcombine.high %v406, %v406
    %v415 = vcombine.high %v413, %v413
    %v417 = vunpack.c.l.s4 1966171168
    %v418 = vunpack.c.0.s8 %v417
    %v419 = vlaneseq
    %v420 = vshrl.u32 %v419, 7
    %v421 = vsub.s32 %v418, %v420
    %v422 = vrot.slane %v406, %v421
    %v424 = vunpack.c.l.s4 1966171168
    %v425 = vunpack.c.0.s8 %v424
    %v426 = vlaneseq
    %v427 = vshrl.u32 %v426, 7
    %v428 = vsub.s32 %v425, %v427
    %v429 = vrot.slane %v413, %v428
    %v431 = vunpack.c.l.s4 1966171168
    %v432 = vunpack.c.0.s8 %v431
    %v433 = vlaneseq
    %v434 = vshrl.u32 %v433, 7
    %v435 = vsub.s32 %v432, %v434
    %v436 = vrot.slane %v414, %v435
    %v438 = vunpack.c.l.s4 1966171168
    %v439 = vunpack.c.0.s8 %v438
    %v440 = vlaneseq
    %v441 = vshrl.u32 %v440, 7
    %v442 = vsub.s32 %v439, %v441
    %v443 = vrot.slane %v415, %v442
    %v444 = vcombine.high %v422, %v422
    %v445 = vcombine.high %v429, %v429
    %v446 = vcombine.high %v436, %v436
    %v447 = vcombine.high %v443, %v443
    %v448 = vcombine.high %v274, %v274
    %v450 = vunpack.c.l.s4 1966171168
    %v451 = vunpack.c.0.s8 %v450
    %v452 = vlaneseq
    %v453 = vshrl.u32 %v452, 7
    %v454 = vsub.s32 %v451, %v453
    %v455 = vrot.slane %v274, %v454
    %v457 = vunpack.c.l.s4 1966171168
    %v458 = vunpack.c.0.s8 %v457
    %v459 = vlaneseq
    %v460 = vshrl.u32 %v459, 7
    %v461 = vsub.s32 %v458, %v460
    %v462 = vrot.slane %v448, %v461
    %v463 = vcombine.high %v455, %v455
    %v464 = vcombine.high %v462, %v462
    %v466 = vunpack.c.l.s4 1966171168
    %v467 = vunpack.c.0.s8 %v466
    %v468 = vlaneseq
    %v469 = vshrl.u32 %v468, 7
    %v470 = vsub.s32 %v467, %v469
    %v471 = vrot.slane %v455, %v470
    %v473 = vunpack.c.l.s4 1966171168
    %v474 = vunpack.c.0.s8 %v473
    %v475 = vlaneseq
    %v476 = vshrl.u32 %v475, 7
    %v477 = vsub.s32 %v474, %v476
    %v478 = vrot.slane %v462, %v477
    %v480 = vunpack.c.l.s4 1966171168
    %v481 = vunpack.c.0.s8 %v480
    %v482 = vlaneseq
    %v483 = vshrl.u32 %v482, 7
    %v484 = vsub.s32 %v481, %v483
    %v485 = vrot.slane %v463, %v484
    %v487 = vunpack.c.l.s4 1966171168
    %v488 = vunpack.c.0.s8 %v487
    %v489 = vlaneseq
    %v490 = vshrl.u32 %v489, 7
    %v491 = vsub.s32 %v488, %v490
    %v492 = vrot.slane %v464, %v491
    %v493 = vcombine.high %v471, %v471
    %v494 = vcombine.high %v478, %v478
    %v495 = vcombine.high %v485, %v485
    %v496 = vcombine.high %v492, %v492
    %v497 = vcombine.high %v279, %v279
    %v499 = vunpack.c.l.s4 1966171168
    %v500 = vunpack.c.0.s8 %v499
    %v501 = vlaneseq
    %v502 = vshrl.u32 %v501, 7
    %v503 = vsub.s32 %v500, %v502
    %v504 = vrot.slane %v279, %v503
    %v506 = vunpack.c.l.s4 1966171168
    %v507 = vunpack.c.0.s8 %v506
    %v508 = vlaneseq
    %v509 = vshrl.u32 %v508, 7
    %v510 = vsub.s32 %v507, %v509
    %v511 = vrot.slane %v497, %v510
    %v512 = vcombine.high %v504, %v504
    %v513 = vcombine.high %v511, %v511
    %v515 = vunpack.c.l.s4 1966171168
    %v516 = vunpack.c.0.s8 %v515
    %v517 = vlaneseq
    %v518 = vshrl.u32 %v517, 7
    %v519 = vsub.s32 %v516, %v518
    %v520 = vrot.slane %v504, %v519
    %v522 = vunpack.c.l.s4 1966171168
    %v523 = vunpack.c.0.s8 %v522
    %v524 = vlaneseq
    %v525 = vshrl.u32 %v524, 7
    %v526 = vsub.s32 %v523, %v525
    %v527 = vrot.slane %v511, %v526
    %v529 = vunpack.c.l.s4 1966171168
    %v530 = vunpack.c.0.s8 %v529
    %v531 = vlaneseq
    %v532 = vshrl.u32 %v531, 7
    %v533 = vsub.s32 %v530, %v532
    %v534 = vrot.slane %v512, %v533
    %v536 = vunpack.c.l.s4 1966171168
    %v537 = vunpack.c.0.s8 %v536
    %v538 = vlaneseq
    %v539 = vshrl.u32 %v538, 7
    %v540 = vsub.s32 %v537, %v539
    %v541 = vrot.slane %v513, %v540
    %v542 = vcombine.high %v520, %v520
    %v543 = vcombine.high %v527, %v527
    %v544 = vcombine.high %v534, %v534
    %v545 = vcombine.high %v541, %v541
    %v546 = vcombine.high %v282, %v282
    %v548 = vunpack.c.l.s4 1966171168
    %v549 = vunpack.c.0.s8 %v548
    %v550 = vlaneseq
    %v551 = vshrl.u32 %v550, 7
    %v552 = vsub.s32 %v549, %v551
    %v553 = vrot.slane %v282, %v552
    %v555 = vunpack.c.l.s4 1966171168
    %v556 = vunpack.c.0.s8 %v555
    %v557 = vlaneseq
    %v558 = vshrl.u32 %v557, 7
    %v559 = vsub.s32 %v556, %v558
    %v560 = vrot.slane %v546, %v559
    %v561 = vcombine.high %v553, %v553
    %v562 = vcombine.high %v560, %v560
    %v564 = vunpack.c.l.s4 1966171168
    %v565 = vunpack.c.0.s8 %v564
    %v566 = vlaneseq
    %v567 = vshrl.u32 %v566, 7
    %v568 = vsub.s32 %v565, %v567
    %v569 = vrot.slane %v553, %v568
    %v571 = vunpack.c.l.s4 1966171168
    %v572 = vunpack.c.0.s8 %v571
    %v573 = vlaneseq
    %v574 = vshrl.u32 %v573, 7
    %v575 = vsub.s32 %v572, %v574
    %v576 = vrot.slane %v560, %v575
    %v578 = vunpack.c.l.s4 1966171168
    %v579 = vunpack.c.0.s8 %v578
    %v580 = vlaneseq
    %v581 = vshrl.u32 %v580, 7
    %v582 = vsub.s32 %v579, %v581
    %v583 = vrot.slane %v561, %v582
    %v585 = vunpack.c.l.s4 1966171168
    %v586 = vunpack.c.0.s8 %v585
    %v587 = vlaneseq
    %v588 = vshrl.u32 %v587, 7
    %v589 = vsub.s32 %v586, %v588
    %v590 = vrot.slane %v562, %v589
    %v591 = vcombine.high %v569, %v569
    %v592 = vcombine.high %v576, %v576
    %v593 = vcombine.high %v583, %v583
    %v594 = vcombine.high %v590, %v590
    %v595 = vcombine.high %v287, %v287
    %v597 = vunpack.c.l.s4 1966171168
    %v598 = vunpack.c.0.s8 %v597
    %v599 = vlaneseq
    %v600 = vshrl.u32 %v599, 7
    %v601 = vsub.s32 %v598, %v600
    %v602 = vrot.slane %v287, %v601
    %v604 = vunpack.c.l.s4 1966171168
    %v605 = vunpack.c.0.s8 %v604
    %v606 = vlaneseq
    %v607 = vshrl.u32 %v606, 7
    %v608 = vsub.s32 %v605, %v607
    %v609 = vrot.slane %v595, %v608
    %v610 = vcombine.high %v602, %v602
    %v611 = vcombine.high %v609, %v609
    %v613 = vunpack.c.l.s4 1966171168
    %v614 = vunpack.c.0.s8 %v613
    %v615 = vlaneseq
    %v616 = vshrl.u32 %v615, 7
    %v617 = vsub.s32 %v614, %v616
    %v618 = vrot.slane %v602, %v617
    %v620 = vunpack.c.l.s4 1966171168
    %v621 = vunpack.c.0.s8 %v620
    %v622 = vlaneseq
    %v623 = vshrl.u32 %v622, 7
    %v624 = vsub.s32 %v621, %v623
    %v625 = vrot.slane %v609, %v624
    %v627 = vunpack.c.l.s4 1966171168
    %v628 = vunpack.c.0.s8 %v627
    %v629 = vlaneseq
    %v630 = vshrl.u32 %v629, 7
    %v631 = vsub.s32 %v628, %v630
    %v632 = vrot.slane %v610, %v631
    %v634 = vunpack.c.l.s4 1966171168
    %v635 = vunpack.c.0.s8 %v634
    %v636 = vlaneseq
    %v637 = vshrl.u32 %v636, 7
    %v638 = vsub.s32 %v635, %v637
    %v639 = vrot.slane %v611, %v638
    %v640 = vcombine.high %v618, %v618
    %v641 = vcombine.high %v625, %v625
    %v642 = vcombine.high %v632, %v632
    %v643 = vcombine.high %v639, %v639
    %v644 = vcombine.high %v290, %v290
    %v646 = vunpack.c.l.s4 1966171168
    %v647 = vunpack.c.0.s8 %v646
    %v648 = vlaneseq
    %v649 = vshrl.u32 %v648, 7
    %v650 = vsub.s32 %v647, %v649
    %v651 = vrot.slane %v290, %v650
    %v653 = vunpack.c.l.s4 1966171168
    %v654 = vunpack.c.0.s8 %v653
    %v655 = vlaneseq
    %v656 = vshrl.u32 %v655, 7
    %v657 = vsub.s32 %v654, %v656
    %v658 = vrot.slane %v644, %v657
    %v659 = vcombine.high %v651, %v651
    %v660 = vcombine.high %v658, %v658
    %v662 = vunpack.c.l.s4 1966171168
    %v663 = vunpack.c.0.s8 %v662
    %v664 = vlaneseq
    %v665 = vshrl.u32 %v664, 7
    %v666 = vsub.s32 %v663, %v665
    %v667 = vrot.slane %v651, %v666
    %v669 = vunpack.c.l.s4 1966171168
    %v670 = vunpack.c.0.s8 %v669
    %v671 = vlaneseq
    %v672 = vshrl.u32 %v671, 7
    %v673 = vsub.s32 %v670, %v672
    %v674 = vrot.slane %v658, %v673
    %v676 = vunpack.c.l.s4 1966171168
    %v677 = vunpack.c.0.s8 %v676
    %v678 = vlaneseq
    %v679 = vshrl.u32 %v678, 7
    %v680 = vsub.s32 %v677, %v679
    %v681 = vrot.slane %v659, %v680
    %v683 = vunpack.c.l.s4 1966171168
    %v684 = vunpack.c.0.s8 %v683
    %v685 = vlaneseq
    %v686 = vshrl.u32 %v685, 7
    %v687 = vsub.s32 %v684, %v686
    %v688 = vrot.slane %v660, %v687
    %v689 = vcombine.high %v667, %v667
    %v690 = vcombine.high %v674, %v674
    %v691 = vcombine.high %v681, %v681
    %v692 = vcombine.high %v688, %v688
    %v693 = vlaneseq
    %v694 = vshrl.u32 %v693, 7
    %v695 = vsub.s32 0, %v694
    %v696 = vrot.slane %v324, %v695
    %v697 = vlaneseq
    %v698 = vshrl.u32 %v697, 7
    %v699 = vsub.s32 0, %v698
    %v700 = vrot.slane %v338, %v699
    %v701 = vlaneseq
    %v702 = vshrl.u32 %v701, 7
    %v703 = vsub.s32 0, %v702
    %v704 = vrot.slane %v346, %v703
    %v705 = vlaneseq
    %v706 = vshrl.u32 %v705, 7
    %v707 = vsub.s32 0, %v706
    %v708 = vrot.slane %v348, %v707
    %v709 = vlaneseq
    %v710 = vshrl.u32 %v709, 7
    %v711 = vsub.s32 0, %v710
    %v712 = vrot.slane %v331, %v711
    %v713 = vlaneseq
    %v714 = vshrl.u32 %v713, 7
    %v715 = vsub.s32 0, %v714
    %v716 = vrot.slane %v345, %v715
    %v717 = vlaneseq
    %v718 = vshrl.u32 %v717, 7
    %v719 = vsub.s32 0, %v718
    %v720 = vrot.slane %v347, %v719
    %v721 = vlaneseq
    %v722 = vshrl.u32 %v721, 7
    %v723 = vsub.s32 0, %v722
    %v724 = vrot.slane %v349, %v723
    %v725 = vlaneseq
    %v726 = vshrl.u32 %v725, 7
    %v727 = vsub.s32 0, %v726
    %v728 = vrot.slane %v373, %v727
    %v729 = vlaneseq
    %v730 = vshrl.u32 %v729, 7
    %v731 = vsub.s32 0, %v730
    %v732 = vrot.slane %v387, %v731
    %v733 = vlaneseq
    %v734 = vshrl.u32 %v733, 7
    %v735 = vsub.s32 0, %v734
    %v736 = vrot.slane %v395, %v735
    %v737 = vlaneseq
    %v738 = vshrl.u32 %v737, 7
    %v739 = vsub.s32 0, %v738
    %v740 = vrot.slane %v397, %v739
    %v741 = vlaneseq
    %v742 = vshrl.u32 %v741, 7
    %v743 = vsub.s32 0, %v742
    %v744 = vrot.slane %v380, %v743
    %v745 = vlaneseq
    %v746 = vshrl.u32 %v745, 7
    %v747 = vsub.s32 0, %v746
    %v748 = vrot.slane %v394, %v747
    %v749 = vlaneseq
    %v750 = vshrl.u32 %v749, 7
    %v751 = vsub.s32 0, %v750
    %v752 = vrot.slane %v396, %v751
    %v753 = vlaneseq
    %v754 = vshrl.u32 %v753, 7
    %v755 = vsub.s32 0, %v754
    %v756 = vrot.slane %v398, %v755
    %v757 = vlaneseq
    %v758 = vshrl.u32 %v757, 7
    %v759 = vsub.s32 0, %v758
    %v760 = vrot.slane %v422, %v759
    %v761 = vlaneseq
    %v762 = vshrl.u32 %v761, 7
    %v763 = vsub.s32 0, %v762
    %v764 = vrot.slane %v436, %v763
    %v765 = vlaneseq
    %v766 = vshrl.u32 %v765, 7
    %v767 = vsub.s32 0, %v766
    %v768 = vrot.slane %v444, %v767
    %v769 = vlaneseq
    %v770 = vshrl.u32 %v769, 7
    %v771 = vsub.s32 0, %v770
    %v772 = vrot.slane %v446, %v771
    %v773 = vlaneseq
    %v774 = vshrl.u32 %v773, 7
    %v775 = vsub.s32 0, %v774
    %v776 = vrot.slane %v429, %v775
    %v777 = vlaneseq
    %v778 = vshrl.u32 %v777, 7
    %v779 = vsub.s32 0, %v778
    %v780 = vrot.slane %v443, %v779
    %v781 = vlaneseq
    %v782 = vshrl.u32 %v781, 7
    %v783 = vsub.s32 0, %v782
    %v784 = vrot.slane %v445, %v783
    %v785 = vlaneseq
    %v786 = vshrl.u32 %v785, 7
    %v787 = vsub.s32 0, %v786
    %v788 = vrot.slane %v447, %v787
    %v789 = vlaneseq
    %v790 = vshrl.u32 %v789, 7
    %v791 = vsub.s32 0, %v790
    %v792 = vrot.slane %v471, %v791
    %v793 = vlaneseq
    %v794 = vshrl.u32 %v793, 7
    %v795 = vsub.s32 0, %v794
    %v796 = vrot.slane %v485, %v795
    %v797 = vlaneseq
    %v798 = vshrl.u32 %v797, 7
    %v799 = vsub.s32 0, %v798
    %v800 = vrot.slane %v493, %v799
    %v801 = vlaneseq
    %v802 = vshrl.u32 %v801, 7
    %v803 = vsub.s32 0, %v802
    %v804 = vrot.slane %v495, %v803
    %v805 = vlaneseq
    %v806 = vshrl.u32 %v805, 7
    %v807 = vsub.s32 0, %v806
    %v808 = vrot.slane %v478, %v807
    %v809 = vlaneseq
    %v810 = vshrl.u32 %v809, 7
    %v811 = vsub.s32 0, %v810
    %v812 = vrot.slane %v492, %v811
    %v813 = vlaneseq
    %v814 = vshrl.u32 %v813, 7
    %v815 = vsub.s32 0, %v814
    %v816 = vrot.slane %v494, %v815
    %v817 = vlaneseq
    %v818 = vshrl.u32 %v817, 7
    %v819 = vsub.s32 0, %v818
    %v820 = vrot.slane %v496, %v819
    %v821 = vlaneseq
    %v822 = vshrl.u32 %v821, 7
    %v823 = vsub.s32 0, %v822
    %v824 = vrot.slane %v520, %v823
    %v825 = vlaneseq
    %v826 = vshrl.u32 %v825, 7
    %v827 = vsub.s32 0, %v826
    %v828 = vrot.slane %v534, %v827
    %v829 = vlaneseq
    %v830 = vshrl.u32 %v829, 7
    %v831 = vsub.s32 0, %v830
    %v832 = vrot.slane %v542, %v831
    %v833 = vlaneseq
    %v834 = vshrl.u32 %v833, 7
    %v835 = vsub.s32 0, %v834
    %v836 = vrot.slane %v544, %v835
    %v837 = vlaneseq
    %v838 = vshrl.u32 %v837, 7
    %v839 = vsub.s32 0, %v838
    %v840 = vrot.slane %v527, %v839
    %v841 = vlaneseq
    %v842 = vshrl.u32 %v841, 7
    %v843 = vsub.s32 0, %v842
    %v844 = vrot.slane %v541, %v843
    %v845 = vlaneseq
    %v846 = vshrl.u32 %v845, 7
    %v847 = vsub.s32 0, %v846
    %v848 = vrot.slane %v543, %v847
    %v849 = vlaneseq
    %v850 = vshrl.u32 %v849, 7
    %v851 = vsub.s32 0, %v850
    %v852 = vrot.slane %v545, %v851
    %v853 = vlaneseq
    %v854 = vshrl.u32 %v853, 7
    %v855 = vsub.s32 0, %v854
    %v856 = vrot.slane %v569, %v855
    %v857 = vlaneseq
    %v858 = vshrl.u32 %v857, 7
    %v859 = vsub.s32 0, %v858
    %v860 = vrot.slane %v583, %v859
    %v861 = vlaneseq
    %v862 = vshrl.u32 %v861, 7
    %v863 = vsub.s32 0, %v862
    %v864 = vrot.slane %v591, %v863
    %v865 = vlaneseq
    %v866 = vshrl.u32 %v865, 7
    %v867 = vsub.s32 0, %v866
    %v868 = vrot.slane %v593, %v867
    %v869 = vlaneseq
    %v870 = vshrl.u32 %v869, 7
    %v871 = vsub.s32 0, %v870
    %v872 = vrot.slane %v576, %v871
    %v873 = vlaneseq
    %v874 = vshrl.u32 %v873, 7
    %v875 = vsub.s32 0, %v874
    %v876 = vrot.slane %v590, %v875
    %v877 = vlaneseq
    %v878 = vshrl.u32 %v877, 7
    %v879 = vsub.s32 0, %v878
    %v880 = vrot.slane %v592, %v879
    %v881 = vlaneseq
    %v882 = vshrl.u32 %v881, 7
    %v883 = vsub.s32 0, %v882
    %v884 = vrot.slane %v594, %v883
    %v885 = vlaneseq
    %v886 = vshrl.u32 %v885, 7
    %v887 = vsub.s32 0, %v886
    %v888 = vrot.slane %v618, %v887
    %v889 = vlaneseq
    %v890 = vshrl.u32 %v889, 7
    %v891 = vsub.s32 0, %v890
    %v892 = vrot.slane %v632, %v891
    %v893 = vlaneseq
    %v894 = vshrl.u32 %v893, 7
    %v895 = vsub.s32 0, %v894
    %v896 = vrot.slane %v640, %v895
    %v897 = vlaneseq
    %v898 = vshrl.u32 %v897, 7
    %v899 = vsub.s32 0, %v898
    %v900 = vrot.slane %v642, %v899
    %v901 = vlaneseq
    %v902 = vshrl.u32 %v901, 7
    %v903 = vsub.s32 0, %v902
    %v904 = vrot.slane %v625, %v903
    %v905 = vlaneseq
    %v906 = vshrl.u32 %v905, 7
    %v907 = vsub.s32 0, %v906
    %v908 = vrot.slane %v639, %v907
    %v909 = vlaneseq
    %v910 = vshrl.u32 %v909, 7
    %v911 = vsub.s32 0, %v910
    %v912 = vrot.slane %v641, %v911
    %v913 = vlaneseq
    %v914 = vshrl.u32 %v913, 7
    %v915 = vsub.s32 0, %v914
    %v916 = vrot.slane %v643, %v915
    %v917 = vlaneseq
    %v918 = vshrl.u32 %v917, 7
    %v919 = vsub.s32 0, %v918
    %v920 = vrot.slane %v667, %v919
    %v921 = vlaneseq
    %v922 = vshrl.u32 %v921, 7
    %v923 = vsub.s32 0, %v922
    %v924 = vrot.slane %v681, %v923
    %v925 = vlaneseq
    %v926 = vshrl.u32 %v925, 7
    %v927 = vsub.s32 0, %v926
    %v928 = vrot.slane %v689, %v927
    %v929 = vlaneseq
    %v930 = vshrl.u32 %v929, 7
    %v931 = vsub.s32 0, %v930
    %v932 = vrot.slane %v691, %v931
    %v933 = vlaneseq
    %v934 = vshrl.u32 %v933, 7
    %v935 = vsub.s32 0, %v934
    %v936 = vrot.slane %v674, %v935
    %v937 = vlaneseq
    %v938 = vshrl.u32 %v937, 7
    %v939 = vsub.s32 0, %v938
    %v940 = vrot.slane %v688, %v939
    %v941 = vlaneseq
    %v942 = vshrl.u32 %v941, 7
    %v943 = vsub.s32 0, %v942
    %v944 = vrot.slane %v690, %v943
    %v945 = vlaneseq
    %v946 = vshrl.u32 %v945, 7
    %v947 = vsub.s32 0, %v946
    %v948 = vrot.slane %v692, %v947
    %1013 = vrot.lane.b32.xlu0 %v263, 96
    %v1014 = vpop.permute.xlu0 %1013
    %1015 = vrot.lane.b32.xlu0 %v266, 96
    %v1016 = vpop.permute.xlu0 %1015
    %1017 = vrot.lane.b32.xlu0 %v271, 96
    %v1018 = vpop.permute.xlu0 %1017
    %1019 = vrot.lane.b32.xlu0 %v274, 96
    %v1020 = vpop.permute.xlu0 %1019
    %1021 = vrot.lane.b32.xlu0 %v279, 96
    %v1022 = vpop.permute.xlu0 %1021
    %1023 = vrot.lane.b32.xlu0 %v282, 96
    %v1024 = vpop.permute.xlu0 %1023
    %1025 = vrot.lane.b32.xlu0 %v287, 96
    %v1026 = vpop.permute.xlu0 %1025
    %1027 = vrot.lane.b32.xlu0 %v290, 96
    %v1028 = vpop.permute.xlu0 %1027
    %v1037 = vmul.f32 %v696, %v1014
    %v1038 = vmul.f32 %v700, %v1014
    %v1039 = vmul.f32 %v704, %v1014
    %v1040 = vmul.f32 %v708, %v1014
    %v1041 = vmul.f32 %v712, %v1014
    %v1042 = vmul.f32 %v716, %v1014
    %v1043 = vmul.f32 %v720, %v1014
    %v1044 = vmul.f32 %v724, %v1014
    %v1045 = vmul.f32 %v728, %v1016
    %v1046 = vmul.f32 %v732, %v1016
    %v1047 = vmul.f32 %v736, %v1016
    %v1048 = vmul.f32 %v740, %v1016
    %v1049 = vmul.f32 %v744, %v1016
    %v1050 = vmul.f32 %v748, %v1016
    %v1051 = vmul.f32 %v752, %v1016
    %v1052 = vmul.f32 %v756, %v1016
    %v1053 = vmul.f32 %v760, %v1018
    %v1054 = vmul.f32 %v764, %v1018
    %v1055 = vmul.f32 %v768, %v1018
    %v1056 = vmul.f32 %v772, %v1018
    %v1057 = vmul.f32 %v776, %v1018
    %v1058 = vmul.f32 %v780, %v1018
    %v1059 = vmul.f32 %v784, %v1018
    %v1060 = vmul.f32 %v788, %v1018
    %v1061 = vmul.f32 %v792, %v1020
    %v1062 = vmul.f32 %v796, %v1020
    %v1063 = vmul.f32 %v800, %v1020
    %v1064 = vmul.f32 %v804, %v1020
    %v1065 = vmul.f32 %v808, %v1020
    %v1066 = vmul.f32 %v812, %v1020
    %v1067 = vmul.f32 %v816, %v1020
    %v1068 = vmul.f32 %v820, %v1020
    %v1069 = vmul.f32 %v824, %v1022
    %v1070 = vmul.f32 %v828, %v1022
    %v1071 = vmul.f32 %v832, %v1022
    %v1072 = vmul.f32 %v836, %v1022
    %v1073 = vmul.f32 %v840, %v1022
    %v1074 = vmul.f32 %v844, %v1022
    %v1075 = vmul.f32 %v848, %v1022
    %v1076 = vmul.f32 %v852, %v1022
    %v1077 = vmul.f32 %v856, %v1024
    %v1078 = vmul.f32 %v860, %v1024
    %v1079 = vmul.f32 %v864, %v1024
    %v1080 = vmul.f32 %v868, %v1024
    %v1081 = vmul.f32 %v872, %v1024
    %v1082 = vmul.f32 %v876, %v1024
    %v1083 = vmul.f32 %v880, %v1024
    %v1084 = vmul.f32 %v884, %v1024
    %v1085 = vmul.f32 %v888, %v1026
    %v1086 = vmul.f32 %v892, %v1026
    %v1087 = vmul.f32 %v896, %v1026
    %v1088 = vmul.f32 %v900, %v1026
    %v1089 = vmul.f32 %v904, %v1026
    %v1090 = vmul.f32 %v908, %v1026
    %v1091 = vmul.f32 %v912, %v1026
    %v1092 = vmul.f32 %v916, %v1026
    %v1093 = vmul.f32 %v920, %v1028
    %v1094 = vmul.f32 %v924, %v1028
    %v1095 = vmul.f32 %v928, %v1028
    %v1096 = vmul.f32 %v932, %v1028
    %v1097 = vmul.f32 %v936, %v1028
    %v1098 = vmul.f32 %v940, %v1028
    %v1099 = vmul.f32 %v944, %v1028
    %v1100 = vmul.f32 %v948, %v1028
    %v1101 = vpack.c.bf16 %v1038, %v1037
    %v1102 = vpack.c.bf16 %v1040, %v1039
    %v1103 = vpack.c.bf16 %v1042, %v1041
    %v1104 = vpack.c.bf16 %v1044, %v1043
    %v1105 = vpack.c.bf16 %v1046, %v1045
    %v1106 = vpack.c.bf16 %v1048, %v1047
    %v1107 = vpack.c.bf16 %v1050, %v1049
    %v1108 = vpack.c.bf16 %v1052, %v1051
    %v1109 = vpack.c.bf16 %v1054, %v1053
    %v1110 = vpack.c.bf16 %v1056, %v1055
    %v1111 = vpack.c.bf16 %v1058, %v1057
    %v1112 = vpack.c.bf16 %v1060, %v1059
    %v1113 = vpack.c.bf16 %v1062, %v1061
    %v1114 = vpack.c.bf16 %v1064, %v1063
    %v1115 = vpack.c.bf16 %v1066, %v1065
    %v1116 = vpack.c.bf16 %v1068, %v1067
    %v1117 = vpack.c.bf16 %v1070, %v1069
    %v1118 = vpack.c.bf16 %v1072, %v1071
    %v1119 = vpack.c.bf16 %v1074, %v1073
    %v1120 = vpack.c.bf16 %v1076, %v1075
    %v1121 = vpack.c.bf16 %v1078, %v1077
    %v1122 = vpack.c.bf16 %v1080, %v1079
    %v1123 = vpack.c.bf16 %v1082, %v1081
    %v1124 = vpack.c.bf16 %v1084, %v1083
    %v1125 = vpack.c.bf16 %v1086, %v1085
    %v1126 = vpack.c.bf16 %v1088, %v1087
    %v1127 = vpack.c.bf16 %v1090, %v1089
    %v1128 = vpack.c.bf16 %v1092, %v1091
    %v1129 = vpack.c.bf16 %v1094, %v1093
    %v1130 = vpack.c.bf16 %v1096, %v1095
    %v1131 = vpack.c.bf16 %v1098, %v1097
    %v1132 = vpack.c.bf16 %v1100, %v1099
    %v1137 = vunpack.c.l.b16 %v161
    %v1138 = vunpack.c.l.b16 %v162
    %v1139 = vunpack.c.l.b16 %v163
    %v1140 = vunpack.c.l.b16 %v164
    %v1141 = vpack.c.b16 %v1138, %v1137
    %v1142 = vpack.c.b16 %v1140, %v1139
    %v1146 = vsel %vm215, %v1101, 0
    %v1149 = vsel %vm215, %v1102, 0
    %v1152 = vsel %vm215, %v1103, 0
    %v1155 = vsel %vm215, %v1104, 0
    %v1158 = vsel %vm215, %v1105, 0
    %v1161 = vsel %vm215, %v1106, 0
    %v1164 = vsel %vm215, %v1107, 0
    %v1167 = vsel %vm215, %v1108, 0
    %v1170 = vsel %vm215, %v1109, 0
    %v1173 = vsel %vm215, %v1110, 0
    %v1176 = vsel %vm215, %v1111, 0
    %v1179 = vsel %vm215, %v1112, 0
    %v1182 = vsel %vm215, %v1113, 0
    %v1185 = vsel %vm215, %v1114, 0
    %v1188 = vsel %vm215, %v1115, 0
    %v1191 = vsel %vm215, %v1116, 0
    %v1194 = vsel %vm215, %v1117, 0
    %v1197 = vsel %vm215, %v1118, 0
    %v1200 = vsel %vm215, %v1119, 0
    %v1203 = vsel %vm215, %v1120, 0
    %v1206 = vsel %vm215, %v1121, 0
    %v1209 = vsel %vm215, %v1122, 0
    %v1212 = vsel %vm215, %v1123, 0
    %v1215 = vsel %vm215, %v1124, 0
    %v1218 = vsel %vm215, %v1125, 0
    %v1221 = vsel %vm215, %v1126, 0
    %v1224 = vsel %vm215, %v1127, 0
    %v1227 = vsel %vm215, %v1128, 0
    %v1230 = vsel %vm215, %v1129, 0
    %v1233 = vsel %vm215, %v1130, 0
    %v1236 = vsel %vm215, %v1131, 0
    %v1239 = vsel %vm215, %v1132, 0
    %1241 = vmatprep.subr.bf16.mxu0 0
    %1242 = vmatpush1.bf16.msra.mxu0 0
    %1243 = vmatprep.subr.bf16.mxu0 0
    %1244 = vmatpush1.bf16.msra.mxu0 0
    %1245 = vmatprep.subr.bf16.mxu0 0
    %1246 = vmatpush1.bf16.msra.mxu0 0
    %1247 = vmatprep.subr.bf16.mxu0 0
    %1248 = vmatpush1.bf16.msra.mxu0 0
    %1249 = vmatprep.subr.bf16.mxu0 0
    %1250 = vmatpush1.bf16.msra.mxu0 0
    %1251 = vmatprep.subr.bf16.mxu0 0
    %1252 = vmatpush1.bf16.msra.mxu0 0
    %1253 = vmatprep.subr.bf16.mxu0 0
    %1254 = vmatpush1.bf16.msra.mxu0 %v1142
    %1255 = vmatprep.subr.bf16.mxu0 0
    %1256 = vmatpush1.bf16.msra.mxu0 %v1141
    %1257 = vmatprep.subr.bf16.mxu0 0
    %1258 = vmatpush2.bf16.msra.mxu0 0
    %1259 = vmatprep.subr.bf16.mxu0 0
    %1260 = vmatpush2.bf16.msra.mxu0 0
    %1261 = vmatprep.subr.bf16.mxu0 0
    %1262 = vmatpush2.bf16.msra.mxu0 0
    %1263 = vmatprep.subr.bf16.mxu0 0
    %1264 = vmatpush2.bf16.msra.mxu0 0
    %1265 = vmatprep.subr.bf16.mxu0 0
    %1266 = vmatpush2.bf16.msra.mxu0 0
    %1267 = vmatprep.subr.bf16.mxu0 0
    %1268 = vmatpush2.bf16.msra.mxu0 0
    %1269 = vmatprep.subr.bf16.mxu0 0
    %1270 = vmatpush2.bf16.msra.mxu0 0
    %1271 = vmatprep.subr.bf16.mxu0 0
    %1272 = vmatpush2.bf16.msra.mxu0 0
    %1273 = vmatprep.mubr.bf16.mxu0 0
    %1274 = vmatmul.mubr.bf16.gmra.mxu0 %v1146
    %v1275 = vpop.f32.mrf.mxu0
    %v1276 = vadd.f32 0.0, %v1275
    %v1277 = vpop.f32.mrf.mxu0
    %v1278 = vpop.f32.mrf.mxu0
    %v1279 = vadd.f32 0.0, %v1278
    %v1280 = vpop.f32.mrf.mxu0
    %1281 = vmatprep.mubr.bf16.mxu0 0
    %1282 = vmatmul.mubr.bf16.gmra.mxu0 %v1149
    %v1283 = vpop.f32.mrf.mxu0
    %v1284 = vadd.f32 0.0, %v1283
    %v1285 = vpop.f32.mrf.mxu0
    %v1286 = vpop.f32.mrf.mxu0
    %v1287 = vadd.f32 0.0, %v1286
    %v1288 = vpop.f32.mrf.mxu0
    %1289 = vmatprep.mubr.bf16.mxu0 0
    %1290 = vmatmul.mubr.bf16.gmra.mxu0 %v1152
    %v1291 = vpop.f32.mrf.mxu0
    %v1292 = vadd.f32 0.0, %v1291
    %v1293 = vpop.f32.mrf.mxu0
    %v1294 = vpop.f32.mrf.mxu0
    %v1295 = vadd.f32 0.0, %v1294
    %v1296 = vpop.f32.mrf.mxu0
    %1297 = vmatprep.mubr.bf16.mxu0 0
    %1298 = vmatmul.mubr.bf16.gmra.mxu0 %v1155
    %v1299 = vpop.f32.mrf.mxu0
    %v1300 = vadd.f32 0.0, %v1299
    %v1301 = vpop.f32.mrf.mxu0
    %v1302 = vpop.f32.mrf.mxu0
    %v1303 = vadd.f32 0.0, %v1302
    %v1304 = vpop.f32.mrf.mxu0
    %1305 = vmatprep.mubr.bf16.mxu0 0
    %1306 = vmatmul.mubr.bf16.gmra.mxu0 %v1158
    %v1307 = vpop.f32.mrf.mxu0
    %v1308 = vadd.f32 0.0, %v1307
    %v1309 = vpop.f32.mrf.mxu0
    %v1310 = vpop.f32.mrf.mxu0
    %v1311 = vadd.f32 0.0, %v1310
    %v1312 = vpop.f32.mrf.mxu0
    %1313 = vmatprep.mubr.bf16.mxu0 0
    %1314 = vmatmul.mubr.bf16.gmra.mxu0 %v1161
    %v1315 = vpop.f32.mrf.mxu0
    %v1316 = vadd.f32 0.0, %v1315
    %v1317 = vpop.f32.mrf.mxu0
    %v1318 = vpop.f32.mrf.mxu0
    %v1319 = vadd.f32 0.0, %v1318
    %v1320 = vpop.f32.mrf.mxu0
    %1321 = vmatprep.mubr.bf16.mxu0 0
    %1322 = vmatmul.mubr.bf16.gmra.mxu0 %v1164
    %v1323 = vpop.f32.mrf.mxu0
    %v1324 = vadd.f32 0.0, %v1323
    %v1325 = vpop.f32.mrf.mxu0
    %v1326 = vpop.f32.mrf.mxu0
    %v1327 = vadd.f32 0.0, %v1326
    %v1328 = vpop.f32.mrf.mxu0
    %1329 = vmatprep.mubr.bf16.mxu0 0
    %1330 = vmatmul.mubr.bf16.gmra.mxu0 %v1167
    %v1331 = vpop.f32.mrf.mxu0
    %v1332 = vadd.f32 0.0, %v1331
    %v1333 = vpop.f32.mrf.mxu0
    %v1334 = vpop.f32.mrf.mxu0
    %v1335 = vadd.f32 0.0, %v1334
    %v1336 = vpop.f32.mrf.mxu0
    %1337 = vmatprep.mubr.bf16.mxu0 0
    %1338 = vmatmul.mubr.bf16.gmra.mxu0 %v1170
    %v1339 = vpop.f32.mrf.mxu0
    %v1340 = vadd.f32 0.0, %v1339
    %v1341 = vpop.f32.mrf.mxu0
    %v1342 = vpop.f32.mrf.mxu0
    %v1343 = vadd.f32 0.0, %v1342
    %v1344 = vpop.f32.mrf.mxu0
    %1345 = vmatprep.mubr.bf16.mxu0 0
    %1346 = vmatmul.mubr.bf16.gmra.mxu0 %v1173
    %v1347 = vpop.f32.mrf.mxu0
    %v1348 = vadd.f32 0.0, %v1347
    %v1349 = vpop.f32.mrf.mxu0
    %v1350 = vpop.f32.mrf.mxu0
    %v1351 = vadd.f32 0.0, %v1350
    %v1352 = vpop.f32.mrf.mxu0
    %1353 = vmatprep.mubr.bf16.mxu0 0
    %1354 = vmatmul.mubr.bf16.gmra.mxu0 %v1176
    %v1355 = vpop.f32.mrf.mxu0
    %v1356 = vadd.f32 0.0, %v1355
    %v1357 = vpop.f32.mrf.mxu0
    %v1358 = vpop.f32.mrf.mxu0
    %v1359 = vadd.f32 0.0, %v1358
    %v1360 = vpop.f32.mrf.mxu0
    %1361 = vmatprep.mubr.bf16.mxu0 0
    %1362 = vmatmul.mubr.bf16.gmra.mxu0 %v1179
    %v1363 = vpop.f32.mrf.mxu0
    %v1364 = vadd.f32 0.0, %v1363
    %v1365 = vpop.f32.mrf.mxu0
    %v1366 = vpop.f32.mrf.mxu0
    %v1367 = vadd.f32 0.0, %v1366
    %v1368 = vpop.f32.mrf.mxu0
    %1369 = vmatprep.mubr.bf16.mxu0 0
    %1370 = vmatmul.mubr.bf16.gmra.mxu0 %v1182
    %v1371 = vpop.f32.mrf.mxu0
    %v1372 = vadd.f32 0.0, %v1371
    %v1373 = vpop.f32.mrf.mxu0
    %v1374 = vpop.f32.mrf.mxu0
    %v1375 = vadd.f32 0.0, %v1374
    %v1376 = vpop.f32.mrf.mxu0
    %1377 = vmatprep.mubr.bf16.mxu0 0
    %1378 = vmatmul.mubr.bf16.gmra.mxu0 %v1185
    %v1379 = vpop.f32.mrf.mxu0
    %v1380 = vadd.f32 0.0, %v1379
    %v1381 = vpop.f32.mrf.mxu0
    %v1382 = vpop.f32.mrf.mxu0
    %v1383 = vadd.f32 0.0, %v1382
    %v1384 = vpop.f32.mrf.mxu0
    %1385 = vmatprep.mubr.bf16.mxu0 0
    %1386 = vmatmul.mubr.bf16.gmra.mxu0 %v1188
    %v1387 = vpop.f32.mrf.mxu0
    %v1388 = vadd.f32 0.0, %v1387
    %v1389 = vpop.f32.mrf.mxu0
    %v1390 = vpop.f32.mrf.mxu0
    %v1391 = vadd.f32 0.0, %v1390
    %v1392 = vpop.f32.mrf.mxu0
    %1393 = vmatprep.mubr.bf16.mxu0 0
    %1394 = vmatmul.mubr.bf16.gmra.mxu0 %v1191
    %v1395 = vpop.f32.mrf.mxu0
    %v1396 = vadd.f32 0.0, %v1395
    %v1397 = vpop.f32.mrf.mxu0
    %v1398 = vpop.f32.mrf.mxu0
    %v1399 = vadd.f32 0.0, %v1398
    %v1400 = vpop.f32.mrf.mxu0
    %1401 = vmatprep.mubr.bf16.mxu0 0
    %1402 = vmatmul.mubr.bf16.gmra.mxu0 %v1194
    %v1403 = vpop.f32.mrf.mxu0
    %v1404 = vadd.f32 0.0, %v1403
    %v1405 = vpop.f32.mrf.mxu0
    %v1406 = vpop.f32.mrf.mxu0
    %v1407 = vadd.f32 0.0, %v1406
    %v1408 = vpop.f32.mrf.mxu0
    %1409 = vmatprep.mubr.bf16.mxu0 0
    %1410 = vmatmul.mubr.bf16.gmra.mxu0 %v1197
    %v1411 = vpop.f32.mrf.mxu0
    %v1412 = vadd.f32 0.0, %v1411
    %v1413 = vpop.f32.mrf.mxu0
    %v1414 = vpop.f32.mrf.mxu0
    %v1415 = vadd.f32 0.0, %v1414
    %v1416 = vpop.f32.mrf.mxu0
    %1417 = vmatprep.mubr.bf16.mxu0 0
    %1418 = vmatmul.mubr.bf16.gmra.mxu0 %v1200
    %v1419 = vpop.f32.mrf.mxu0
    %v1420 = vadd.f32 0.0, %v1419
    %v1421 = vpop.f32.mrf.mxu0
    %v1422 = vpop.f32.mrf.mxu0
    %v1423 = vadd.f32 0.0, %v1422
    %v1424 = vpop.f32.mrf.mxu0
    %1425 = vmatprep.mubr.bf16.mxu0 0
    %1426 = vmatmul.mubr.bf16.gmra.mxu0 %v1203
    %v1427 = vpop.f32.mrf.mxu0
    %v1428 = vadd.f32 0.0, %v1427
    %v1429 = vpop.f32.mrf.mxu0
    %v1430 = vpop.f32.mrf.mxu0
    %v1431 = vadd.f32 0.0, %v1430
    %v1432 = vpop.f32.mrf.mxu0
    %1433 = vmatprep.mubr.bf16.mxu0 0
    %1434 = vmatmul.mubr.bf16.gmra.mxu0 %v1206
    %v1435 = vpop.f32.mrf.mxu0
    %v1436 = vadd.f32 0.0, %v1435
    %v1437 = vpop.f32.mrf.mxu0
    %v1438 = vpop.f32.mrf.mxu0
    %v1439 = vadd.f32 0.0, %v1438
    %v1440 = vpop.f32.mrf.mxu0
    %1441 = vmatprep.mubr.bf16.mxu0 0
    %1442 = vmatmul.mubr.bf16.gmra.mxu0 %v1209
    %v1443 = vpop.f32.mrf.mxu0
    %v1444 = vadd.f32 0.0, %v1443
    %v1445 = vpop.f32.mrf.mxu0
    %v1446 = vpop.f32.mrf.mxu0
    %v1447 = vadd.f32 0.0, %v1446
    %v1448 = vpop.f32.mrf.mxu0
    %1449 = vmatprep.mubr.bf16.mxu0 0
    %1450 = vmatmul.mubr.bf16.gmra.mxu0 %v1212
    %v1451 = vpop.f32.mrf.mxu0
    %v1452 = vadd.f32 0.0, %v1451
    %v1453 = vpop.f32.mrf.mxu0
    %v1454 = vpop.f32.mrf.mxu0
    %v1455 = vadd.f32 0.0, %v1454
    %v1456 = vpop.f32.mrf.mxu0
    %1457 = vmatprep.mubr.bf16.mxu0 0
    %1458 = vmatmul.mubr.bf16.gmra.mxu0 %v1215
    %v1459 = vpop.f32.mrf.mxu0
    %v1460 = vadd.f32 0.0, %v1459
    %v1461 = vpop.f32.mrf.mxu0
    %v1462 = vpop.f32.mrf.mxu0
    %v1463 = vadd.f32 0.0, %v1462
    %v1464 = vpop.f32.mrf.mxu0
    %1465 = vmatprep.mubr.bf16.mxu0 0
    %1466 = vmatmul.mubr.bf16.gmra.mxu0 %v1218
    %v1467 = vpop.f32.mrf.mxu0
    %v1468 = vadd.f32 0.0, %v1467
    %v1469 = vpop.f32.mrf.mxu0
    %v1470 = vpop.f32.mrf.mxu0
    %v1471 = vadd.f32 0.0, %v1470
    %v1472 = vpop.f32.mrf.mxu0
    %1473 = vmatprep.mubr.bf16.mxu0 0
    %1474 = vmatmul.mubr.bf16.gmra.mxu0 %v1221
    %v1475 = vpop.f32.mrf.mxu0
    %v1476 = vadd.f32 0.0, %v1475
    %v1477 = vpop.f32.mrf.mxu0
    %v1478 = vpop.f32.mrf.mxu0
    %v1479 = vadd.f32 0.0, %v1478
    %v1480 = vpop.f32.mrf.mxu0
    %1481 = vmatprep.mubr.bf16.mxu0 0
    %1482 = vmatmul.mubr.bf16.gmra.mxu0 %v1224
    %v1483 = vpop.f32.mrf.mxu0
    %v1484 = vadd.f32 0.0, %v1483
    %v1485 = vpop.f32.mrf.mxu0
    %v1486 = vpop.f32.mrf.mxu0
    %v1487 = vadd.f32 0.0, %v1486
    %v1488 = vpop.f32.mrf.mxu0
    %1489 = vmatprep.mubr.bf16.mxu0 0
    %1490 = vmatmul.mubr.bf16.gmra.mxu0 %v1227
    %v1491 = vpop.f32.mrf.mxu0
    %v1492 = vadd.f32 0.0, %v1491
    %v1493 = vpop.f32.mrf.mxu0
    %v1494 = vpop.f32.mrf.mxu0
    %v1495 = vadd.f32 0.0, %v1494
    %v1496 = vpop.f32.mrf.mxu0
    %1497 = vmatprep.mubr.bf16.mxu0 0
    %1498 = vmatmul.mubr.bf16.gmra.mxu0 %v1230
    %v1499 = vpop.f32.mrf.mxu0
    %v1500 = vadd.f32 0.0, %v1499
    %v1501 = vpop.f32.mrf.mxu0
    %v1502 = vpop.f32.mrf.mxu0
    %v1503 = vadd.f32 0.0, %v1502
    %v1504 = vpop.f32.mrf.mxu0
    %1505 = vmatprep.mubr.bf16.mxu0 0
    %1506 = vmatmul.mubr.bf16.gmra.mxu0 %v1233
    %v1507 = vpop.f32.mrf.mxu0
    %v1508 = vadd.f32 0.0, %v1507
    %v1509 = vpop.f32.mrf.mxu0
    %v1510 = vpop.f32.mrf.mxu0
    %v1511 = vadd.f32 0.0, %v1510
    %v1512 = vpop.f32.mrf.mxu0
    %1513 = vmatprep.mubr.bf16.mxu0 0
    %1514 = vmatmul.mubr.bf16.gmra.mxu0 %v1236
    %v1515 = vpop.f32.mrf.mxu0
    %v1516 = vadd.f32 0.0, %v1515
    %v1517 = vpop.f32.mrf.mxu0
    %v1518 = vpop.f32.mrf.mxu0
    %v1519 = vadd.f32 0.0, %v1518
    %v1520 = vpop.f32.mrf.mxu0
    %1521 = vmatprep.mubr.bf16.mxu0 0
    %1522 = vmatmul.mubr.bf16.gmra.mxu0 %v1239
    %v1523 = vpop.f32.mrf.mxu0
    %v1524 = vadd.f32 0.0, %v1523
    %v1525 = vpop.f32.mrf.mxu0
    %v1526 = vpop.f32.mrf.mxu0
    %v1527 = vadd.f32 0.0, %v1526
    %v1528 = vpop.f32.mrf.mxu0
    %1529 = vdwg.mxu0
    %v1530 = vmul.f32 %v1276, 0.35355338
    %v1531 = vmul.f32 %v1279, 0.35355338
    %v1532 = vmul.f32 %v1284, 0.35355338
    %v1533 = vmul.f32 %v1287, 0.35355338
    %v1534 = vmul.f32 %v1292, 0.35355338
    %v1535 = vmul.f32 %v1295, 0.35355338
    %v1536 = vmul.f32 %v1300, 0.35355338
    %v1537 = vmul.f32 %v1303, 0.35355338
    %v1538 = vmul.f32 %v1308, 0.35355338
    %v1539 = vmul.f32 %v1311, 0.35355338
    %v1540 = vmul.f32 %v1316, 0.35355338
    %v1541 = vmul.f32 %v1319, 0.35355338
    %v1542 = vmul.f32 %v1324, 0.35355338
    %v1543 = vmul.f32 %v1327, 0.35355338
    %v1544 = vmul.f32 %v1332, 0.35355338
    %v1545 = vmul.f32 %v1335, 0.35355338
    %v1546 = vmul.f32 %v1340, 0.35355338
    %v1547 = vmul.f32 %v1343, 0.35355338
    %v1548 = vmul.f32 %v1348, 0.35355338
    %v1549 = vmul.f32 %v1351, 0.35355338
    %v1550 = vmul.f32 %v1356, 0.35355338
    %v1551 = vmul.f32 %v1359, 0.35355338
    %v1552 = vmul.f32 %v1364, 0.35355338
    %v1553 = vmul.f32 %v1367, 0.35355338
    %v1554 = vmul.f32 %v1372, 0.35355338
    %v1555 = vmul.f32 %v1375, 0.35355338
    %v1556 = vmul.f32 %v1380, 0.35355338
    %v1557 = vmul.f32 %v1383, 0.35355338
    %v1558 = vmul.f32 %v1388, 0.35355338
    %v1559 = vmul.f32 %v1391, 0.35355338
    %v1560 = vmul.f32 %v1396, 0.35355338
    %v1561 = vmul.f32 %v1399, 0.35355338
    %v1562 = vmul.f32 %v1404, 0.35355338
    %v1563 = vmul.f32 %v1407, 0.35355338
    %v1564 = vmul.f32 %v1412, 0.35355338
    %v1565 = vmul.f32 %v1415, 0.35355338
    %v1566 = vmul.f32 %v1420, 0.35355338
    %v1567 = vmul.f32 %v1423, 0.35355338
    %v1568 = vmul.f32 %v1428, 0.35355338
    %v1569 = vmul.f32 %v1431, 0.35355338
    %v1570 = vmul.f32 %v1436, 0.35355338
    %v1571 = vmul.f32 %v1439, 0.35355338
    %v1572 = vmul.f32 %v1444, 0.35355338
    %v1573 = vmul.f32 %v1447, 0.35355338
    %v1574 = vmul.f32 %v1452, 0.35355338
    %v1575 = vmul.f32 %v1455, 0.35355338
    %v1576 = vmul.f32 %v1460, 0.35355338
    %v1577 = vmul.f32 %v1463, 0.35355338
    %v1578 = vmul.f32 %v1468, 0.35355338
    %v1579 = vmul.f32 %v1471, 0.35355338
    %v1580 = vmul.f32 %v1476, 0.35355338
    %v1581 = vmul.f32 %v1479, 0.35355338
    %v1582 = vmul.f32 %v1484, 0.35355338
    %v1583 = vmul.f32 %v1487, 0.35355338
    %v1584 = vmul.f32 %v1492, 0.35355338
    %v1585 = vmul.f32 %v1495, 0.35355338
    %v1586 = vmul.f32 %v1500, 0.35355338
    %v1587 = vmul.f32 %v1503, 0.35355338
    %v1588 = vmul.f32 %v1508, 0.35355338
    %v1589 = vmul.f32 %v1511, 0.35355338
    %v1590 = vmul.f32 %v1516, 0.35355338
    %v1591 = vmul.f32 %v1519, 0.35355338
    %v1592 = vmul.f32 %v1524, 0.35355338
    %v1593 = vmul.f32 %v1527, 0.35355338
    %v1594 = vsel %vm215, %v1530, -inf
    %v1595 = vrot.slane %v1594, 4
    %v1596 = vmax.f32 %v1594, %v1595
    %v1597 = vrot.slane %v1596, 2
    %v1598 = vmax.f32 %v1596, %v1597
    %v1599 = vrot.slane %v1598, 1
    %v1600 = vmax.f32 %v1598, %v1599
    %v1601 = vsel %vm215, %v1531, -inf
    %v1602 = vrot.slane %v1601, 4
    %v1603 = vmax.f32 %v1601, %v1602
    %v1604 = vrot.slane %v1603, 2
    %v1605 = vmax.f32 %v1603, %v1604
    %v1606 = vrot.slane %v1605, 1
    %v1607 = vmax.f32 %v1605, %v1606
    %v1608 = vsel %vm215, %v1532, -inf
    %v1609 = vrot.slane %v1608, 4
    %v1610 = vmax.f32 %v1608, %v1609
    %v1611 = vrot.slane %v1610, 2
    %v1612 = vmax.f32 %v1610, %v1611
    %v1613 = vrot.slane %v1612, 1
    %v1614 = vmax.f32 %v1612, %v1613
    %v1615 = vsel %vm215, %v1533, -inf
    %v1616 = vrot.slane %v1615, 4
    %v1617 = vmax.f32 %v1615, %v1616
    %v1618 = vrot.slane %v1617, 2
    %v1619 = vmax.f32 %v1617, %v1618
    %v1620 = vrot.slane %v1619, 1
    %v1621 = vmax.f32 %v1619, %v1620
    %v1622 = vsel %vm215, %v1534, -inf
    %v1623 = vrot.slane %v1622, 4
    %v1624 = vmax.f32 %v1622, %v1623
    %v1625 = vrot.slane %v1624, 2
    %v1626 = vmax.f32 %v1624, %v1625
    %v1627 = vrot.slane %v1626, 1
    %v1628 = vmax.f32 %v1626, %v1627
    %v1629 = vsel %vm215, %v1535, -inf
    %v1630 = vrot.slane %v1629, 4
    %v1631 = vmax.f32 %v1629, %v1630
    %v1632 = vrot.slane %v1631, 2
    %v1633 = vmax.f32 %v1631, %v1632
    %v1634 = vrot.slane %v1633, 1
    %v1635 = vmax.f32 %v1633, %v1634
    %v1636 = vsel %vm215, %v1536, -inf
    %v1637 = vrot.slane %v1636, 4
    %v1638 = vmax.f32 %v1636, %v1637
    %v1639 = vrot.slane %v1638, 2
    %v1640 = vmax.f32 %v1638, %v1639
    %v1641 = vrot.slane %v1640, 1
    %v1642 = vmax.f32 %v1640, %v1641
    %v1643 = vsel %vm215, %v1537, -inf
    %v1644 = vrot.slane %v1643, 4
    %v1645 = vmax.f32 %v1643, %v1644
    %v1646 = vrot.slane %v1645, 2
    %v1647 = vmax.f32 %v1645, %v1646
    %v1648 = vrot.slane %v1647, 1
    %v1649 = vmax.f32 %v1647, %v1648
    %v1650 = vsel %vm215, %v1538, -inf
    %v1651 = vrot.slane %v1650, 4
    %v1652 = vmax.f32 %v1650, %v1651
    %v1653 = vrot.slane %v1652, 2
    %v1654 = vmax.f32 %v1652, %v1653
    %v1655 = vrot.slane %v1654, 1
    %v1656 = vmax.f32 %v1654, %v1655
    %v1657 = vsel %vm215, %v1539, -inf
    %v1658 = vrot.slane %v1657, 4
    %v1659 = vmax.f32 %v1657, %v1658
    %v1660 = vrot.slane %v1659, 2
    %v1661 = vmax.f32 %v1659, %v1660
    %v1662 = vrot.slane %v1661, 1
    %v1663 = vmax.f32 %v1661, %v1662
    %v1664 = vsel %vm215, %v1540, -inf
    %v1665 = vrot.slane %v1664, 4
    %v1666 = vmax.f32 %v1664, %v1665
    %v1667 = vrot.slane %v1666, 2
    %v1668 = vmax.f32 %v1666, %v1667
    %v1669 = vrot.slane %v1668, 1
    %v1670 = vmax.f32 %v1668, %v1669
    %v1671 = vsel %vm215, %v1541, -inf
    %v1672 = vrot.slane %v1671, 4
    %v1673 = vmax.f32 %v1671, %v1672
    %v1674 = vrot.slane %v1673, 2
    %v1675 = vmax.f32 %v1673, %v1674
    %v1676 = vrot.slane %v1675, 1
    %v1677 = vmax.f32 %v1675, %v1676
    %v1678 = vsel %vm215, %v1542, -inf
    %v1679 = vrot.slane %v1678, 4
    %v1680 = vmax.f32 %v1678, %v1679
    %v1681 = vrot.slane %v1680, 2
    %v1682 = vmax.f32 %v1680, %v1681
    %v1683 = vrot.slane %v1682, 1
    %v1684 = vmax.f32 %v1682, %v1683
    %v1685 = vsel %vm215, %v1543, -inf
    %v1686 = vrot.slane %v1685, 4
    %v1687 = vmax.f32 %v1685, %v1686
    %v1688 = vrot.slane %v1687, 2
    %v1689 = vmax.f32 %v1687, %v1688
    %v1690 = vrot.slane %v1689, 1
    %v1691 = vmax.f32 %v1689, %v1690
    %v1692 = vsel %vm215, %v1544, -inf
    %v1693 = vrot.slane %v1692, 4
    %v1694 = vmax.f32 %v1692, %v1693
    %v1695 = vrot.slane %v1694, 2
    %v1696 = vmax.f32 %v1694, %v1695
    %v1697 = vrot.slane %v1696, 1
    %v1698 = vmax.f32 %v1696, %v1697
    %v1699 = vsel %vm215, %v1545, -inf
    %v1700 = vrot.slane %v1699, 4
    %v1701 = vmax.f32 %v1699, %v1700
    %v1702 = vrot.slane %v1701, 2
    %v1703 = vmax.f32 %v1701, %v1702
    %v1704 = vrot.slane %v1703, 1
    %v1705 = vmax.f32 %v1703, %v1704
    %v1706 = vsel %vm215, %v1546, -inf
    %v1707 = vrot.slane %v1706, 4
    %v1708 = vmax.f32 %v1706, %v1707
    %v1709 = vrot.slane %v1708, 2
    %v1710 = vmax.f32 %v1708, %v1709
    %v1711 = vrot.slane %v1710, 1
    %v1712 = vmax.f32 %v1710, %v1711
    %v1713 = vsel %vm215, %v1547, -inf
    %v1714 = vrot.slane %v1713, 4
    %v1715 = vmax.f32 %v1713, %v1714
    %v1716 = vrot.slane %v1715, 2
    %v1717 = vmax.f32 %v1715, %v1716
    %v1718 = vrot.slane %v1717, 1
    %v1719 = vmax.f32 %v1717, %v1718
    %v1720 = vsel %vm215, %v1548, -inf
    %v1721 = vrot.slane %v1720, 4
    %v1722 = vmax.f32 %v1720, %v1721
    %v1723 = vrot.slane %v1722, 2
    %v1724 = vmax.f32 %v1722, %v1723
    %v1725 = vrot.slane %v1724, 1
    %v1726 = vmax.f32 %v1724, %v1725
    %v1727 = vsel %vm215, %v1549, -inf
    %v1728 = vrot.slane %v1727, 4
    %v1729 = vmax.f32 %v1727, %v1728
    %v1730 = vrot.slane %v1729, 2
    %v1731 = vmax.f32 %v1729, %v1730
    %v1732 = vrot.slane %v1731, 1
    %v1733 = vmax.f32 %v1731, %v1732
    %v1734 = vsel %vm215, %v1550, -inf
    %v1735 = vrot.slane %v1734, 4
    %v1736 = vmax.f32 %v1734, %v1735
    %v1737 = vrot.slane %v1736, 2
    %v1738 = vmax.f32 %v1736, %v1737
    %v1739 = vrot.slane %v1738, 1
    %v1740 = vmax.f32 %v1738, %v1739
    %v1741 = vsel %vm215, %v1551, -inf
    %v1742 = vrot.slane %v1741, 4
    %v1743 = vmax.f32 %v1741, %v1742
    %v1744 = vrot.slane %v1743, 2
    %v1745 = vmax.f32 %v1743, %v1744
    %v1746 = vrot.slane %v1745, 1
    %v1747 = vmax.f32 %v1745, %v1746
    %v1748 = vsel %vm215, %v1552, -inf
    %v1749 = vrot.slane %v1748, 4
    %v1750 = vmax.f32 %v1748, %v1749
    %v1751 = vrot.slane %v1750, 2
    %v1752 = vmax.f32 %v1750, %v1751
    %v1753 = vrot.slane %v1752, 1
    %v1754 = vmax.f32 %v1752, %v1753
    %v1755 = vsel %vm215, %v1553, -inf
    %v1756 = vrot.slane %v1755, 4
    %v1757 = vmax.f32 %v1755, %v1756
    %v1758 = vrot.slane %v1757, 2
    %v1759 = vmax.f32 %v1757, %v1758
    %v1760 = vrot.slane %v1759, 1
    %v1761 = vmax.f32 %v1759, %v1760
    %v1762 = vsel %vm215, %v1554, -inf
    %v1763 = vrot.slane %v1762, 4
    %v1764 = vmax.f32 %v1762, %v1763
    %v1765 = vrot.slane %v1764, 2
    %v1766 = vmax.f32 %v1764, %v1765
    %v1767 = vrot.slane %v1766, 1
    %v1768 = vmax.f32 %v1766, %v1767
    %v1769 = vsel %vm215, %v1555, -inf
    %v1770 = vrot.slane %v1769, 4
    %v1771 = vmax.f32 %v1769, %v1770
    %v1772 = vrot.slane %v1771, 2
    %v1773 = vmax.f32 %v1771, %v1772
    %v1774 = vrot.slane %v1773, 1
    %v1775 = vmax.f32 %v1773, %v1774
    %v1776 = vsel %vm215, %v1556, -inf
    %v1777 = vrot.slane %v1776, 4
    %v1778 = vmax.f32 %v1776, %v1777
    %v1779 = vrot.slane %v1778, 2
    %v1780 = vmax.f32 %v1778, %v1779
    %v1781 = vrot.slane %v1780, 1
    %v1782 = vmax.f32 %v1780, %v1781
    %v1783 = vsel %vm215, %v1557, -inf
    %v1784 = vrot.slane %v1783, 4
    %v1785 = vmax.f32 %v1783, %v1784
    %v1786 = vrot.slane %v1785, 2
    %v1787 = vmax.f32 %v1785, %v1786
    %v1788 = vrot.slane %v1787, 1
    %v1789 = vmax.f32 %v1787, %v1788
    %v1790 = vsel %vm215, %v1558, -inf
    %v1791 = vrot.slane %v1790, 4
    %v1792 = vmax.f32 %v1790, %v1791
    %v1793 = vrot.slane %v1792, 2
    %v1794 = vmax.f32 %v1792, %v1793
    %v1795 = vrot.slane %v1794, 1
    %v1796 = vmax.f32 %v1794, %v1795
    %v1797 = vsel %vm215, %v1559, -inf
    %v1798 = vrot.slane %v1797, 4
    %v1799 = vmax.f32 %v1797, %v1798
    %v1800 = vrot.slane %v1799, 2
    %v1801 = vmax.f32 %v1799, %v1800
    %v1802 = vrot.slane %v1801, 1
    %v1803 = vmax.f32 %v1801, %v1802
    %v1804 = vsel %vm215, %v1560, -inf
    %v1805 = vrot.slane %v1804, 4
    %v1806 = vmax.f32 %v1804, %v1805
    %v1807 = vrot.slane %v1806, 2
    %v1808 = vmax.f32 %v1806, %v1807
    %v1809 = vrot.slane %v1808, 1
    %v1810 = vmax.f32 %v1808, %v1809
    %v1811 = vsel %vm215, %v1561, -inf
    %v1812 = vrot.slane %v1811, 4
    %v1813 = vmax.f32 %v1811, %v1812
    %v1814 = vrot.slane %v1813, 2
    %v1815 = vmax.f32 %v1813, %v1814
    %v1816 = vrot.slane %v1815, 1
    %v1817 = vmax.f32 %v1815, %v1816
    %v1818 = vsel %vm215, %v1562, -inf
    %v1819 = vrot.slane %v1818, 4
    %v1820 = vmax.f32 %v1818, %v1819
    %v1821 = vrot.slane %v1820, 2
    %v1822 = vmax.f32 %v1820, %v1821
    %v1823 = vrot.slane %v1822, 1
    %v1824 = vmax.f32 %v1822, %v1823
    %v1825 = vsel %vm215, %v1563, -inf
    %v1826 = vrot.slane %v1825, 4
    %v1827 = vmax.f32 %v1825, %v1826
    %v1828 = vrot.slane %v1827, 2
    %v1829 = vmax.f32 %v1827, %v1828
    %v1830 = vrot.slane %v1829, 1
    %v1831 = vmax.f32 %v1829, %v1830
    %v1832 = vsel %vm215, %v1564, -inf
    %v1833 = vrot.slane %v1832, 4
    %v1834 = vmax.f32 %v1832, %v1833
    %v1835 = vrot.slane %v1834, 2
    %v1836 = vmax.f32 %v1834, %v1835
    %v1837 = vrot.slane %v1836, 1
    %v1838 = vmax.f32 %v1836, %v1837
    %v1839 = vsel %vm215, %v1565, -inf
    %v1840 = vrot.slane %v1839, 4
    %v1841 = vmax.f32 %v1839, %v1840
    %v1842 = vrot.slane %v1841, 2
    %v1843 = vmax.f32 %v1841, %v1842
    %v1844 = vrot.slane %v1843, 1
    %v1845 = vmax.f32 %v1843, %v1844
    %v1846 = vsel %vm215, %v1566, -inf
    %v1847 = vrot.slane %v1846, 4
    %v1848 = vmax.f32 %v1846, %v1847
    %v1849 = vrot.slane %v1848, 2
    %v1850 = vmax.f32 %v1848, %v1849
    %v1851 = vrot.slane %v1850, 1
    %v1852 = vmax.f32 %v1850, %v1851
    %v1853 = vsel %vm215, %v1567, -inf
    %v1854 = vrot.slane %v1853, 4
    %v1855 = vmax.f32 %v1853, %v1854
    %v1856 = vrot.slane %v1855, 2
    %v1857 = vmax.f32 %v1855, %v1856
    %v1858 = vrot.slane %v1857, 1
    %v1859 = vmax.f32 %v1857, %v1858
    %v1860 = vsel %vm215, %v1568, -inf
    %v1861 = vrot.slane %v1860, 4
    %v1862 = vmax.f32 %v1860, %v1861
    %v1863 = vrot.slane %v1862, 2
    %v1864 = vmax.f32 %v1862, %v1863
    %v1865 = vrot.slane %v1864, 1
    %v1866 = vmax.f32 %v1864, %v1865
    %v1867 = vsel %vm215, %v1569, -inf
    %v1868 = vrot.slane %v1867, 4
    %v1869 = vmax.f32 %v1867, %v1868
    %v1870 = vrot.slane %v1869, 2
    %v1871 = vmax.f32 %v1869, %v1870
    %v1872 = vrot.slane %v1871, 1
    %v1873 = vmax.f32 %v1871, %v1872
    %v1874 = vsel %vm215, %v1570, -inf
    %v1875 = vrot.slane %v1874, 4
    %v1876 = vmax.f32 %v1874, %v1875
    %v1877 = vrot.slane %v1876, 2
    %v1878 = vmax.f32 %v1876, %v1877
    %v1879 = vrot.slane %v1878, 1
    %v1880 = vmax.f32 %v1878, %v1879
    %v1881 = vsel %vm215, %v1571, -inf
    %v1882 = vrot.slane %v1881, 4
    %v1883 = vmax.f32 %v1881, %v1882
    %v1884 = vrot.slane %v1883, 2
    %v1885 = vmax.f32 %v1883, %v1884
    %v1886 = vrot.slane %v1885, 1
    %v1887 = vmax.f32 %v1885, %v1886
    %v1888 = vsel %vm215, %v1572, -inf
    %v1889 = vrot.slane %v1888, 4
    %v1890 = vmax.f32 %v1888, %v1889
    %v1891 = vrot.slane %v1890, 2
    %v1892 = vmax.f32 %v1890, %v1891
    %v1893 = vrot.slane %v1892, 1
    %v1894 = vmax.f32 %v1892, %v1893
    %v1895 = vsel %vm215, %v1573, -inf
    %v1896 = vrot.slane %v1895, 4
    %v1897 = vmax.f32 %v1895, %v1896
    %v1898 = vrot.slane %v1897, 2
    %v1899 = vmax.f32 %v1897, %v1898
    %v1900 = vrot.slane %v1899, 1
    %v1901 = vmax.f32 %v1899, %v1900
    %v1902 = vsel %vm215, %v1574, -inf
    %v1903 = vrot.slane %v1902, 4
    %v1904 = vmax.f32 %v1902, %v1903
    %v1905 = vrot.slane %v1904, 2
    %v1906 = vmax.f32 %v1904, %v1905
    %v1907 = vrot.slane %v1906, 1
    %v1908 = vmax.f32 %v1906, %v1907
    %v1909 = vsel %vm215, %v1575, -inf
    %v1910 = vrot.slane %v1909, 4
    %v1911 = vmax.f32 %v1909, %v1910
    %v1912 = vrot.slane %v1911, 2
    %v1913 = vmax.f32 %v1911, %v1912
    %v1914 = vrot.slane %v1913, 1
    %v1915 = vmax.f32 %v1913, %v1914
    %v1916 = vsel %vm215, %v1576, -inf
    %v1917 = vrot.slane %v1916, 4
    %v1918 = vmax.f32 %v1916, %v1917
    %v1919 = vrot.slane %v1918, 2
    %v1920 = vmax.f32 %v1918, %v1919
    %v1921 = vrot.slane %v1920, 1
    %v1922 = vmax.f32 %v1920, %v1921
    %v1923 = vsel %vm215, %v1577, -inf
    %v1924 = vrot.slane %v1923, 4
    %v1925 = vmax.f32 %v1923, %v1924
    %v1926 = vrot.slane %v1925, 2
    %v1927 = vmax.f32 %v1925, %v1926
    %v1928 = vrot.slane %v1927, 1
    %v1929 = vmax.f32 %v1927, %v1928
    %v1930 = vsel %vm215, %v1578, -inf
    %v1931 = vrot.slane %v1930, 4
    %v1932 = vmax.f32 %v1930, %v1931
    %v1933 = vrot.slane %v1932, 2
    %v1934 = vmax.f32 %v1932, %v1933
    %v1935 = vrot.slane %v1934, 1
    %v1936 = vmax.f32 %v1934, %v1935
    %v1937 = vsel %vm215, %v1579, -inf
    %v1938 = vrot.slane %v1937, 4
    %v1939 = vmax.f32 %v1937, %v1938
    %v1940 = vrot.slane %v1939, 2
    %v1941 = vmax.f32 %v1939, %v1940
    %v1942 = vrot.slane %v1941, 1
    %v1943 = vmax.f32 %v1941, %v1942
    %v1944 = vsel %vm215, %v1580, -inf
    %v1945 = vrot.slane %v1944, 4
    %v1946 = vmax.f32 %v1944, %v1945
    %v1947 = vrot.slane %v1946, 2
    %v1948 = vmax.f32 %v1946, %v1947
    %v1949 = vrot.slane %v1948, 1
    %v1950 = vmax.f32 %v1948, %v1949
    %v1951 = vsel %vm215, %v1581, -inf
    %v1952 = vrot.slane %v1951, 4
    %v1953 = vmax.f32 %v1951, %v1952
    %v1954 = vrot.slane %v1953, 2
    %v1955 = vmax.f32 %v1953, %v1954
    %v1956 = vrot.slane %v1955, 1
    %v1957 = vmax.f32 %v1955, %v1956
    %v1958 = vsel %vm215, %v1582, -inf
    %v1959 = vrot.slane %v1958, 4
    %v1960 = vmax.f32 %v1958, %v1959
    %v1961 = vrot.slane %v1960, 2
    %v1962 = vmax.f32 %v1960, %v1961
    %v1963 = vrot.slane %v1962, 1
    %v1964 = vmax.f32 %v1962, %v1963
    %v1965 = vsel %vm215, %v1583, -inf
    %v1966 = vrot.slane %v1965, 4
    %v1967 = vmax.f32 %v1965, %v1966
    %v1968 = vrot.slane %v1967, 2
    %v1969 = vmax.f32 %v1967, %v1968
    %v1970 = vrot.slane %v1969, 1
    %v1971 = vmax.f32 %v1969, %v1970
    %v1972 = vsel %vm215, %v1584, -inf
    %v1973 = vrot.slane %v1972, 4
    %v1974 = vmax.f32 %v1972, %v1973
    %v1975 = vrot.slane %v1974, 2
    %v1976 = vmax.f32 %v1974, %v1975
    %v1977 = vrot.slane %v1976, 1
    %v1978 = vmax.f32 %v1976, %v1977
    %v1979 = vsel %vm215, %v1585, -inf
    %v1980 = vrot.slane %v1979, 4
    %v1981 = vmax.f32 %v1979, %v1980
    %v1982 = vrot.slane %v1981, 2
    %v1983 = vmax.f32 %v1981, %v1982
    %v1984 = vrot.slane %v1983, 1
    %v1985 = vmax.f32 %v1983, %v1984
    %v1986 = vsel %vm215, %v1586, -inf
    %v1987 = vrot.slane %v1986, 4
    %v1988 = vmax.f32 %v1986, %v1987
    %v1989 = vrot.slane %v1988, 2
    %v1990 = vmax.f32 %v1988, %v1989
    %v1991 = vrot.slane %v1990, 1
    %v1992 = vmax.f32 %v1990, %v1991
    %v1993 = vsel %vm215, %v1587, -inf
    %v1994 = vrot.slane %v1993, 4
    %v1995 = vmax.f32 %v1993, %v1994
    %v1996 = vrot.slane %v1995, 2
    %v1997 = vmax.f32 %v1995, %v1996
    %v1998 = vrot.slane %v1997, 1
    %v1999 = vmax.f32 %v1997, %v1998
    %v2000 = vsel %vm215, %v1588, -inf
    %v2001 = vrot.slane %v2000, 4
    %v2002 = vmax.f32 %v2000, %v2001
    %v2003 = vrot.slane %v2002, 2
    %v2004 = vmax.f32 %v2002, %v2003
    %v2005 = vrot.slane %v2004, 1
    %v2006 = vmax.f32 %v2004, %v2005
    %v2007 = vsel %vm215, %v1589, -inf
    %v2008 = vrot.slane %v2007, 4
    %v2009 = vmax.f32 %v2007, %v2008
    %v2010 = vrot.slane %v2009, 2
    %v2011 = vmax.f32 %v2009, %v2010
    %v2012 = vrot.slane %v2011, 1
    %v2013 = vmax.f32 %v2011, %v2012
    %v2014 = vsel %vm215, %v1590, -inf
    %v2015 = vrot.slane %v2014, 4
    %v2016 = vmax.f32 %v2014, %v2015
    %v2017 = vrot.slane %v2016, 2
    %v2018 = vmax.f32 %v2016, %v2017
    %v2019 = vrot.slane %v2018, 1
    %v2020 = vmax.f32 %v2018, %v2019
    %v2021 = vsel %vm215, %v1591, -inf
    %v2022 = vrot.slane %v2021, 4
    %v2023 = vmax.f32 %v2021, %v2022
    %v2024 = vrot.slane %v2023, 2
    %v2025 = vmax.f32 %v2023, %v2024
    %v2026 = vrot.slane %v2025, 1
    %v2027 = vmax.f32 %v2025, %v2026
    %v2028 = vsel %vm215, %v1592, -inf
    %v2029 = vrot.slane %v2028, 4
    %v2030 = vmax.f32 %v2028, %v2029
    %v2031 = vrot.slane %v2030, 2
    %v2032 = vmax.f32 %v2030, %v2031
    %v2033 = vrot.slane %v2032, 1
    %v2034 = vmax.f32 %v2032, %v2033
    %v2035 = vsel %vm215, %v1593, -inf
    %v2036 = vrot.slane %v2035, 4
    %v2037 = vmax.f32 %v2035, %v2036
    %v2038 = vrot.slane %v2037, 2
    %v2039 = vmax.f32 %v2037, %v2038
    %v2040 = vrot.slane %v2039, 1
    %v2041 = vmax.f32 %v2039, %v2040
    %v2042 = vsub.f32 %v1530, %v1600
    %v2043 = vsub.f32 %v1531, %v1607
    %v2044 = vsub.f32 %v1532, %v1614
    %v2045 = vsub.f32 %v1533, %v1621
    %v2046 = vsub.f32 %v1534, %v1628
    %v2047 = vsub.f32 %v1535, %v1635
    %v2048 = vsub.f32 %v1536, %v1642
    %v2049 = vsub.f32 %v1537, %v1649
    %v2050 = vsub.f32 %v1538, %v1656
    %v2051 = vsub.f32 %v1539, %v1663
    %v2052 = vsub.f32 %v1540, %v1670
    %v2053 = vsub.f32 %v1541, %v1677
    %v2054 = vsub.f32 %v1542, %v1684
    %v2055 = vsub.f32 %v1543, %v1691
    %v2056 = vsub.f32 %v1544, %v1698
    %v2057 = vsub.f32 %v1545, %v1705
    %v2058 = vsub.f32 %v1546, %v1712
    %v2059 = vsub.f32 %v1547, %v1719
    %v2060 = vsub.f32 %v1548, %v1726
    %v2061 = vsub.f32 %v1549, %v1733
    %v2062 = vsub.f32 %v1550, %v1740
    %v2063 = vsub.f32 %v1551, %v1747
    %v2064 = vsub.f32 %v1552, %v1754
    %v2065 = vsub.f32 %v1553, %v1761
    %v2066 = vsub.f32 %v1554, %v1768
    %v2067 = vsub.f32 %v1555, %v1775
    %v2068 = vsub.f32 %v1556, %v1782
    %v2069 = vsub.f32 %v1557, %v1789
    %v2070 = vsub.f32 %v1558, %v1796
    %v2071 = vsub.f32 %v1559, %v1803
    %v2072 = vsub.f32 %v1560, %v1810
    %v2073 = vsub.f32 %v1561, %v1817
    %v2074 = vsub.f32 %v1562, %v1824
    %v2075 = vsub.f32 %v1563, %v1831
    %v2076 = vsub.f32 %v1564, %v1838
    %v2077 = vsub.f32 %v1565, %v1845
    %v2078 = vsub.f32 %v1566, %v1852
    %v2079 = vsub.f32 %v1567, %v1859
    %v2080 = vsub.f32 %v1568, %v1866
    %v2081 = vsub.f32 %v1569, %v1873
    %v2082 = vsub.f32 %v1570, %v1880
    %v2083 = vsub.f32 %v1571, %v1887
    %v2084 = vsub.f32 %v1572, %v1894
    %v2085 = vsub.f32 %v1573, %v1901
    %v2086 = vsub.f32 %v1574, %v1908
    %v2087 = vsub.f32 %v1575, %v1915
    %v2088 = vsub.f32 %v1576, %v1922
    %v2089 = vsub.f32 %v1577, %v1929
    %v2090 = vsub.f32 %v1578, %v1936
    %v2091 = vsub.f32 %v1579, %v1943
    %v2092 = vsub.f32 %v1580, %v1950
    %v2093 = vsub.f32 %v1581, %v1957
    %v2094 = vsub.f32 %v1582, %v1964
    %v2095 = vsub.f32 %v1583, %v1971
    %v2096 = vsub.f32 %v1584, %v1978
    %v2097 = vsub.f32 %v1585, %v1985
    %v2098 = vsub.f32 %v1586, %v1992
    %v2099 = vsub.f32 %v1587, %v1999
    %v2100 = vsub.f32 %v1588, %v2006
    %v2101 = vsub.f32 %v1589, %v2013
    %v2102 = vsub.f32 %v1590, %v2020
    %v2103 = vsub.f32 %v1591, %v2027
    %v2104 = vsub.f32 %v1592, %v2034
    %v2105 = vsub.f32 %v1593, %v2041
    %v2106 = vmul.f32 %v2042, 1.442695
    %v2107 = vpow.pop %v2106
    %v2108 = vmul.f32 %v2043, 1.442695
    %v2109 = vpow.pop %v2108
    %v2110 = vmul.f32 %v2044, 1.442695
    %v2111 = vpow.pop %v2110
    %v2112 = vmul.f32 %v2045, 1.442695
    %v2113 = vpow.pop %v2112
    %v2114 = vmul.f32 %v2046, 1.442695
    %v2115 = vpow.pop %v2114
    %v2116 = vmul.f32 %v2047, 1.442695
    %v2117 = vpow.pop %v2116
    %v2118 = vmul.f32 %v2048, 1.442695
    %v2119 = vpow.pop %v2118
    %v2120 = vmul.f32 %v2049, 1.442695
    %v2121 = vpow.pop %v2120
    %v2122 = vmul.f32 %v2050, 1.442695
    %v2123 = vpow.pop %v2122
    %v2124 = vmul.f32 %v2051, 1.442695
    %v2125 = vpow.pop %v2124
    %v2126 = vmul.f32 %v2052, 1.442695
    %v2127 = vpow.pop %v2126
    %v2128 = vmul.f32 %v2053, 1.442695
    %v2129 = vpow.pop %v2128
    %v2130 = vmul.f32 %v2054, 1.442695
    %v2131 = vpow.pop %v2130
    %v2132 = vmul.f32 %v2055, 1.442695
    %v2133 = vpow.pop %v2132
    %v2134 = vmul.f32 %v2056, 1.442695
    %v2135 = vpow.pop %v2134
    %v2136 = vmul.f32 %v2057, 1.442695
    %v2137 = vpow.pop %v2136
    %v2138 = vmul.f32 %v2058, 1.442695
    %v2139 = vpow.pop %v2138
    %v2140 = vmul.f32 %v2059, 1.442695
    %v2141 = vpow.pop %v2140
    %v2142 = vmul.f32 %v2060, 1.442695
    %v2143 = vpow.pop %v2142
    %v2144 = vmul.f32 %v2061, 1.442695
    %v2145 = vpow.pop %v2144
    %v2146 = vmul.f32 %v2062, 1.442695
    %v2147 = vpow.pop %v2146
    %v2148 = vmul.f32 %v2063, 1.442695
    %v2149 = vpow.pop %v2148
    %v2150 = vmul.f32 %v2064, 1.442695
    %v2151 = vpow.pop %v2150
    %v2152 = vmul.f32 %v2065, 1.442695
    %v2153 = vpow.pop %v2152
    %v2154 = vmul.f32 %v2066, 1.442695
    %v2155 = vpow.pop %v2154
    %v2156 = vmul.f32 %v2067, 1.442695
    %v2157 = vpow.pop %v2156
    %v2158 = vmul.f32 %v2068, 1.442695
    %v2159 = vpow.pop %v2158
    %v2160 = vmul.f32 %v2069, 1.442695
    %v2161 = vpow.pop %v2160
    %v2162 = vmul.f32 %v2070, 1.442695
    %v2163 = vpow.pop %v2162
    %v2164 = vmul.f32 %v2071, 1.442695
    %v2165 = vpow.pop %v2164
    %v2166 = vmul.f32 %v2072, 1.442695
    %v2167 = vpow.pop %v2166
    %v2168 = vmul.f32 %v2073, 1.442695
    %v2169 = vpow.pop %v2168
    %v2170 = vmul.f32 %v2074, 1.442695
    %v2171 = vpow.pop %v2170
    %v2172 = vmul.f32 %v2075, 1.442695
    %v2173 = vpow.pop %v2172
    %v2174 = vmul.f32 %v2076, 1.442695
    %v2175 = vpow.pop %v2174
    %v2176 = vmul.f32 %v2077, 1.442695
    %v2177 = vpow.pop %v2176
    %v2178 = vmul.f32 %v2078, 1.442695
    %v2179 = vpow.pop %v2178
    %v2180 = vmul.f32 %v2079, 1.442695
    %v2181 = vpow.pop %v2180
    %v2182 = vmul.f32 %v2080, 1.442695
    %v2183 = vpow.pop %v2182
    %v2184 = vmul.f32 %v2081, 1.442695
    %v2185 = vpow.pop %v2184
    %v2186 = vmul.f32 %v2082, 1.442695
    %v2187 = vpow.pop %v2186
    %v2188 = vmul.f32 %v2083, 1.442695
    %v2189 = vpow.pop %v2188
    %v2190 = vmul.f32 %v2084, 1.442695
    %v2191 = vpow.pop %v2190
    %v2192 = vmul.f32 %v2085, 1.442695
    %v2193 = vpow.pop %v2192
    %v2194 = vmul.f32 %v2086, 1.442695
    %v2195 = vpow.pop %v2194
    %v2196 = vmul.f32 %v2087, 1.442695
    %v2197 = vpow.pop %v2196
    %v2198 = vmul.f32 %v2088, 1.442695
    %v2199 = vpow.pop %v2198
    %v2200 = vmul.f32 %v2089, 1.442695
    %v2201 = vpow.pop %v2200
    %v2202 = vmul.f32 %v2090, 1.442695
    %v2203 = vpow.pop %v2202
    %v2204 = vmul.f32 %v2091, 1.442695
    %v2205 = vpow.pop %v2204
    %v2206 = vmul.f32 %v2092, 1.442695
    %v2207 = vpow.pop %v2206
    %v2208 = vmul.f32 %v2093, 1.442695
    %v2209 = vpow.pop %v2208
    %v2210 = vmul.f32 %v2094, 1.442695
    %v2211 = vpow.pop %v2210
    %v2212 = vmul.f32 %v2095, 1.442695
    %v2213 = vpow.pop %v2212
    %v2214 = vmul.f32 %v2096, 1.442695
    %v2215 = vpow.pop %v2214
    %v2216 = vmul.f32 %v2097, 1.442695
    %v2217 = vpow.pop %v2216
    %v2218 = vmul.f32 %v2098, 1.442695
    %v2219 = vpow.pop %v2218
    %v2220 = vmul.f32 %v2099, 1.442695
    %v2221 = vpow.pop %v2220
    %v2222 = vmul.f32 %v2100, 1.442695
    %v2223 = vpow.pop %v2222
    %v2224 = vmul.f32 %v2101, 1.442695
    %v2225 = vpow.pop %v2224
    %v2226 = vmul.f32 %v2102, 1.442695
    %v2227 = vpow.pop %v2226
    %v2228 = vmul.f32 %v2103, 1.442695
    %v2229 = vpow.pop %v2228
    %v2230 = vmul.f32 %v2104, 1.442695
    %v2231 = vpow.pop %v2230
    %v2232 = vmul.f32 %v2105, 1.442695
    %v2233 = vpow.pop %v2232
    %v2234 = vsel %vm215, %v2107, 0.0
    %v2235 = vrot.slane %v2234, 4
    %v2236 = vadd.f32 %v2234, %v2235
    %v2237 = vrot.slane %v2236, 2
    %v2238 = vadd.f32 %v2236, %v2237
    %v2239 = vrot.slane %v2238, 1
    %v2240 = vadd.f32 %v2238, %v2239
    %v2241 = vsel %vm215, %v2109, 0.0
    %v2242 = vrot.slane %v2241, 4
    %v2243 = vadd.f32 %v2241, %v2242
    %v2244 = vrot.slane %v2243, 2
    %v2245 = vadd.f32 %v2243, %v2244
    %v2246 = vrot.slane %v2245, 1
    %v2247 = vadd.f32 %v2245, %v2246
    %v2248 = vsel %vm215, %v2111, 0.0
    %v2249 = vrot.slane %v2248, 4
    %v2250 = vadd.f32 %v2248, %v2249
    %v2251 = vrot.slane %v2250, 2
    %v2252 = vadd.f32 %v2250, %v2251
    %v2253 = vrot.slane %v2252, 1
    %v2254 = vadd.f32 %v2252, %v2253
    %v2255 = vsel %vm215, %v2113, 0.0
    %v2256 = vrot.slane %v2255, 4
    %v2257 = vadd.f32 %v2255, %v2256
    %v2258 = vrot.slane %v2257, 2
    %v2259 = vadd.f32 %v2257, %v2258
    %v2260 = vrot.slane %v2259, 1
    %v2261 = vadd.f32 %v2259, %v2260
    %v2262 = vsel %vm215, %v2115, 0.0
    %v2263 = vrot.slane %v2262, 4
    %v2264 = vadd.f32 %v2262, %v2263
    %v2265 = vrot.slane %v2264, 2
    %v2266 = vadd.f32 %v2264, %v2265
    %v2267 = vrot.slane %v2266, 1
    %v2268 = vadd.f32 %v2266, %v2267
    %v2269 = vsel %vm215, %v2117, 0.0
    %v2270 = vrot.slane %v2269, 4
    %v2271 = vadd.f32 %v2269, %v2270
    %v2272 = vrot.slane %v2271, 2
    %v2273 = vadd.f32 %v2271, %v2272
    %v2274 = vrot.slane %v2273, 1
    %v2275 = vadd.f32 %v2273, %v2274
    %v2276 = vsel %vm215, %v2119, 0.0
    %v2277 = vrot.slane %v2276, 4
    %v2278 = vadd.f32 %v2276, %v2277
    %v2279 = vrot.slane %v2278, 2
    %v2280 = vadd.f32 %v2278, %v2279
    %v2281 = vrot.slane %v2280, 1
    %v2282 = vadd.f32 %v2280, %v2281
    %v2283 = vsel %vm215, %v2121, 0.0
    %v2284 = vrot.slane %v2283, 4
    %v2285 = vadd.f32 %v2283, %v2284
    %v2286 = vrot.slane %v2285, 2
    %v2287 = vadd.f32 %v2285, %v2286
    %v2288 = vrot.slane %v2287, 1
    %v2289 = vadd.f32 %v2287, %v2288
    %v2290 = vsel %vm215, %v2123, 0.0
    %v2291 = vrot.slane %v2290, 4
    %v2292 = vadd.f32 %v2290, %v2291
    %v2293 = vrot.slane %v2292, 2
    %v2294 = vadd.f32 %v2292, %v2293
    %v2295 = vrot.slane %v2294, 1
    %v2296 = vadd.f32 %v2294, %v2295
    %v2297 = vsel %vm215, %v2125, 0.0
    %v2298 = vrot.slane %v2297, 4
    %v2299 = vadd.f32 %v2297, %v2298
    %v2300 = vrot.slane %v2299, 2
    %v2301 = vadd.f32 %v2299, %v2300
    %v2302 = vrot.slane %v2301, 1
    %v2303 = vadd.f32 %v2301, %v2302
    %v2304 = vsel %vm215, %v2127, 0.0
    %v2305 = vrot.slane %v2304, 4
    %v2306 = vadd.f32 %v2304, %v2305
    %v2307 = vrot.slane %v2306, 2
    %v2308 = vadd.f32 %v2306, %v2307
    %v2309 = vrot.slane %v2308, 1
    %v2310 = vadd.f32 %v2308, %v2309
    %v2311 = vsel %vm215, %v2129, 0.0
    %v2312 = vrot.slane %v2311, 4
    %v2313 = vadd.f32 %v2311, %v2312
    %v2314 = vrot.slane %v2313, 2
    %v2315 = vadd.f32 %v2313, %v2314
    %v2316 = vrot.slane %v2315, 1
    %v2317 = vadd.f32 %v2315, %v2316
    %v2318 = vsel %vm215, %v2131, 0.0
    %v2319 = vrot.slane %v2318, 4
    %v2320 = vadd.f32 %v2318, %v2319
    %v2321 = vrot.slane %v2320, 2
    %v2322 = vadd.f32 %v2320, %v2321
    %v2323 = vrot.slane %v2322, 1
    %v2324 = vadd.f32 %v2322, %v2323
    %v2325 = vsel %vm215, %v2133, 0.0
    %v2326 = vrot.slane %v2325, 4
    %v2327 = vadd.f32 %v2325, %v2326
    %v2328 = vrot.slane %v2327, 2
    %v2329 = vadd.f32 %v2327, %v2328
    %v2330 = vrot.slane %v2329, 1
    %v2331 = vadd.f32 %v2329, %v2330
    %v2332 = vsel %vm215, %v2135, 0.0
    %v2333 = vrot.slane %v2332, 4
    %v2334 = vadd.f32 %v2332, %v2333
    %v2335 = vrot.slane %v2334, 2
    %v2336 = vadd.f32 %v2334, %v2335
    %v2337 = vrot.slane %v2336, 1
    %v2338 = vadd.f32 %v2336, %v2337
    %v2339 = vsel %vm215, %v2137, 0.0
    %v2340 = vrot.slane %v2339, 4
    %v2341 = vadd.f32 %v2339, %v2340
    %v2342 = vrot.slane %v2341, 2
    %v2343 = vadd.f32 %v2341, %v2342
    %v2344 = vrot.slane %v2343, 1
    %v2345 = vadd.f32 %v2343, %v2344
    %v2346 = vsel %vm215, %v2139, 0.0
    %v2347 = vrot.slane %v2346, 4
    %v2348 = vadd.f32 %v2346, %v2347
    %v2349 = vrot.slane %v2348, 2
    %v2350 = vadd.f32 %v2348, %v2349
    %v2351 = vrot.slane %v2350, 1
    %v2352 = vadd.f32 %v2350, %v2351
    %v2353 = vsel %vm215, %v2141, 0.0
    %v2354 = vrot.slane %v2353, 4
    %v2355 = vadd.f32 %v2353, %v2354
    %v2356 = vrot.slane %v2355, 2
    %v2357 = vadd.f32 %v2355, %v2356
    %v2358 = vrot.slane %v2357, 1
    %v2359 = vadd.f32 %v2357, %v2358
    %v2360 = vsel %vm215, %v2143, 0.0
    %v2361 = vrot.slane %v2360, 4
    %v2362 = vadd.f32 %v2360, %v2361
    %v2363 = vrot.slane %v2362, 2
    %v2364 = vadd.f32 %v2362, %v2363
    %v2365 = vrot.slane %v2364, 1
    %v2366 = vadd.f32 %v2364, %v2365
    %v2367 = vsel %vm215, %v2145, 0.0
    %v2368 = vrot.slane %v2367, 4
    %v2369 = vadd.f32 %v2367, %v2368
    %v2370 = vrot.slane %v2369, 2
    %v2371 = vadd.f32 %v2369, %v2370
    %v2372 = vrot.slane %v2371, 1
    %v2373 = vadd.f32 %v2371, %v2372
    %v2374 = vsel %vm215, %v2147, 0.0
    %v2375 = vrot.slane %v2374, 4
    %v2376 = vadd.f32 %v2374, %v2375
    %v2377 = vrot.slane %v2376, 2
    %v2378 = vadd.f32 %v2376, %v2377
    %v2379 = vrot.slane %v2378, 1
    %v2380 = vadd.f32 %v2378, %v2379
    %v2381 = vsel %vm215, %v2149, 0.0
    %v2382 = vrot.slane %v2381, 4
    %v2383 = vadd.f32 %v2381, %v2382
    %v2384 = vrot.slane %v2383, 2
    %v2385 = vadd.f32 %v2383, %v2384
    %v2386 = vrot.slane %v2385, 1
    %v2387 = vadd.f32 %v2385, %v2386
    %v2388 = vsel %vm215, %v2151, 0.0
    %v2389 = vrot.slane %v2388, 4
    %v2390 = vadd.f32 %v2388, %v2389
    %v2391 = vrot.slane %v2390, 2
    %v2392 = vadd.f32 %v2390, %v2391
    %v2393 = vrot.slane %v2392, 1
    %v2394 = vadd.f32 %v2392, %v2393
    %v2395 = vsel %vm215, %v2153, 0.0
    %v2396 = vrot.slane %v2395, 4
    %v2397 = vadd.f32 %v2395, %v2396
    %v2398 = vrot.slane %v2397, 2
    %v2399 = vadd.f32 %v2397, %v2398
    %v2400 = vrot.slane %v2399, 1
    %v2401 = vadd.f32 %v2399, %v2400
    %v2402 = vsel %vm215, %v2155, 0.0
    %v2403 = vrot.slane %v2402, 4
    %v2404 = vadd.f32 %v2402, %v2403
    %v2405 = vrot.slane %v2404, 2
    %v2406 = vadd.f32 %v2404, %v2405
    %v2407 = vrot.slane %v2406, 1
    %v2408 = vadd.f32 %v2406, %v2407
    %v2409 = vsel %vm215, %v2157, 0.0
    %v2410 = vrot.slane %v2409, 4
    %v2411 = vadd.f32 %v2409, %v2410
    %v2412 = vrot.slane %v2411, 2
    %v2413 = vadd.f32 %v2411, %v2412
    %v2414 = vrot.slane %v2413, 1
    %v2415 = vadd.f32 %v2413, %v2414
    %v2416 = vsel %vm215, %v2159, 0.0
    %v2417 = vrot.slane %v2416, 4
    %v2418 = vadd.f32 %v2416, %v2417
    %v2419 = vrot.slane %v2418, 2
    %v2420 = vadd.f32 %v2418, %v2419
    %v2421 = vrot.slane %v2420, 1
    %v2422 = vadd.f32 %v2420, %v2421
    %v2423 = vsel %vm215, %v2161, 0.0
    %v2424 = vrot.slane %v2423, 4
    %v2425 = vadd.f32 %v2423, %v2424
    %v2426 = vrot.slane %v2425, 2
    %v2427 = vadd.f32 %v2425, %v2426
    %v2428 = vrot.slane %v2427, 1
    %v2429 = vadd.f32 %v2427, %v2428
    %v2430 = vsel %vm215, %v2163, 0.0
    %v2431 = vrot.slane %v2430, 4
    %v2432 = vadd.f32 %v2430, %v2431
    %v2433 = vrot.slane %v2432, 2
    %v2434 = vadd.f32 %v2432, %v2433
    %v2435 = vrot.slane %v2434, 1
    %v2436 = vadd.f32 %v2434, %v2435
    %v2437 = vsel %vm215, %v2165, 0.0
    %v2438 = vrot.slane %v2437, 4
    %v2439 = vadd.f32 %v2437, %v2438
    %v2440 = vrot.slane %v2439, 2
    %v2441 = vadd.f32 %v2439, %v2440
    %v2442 = vrot.slane %v2441, 1
    %v2443 = vadd.f32 %v2441, %v2442
    %v2444 = vsel %vm215, %v2167, 0.0
    %v2445 = vrot.slane %v2444, 4
    %v2446 = vadd.f32 %v2444, %v2445
    %v2447 = vrot.slane %v2446, 2
    %v2448 = vadd.f32 %v2446, %v2447
    %v2449 = vrot.slane %v2448, 1
    %v2450 = vadd.f32 %v2448, %v2449
    %v2451 = vsel %vm215, %v2169, 0.0
    %v2452 = vrot.slane %v2451, 4
    %v2453 = vadd.f32 %v2451, %v2452
    %v2454 = vrot.slane %v2453, 2
    %v2455 = vadd.f32 %v2453, %v2454
    %v2456 = vrot.slane %v2455, 1
    %v2457 = vadd.f32 %v2455, %v2456
    %v2458 = vsel %vm215, %v2171, 0.0
    %v2459 = vrot.slane %v2458, 4
    %v2460 = vadd.f32 %v2458, %v2459
    %v2461 = vrot.slane %v2460, 2
    %v2462 = vadd.f32 %v2460, %v2461
    %v2463 = vrot.slane %v2462, 1
    %v2464 = vadd.f32 %v2462, %v2463
    %v2465 = vsel %vm215, %v2173, 0.0
    %v2466 = vrot.slane %v2465, 4
    %v2467 = vadd.f32 %v2465, %v2466
    %v2468 = vrot.slane %v2467, 2
    %v2469 = vadd.f32 %v2467, %v2468
    %v2470 = vrot.slane %v2469, 1
    %v2471 = vadd.f32 %v2469, %v2470
    %v2472 = vsel %vm215, %v2175, 0.0
    %v2473 = vrot.slane %v2472, 4
    %v2474 = vadd.f32 %v2472, %v2473
    %v2475 = vrot.slane %v2474, 2
    %v2476 = vadd.f32 %v2474, %v2475
    %v2477 = vrot.slane %v2476, 1
    %v2478 = vadd.f32 %v2476, %v2477
    %v2479 = vsel %vm215, %v2177, 0.0
    %v2480 = vrot.slane %v2479, 4
    %v2481 = vadd.f32 %v2479, %v2480
    %v2482 = vrot.slane %v2481, 2
    %v2483 = vadd.f32 %v2481, %v2482
    %v2484 = vrot.slane %v2483, 1
    %v2485 = vadd.f32 %v2483, %v2484
    %v2486 = vsel %vm215, %v2179, 0.0
    %v2487 = vrot.slane %v2486, 4
    %v2488 = vadd.f32 %v2486, %v2487
    %v2489 = vrot.slane %v2488, 2
    %v2490 = vadd.f32 %v2488, %v2489
    %v2491 = vrot.slane %v2490, 1
    %v2492 = vadd.f32 %v2490, %v2491
    %v2493 = vsel %vm215, %v2181, 0.0
    %v2494 = vrot.slane %v2493, 4
    %v2495 = vadd.f32 %v2493, %v2494
    %v2496 = vrot.slane %v2495, 2
    %v2497 = vadd.f32 %v2495, %v2496
    %v2498 = vrot.slane %v2497, 1
    %v2499 = vadd.f32 %v2497, %v2498
    %v2500 = vsel %vm215, %v2183, 0.0
    %v2501 = vrot.slane %v2500, 4
    %v2502 = vadd.f32 %v2500, %v2501
    %v2503 = vrot.slane %v2502, 2
    %v2504 = vadd.f32 %v2502, %v2503
    %v2505 = vrot.slane %v2504, 1
    %v2506 = vadd.f32 %v2504, %v2505
    %v2507 = vsel %vm215, %v2185, 0.0
    %v2508 = vrot.slane %v2507, 4
    %v2509 = vadd.f32 %v2507, %v2508
    %v2510 = vrot.slane %v2509, 2
    %v2511 = vadd.f32 %v2509, %v2510
    %v2512 = vrot.slane %v2511, 1
    %v2513 = vadd.f32 %v2511, %v2512
    %v2514 = vsel %vm215, %v2187, 0.0
    %v2515 = vrot.slane %v2514, 4
    %v2516 = vadd.f32 %v2514, %v2515
    %v2517 = vrot.slane %v2516, 2
    %v2518 = vadd.f32 %v2516, %v2517
    %v2519 = vrot.slane %v2518, 1
    %v2520 = vadd.f32 %v2518, %v2519
    %v2521 = vsel %vm215, %v2189, 0.0
    %v2522 = vrot.slane %v2521, 4
    %v2523 = vadd.f32 %v2521, %v2522
    %v2524 = vrot.slane %v2523, 2
    %v2525 = vadd.f32 %v2523, %v2524
    %v2526 = vrot.slane %v2525, 1
    %v2527 = vadd.f32 %v2525, %v2526
    %v2528 = vsel %vm215, %v2191, 0.0
    %v2529 = vrot.slane %v2528, 4
    %v2530 = vadd.f32 %v2528, %v2529
    %v2531 = vrot.slane %v2530, 2
    %v2532 = vadd.f32 %v2530, %v2531
    %v2533 = vrot.slane %v2532, 1
    %v2534 = vadd.f32 %v2532, %v2533
    %v2535 = vsel %vm215, %v2193, 0.0
    %v2536 = vrot.slane %v2535, 4
    %v2537 = vadd.f32 %v2535, %v2536
    %v2538 = vrot.slane %v2537, 2
    %v2539 = vadd.f32 %v2537, %v2538
    %v2540 = vrot.slane %v2539, 1
    %v2541 = vadd.f32 %v2539, %v2540
    %v2542 = vsel %vm215, %v2195, 0.0
    %v2543 = vrot.slane %v2542, 4
    %v2544 = vadd.f32 %v2542, %v2543
    %v2545 = vrot.slane %v2544, 2
    %v2546 = vadd.f32 %v2544, %v2545
    %v2547 = vrot.slane %v2546, 1
    %v2548 = vadd.f32 %v2546, %v2547
    %v2549 = vsel %vm215, %v2197, 0.0
    %v2550 = vrot.slane %v2549, 4
    %v2551 = vadd.f32 %v2549, %v2550
    %v2552 = vrot.slane %v2551, 2
    %v2553 = vadd.f32 %v2551, %v2552
    %v2554 = vrot.slane %v2553, 1
    %v2555 = vadd.f32 %v2553, %v2554
    %v2556 = vsel %vm215, %v2199, 0.0
    %v2557 = vrot.slane %v2556, 4
    %v2558 = vadd.f32 %v2556, %v2557
    %v2559 = vrot.slane %v2558, 2
    %v2560 = vadd.f32 %v2558, %v2559
    %v2561 = vrot.slane %v2560, 1
    %v2562 = vadd.f32 %v2560, %v2561
    %v2563 = vsel %vm215, %v2201, 0.0
    %v2564 = vrot.slane %v2563, 4
    %v2565 = vadd.f32 %v2563, %v2564
    %v2566 = vrot.slane %v2565, 2
    %v2567 = vadd.f32 %v2565, %v2566
    %v2568 = vrot.slane %v2567, 1
    %v2569 = vadd.f32 %v2567, %v2568
    %v2570 = vsel %vm215, %v2203, 0.0
    %v2571 = vrot.slane %v2570, 4
    %v2572 = vadd.f32 %v2570, %v2571
    %v2573 = vrot.slane %v2572, 2
    %v2574 = vadd.f32 %v2572, %v2573
    %v2575 = vrot.slane %v2574, 1
    %v2576 = vadd.f32 %v2574, %v2575
    %v2577 = vsel %vm215, %v2205, 0.0
    %v2578 = vrot.slane %v2577, 4
    %v2579 = vadd.f32 %v2577, %v2578
    %v2580 = vrot.slane %v2579, 2
    %v2581 = vadd.f32 %v2579, %v2580
    %v2582 = vrot.slane %v2581, 1
    %v2583 = vadd.f32 %v2581, %v2582
    %v2584 = vsel %vm215, %v2207, 0.0
    %v2585 = vrot.slane %v2584, 4
    %v2586 = vadd.f32 %v2584, %v2585
    %v2587 = vrot.slane %v2586, 2
    %v2588 = vadd.f32 %v2586, %v2587
    %v2589 = vrot.slane %v2588, 1
    %v2590 = vadd.f32 %v2588, %v2589
    %v2591 = vsel %vm215, %v2209, 0.0
    %v2592 = vrot.slane %v2591, 4
    %v2593 = vadd.f32 %v2591, %v2592
    %v2594 = vrot.slane %v2593, 2
    %v2595 = vadd.f32 %v2593, %v2594
    %v2596 = vrot.slane %v2595, 1
    %v2597 = vadd.f32 %v2595, %v2596
    %v2598 = vsel %vm215, %v2211, 0.0
    %v2599 = vrot.slane %v2598, 4
    %v2600 = vadd.f32 %v2598, %v2599
    %v2601 = vrot.slane %v2600, 2
    %v2602 = vadd.f32 %v2600, %v2601
    %v2603 = vrot.slane %v2602, 1
    %v2604 = vadd.f32 %v2602, %v2603
    %v2605 = vsel %vm215, %v2213, 0.0
    %v2606 = vrot.slane %v2605, 4
    %v2607 = vadd.f32 %v2605, %v2606
    %v2608 = vrot.slane %v2607, 2
    %v2609 = vadd.f32 %v2607, %v2608
    %v2610 = vrot.slane %v2609, 1
    %v2611 = vadd.f32 %v2609, %v2610
    %v2612 = vsel %vm215, %v2215, 0.0
    %v2613 = vrot.slane %v2612, 4
    %v2614 = vadd.f32 %v2612, %v2613
    %v2615 = vrot.slane %v2614, 2
    %v2616 = vadd.f32 %v2614, %v2615
    %v2617 = vrot.slane %v2616, 1
    %v2618 = vadd.f32 %v2616, %v2617
    %v2619 = vsel %vm215, %v2217, 0.0
    %v2620 = vrot.slane %v2619, 4
    %v2621 = vadd.f32 %v2619, %v2620
    %v2622 = vrot.slane %v2621, 2
    %v2623 = vadd.f32 %v2621, %v2622
    %v2624 = vrot.slane %v2623, 1
    %v2625 = vadd.f32 %v2623, %v2624
    %v2626 = vsel %vm215, %v2219, 0.0
    %v2627 = vrot.slane %v2626, 4
    %v2628 = vadd.f32 %v2626, %v2627
    %v2629 = vrot.slane %v2628, 2
    %v2630 = vadd.f32 %v2628, %v2629
    %v2631 = vrot.slane %v2630, 1
    %v2632 = vadd.f32 %v2630, %v2631
    %v2633 = vsel %vm215, %v2221, 0.0
    %v2634 = vrot.slane %v2633, 4
    %v2635 = vadd.f32 %v2633, %v2634
    %v2636 = vrot.slane %v2635, 2
    %v2637 = vadd.f32 %v2635, %v2636
    %v2638 = vrot.slane %v2637, 1
    %v2639 = vadd.f32 %v2637, %v2638
    %v2640 = vsel %vm215, %v2223, 0.0
    %v2641 = vrot.slane %v2640, 4
    %v2642 = vadd.f32 %v2640, %v2641
    %v2643 = vrot.slane %v2642, 2
    %v2644 = vadd.f32 %v2642, %v2643
    %v2645 = vrot.slane %v2644, 1
    %v2646 = vadd.f32 %v2644, %v2645
    %v2647 = vsel %vm215, %v2225, 0.0
    %v2648 = vrot.slane %v2647, 4
    %v2649 = vadd.f32 %v2647, %v2648
    %v2650 = vrot.slane %v2649, 2
    %v2651 = vadd.f32 %v2649, %v2650
    %v2652 = vrot.slane %v2651, 1
    %v2653 = vadd.f32 %v2651, %v2652
    %v2654 = vsel %vm215, %v2227, 0.0
    %v2655 = vrot.slane %v2654, 4
    %v2656 = vadd.f32 %v2654, %v2655
    %v2657 = vrot.slane %v2656, 2
    %v2658 = vadd.f32 %v2656, %v2657
    %v2659 = vrot.slane %v2658, 1
    %v2660 = vadd.f32 %v2658, %v2659
    %v2661 = vsel %vm215, %v2229, 0.0
    %v2662 = vrot.slane %v2661, 4
    %v2663 = vadd.f32 %v2661, %v2662
    %v2664 = vrot.slane %v2663, 2
    %v2665 = vadd.f32 %v2663, %v2664
    %v2666 = vrot.slane %v2665, 1
    %v2667 = vadd.f32 %v2665, %v2666
    %v2668 = vsel %vm215, %v2231, 0.0
    %v2669 = vrot.slane %v2668, 4
    %v2670 = vadd.f32 %v2668, %v2669
    %v2671 = vrot.slane %v2670, 2
    %v2672 = vadd.f32 %v2670, %v2671
    %v2673 = vrot.slane %v2672, 1
    %v2674 = vadd.f32 %v2672, %v2673
    %v2675 = vsel %vm215, %v2233, 0.0
    %v2676 = vrot.slane %v2675, 4
    %v2677 = vadd.f32 %v2675, %v2676
    %v2678 = vrot.slane %v2677, 2
    %v2679 = vadd.f32 %v2677, %v2678
    %v2680 = vrot.slane %v2679, 1
    %v2681 = vadd.f32 %v2679, %v2680
    %v2682 = vrcp.pop %v2240
    %v2683 = vrcp.pop %v2247
    %v2684 = vrcp.pop %v2254
    %v2685 = vrcp.pop %v2261
    %v2686 = vrcp.pop %v2268
    %v2687 = vrcp.pop %v2275
    %v2688 = vrcp.pop %v2282
    %v2689 = vrcp.pop %v2289
    %v2690 = vrcp.pop %v2296
    %v2691 = vrcp.pop %v2303
    %v2692 = vrcp.pop %v2310
    %v2693 = vrcp.pop %v2317
    %v2694 = vrcp.pop %v2324
    %v2695 = vrcp.pop %v2331
    %v2696 = vrcp.pop %v2338
    %v2697 = vrcp.pop %v2345
    %v2698 = vrcp.pop %v2352
    %v2699 = vrcp.pop %v2359
    %v2700 = vrcp.pop %v2366
    %v2701 = vrcp.pop %v2373
    %v2702 = vrcp.pop %v2380
    %v2703 = vrcp.pop %v2387
    %v2704 = vrcp.pop %v2394
    %v2705 = vrcp.pop %v2401
    %v2706 = vrcp.pop %v2408
    %v2707 = vrcp.pop %v2415
    %v2708 = vrcp.pop %v2422
    %v2709 = vrcp.pop %v2429
    %v2710 = vrcp.pop %v2436
    %v2711 = vrcp.pop %v2443
    %v2712 = vrcp.pop %v2450
    %v2713 = vrcp.pop %v2457
    %v2714 = vrcp.pop %v2464
    %v2715 = vrcp.pop %v2471
    %v2716 = vrcp.pop %v2478
    %v2717 = vrcp.pop %v2485
    %v2718 = vrcp.pop %v2492
    %v2719 = vrcp.pop %v2499
    %v2720 = vrcp.pop %v2506
    %v2721 = vrcp.pop %v2513
    %v2722 = vrcp.pop %v2520
    %v2723 = vrcp.pop %v2527
    %v2724 = vrcp.pop %v2534
    %v2725 = vrcp.pop %v2541
    %v2726 = vrcp.pop %v2548
    %v2727 = vrcp.pop %v2555
    %v2728 = vrcp.pop %v2562
    %v2729 = vrcp.pop %v2569
    %v2730 = vrcp.pop %v2576
    %v2731 = vrcp.pop %v2583
    %v2732 = vrcp.pop %v2590
    %v2733 = vrcp.pop %v2597
    %v2734 = vrcp.pop %v2604
    %v2735 = vrcp.pop %v2611
    %v2736 = vrcp.pop %v2618
    %v2737 = vrcp.pop %v2625
    %v2738 = vrcp.pop %v2632
    %v2739 = vrcp.pop %v2639
    %v2740 = vrcp.pop %v2646
    %v2741 = vrcp.pop %v2653
    %v2742 = vrcp.pop %v2660
    %v2743 = vrcp.pop %v2667
    %v2744 = vrcp.pop %v2674
    %v2745 = vrcp.pop %v2681
    %v2746 = vmul.f32 %v2107, %v2682
    %v2747 = vmul.f32 %v2109, %v2683
    %v2748 = vmul.f32 %v2111, %v2684
    %v2749 = vmul.f32 %v2113, %v2685
    %v2750 = vmul.f32 %v2115, %v2686
    %v2751 = vmul.f32 %v2117, %v2687
    %v2752 = vmul.f32 %v2119, %v2688
    %v2753 = vmul.f32 %v2121, %v2689
    %v2754 = vmul.f32 %v2123, %v2690
    %v2755 = vmul.f32 %v2125, %v2691
    %v2756 = vmul.f32 %v2127, %v2692
    %v2757 = vmul.f32 %v2129, %v2693
    %v2758 = vmul.f32 %v2131, %v2694
    %v2759 = vmul.f32 %v2133, %v2695
    %v2760 = vmul.f32 %v2135, %v2696
    %v2761 = vmul.f32 %v2137, %v2697
    %v2762 = vmul.f32 %v2139, %v2698
    %v2763 = vmul.f32 %v2141, %v2699
    %v2764 = vmul.f32 %v2143, %v2700
    %v2765 = vmul.f32 %v2145, %v2701
    %v2766 = vmul.f32 %v2147, %v2702
    %v2767 = vmul.f32 %v2149, %v2703
    %v2768 = vmul.f32 %v2151, %v2704
    %v2769 = vmul.f32 %v2153, %v2705
    %v2770 = vmul.f32 %v2155, %v2706
    %v2771 = vmul.f32 %v2157, %v2707
    %v2772 = vmul.f32 %v2159, %v2708
    %v2773 = vmul.f32 %v2161, %v2709
    %v2774 = vmul.f32 %v2163, %v2710
    %v2775 = vmul.f32 %v2165, %v2711
    %v2776 = vmul.f32 %v2167, %v2712
    %v2777 = vmul.f32 %v2169, %v2713
    %v2778 = vmul.f32 %v2171, %v2714
    %v2779 = vmul.f32 %v2173, %v2715
    %v2780 = vmul.f32 %v2175, %v2716
    %v2781 = vmul.f32 %v2177, %v2717
    %v2782 = vmul.f32 %v2179, %v2718
    %v2783 = vmul.f32 %v2181, %v2719
    %v2784 = vmul.f32 %v2183, %v2720
    %v2785 = vmul.f32 %v2185, %v2721
    %v2786 = vmul.f32 %v2187, %v2722
    %v2787 = vmul.f32 %v2189, %v2723
    %v2788 = vmul.f32 %v2191, %v2724
    %v2789 = vmul.f32 %v2193, %v2725
    %v2790 = vmul.f32 %v2195, %v2726
    %v2791 = vmul.f32 %v2197, %v2727
    %v2792 = vmul.f32 %v2199, %v2728
    %v2793 = vmul.f32 %v2201, %v2729
    %v2794 = vmul.f32 %v2203, %v2730
    %v2795 = vmul.f32 %v2205, %v2731
    %v2796 = vmul.f32 %v2207, %v2732
    %v2797 = vmul.f32 %v2209, %v2733
    %v2798 = vmul.f32 %v2211, %v2734
    %v2799 = vmul.f32 %v2213, %v2735
    %v2800 = vmul.f32 %v2215, %v2736
    %v2801 = vmul.f32 %v2217, %v2737
    %v2802 = vmul.f32 %v2219, %v2738
    %v2803 = vmul.f32 %v2221, %v2739
    %v2804 = vmul.f32 %v2223, %v2740
    %v2805 = vmul.f32 %v2225, %v2741
    %v2806 = vmul.f32 %v2227, %v2742
    %v2807 = vmul.f32 %v2229, %v2743
    %v2808 = vmul.f32 %v2231, %v2744
    %v2809 = vmul.f32 %v2233, %v2745
    %2810 = vrot.lane.b32.xlu0 %v263, 64
    %v2811 = vpop.permute.xlu0 %2810
    %2812 = vrot.lane.b32.xlu0 %v266, 64
    %v2813 = vpop.permute.xlu0 %2812
    %2814 = vrot.lane.b32.xlu0 %v271, 64
    %v2815 = vpop.permute.xlu0 %2814
    %2816 = vrot.lane.b32.xlu0 %v274, 64
    %v2817 = vpop.permute.xlu0 %2816
    %2818 = vrot.lane.b32.xlu0 %v279, 64
    %v2819 = vpop.permute.xlu0 %2818
    %2820 = vrot.lane.b32.xlu0 %v282, 64
    %v2821 = vpop.permute.xlu0 %2820
    %2822 = vrot.lane.b32.xlu0 %v287, 64
    %v2823 = vpop.permute.xlu0 %2822
    %2824 = vrot.lane.b32.xlu0 %v290, 64
    %v2825 = vpop.permute.xlu0 %2824
    %v2834 = vmul.f32 %v2746, %v2811
    %v2835 = vmul.f32 %v2747, %v2811
    %v2836 = vmul.f32 %v2748, %v2811
    %v2837 = vmul.f32 %v2749, %v2811
    %v2838 = vmul.f32 %v2750, %v2811
    %v2839 = vmul.f32 %v2751, %v2811
    %v2840 = vmul.f32 %v2752, %v2811
    %v2841 = vmul.f32 %v2753, %v2811
    %v2842 = vmul.f32 %v2754, %v2813
    %v2843 = vmul.f32 %v2755, %v2813
    %v2844 = vmul.f32 %v2756, %v2813
    %v2845 = vmul.f32 %v2757, %v2813
    %v2846 = vmul.f32 %v2758, %v2813
    %v2847 = vmul.f32 %v2759, %v2813
    %v2848 = vmul.f32 %v2760, %v2813
    %v2849 = vmul.f32 %v2761, %v2813
    %v2850 = vmul.f32 %v2762, %v2815
    %v2851 = vmul.f32 %v2763, %v2815
    %v2852 = vmul.f32 %v2764, %v2815
    %v2853 = vmul.f32 %v2765, %v2815
    %v2854 = vmul.f32 %v2766, %v2815
    %v2855 = vmul.f32 %v2767, %v2815
    %v2856 = vmul.f32 %v2768, %v2815
    %v2857 = vmul.f32 %v2769, %v2815
    %v2858 = vmul.f32 %v2770, %v2817
    %v2859 = vmul.f32 %v2771, %v2817
    %v2860 = vmul.f32 %v2772, %v2817
    %v2861 = vmul.f32 %v2773, %v2817
    %v2862 = vmul.f32 %v2774, %v2817
    %v2863 = vmul.f32 %v2775, %v2817
    %v2864 = vmul.f32 %v2776, %v2817
    %v2865 = vmul.f32 %v2777, %v2817
    %v2866 = vmul.f32 %v2778, %v2819
    %v2867 = vmul.f32 %v2779, %v2819
    %v2868 = vmul.f32 %v2780, %v2819
    %v2869 = vmul.f32 %v2781, %v2819
    %v2870 = vmul.f32 %v2782, %v2819
    %v2871 = vmul.f32 %v2783, %v2819
    %v2872 = vmul.f32 %v2784, %v2819
    %v2873 = vmul.f32 %v2785, %v2819
    %v2874 = vmul.f32 %v2786, %v2821
    %v2875 = vmul.f32 %v2787, %v2821
    %v2876 = vmul.f32 %v2788, %v2821
    %v2877 = vmul.f32 %v2789, %v2821
    %v2878 = vmul.f32 %v2790, %v2821
    %v2879 = vmul.f32 %v2791, %v2821
    %v2880 = vmul.f32 %v2792, %v2821
    %v2881 = vmul.f32 %v2793, %v2821
    %v2882 = vmul.f32 %v2794, %v2823
    %v2883 = vmul.f32 %v2795, %v2823
    %v2884 = vmul.f32 %v2796, %v2823
    %v2885 = vmul.f32 %v2797, %v2823
    %v2886 = vmul.f32 %v2798, %v2823
    %v2887 = vmul.f32 %v2799, %v2823
    %v2888 = vmul.f32 %v2800, %v2823
    %v2889 = vmul.f32 %v2801, %v2823
    %v2890 = vmul.f32 %v2802, %v2825
    %v2891 = vmul.f32 %v2803, %v2825
    %v2892 = vmul.f32 %v2804, %v2825
    %v2893 = vmul.f32 %v2805, %v2825
    %v2894 = vmul.f32 %v2806, %v2825
    %v2895 = vmul.f32 %v2807, %v2825
    %v2896 = vmul.f32 %v2808, %v2825
    %v2897 = vmul.f32 %v2809, %v2825
    %v2898 = vsel %vm215, %v2834, 0.0
    %v2899 = vrot.slane %v2898, 4
    %v2900 = vadd.f32 %v2898, %v2899
    %v2901 = vrot.slane %v2900, 2
    %v2902 = vadd.f32 %v2900, %v2901
    %v2903 = vrot.slane %v2902, 1
    %v2904 = vadd.f32 %v2902, %v2903
    %v2905 = vsel %vm215, %v2835, 0.0
    %v2906 = vrot.slane %v2905, 4
    %v2907 = vadd.f32 %v2905, %v2906
    %v2908 = vrot.slane %v2907, 2
    %v2909 = vadd.f32 %v2907, %v2908
    %v2910 = vrot.slane %v2909, 1
    %v2911 = vadd.f32 %v2909, %v2910
    %v2912 = vsel %vm215, %v2836, 0.0
    %v2913 = vrot.slane %v2912, 4
    %v2914 = vadd.f32 %v2912, %v2913
    %v2915 = vrot.slane %v2914, 2
    %v2916 = vadd.f32 %v2914, %v2915
    %v2917 = vrot.slane %v2916, 1
    %v2918 = vadd.f32 %v2916, %v2917
    %v2919 = vsel %vm215, %v2837, 0.0
    %v2920 = vrot.slane %v2919, 4
    %v2921 = vadd.f32 %v2919, %v2920
    %v2922 = vrot.slane %v2921, 2
    %v2923 = vadd.f32 %v2921, %v2922
    %v2924 = vrot.slane %v2923, 1
    %v2925 = vadd.f32 %v2923, %v2924
    %v2926 = vsel %vm215, %v2838, 0.0
    %v2927 = vrot.slane %v2926, 4
    %v2928 = vadd.f32 %v2926, %v2927
    %v2929 = vrot.slane %v2928, 2
    %v2930 = vadd.f32 %v2928, %v2929
    %v2931 = vrot.slane %v2930, 1
    %v2932 = vadd.f32 %v2930, %v2931
    %v2933 = vsel %vm215, %v2839, 0.0
    %v2934 = vrot.slane %v2933, 4
    %v2935 = vadd.f32 %v2933, %v2934
    %v2936 = vrot.slane %v2935, 2
    %v2937 = vadd.f32 %v2935, %v2936
    %v2938 = vrot.slane %v2937, 1
    %v2939 = vadd.f32 %v2937, %v2938
    %v2940 = vsel %vm215, %v2840, 0.0
    %v2941 = vrot.slane %v2940, 4
    %v2942 = vadd.f32 %v2940, %v2941
    %v2943 = vrot.slane %v2942, 2
    %v2944 = vadd.f32 %v2942, %v2943
    %v2945 = vrot.slane %v2944, 1
    %v2946 = vadd.f32 %v2944, %v2945
    %v2947 = vsel %vm215, %v2841, 0.0
    %v2948 = vrot.slane %v2947, 4
    %v2949 = vadd.f32 %v2947, %v2948
    %v2950 = vrot.slane %v2949, 2
    %v2951 = vadd.f32 %v2949, %v2950
    %v2952 = vrot.slane %v2951, 1
    %v2953 = vadd.f32 %v2951, %v2952
    %v2954 = vsel %vm215, %v2842, 0.0
    %v2955 = vrot.slane %v2954, 4
    %v2956 = vadd.f32 %v2954, %v2955
    %v2957 = vrot.slane %v2956, 2
    %v2958 = vadd.f32 %v2956, %v2957
    %v2959 = vrot.slane %v2958, 1
    %v2960 = vadd.f32 %v2958, %v2959
    %v2961 = vsel %vm215, %v2843, 0.0
    %v2962 = vrot.slane %v2961, 4
    %v2963 = vadd.f32 %v2961, %v2962
    %v2964 = vrot.slane %v2963, 2
    %v2965 = vadd.f32 %v2963, %v2964
    %v2966 = vrot.slane %v2965, 1
    %v2967 = vadd.f32 %v2965, %v2966
    %v2968 = vsel %vm215, %v2844, 0.0
    %v2969 = vrot.slane %v2968, 4
    %v2970 = vadd.f32 %v2968, %v2969
    %v2971 = vrot.slane %v2970, 2
    %v2972 = vadd.f32 %v2970, %v2971
    %v2973 = vrot.slane %v2972, 1
    %v2974 = vadd.f32 %v2972, %v2973
    %v2975 = vsel %vm215, %v2845, 0.0
    %v2976 = vrot.slane %v2975, 4
    %v2977 = vadd.f32 %v2975, %v2976
    %v2978 = vrot.slane %v2977, 2
    %v2979 = vadd.f32 %v2977, %v2978
    %v2980 = vrot.slane %v2979, 1
    %v2981 = vadd.f32 %v2979, %v2980
    %v2982 = vsel %vm215, %v2846, 0.0
    %v2983 = vrot.slane %v2982, 4
    %v2984 = vadd.f32 %v2982, %v2983
    %v2985 = vrot.slane %v2984, 2
    %v2986 = vadd.f32 %v2984, %v2985
    %v2987 = vrot.slane %v2986, 1
    %v2988 = vadd.f32 %v2986, %v2987
    %v2989 = vsel %vm215, %v2847, 0.0
    %v2990 = vrot.slane %v2989, 4
    %v2991 = vadd.f32 %v2989, %v2990
    %v2992 = vrot.slane %v2991, 2
    %v2993 = vadd.f32 %v2991, %v2992
    %v2994 = vrot.slane %v2993, 1
    %v2995 = vadd.f32 %v2993, %v2994
    %v2996 = vsel %vm215, %v2848, 0.0
    %v2997 = vrot.slane %v2996, 4
    %v2998 = vadd.f32 %v2996, %v2997
    %v2999 = vrot.slane %v2998, 2
    %v3000 = vadd.f32 %v2998, %v2999
    %v3001 = vrot.slane %v3000, 1
    %v3002 = vadd.f32 %v3000, %v3001
    %v3003 = vsel %vm215, %v2849, 0.0
    %v3004 = vrot.slane %v3003, 4
    %v3005 = vadd.f32 %v3003, %v3004
    %v3006 = vrot.slane %v3005, 2
    %v3007 = vadd.f32 %v3005, %v3006
    %v3008 = vrot.slane %v3007, 1
    %v3009 = vadd.f32 %v3007, %v3008
    %v3010 = vsel %vm215, %v2850, 0.0
    %v3011 = vrot.slane %v3010, 4
    %v3012 = vadd.f32 %v3010, %v3011
    %v3013 = vrot.slane %v3012, 2
    %v3014 = vadd.f32 %v3012, %v3013
    %v3015 = vrot.slane %v3014, 1
    %v3016 = vadd.f32 %v3014, %v3015
    %v3017 = vsel %vm215, %v2851, 0.0
    %v3018 = vrot.slane %v3017, 4
    %v3019 = vadd.f32 %v3017, %v3018
    %v3020 = vrot.slane %v3019, 2
    %v3021 = vadd.f32 %v3019, %v3020
    %v3022 = vrot.slane %v3021, 1
    %v3023 = vadd.f32 %v3021, %v3022
    %v3024 = vsel %vm215, %v2852, 0.0
    %v3025 = vrot.slane %v3024, 4
    %v3026 = vadd.f32 %v3024, %v3025
    %v3027 = vrot.slane %v3026, 2
    %v3028 = vadd.f32 %v3026, %v3027
    %v3029 = vrot.slane %v3028, 1
    %v3030 = vadd.f32 %v3028, %v3029
    %v3031 = vsel %vm215, %v2853, 0.0
    %v3032 = vrot.slane %v3031, 4
    %v3033 = vadd.f32 %v3031, %v3032
    %v3034 = vrot.slane %v3033, 2
    %v3035 = vadd.f32 %v3033, %v3034
    %v3036 = vrot.slane %v3035, 1
    %v3037 = vadd.f32 %v3035, %v3036
    %v3038 = vsel %vm215, %v2854, 0.0
    %v3039 = vrot.slane %v3038, 4
    %v3040 = vadd.f32 %v3038, %v3039
    %v3041 = vrot.slane %v3040, 2
    %v3042 = vadd.f32 %v3040, %v3041
    %v3043 = vrot.slane %v3042, 1
    %v3044 = vadd.f32 %v3042, %v3043
    %v3045 = vsel %vm215, %v2855, 0.0
    %v3046 = vrot.slane %v3045, 4
    %v3047 = vadd.f32 %v3045, %v3046
    %v3048 = vrot.slane %v3047, 2
    %v3049 = vadd.f32 %v3047, %v3048
    %v3050 = vrot.slane %v3049, 1
    %v3051 = vadd.f32 %v3049, %v3050
    %v3052 = vsel %vm215, %v2856, 0.0
    %v3053 = vrot.slane %v3052, 4
    %v3054 = vadd.f32 %v3052, %v3053
    %v3055 = vrot.slane %v3054, 2
    %v3056 = vadd.f32 %v3054, %v3055
    %v3057 = vrot.slane %v3056, 1
    %v3058 = vadd.f32 %v3056, %v3057
    %v3059 = vsel %vm215, %v2857, 0.0
    %v3060 = vrot.slane %v3059, 4
    %v3061 = vadd.f32 %v3059, %v3060
    %v3062 = vrot.slane %v3061, 2
    %v3063 = vadd.f32 %v3061, %v3062
    %v3064 = vrot.slane %v3063, 1
    %v3065 = vadd.f32 %v3063, %v3064
    %v3066 = vsel %vm215, %v2858, 0.0
    %v3067 = vrot.slane %v3066, 4
    %v3068 = vadd.f32 %v3066, %v3067
    %v3069 = vrot.slane %v3068, 2
    %v3070 = vadd.f32 %v3068, %v3069
    %v3071 = vrot.slane %v3070, 1
    %v3072 = vadd.f32 %v3070, %v3071
    %v3073 = vsel %vm215, %v2859, 0.0
    %v3074 = vrot.slane %v3073, 4
    %v3075 = vadd.f32 %v3073, %v3074
    %v3076 = vrot.slane %v3075, 2
    %v3077 = vadd.f32 %v3075, %v3076
    %v3078 = vrot.slane %v3077, 1
    %v3079 = vadd.f32 %v3077, %v3078
    %v3080 = vsel %vm215, %v2860, 0.0
    %v3081 = vrot.slane %v3080, 4
    %v3082 = vadd.f32 %v3080, %v3081
    %v3083 = vrot.slane %v3082, 2
    %v3084 = vadd.f32 %v3082, %v3083
    %v3085 = vrot.slane %v3084, 1
    %v3086 = vadd.f32 %v3084, %v3085
    %v3087 = vsel %vm215, %v2861, 0.0
    %v3088 = vrot.slane %v3087, 4
    %v3089 = vadd.f32 %v3087, %v3088
    %v3090 = vrot.slane %v3089, 2
    %v3091 = vadd.f32 %v3089, %v3090
    %v3092 = vrot.slane %v3091, 1
    %v3093 = vadd.f32 %v3091, %v3092
    %v3094 = vsel %vm215, %v2862, 0.0
    %v3095 = vrot.slane %v3094, 4
    %v3096 = vadd.f32 %v3094, %v3095
    %v3097 = vrot.slane %v3096, 2
    %v3098 = vadd.f32 %v3096, %v3097
    %v3099 = vrot.slane %v3098, 1
    %v3100 = vadd.f32 %v3098, %v3099
    %v3101 = vsel %vm215, %v2863, 0.0
    %v3102 = vrot.slane %v3101, 4
    %v3103 = vadd.f32 %v3101, %v3102
    %v3104 = vrot.slane %v3103, 2
    %v3105 = vadd.f32 %v3103, %v3104
    %v3106 = vrot.slane %v3105, 1
    %v3107 = vadd.f32 %v3105, %v3106
    %v3108 = vsel %vm215, %v2864, 0.0
    %v3109 = vrot.slane %v3108, 4
    %v3110 = vadd.f32 %v3108, %v3109
    %v3111 = vrot.slane %v3110, 2
    %v3112 = vadd.f32 %v3110, %v3111
    %v3113 = vrot.slane %v3112, 1
    %v3114 = vadd.f32 %v3112, %v3113
    %v3115 = vsel %vm215, %v2865, 0.0
    %v3116 = vrot.slane %v3115, 4
    %v3117 = vadd.f32 %v3115, %v3116
    %v3118 = vrot.slane %v3117, 2
    %v3119 = vadd.f32 %v3117, %v3118
    %v3120 = vrot.slane %v3119, 1
    %v3121 = vadd.f32 %v3119, %v3120
    %v3122 = vsel %vm215, %v2866, 0.0
    %v3123 = vrot.slane %v3122, 4
    %v3124 = vadd.f32 %v3122, %v3123
    %v3125 = vrot.slane %v3124, 2
    %v3126 = vadd.f32 %v3124, %v3125
    %v3127 = vrot.slane %v3126, 1
    %v3128 = vadd.f32 %v3126, %v3127
    %v3129 = vsel %vm215, %v2867, 0.0
    %v3130 = vrot.slane %v3129, 4
    %v3131 = vadd.f32 %v3129, %v3130
    %v3132 = vrot.slane %v3131, 2
    %v3133 = vadd.f32 %v3131, %v3132
    %v3134 = vrot.slane %v3133, 1
    %v3135 = vadd.f32 %v3133, %v3134
    %v3136 = vsel %vm215, %v2868, 0.0
    %v3137 = vrot.slane %v3136, 4
    %v3138 = vadd.f32 %v3136, %v3137
    %v3139 = vrot.slane %v3138, 2
    %v3140 = vadd.f32 %v3138, %v3139
    %v3141 = vrot.slane %v3140, 1
    %v3142 = vadd.f32 %v3140, %v3141
    %v3143 = vsel %vm215, %v2869, 0.0
    %v3144 = vrot.slane %v3143, 4
    %v3145 = vadd.f32 %v3143, %v3144
    %v3146 = vrot.slane %v3145, 2
    %v3147 = vadd.f32 %v3145, %v3146
    %v3148 = vrot.slane %v3147, 1
    %v3149 = vadd.f32 %v3147, %v3148
    %v3150 = vsel %vm215, %v2870, 0.0
    %v3151 = vrot.slane %v3150, 4
    %v3152 = vadd.f32 %v3150, %v3151
    %v3153 = vrot.slane %v3152, 2
    %v3154 = vadd.f32 %v3152, %v3153
    %v3155 = vrot.slane %v3154, 1
    %v3156 = vadd.f32 %v3154, %v3155
    %v3157 = vsel %vm215, %v2871, 0.0
    %v3158 = vrot.slane %v3157, 4
    %v3159 = vadd.f32 %v3157, %v3158
    %v3160 = vrot.slane %v3159, 2
    %v3161 = vadd.f32 %v3159, %v3160
    %v3162 = vrot.slane %v3161, 1
    %v3163 = vadd.f32 %v3161, %v3162
    %v3164 = vsel %vm215, %v2872, 0.0
    %v3165 = vrot.slane %v3164, 4
    %v3166 = vadd.f32 %v3164, %v3165
    %v3167 = vrot.slane %v3166, 2
    %v3168 = vadd.f32 %v3166, %v3167
    %v3169 = vrot.slane %v3168, 1
    %v3170 = vadd.f32 %v3168, %v3169
    %v3171 = vsel %vm215, %v2873, 0.0
    %v3172 = vrot.slane %v3171, 4
    %v3173 = vadd.f32 %v3171, %v3172
    %v3174 = vrot.slane %v3173, 2
    %v3175 = vadd.f32 %v3173, %v3174
    %v3176 = vrot.slane %v3175, 1
    %v3177 = vadd.f32 %v3175, %v3176
    %v3178 = vsel %vm215, %v2874, 0.0
    %v3179 = vrot.slane %v3178, 4
    %v3180 = vadd.f32 %v3178, %v3179
    %v3181 = vrot.slane %v3180, 2
    %v3182 = vadd.f32 %v3180, %v3181
    %v3183 = vrot.slane %v3182, 1
    %v3184 = vadd.f32 %v3182, %v3183
    %v3185 = vsel %vm215, %v2875, 0.0
    %v3186 = vrot.slane %v3185, 4
    %v3187 = vadd.f32 %v3185, %v3186
    %v3188 = vrot.slane %v3187, 2
    %v3189 = vadd.f32 %v3187, %v3188
    %v3190 = vrot.slane %v3189, 1
    %v3191 = vadd.f32 %v3189, %v3190
    %v3192 = vsel %vm215, %v2876, 0.0
    %v3193 = vrot.slane %v3192, 4
    %v3194 = vadd.f32 %v3192, %v3193
    %v3195 = vrot.slane %v3194, 2
    %v3196 = vadd.f32 %v3194, %v3195
    %v3197 = vrot.slane %v3196, 1
    %v3198 = vadd.f32 %v3196, %v3197
    %v3199 = vsel %vm215, %v2877, 0.0
    %v3200 = vrot.slane %v3199, 4
    %v3201 = vadd.f32 %v3199, %v3200
    %v3202 = vrot.slane %v3201, 2
    %v3203 = vadd.f32 %v3201, %v3202
    %v3204 = vrot.slane %v3203, 1
    %v3205 = vadd.f32 %v3203, %v3204
    %v3206 = vsel %vm215, %v2878, 0.0
    %v3207 = vrot.slane %v3206, 4
    %v3208 = vadd.f32 %v3206, %v3207
    %v3209 = vrot.slane %v3208, 2
    %v3210 = vadd.f32 %v3208, %v3209
    %v3211 = vrot.slane %v3210, 1
    %v3212 = vadd.f32 %v3210, %v3211
    %v3213 = vsel %vm215, %v2879, 0.0
    %v3214 = vrot.slane %v3213, 4
    %v3215 = vadd.f32 %v3213, %v3214
    %v3216 = vrot.slane %v3215, 2
    %v3217 = vadd.f32 %v3215, %v3216
    %v3218 = vrot.slane %v3217, 1
    %v3219 = vadd.f32 %v3217, %v3218
    %v3220 = vsel %vm215, %v2880, 0.0
    %v3221 = vrot.slane %v3220, 4
    %v3222 = vadd.f32 %v3220, %v3221
    %v3223 = vrot.slane %v3222, 2
    %v3224 = vadd.f32 %v3222, %v3223
    %v3225 = vrot.slane %v3224, 1
    %v3226 = vadd.f32 %v3224, %v3225
    %v3227 = vsel %vm215, %v2881, 0.0
    %v3228 = vrot.slane %v3227, 4
    %v3229 = vadd.f32 %v3227, %v3228
    %v3230 = vrot.slane %v3229, 2
    %v3231 = vadd.f32 %v3229, %v3230
    %v3232 = vrot.slane %v3231, 1
    %v3233 = vadd.f32 %v3231, %v3232
    %v3234 = vsel %vm215, %v2882, 0.0
    %v3235 = vrot.slane %v3234, 4
    %v3236 = vadd.f32 %v3234, %v3235
    %v3237 = vrot.slane %v3236, 2
    %v3238 = vadd.f32 %v3236, %v3237
    %v3239 = vrot.slane %v3238, 1
    %v3240 = vadd.f32 %v3238, %v3239
    %v3241 = vsel %vm215, %v2883, 0.0
    %v3242 = vrot.slane %v3241, 4
    %v3243 = vadd.f32 %v3241, %v3242
    %v3244 = vrot.slane %v3243, 2
    %v3245 = vadd.f32 %v3243, %v3244
    %v3246 = vrot.slane %v3245, 1
    %v3247 = vadd.f32 %v3245, %v3246
    %v3248 = vsel %vm215, %v2884, 0.0
    %v3249 = vrot.slane %v3248, 4
    %v3250 = vadd.f32 %v3248, %v3249
    %v3251 = vrot.slane %v3250, 2
    %v3252 = vadd.f32 %v3250, %v3251
    %v3253 = vrot.slane %v3252, 1
    %v3254 = vadd.f32 %v3252, %v3253
    %v3255 = vsel %vm215, %v2885, 0.0
    %v3256 = vrot.slane %v3255, 4
    %v3257 = vadd.f32 %v3255, %v3256
    %v3258 = vrot.slane %v3257, 2
    %v3259 = vadd.f32 %v3257, %v3258
    %v3260 = vrot.slane %v3259, 1
    %v3261 = vadd.f32 %v3259, %v3260
    %v3262 = vsel %vm215, %v2886, 0.0
    %v3263 = vrot.slane %v3262, 4
    %v3264 = vadd.f32 %v3262, %v3263
    %v3265 = vrot.slane %v3264, 2
    %v3266 = vadd.f32 %v3264, %v3265
    %v3267 = vrot.slane %v3266, 1
    %v3268 = vadd.f32 %v3266, %v3267
    %v3269 = vsel %vm215, %v2887, 0.0
    %v3270 = vrot.slane %v3269, 4
    %v3271 = vadd.f32 %v3269, %v3270
    %v3272 = vrot.slane %v3271, 2
    %v3273 = vadd.f32 %v3271, %v3272
    %v3274 = vrot.slane %v3273, 1
    %v3275 = vadd.f32 %v3273, %v3274
    %v3276 = vsel %vm215, %v2888, 0.0
    %v3277 = vrot.slane %v3276, 4
    %v3278 = vadd.f32 %v3276, %v3277
    %v3279 = vrot.slane %v3278, 2
    %v3280 = vadd.f32 %v3278, %v3279
    %v3281 = vrot.slane %v3280, 1
    %v3282 = vadd.f32 %v3280, %v3281
    %v3283 = vsel %vm215, %v2889, 0.0
    %v3284 = vrot.slane %v3283, 4
    %v3285 = vadd.f32 %v3283, %v3284
    %v3286 = vrot.slane %v3285, 2
    %v3287 = vadd.f32 %v3285, %v3286
    %v3288 = vrot.slane %v3287, 1
    %v3289 = vadd.f32 %v3287, %v3288
    %v3290 = vsel %vm215, %v2890, 0.0
    %v3291 = vrot.slane %v3290, 4
    %v3292 = vadd.f32 %v3290, %v3291
    %v3293 = vrot.slane %v3292, 2
    %v3294 = vadd.f32 %v3292, %v3293
    %v3295 = vrot.slane %v3294, 1
    %v3296 = vadd.f32 %v3294, %v3295
    %v3297 = vsel %vm215, %v2891, 0.0
    %v3298 = vrot.slane %v3297, 4
    %v3299 = vadd.f32 %v3297, %v3298
    %v3300 = vrot.slane %v3299, 2
    %v3301 = vadd.f32 %v3299, %v3300
    %v3302 = vrot.slane %v3301, 1
    %v3303 = vadd.f32 %v3301, %v3302
    %v3304 = vsel %vm215, %v2892, 0.0
    %v3305 = vrot.slane %v3304, 4
    %v3306 = vadd.f32 %v3304, %v3305
    %v3307 = vrot.slane %v3306, 2
    %v3308 = vadd.f32 %v3306, %v3307
    %v3309 = vrot.slane %v3308, 1
    %v3310 = vadd.f32 %v3308, %v3309
    %v3311 = vsel %vm215, %v2893, 0.0
    %v3312 = vrot.slane %v3311, 4
    %v3313 = vadd.f32 %v3311, %v3312
    %v3314 = vrot.slane %v3313, 2
    %v3315 = vadd.f32 %v3313, %v3314
    %v3316 = vrot.slane %v3315, 1
    %v3317 = vadd.f32 %v3315, %v3316
    %v3318 = vsel %vm215, %v2894, 0.0
    %v3319 = vrot.slane %v3318, 4
    %v3320 = vadd.f32 %v3318, %v3319
    %v3321 = vrot.slane %v3320, 2
    %v3322 = vadd.f32 %v3320, %v3321
    %v3323 = vrot.slane %v3322, 1
    %v3324 = vadd.f32 %v3322, %v3323
    %v3325 = vsel %vm215, %v2895, 0.0
    %v3326 = vrot.slane %v3325, 4
    %v3327 = vadd.f32 %v3325, %v3326
    %v3328 = vrot.slane %v3327, 2
    %v3329 = vadd.f32 %v3327, %v3328
    %v3330 = vrot.slane %v3329, 1
    %v3331 = vadd.f32 %v3329, %v3330
    %v3332 = vsel %vm215, %v2896, 0.0
    %v3333 = vrot.slane %v3332, 4
    %v3334 = vadd.f32 %v3332, %v3333
    %v3335 = vrot.slane %v3334, 2
    %v3336 = vadd.f32 %v3334, %v3335
    %v3337 = vrot.slane %v3336, 1
    %v3338 = vadd.f32 %v3336, %v3337
    %v3339 = vsel %vm215, %v2897, 0.0
    %v3340 = vrot.slane %v3339, 4
    %v3341 = vadd.f32 %v3339, %v3340
    %v3342 = vrot.slane %v3341, 2
    %v3343 = vadd.f32 %v3341, %v3342
    %v3344 = vrot.slane %v3343, 1
    %v3345 = vadd.f32 %v3343, %v3344
    %v3346 = vpack.c.bf16 %v2904, %v2904
    %v3347 = vpack.c.bf16 %v2911, %v2911
    %v3348 = vpack.c.bf16 %v2918, %v2918
    %v3349 = vpack.c.bf16 %v2925, %v2925
    %v3350 = vpack.c.bf16 %v2932, %v2932
    %v3351 = vpack.c.bf16 %v2939, %v2939
    %v3352 = vpack.c.bf16 %v2946, %v2946
    %v3353 = vpack.c.bf16 %v2953, %v2953
    %v3354 = vpack.c.bf16 %v2960, %v2960
    %v3355 = vpack.c.bf16 %v2967, %v2967
    %v3356 = vpack.c.bf16 %v2974, %v2974
    %v3357 = vpack.c.bf16 %v2981, %v2981
    %v3358 = vpack.c.bf16 %v2988, %v2988
    %v3359 = vpack.c.bf16 %v2995, %v2995
    %v3360 = vpack.c.bf16 %v3002, %v3002
    %v3361 = vpack.c.bf16 %v3009, %v3009
    %v3362 = vpack.c.bf16 %v3016, %v3016
    %v3363 = vpack.c.bf16 %v3023, %v3023
    %v3364 = vpack.c.bf16 %v3030, %v3030
    %v3365 = vpack.c.bf16 %v3037, %v3037
    %v3366 = vpack.c.bf16 %v3044, %v3044
    %v3367 = vpack.c.bf16 %v3051, %v3051
    %v3368 = vpack.c.bf16 %v3058, %v3058
    %v3369 = vpack.c.bf16 %v3065, %v3065
    %v3370 = vpack.c.bf16 %v3072, %v3072
    %v3371 = vpack.c.bf16 %v3079, %v3079
    %v3372 = vpack.c.bf16 %v3086, %v3086
    %v3373 = vpack.c.bf16 %v3093, %v3093
    %v3374 = vpack.c.bf16 %v3100, %v3100
    %v3375 = vpack.c.bf16 %v3107, %v3107
    %v3376 = vpack.c.bf16 %v3114, %v3114
    %v3377 = vpack.c.bf16 %v3121, %v3121
    %v3378 = vpack.c.bf16 %v3128, %v3128
    %v3379 = vpack.c.bf16 %v3135, %v3135
    %v3380 = vpack.c.bf16 %v3142, %v3142
    %v3381 = vpack.c.bf16 %v3149, %v3149
    %v3382 = vpack.c.bf16 %v3156, %v3156
    %v3383 = vpack.c.bf16 %v3163, %v3163
    %v3384 = vpack.c.bf16 %v3170, %v3170
    %v3385 = vpack.c.bf16 %v3177, %v3177
    %v3386 = vpack.c.bf16 %v3184, %v3184
    %v3387 = vpack.c.bf16 %v3191, %v3191
    %v3388 = vpack.c.bf16 %v3198, %v3198
    %v3389 = vpack.c.bf16 %v3205, %v3205
    %v3390 = vpack.c.bf16 %v3212, %v3212
    %v3391 = vpack.c.bf16 %v3219, %v3219
    %v3392 = vpack.c.bf16 %v3226, %v3226
    %v3393 = vpack.c.bf16 %v3233, %v3233
    %v3394 = vpack.c.bf16 %v3240, %v3240
    %v3395 = vpack.c.bf16 %v3247, %v3247
    %v3396 = vpack.c.bf16 %v3254, %v3254
    %v3397 = vpack.c.bf16 %v3261, %v3261
    %v3398 = vpack.c.bf16 %v3268, %v3268
    %v3399 = vpack.c.bf16 %v3275, %v3275
    %v3400 = vpack.c.bf16 %v3282, %v3282
    %v3401 = vpack.c.bf16 %v3289, %v3289
    %v3402 = vpack.c.bf16 %v3296, %v3296
    %v3403 = vpack.c.bf16 %v3303, %v3303
    %v3404 = vpack.c.bf16 %v3310, %v3310
    %v3405 = vpack.c.bf16 %v3317, %v3317
    %v3406 = vpack.c.bf16 %v3324, %v3324
    %v3407 = vpack.c.bf16 %v3331, %v3331
    %v3408 = vpack.c.bf16 %v3338, %v3338
    %v3409 = vpack.c.bf16 %v3345, %v3345
    %v3411 = vlaneseq
    %v3412 = vshrl.u32 %v3411, 7
    %v3413 = vsub.s32 0, %v3412
    %v3414 = vrot.slane %v174, %v3413
    %v3480 = vunpack.c.l.b16 %v3346
    %v3481 = vunpack.c.l.b16 %v3347
    %v3482 = vunpack.c.l.b16 %v3348
    %v3483 = vunpack.c.l.b16 %v3349
    %v3484 = vunpack.c.l.b16 %v3350
    %v3485 = vunpack.c.l.b16 %v3351
    %v3486 = vunpack.c.l.b16 %v3352
    %v3487 = vunpack.c.l.b16 %v3353
    %v3488 = vunpack.c.l.b16 %v3354
    %v3489 = vunpack.c.l.b16 %v3355
    %v3490 = vunpack.c.l.b16 %v3356
    %v3491 = vunpack.c.l.b16 %v3357
    %v3492 = vunpack.c.l.b16 %v3358
    %v3493 = vunpack.c.l.b16 %v3359
    %v3494 = vunpack.c.l.b16 %v3360
    %v3495 = vunpack.c.l.b16 %v3361
    %v3496 = vunpack.c.l.b16 %v3362
    %v3497 = vunpack.c.l.b16 %v3363
    %v3498 = vunpack.c.l.b16 %v3364
    %v3499 = vunpack.c.l.b16 %v3365
    %v3500 = vunpack.c.l.b16 %v3366
    %v3501 = vunpack.c.l.b16 %v3367
    %v3502 = vunpack.c.l.b16 %v3368
    %v3503 = vunpack.c.l.b16 %v3369
    %v3504 = vunpack.c.l.b16 %v3370
    %v3505 = vunpack.c.l.b16 %v3371
    %v3506 = vunpack.c.l.b16 %v3372
    %v3507 = vunpack.c.l.b16 %v3373
    %v3508 = vunpack.c.l.b16 %v3374
    %v3509 = vunpack.c.l.b16 %v3375
    %v3510 = vunpack.c.l.b16 %v3376
    %v3511 = vunpack.c.l.b16 %v3377
    %v3512 = vunpack.c.l.b16 %v3378
    %v3513 = vunpack.c.l.b16 %v3379
    %v3514 = vunpack.c.l.b16 %v3380
    %v3515 = vunpack.c.l.b16 %v3381
    %v3516 = vunpack.c.l.b16 %v3382
    %v3517 = vunpack.c.l.b16 %v3383
    %v3518 = vunpack.c.l.b16 %v3384
    %v3519 = vunpack.c.l.b16 %v3385
    %v3520 = vunpack.c.l.b16 %v3386
    %v3521 = vunpack.c.l.b16 %v3387
    %v3522 = vunpack.c.l.b16 %v3388
    %v3523 = vunpack.c.l.b16 %v3389
    %v3524 = vunpack.c.l.b16 %v3390
    %v3525 = vunpack.c.l.b16 %v3391
    %v3526 = vunpack.c.l.b16 %v3392
    %v3527 = vunpack.c.l.b16 %v3393
    %v3528 = vunpack.c.l.b16 %v3394
    %v3529 = vunpack.c.l.b16 %v3395
    %v3530 = vunpack.c.l.b16 %v3396
    %v3531 = vunpack.c.l.b16 %v3397
    %v3532 = vunpack.c.l.b16 %v3398
    %v3533 = vunpack.c.l.b16 %v3399
    %v3534 = vunpack.c.l.b16 %v3400
    %v3535 = vunpack.c.l.b16 %v3401
    %v3536 = vunpack.c.l.b16 %v3402
    %v3537 = vunpack.c.l.b16 %v3403
    %v3538 = vunpack.c.l.b16 %v3404
    %v3539 = vunpack.c.l.b16 %v3405
    %v3540 = vunpack.c.l.b16 %v3406
    %v3541 = vunpack.c.l.b16 %v3407
    %v3542 = vunpack.c.l.b16 %v3408
    %v3543 = vunpack.c.l.b16 %v3409
    %vm3544 = vcmask 1041409
    %v3545 = vsel %vm3544, %v3481, %v3480
    %vm3546 = vcmask 1042434
    %v3547 = vsel %vm3546, %v3482, %v3545
    %vm3548 = vcmask 1043459
    %v3549 = vsel %vm3548, %v3483, %v3547
    %vm3550 = vcmask 1044484
    %v3551 = vsel %vm3550, %v3484, %v3549
    %vm3552 = vcmask 1045509
    %v3553 = vsel %vm3552, %v3485, %v3551
    %vm3554 = vcmask 1046534
    %v3555 = vsel %vm3554, %v3486, %v3553
    %vm3556 = vcmask 1047559
    %v3557 = vsel %vm3556, %v3487, %v3555
    %v3558 = vsel %vm3544, %v3489, %v3488
    %v3559 = vsel %vm3546, %v3490, %v3558
    %v3560 = vsel %vm3548, %v3491, %v3559
    %v3561 = vsel %vm3550, %v3492, %v3560
    %v3562 = vsel %vm3552, %v3493, %v3561
    %v3563 = vsel %vm3554, %v3494, %v3562
    %v3564 = vsel %vm3556, %v3495, %v3563
    %v3565 = vsel %vm3544, %v3497, %v3496
    %v3566 = vsel %vm3546, %v3498, %v3565
    %v3567 = vsel %vm3548, %v3499, %v3566
    %v3568 = vsel %vm3550, %v3500, %v3567
    %v3569 = vsel %vm3552, %v3501, %v3568
    %v3570 = vsel %vm3554, %v3502, %v3569
    %v3571 = vsel %vm3556, %v3503, %v3570
    %v3572 = vsel %vm3544, %v3505, %v3504
    %v3573 = vsel %vm3546, %v3506, %v3572
    %v3574 = vsel %vm3548, %v3507, %v3573
    %v3575 = vsel %vm3550, %v3508, %v3574
    %v3576 = vsel %vm3552, %v3509, %v3575
    %v3577 = vsel %vm3554, %v3510, %v3576
    %v3578 = vsel %vm3556, %v3511, %v3577
    %v3579 = vsel %vm3544, %v3513, %v3512
    %v3580 = vsel %vm3546, %v3514, %v3579
    %v3581 = vsel %vm3548, %v3515, %v3580
    %v3582 = vsel %vm3550, %v3516, %v3581
    %v3583 = vsel %vm3552, %v3517, %v3582
    %v3584 = vsel %vm3554, %v3518, %v3583
    %v3585 = vsel %vm3556, %v3519, %v3584
    %v3586 = vsel %vm3544, %v3521, %v3520
    %v3587 = vsel %vm3546, %v3522, %v3586
    %v3588 = vsel %vm3548, %v3523, %v3587
    %v3589 = vsel %vm3550, %v3524, %v3588
    %v3590 = vsel %vm3552, %v3525, %v3589
    %v3591 = vsel %vm3554, %v3526, %v3590
    %v3592 = vsel %vm3556, %v3527, %v3591
    %v3593 = vsel %vm3544, %v3529, %v3528
    %v3594 = vsel %vm3546, %v3530, %v3593
    %v3595 = vsel %vm3548, %v3531, %v3594
    %v3596 = vsel %vm3550, %v3532, %v3595
    %v3597 = vsel %vm3552, %v3533, %v3596
    %v3598 = vsel %vm3554, %v3534, %v3597
    %v3599 = vsel %vm3556, %v3535, %v3598
    %v3600 = vsel %vm3544, %v3537, %v3536
    %v3601 = vsel %vm3546, %v3538, %v3600
    %v3602 = vsel %vm3548, %v3539, %v3601
    %v3603 = vsel %vm3550, %v3540, %v3602
    %v3604 = vsel %vm3552, %v3541, %v3603
    %v3605 = vsel %vm3554, %v3542, %v3604
    %v3606 = vsel %vm3556, %v3543, %v3605
    %v3607 = vpack.c.b16 %v3564, %v3557
    %v3608 = vpack.c.b16 %v3578, %v3571
    %v3609 = vpack.c.b16 %v3592, %v3585
    %v3610 = vpack.c.b16 %v3606, %v3599
    %v3615 = vunpack.c.l.b16 %v170
    %v3616 = vunpack.c.l.b16 %v171
    %v3617 = vunpack.c.l.b16 %v172
    %v3618 = vunpack.c.l.b16 %v173
    %v3619 = vpack.c.b16 %v3616, %v3615
    %v3620 = vpack.c.b16 %v3618, %v3617
    %v3624 = vsel %vm215, %v3607, 0
    %v3627 = vsel %vm215, %v3608, 0
    %v3630 = vsel %vm215, %v3609, 0
    %v3633 = vsel %vm215, %v3610, 0
    %3635 = vmatprep.subr.bf16.mxu0 0
    %3636 = vmatpush1.bf16.msra.mxu0 0
    %3637 = vmatprep.subr.bf16.mxu0 0
    %3638 = vmatpush1.bf16.msra.mxu0 0
    %3639 = vmatprep.subr.bf16.mxu0 0
    %3640 = vmatpush1.bf16.msra.mxu0 0
    %3641 = vmatprep.subr.bf16.mxu0 0
    %3642 = vmatpush1.bf16.msra.mxu0 0
    %3643 = vmatprep.subr.bf16.mxu0 0
    %3644 = vmatpush1.bf16.msra.mxu0 0
    %3645 = vmatprep.subr.bf16.mxu0 0
    %3646 = vmatpush1.bf16.msra.mxu0 0
    %3647 = vmatprep.subr.bf16.mxu0 0
    %3648 = vmatpush1.bf16.msra.mxu0 %v3620
    %3649 = vmatprep.subr.bf16.mxu0 0
    %3650 = vmatpush1.bf16.msra.mxu0 %v3619
    %3651 = vmatprep.subr.bf16.mxu0 0
    %3652 = vmatpush2.bf16.msra.mxu0 0
    %3653 = vmatprep.subr.bf16.mxu0 0
    %3654 = vmatpush2.bf16.msra.mxu0 0
    %3655 = vmatprep.subr.bf16.mxu0 0
    %3656 = vmatpush2.bf16.msra.mxu0 0
    %3657 = vmatprep.subr.bf16.mxu0 0
    %3658 = vmatpush2.bf16.msra.mxu0 0
    %3659 = vmatprep.subr.bf16.mxu0 0
    %3660 = vmatpush2.bf16.msra.mxu0 0
    %3661 = vmatprep.subr.bf16.mxu0 0
    %3662 = vmatpush2.bf16.msra.mxu0 0
    %3663 = vmatprep.subr.bf16.mxu0 0
    %3664 = vmatpush2.bf16.msra.mxu0 0
    %3665 = vmatprep.subr.bf16.mxu0 0
    %3666 = vmatpush2.bf16.msra.mxu0 0
    %3667 = vmatprep.mubr.bf16.mxu0 0
    %3668 = vmatmul.mubr.bf16.gmra.mxu0 %v3624
    %v3669 = vpop.f32.mrf.mxu0
    %v3670 = vadd.f32 %v3414, %v3669
    %v3671 = vpop.f32.mrf.mxu0
    %v3672 = vpop.f32.mrf.mxu0
    %v3673 = vadd.f32 %v3414, %v3672
    %v3674 = vpop.f32.mrf.mxu0
    %3675 = vmatprep.mubr.bf16.mxu0 0
    %3676 = vmatmul.mubr.bf16.gmra.mxu0 %v3627
    %v3677 = vpop.f32.mrf.mxu0
    %v3678 = vadd.f32 %v3414, %v3677
    %v3679 = vpop.f32.mrf.mxu0
    %v3680 = vpop.f32.mrf.mxu0
    %v3681 = vadd.f32 %v3414, %v3680
    %v3682 = vpop.f32.mrf.mxu0
    %3683 = vmatprep.mubr.bf16.mxu0 0
    %3684 = vmatmul.mubr.bf16.gmra.mxu0 %v3630
    %v3685 = vpop.f32.mrf.mxu0
    %v3686 = vadd.f32 %v3414, %v3685
    %v3687 = vpop.f32.mrf.mxu0
    %v3688 = vpop.f32.mrf.mxu0
    %v3689 = vadd.f32 %v3414, %v3688
    %v3690 = vpop.f32.mrf.mxu0
    %3691 = vmatprep.mubr.bf16.mxu0 0
    %3692 = vmatmul.mubr.bf16.gmra.mxu0 %v3633
    %v3693 = vpop.f32.mrf.mxu0
    %v3694 = vadd.f32 %v3414, %v3693
    %v3695 = vpop.f32.mrf.mxu0
    %v3696 = vpop.f32.mrf.mxu0
    %v3697 = vadd.f32 %v3414, %v3696
    %v3698 = vpop.f32.mrf.mxu0
    %3699 = vdwg.mxu0
    %v3700 = vadd.f32 %v131, %v3670
    %v3701 = vadd.f32 %v134, %v3673
    %v3702 = vadd.f32 %v139, %v3678
    %v3703 = vadd.f32 %v142, %v3681
    %v3704 = vadd.f32 %v147, %v3686
    %v3705 = vadd.f32 %v150, %v3689
    %v3706 = vadd.f32 %v155, %v3694
    %v3707 = vadd.f32 %v158, %v3697
    %v3708 = vsel %vm215, %v3700, 0.0
    %v3709 = vsel %vm215, %v3701, 0.0
    %v3710 = vadd.f32 %v3708, %v3709
    %v3711 = vsel %vm215, %v3702, 0.0
    %v3712 = vadd.f32 %v3710, %v3711
    %v3713 = vsel %vm215, %v3703, 0.0
    %v3714 = vadd.f32 %v3712, %v3713
    %v3715 = vsel %vm215, %v3704, 0.0
    %v3716 = vadd.f32 %v3714, %v3715
    %v3717 = vsel %vm215, %v3705, 0.0
    %v3718 = vadd.f32 %v3716, %v3717
    %v3719 = vsel %vm215, %v3706, 0.0
    %v3720 = vadd.f32 %v3718, %v3719
    %v3721 = vsel %vm215, %v3707, 0.0
    %v3722 = vadd.f32 %v3720, %v3721
    %v3723 = vrot.slane %v3722, 4
    %v3724 = vadd.f32 %v3722, %v3723
    %v3725 = vrot.slane %v3724, 2
    %v3726 = vadd.f32 %v3724, %v3725
    %v3727 = vrot.slane %v3726, 1
    %v3728 = vadd.f32 %v3726, %v3727
    %v3729 = vmul.f32 %v3700, %v3700
    %v3730 = vmul.f32 %v3701, %v3701
    %v3731 = vmul.f32 %v3702, %v3702
    %v3732 = vmul.f32 %v3703, %v3703
    %v3733 = vmul.f32 %v3704, %v3704
    %v3734 = vmul.f32 %v3705, %v3705
    %v3735 = vmul.f32 %v3706, %v3706
    %v3736 = vmul.f32 %v3707, %v3707
    %v3737 = vsel %vm215, %v3729, 0.0
    %v3738 = vsel %vm215, %v3730, 0.0
    %v3739 = vadd.f32 %v3737, %v3738
    %v3740 = vsel %vm215, %v3731, 0.0
    %v3741 = vadd.f32 %v3739, %v3740
    %v3742 = vsel %vm215, %v3732, 0.0
    %v3743 = vadd.f32 %v3741, %v3742
    %v3744 = vsel %vm215, %v3733, 0.0
    %v3745 = vadd.f32 %v3743, %v3744
    %v3746 = vsel %vm215, %v3734, 0.0
    %v3747 = vadd.f32 %v3745, %v3746
    %v3748 = vsel %vm215, %v3735, 0.0
    %v3749 = vadd.f32 %v3747, %v3748
    %v3750 = vsel %vm215, %v3736, 0.0
    %v3751 = vadd.f32 %v3749, %v3750
    %v3752 = vrot.slane %v3751, 4
    %v3753 = vadd.f32 %v3751, %v3752
    %v3754 = vrot.slane %v3753, 2
    %v3755 = vadd.f32 %v3753, %v3754
    %v3756 = vrot.slane %v3755, 1
    %v3757 = vadd.f32 %v3755, %v3756
    %v3758 = vmul.f32 %v3728, 0.015625
    %v3759 = vmul.f32 %v3757, 0.015625
    %v3760 = vmul.f32 %v3758, %v3758
    %v3761 = vsub.f32 %v3759, %v3760
    %v3762 = vsub.f32 %v3700, %v3758
    %v3763 = vsub.f32 %v3701, %v3758
    %v3764 = vsub.f32 %v3702, %v3758
    %v3765 = vsub.f32 %v3703, %v3758
    %v3766 = vsub.f32 %v3704, %v3758
    %v3767 = vsub.f32 %v3705, %v3758
    %v3768 = vsub.f32 %v3706, %v3758
    %v3769 = vsub.f32 %v3707, %v3758
    %v3770 = vadd.f32 %v3761, 1e-05
    %v3771 = vrsqrt.pop %v3770
    %v3772 = vmul.f32 %v3762, %v3771
    %v3773 = vmul.f32 %v3763, %v3771
    %v3774 = vmul.f32 %v3764, %v3771
    %v3775 = vmul.f32 %v3765, %v3771
    %v3776 = vmul.f32 %v3766, %v3771
    %v3777 = vmul.f32 %v3767, %v3771
    %v3778 = vmul.f32 %v3768, %v3771
    %v3779 = vmul.f32 %v3769, %v3771
    %v3781 = vlaneseq
    %v3782 = vshrl.u32 %v3781, 7
    %v3783 = vsub.s32 0, %v3782
    %v3784 = vrot.slane %v175, %v3783
    %v3786 = vmul.f32 %v3772, %v3784
    %v3787 = vmul.f32 %v3773, %v3784
    %v3788 = vmul.f32 %v3774, %v3784
    %v3789 = vmul.f32 %v3775, %v3784
    %v3790 = vmul.f32 %v3776, %v3784
    %v3791 = vmul.f32 %v3777, %v3784
    %v3792 = vmul.f32 %v3778, %v3784
    %v3793 = vmul.f32 %v3779, %v3784
    %v3795 = vlaneseq
    %v3796 = vshrl.u32 %v3795, 7
    %v3797 = vsub.s32 0, %v3796
    %v3798 = vrot.slane %v176, %v3797
    %v3800 = vadd.f32 %v3786, %v3798
    %v3801 = vadd.f32 %v3787, %v3798
    %v3802 = vadd.f32 %v3788, %v3798
    %v3803 = vadd.f32 %v3789, %v3798
    %v3804 = vadd.f32 %v3790, %v3798
    %v3805 = vadd.f32 %v3791, %v3798
    %v3806 = vadd.f32 %v3792, %v3798
    %v3807 = vadd.f32 %v3793, %v3798
    %v3808 = vpack.c.bf16 %v3801, %v3800
    %v3809 = vpack.c.bf16 %v3803, %v3802
    %v3810 = vpack.c.bf16 %v3805, %v3804
    %v3811 = vpack.c.bf16 %v3807, %v3806
    %v3813 = vlaneseq
    %v3814 = vshrl.u32 %v3813, 7
    %v3815 = vsub.s32 0, %v3814
    %v3816 = vrot.slane %v181, %v3815
    %v3822 = vunpack.c.l.b16 %v177
    %v3823 = vunpack.c.l.b16 %v178
    %v3824 = vunpack.c.l.b16 %v179
    %v3825 = vunpack.c.l.b16 %v180
    %v3826 = vpack.c.b16 %v3823, %v3822
    %v3827 = vpack.c.b16 %v3825, %v3824
    %v3831 = vsel %vm215, %v3808, 0
    %v3834 = vsel %vm215, %v3809, 0
    %v3837 = vsel %vm215, %v3810, 0
    %v3840 = vsel %vm215, %v3811, 0
    %3842 = vmatprep.subr.bf16.mxu0 0
    %3843 = vmatpush1.bf16.msra.mxu0 0
    %3844 = vmatprep.subr.bf16.mxu0 0
    %3845 = vmatpush1.bf16.msra.mxu0 0
    %3846 = vmatprep.subr.bf16.mxu0 0
    %3847 = vmatpush1.bf16.msra.mxu0 0
    %3848 = vmatprep.subr.bf16.mxu0 0
    %3849 = vmatpush1.bf16.msra.mxu0 0
    %3850 = vmatprep.subr.bf16.mxu0 0
    %3851 = vmatpush1.bf16.msra.mxu0 0
    %3852 = vmatprep.subr.bf16.mxu0 0
    %3853 = vmatpush1.bf16.msra.mxu0 0
    %3854 = vmatprep.subr.bf16.mxu0 0
    %3855 = vmatpush1.bf16.msra.mxu0 %v3827
    %3856 = vmatprep.subr.bf16.mxu0 0
    %3857 = vmatpush1.bf16.msra.mxu0 %v3826
    %3858 = vmatprep.subr.bf16.mxu0 0
    %3859 = vmatpush2.bf16.msra.mxu0 0
    %3860 = vmatprep.subr.bf16.mxu0 0
    %3861 = vmatpush2.bf16.msra.mxu0 0
    %3862 = vmatprep.subr.bf16.mxu0 0
    %3863 = vmatpush2.bf16.msra.mxu0 0
    %3864 = vmatprep.subr.bf16.mxu0 0
    %3865 = vmatpush2.bf16.msra.mxu0 0
    %3866 = vmatprep.subr.bf16.mxu0 0
    %3867 = vmatpush2.bf16.msra.mxu0 0
    %3868 = vmatprep.subr.bf16.mxu0 0
    %3869 = vmatpush2.bf16.msra.mxu0 0
    %3870 = vmatprep.subr.bf16.mxu0 0
    %3871 = vmatpush2.bf16.msra.mxu0 0
    %3872 = vmatprep.subr.bf16.mxu0 0
    %3873 = vmatpush2.bf16.msra.mxu0 0
    %3874 = vmatprep.mubr.bf16.mxu0 0
    %3875 = vmatmul.mubr.bf16.gmra.mxu0 %v3831
    %v3876 = vpop.f32.mrf.mxu0
    %v3877 = vadd.f32 %v3816, %v3876
    %v3878 = vpop.f32.mrf.mxu0
    %v3879 = vpop.f32.mrf.mxu0
    %v3880 = vadd.f32 %v3816, %v3879
    %v3881 = vpop.f32.mrf.mxu0
    %3882 = vmatprep.mubr.bf16.mxu0 0
    %3883 = vmatmul.mubr.bf16.gmra.mxu0 %v3834
    %v3884 = vpop.f32.mrf.mxu0
    %v3885 = vadd.f32 %v3816, %v3884
    %v3886 = vpop.f32.mrf.mxu0
    %v3887 = vpop.f32.mrf.mxu0
    %v3888 = vadd.f32 %v3816, %v3887
    %v3889 = vpop.f32.mrf.mxu0
    %3890 = vmatprep.mubr.bf16.mxu0 0
    %3891 = vmatmul.mubr.bf16.gmra.mxu0 %v3837
    %v3892 = vpop.f32.mrf.mxu0
    %v3893 = vadd.f32 %v3816, %v3892
    %v3894 = vpop.f32.mrf.mxu0
    %v3895 = vpop.f32.mrf.mxu0
    %v3896 = vadd.f32 %v3816, %v3895
    %v3897 = vpop.f32.mrf.mxu0
    %3898 = vmatprep.mubr.bf16.mxu0 0
    %3899 = vmatmul.mubr.bf16.gmra.mxu0 %v3840
    %v3900 = vpop.f32.mrf.mxu0
    %v3901 = vadd.f32 %v3816, %v3900
    %v3902 = vpop.f32.mrf.mxu0
    %v3903 = vpop.f32.mrf.mxu0
    %v3904 = vadd.f32 %v3816, %v3903
    %v3905 = vpop.f32.mrf.mxu0
    %3906 = vdwg.mxu0
    %v3907 = vmul.f32 %v3877, 0.5
    %v3908 = vmul.f32 %v3880, 0.5
    %v3909 = vmul.f32 %v3885, 0.5
    %v3910 = vmul.f32 %v3888, 0.5
    %v3911 = vmul.f32 %v3893, 0.5
    %v3912 = vmul.f32 %v3896, 0.5
    %v3913 = vmul.f32 %v3901, 0.5
    %v3914 = vmul.f32 %v3904, 0.5
    %v3915 = vmul.f32 %v3877, 0.044715
    %v3916 = vmul.f32 %v3880, 0.044715
    %v3917 = vmul.f32 %v3885, 0.044715
    %v3918 = vmul.f32 %v3888, 0.044715
    %v3919 = vmul.f32 %v3893, 0.044715
    %v3920 = vmul.f32 %v3896, 0.044715
    %v3921 = vmul.f32 %v3901, 0.044715
    %v3922 = vmul.f32 %v3904, 0.044715
    %v3923 = vmul.f32 %v3915, %v3877
    %v3924 = vmul.f32 %v3916, %v3880
    %v3925 = vmul.f32 %v3917, %v3885
    %v3926 = vmul.f32 %v3918, %v3888
    %v3927 = vmul.f32 %v3919, %v3893
    %v3928 = vmul.f32 %v3920, %v3896
    %v3929 = vmul.f32 %v3921, %v3901
    %v3930 = vmul.f32 %v3922, %v3904
    %v3931 = vmul.f32 %v3923, %v3877
    %v3932 = vmul.f32 %v3924, %v3880
    %v3933 = vmul.f32 %v3925, %v3885
    %v3934 = vmul.f32 %v3926, %v3888
    %v3935 = vmul.f32 %v3927, %v3893
    %v3936 = vmul.f32 %v3928, %v3896
    %v3937 = vmul.f32 %v3929, %v3901
    %v3938 = vmul.f32 %v3930, %v3904
    %v3939 = vadd.f32 %v3877, %v3931
    %v3940 = vadd.f32 %v3880, %v3932
    %v3941 = vadd.f32 %v3885, %v3933
    %v3942 = vadd.f32 %v3888, %v3934
    %v3943 = vadd.f32 %v3893, %v3935
    %v3944 = vadd.f32 %v3896, %v3936
    %v3945 = vadd.f32 %v3901, %v3937
    %v3946 = vadd.f32 %v3904, %v3938
    %v3947 = vmul.f32 %v3939, 0.7978846
    %v3948 = vmul.f32 %v3940, 0.7978846
    %v3949 = vmul.f32 %v3941, 0.7978846
    %v3950 = vmul.f32 %v3942, 0.7978846
    %v3951 = vmul.f32 %v3943, 0.7978846
    %v3952 = vmul.f32 %v3944, 0.7978846
    %v3953 = vmul.f32 %v3945, 0.7978846
    %v3954 = vmul.f32 %v3946, 0.7978846
    %v3955 = vtanh.pop %v3947
    %v3956 = vtanh.pop %v3948
    %v3957 = vtanh.pop %v3949
    %v3958 = vtanh.pop %v3950
    %v3959 = vtanh.pop %v3951
    %v3960 = vtanh.pop %v3952
    %v3961 = vtanh.pop %v3953
    %v3962 = vtanh.pop %v3954
    %v3963 = vadd.f32 %v3955, 1.0
    %v3964 = vadd.f32 %v3956, 1.0
    %v3965 = vadd.f32 %v3957, 1.0
    %v3966 = vadd.f32 %v3958, 1.0
    %v3967 = vadd.f32 %v3959, 1.0
    %v3968 = vadd.f32 %v3960, 1.0
    %v3969 = vadd.f32 %v3961, 1.0
    %v3970 = vadd.f32 %v3962, 1.0
    %v3971 = vmul.f32 %v3907, %v3963
    %v3972 = vmul.f32 %v3908, %v3964
    %v3973 = vmul.f32 %v3909, %v3965
    %v3974 = vmul.f32 %v3910, %v3966
    %v3975 = vmul.f32 %v3911, %v3967
    %v3976 = vmul.f32 %v3912, %v3968
    %v3977 = vmul.f32 %v3913, %v3969
    %v3978 = vmul.f32 %v3914, %v3970
    %v3979 = vpack.c.bf16 %v3972, %v3971
    %v3980 = vpack.c.bf16 %v3974, %v3973
    %v3981 = vpack.c.bf16 %v3976, %v3975
    %v3982 = vpack.c.bf16 %v3978, %v3977
    %v3984 = vlaneseq
    %v3985 = vshrl.u32 %v3984, 7
    %v3986 = vsub.s32 0, %v3985
    %v3987 = vrot.slane %v190, %v3986
    %v3997 = vunpack.c.l.b16 %v182
    %v3998 = vunpack.c.l.b16 %v183
    %v3999 = vunpack.c.l.b16 %v184
    %v4000 = vunpack.c.l.b16 %v185
    %v4001 = vunpack.c.l.b16 %v186
    %v4002 = vunpack.c.l.b16 %v187
    %v4003 = vunpack.c.l.b16 %v188
    %v4004 = vunpack.c.l.b16 %v189
    %v4005 = vpack.c.b16 %v3998, %v3997
    %v4006 = vpack.c.b16 %v4000, %v3999
    %v4007 = vpack.c.b16 %v4002, %v4001
    %v4008 = vpack.c.b16 %v4004, %v4003
    %vm4013 = vcmask 523264
    %v4015 = vsel %vm4013, %v3979, 0
    %v4018 = vsel %vm4013, %v3980, 0
    %v4021 = vsel %vm4013, %v3981, 0
    %v4024 = vsel %vm4013, %v3982, 0
    %4026 = vmatprep.subr.bf16.mxu0 0
    %4027 = vmatpush1.bf16.msra.mxu0 0
    %4028 = vmatprep.subr.bf16.mxu0 0
    %4029 = vmatpush1.bf16.msra.mxu0 0
    %4030 = vmatprep.subr.bf16.mxu0 0
    %4031 = vmatpush1.bf16.msra.mxu0 0
    %4032 = vmatprep.subr.bf16.mxu0 0
    %4033 = vmatpush1.bf16.msra.mxu0 0
    %4034 = vmatprep.subr.bf16.mxu0 0
    %4035 = vmatpush1.bf16.msra.mxu0 %v4008
    %4036 = vmatprep.subr.bf16.mxu0 0
    %4037 = vmatpush1.bf16.msra.mxu0 %v4007
    %4038 = vmatprep.subr.bf16.mxu0 0
    %4039 = vmatpush1.bf16.msra.mxu0 %v4006
    %4040 = vmatprep.subr.bf16.mxu0 0
    %4041 = vmatpush1.bf16.msra.mxu0 %v4005
    %4042 = vmatprep.subr.bf16.mxu0 0
    %4043 = vmatpush2.bf16.msra.mxu0 0
    %4044 = vmatprep.subr.bf16.mxu0 0
    %4045 = vmatpush2.bf16.msra.mxu0 0
    %4046 = vmatprep.subr.bf16.mxu0 0
    %4047 = vmatpush2.bf16.msra.mxu0 0
    %4048 = vmatprep.subr.bf16.mxu0 0
    %4049 = vmatpush2.bf16.msra.mxu0 0
    %4050 = vmatprep.subr.bf16.mxu0 0
    %4051 = vmatpush2.bf16.msra.mxu0 0
    %4052 = vmatprep.subr.bf16.mxu0 0
    %4053 = vmatpush2.bf16.msra.mxu0 0
    %4054 = vmatprep.subr.bf16.mxu0 0
    %4055 = vmatpush2.bf16.msra.mxu0 0
    %4056 = vmatprep.subr.bf16.mxu0 0
    %4057 = vmatpush2.bf16.msra.mxu0 0
    %4058 = vmatprep.mubr.bf16.mxu0 0
    %4059 = vmatmul.mubr.bf16.gmra.mxu0 %v4015
    %v4060 = vpop.f32.mrf.mxu0
    %v4061 = vadd.f32 %v3987, %v4060
    %v4062 = vpop.f32.mrf.mxu0
    %v4063 = vpop.f32.mrf.mxu0
    %v4064 = vadd.f32 %v3987, %v4063
    %v4065 = vpop.f32.mrf.mxu0
    %4066 = vmatprep.mubr.bf16.mxu0 0
    %4067 = vmatmul.mubr.bf16.gmra.mxu0 %v4018
    %v4068 = vpop.f32.mrf.mxu0
    %v4069 = vadd.f32 %v3987, %v4068
    %v4070 = vpop.f32.mrf.mxu0
    %v4071 = vpop.f32.mrf.mxu0
    %v4072 = vadd.f32 %v3987, %v4071
    %v4073 = vpop.f32.mrf.mxu0
    %4074 = vmatprep.mubr.bf16.mxu0 0
    %4075 = vmatmul.mubr.bf16.gmra.mxu0 %v4021
    %v4076 = vpop.f32.mrf.mxu0
    %v4077 = vadd.f32 %v3987, %v4076
    %v4078 = vpop.f32.mrf.mxu0
    %v4079 = vpop.f32.mrf.mxu0
    %v4080 = vadd.f32 %v3987, %v4079
    %v4081 = vpop.f32.mrf.mxu0
    %4082 = vmatprep.mubr.bf16.mxu0 0
    %4083 = vmatmul.mubr.bf16.gmra.mxu0 %v4024
    %v4084 = vpop.f32.mrf.mxu0
    %v4085 = vadd.f32 %v3987, %v4084
    %v4086 = vpop.f32.mrf.mxu0
    %v4087 = vpop.f32.mrf.mxu0
    %v4088 = vadd.f32 %v3987, %v4087
    %v4089 = vpop.f32.mrf.mxu0
    %4090 = vdwg.mxu0
    %v4091 = vadd.f32 %v3800, %v4061
    %v4092 = vadd.f32 %v3801, %v4064
    %v4093 = vadd.f32 %v3802, %v4069
    %v4094 = vadd.f32 %v3803, %v4072
    %v4095 = vadd.f32 %v3804, %v4077
    %v4096 = vadd.f32 %v3805, %v4080
    %v4097 = vadd.f32 %v3806, %v4085
    %v4098 = vadd.f32 %v3807, %v4088
    %v4099 = vsel %vm215, %v4091, 0.0
    %v4100 = vsel %vm215, %v4092, 0.0
    %v4101 = vadd.f32 %v4099, %v4100
    %v4102 = vsel %vm215, %v4093, 0.0
    %v4103 = vadd.f32 %v4101, %v4102
    %v4104 = vsel %vm215, %v4094, 0.0
    %v4105 = vadd.f32 %v4103, %v4104
    %v4106 = vsel %vm215, %v4095, 0.0
    %v4107 = vadd.f32 %v4105, %v4106
    %v4108 = vsel %vm215, %v4096, 0.0
    %v4109 = vadd.f32 %v4107, %v4108
    %v4110 = vsel %vm215, %v4097, 0.0
    %v4111 = vadd.f32 %v4109, %v4110
    %v4112 = vsel %vm215, %v4098, 0.0
    %v4113 = vadd.f32 %v4111, %v4112
    %v4114 = vrot.slane %v4113, 4
    %v4115 = vadd.f32 %v4113, %v4114
    %v4116 = vrot.slane %v4115, 2
    %v4117 = vadd.f32 %v4115, %v4116
    %v4118 = vrot.slane %v4117, 1
    %v4119 = vadd.f32 %v4117, %v4118
    %v4120 = vmul.f32 %v4091, %v4091
    %v4121 = vmul.f32 %v4092, %v4092
    %v4122 = vmul.f32 %v4093, %v4093
    %v4123 = vmul.f32 %v4094, %v4094
    %v4124 = vmul.f32 %v4095, %v4095
    %v4125 = vmul.f32 %v4096, %v4096
    %v4126 = vmul.f32 %v4097, %v4097
    %v4127 = vmul.f32 %v4098, %v4098
    %v4128 = vsel %vm215, %v4120, 0.0
    %v4129 = vsel %vm215, %v4121, 0.0
    %v4130 = vadd.f32 %v4128, %v4129
    %v4131 = vsel %vm215, %v4122, 0.0
    %v4132 = vadd.f32 %v4130, %v4131
    %v4133 = vsel %vm215, %v4123, 0.0
    %v4134 = vadd.f32 %v4132, %v4133
    %v4135 = vsel %vm215, %v4124, 0.0
    %v4136 = vadd.f32 %v4134, %v4135
    %v4137 = vsel %vm215, %v4125, 0.0
    %v4138 = vadd.f32 %v4136, %v4137
    %v4139 = vsel %vm215, %v4126, 0.0
    %v4140 = vadd.f32 %v4138, %v4139
    %v4141 = vsel %vm215, %v4127, 0.0
    %v4142 = vadd.f32 %v4140, %v4141
    %v4143 = vrot.slane %v4142, 4
    %v4144 = vadd.f32 %v4142, %v4143
    %v4145 = vrot.slane %v4144, 2
    %v4146 = vadd.f32 %v4144, %v4145
    %v4147 = vrot.slane %v4146, 1
    %v4148 = vadd.f32 %v4146, %v4147
    %v4149 = vmul.f32 %v4119, 0.015625
    %v4150 = vmul.f32 %v4148, 0.015625
    %v4151 = vmul.f32 %v4149, %v4149
    %v4152 = vsub.f32 %v4150, %v4151
    %v4153 = vsub.f32 %v4091, %v4149
    %v4154 = vsub.f32 %v4092, %v4149
    %v4155 = vsub.f32 %v4093, %v4149
    %v4156 = vsub.f32 %v4094, %v4149
    %v4157 = vsub.f32 %v4095, %v4149
    %v4158 = vsub.f32 %v4096, %v4149
    %v4159 = vsub.f32 %v4097, %v4149
    %v4160 = vsub.f32 %v4098, %v4149
    %v4161 = vadd.f32 %v4152, 1e-05
    %v4162 = vrsqrt.pop %v4161
    %v4163 = vmul.f32 %v4153, %v4162
    %v4164 = vmul.f32 %v4154, %v4162
    %v4165 = vmul.f32 %v4155, %v4162
    %v4166 = vmul.f32 %v4156, %v4162
    %v4167 = vmul.f32 %v4157, %v4162
    %v4168 = vmul.f32 %v4158, %v4162
    %v4169 = vmul.f32 %v4159, %v4162
    %v4170 = vmul.f32 %v4160, %v4162
    %v4172 = vlaneseq
    %v4173 = vshrl.u32 %v4172, 7
    %v4174 = vsub.s32 0, %v4173
    %v4175 = vrot.slane %v191, %v4174
    %v4177 = vmul.f32 %v4163, %v4175
    %v4178 = vmul.f32 %v4164, %v4175
    %v4179 = vmul.f32 %v4165, %v4175
    %v4180 = vmul.f32 %v4166, %v4175
    %v4181 = vmul.f32 %v4167, %v4175
    %v4182 = vmul.f32 %v4168, %v4175
    %v4183 = vmul.f32 %v4169, %v4175
    %v4184 = vmul.f32 %v4170, %v4175
    %v4186 = vlaneseq
    %v4187 = vshrl.u32 %v4186, 7
    %v4188 = vsub.s32 0, %v4187
    %v4189 = vrot.slane %v192, %v4188
    %v4191 = vadd.f32 %v4177, %v4189
    %v4192 = vadd.f32 %v4178, %v4189
    %v4193 = vadd.f32 %v4179, %v4189
    %v4194 = vadd.f32 %v4180, %v4189
    %v4195 = vadd.f32 %v4181, %v4189
    %v4196 = vadd.f32 %v4182, %v4189
    %v4197 = vadd.f32 %v4183, %v4189
    %v4198 = vadd.f32 %v4184, %v4189
    %s4199 = scalar_lea.vmem %s4, 16
    %v4200 = vld [vmem:[%s4199] sm:$0xf]
    %v4201 = vld [vmem:[%s4199 + $0x4] sm:$0xf]
    %v4202 = vld [vmem:[%s4199 + $0x8] sm:$0xf]
    %v4203 = vld [vmem:[%s4199 + $0xc] sm:$0xf]
    %s4204 = scalar_lea.vmem %s5, 1
    %v4205 = vld [vmem:[%s4204] sm:$0x1]
    %s4206 = scalar_lea.vmem %s6, 16
    %v4207 = vld [vmem:[%s4206] sm:$0xf]
    %v4208 = vld [vmem:[%s4206 + $0x4] sm:$0xf]
    %v4209 = vld [vmem:[%s4206 + $0x8] sm:$0xf]
    %v4210 = vld [vmem:[%s4206 + $0xc] sm:$0xf]
    %s4211 = scalar_lea.vmem %s7, 1
    %v4212 = vld [vmem:[%s4211] sm:$0x1]
    %s4213 = scalar_lea.vmem %s8, 1
    %v4214 = vld [vmem:[%s4213] sm:$0x1]
    %s4215 = scalar_lea.vmem %s9, 1
    %v4216 = vld [vmem:[%s4215] sm:$0x1]
    %s4217 = scalar_lea.vmem %s10, 16
    %v4218 = vld [vmem:[%s4217] sm:$0xf]
    %v4219 = vld [vmem:[%s4217 + $0x4] sm:$0xf]
    %v4220 = vld [vmem:[%s4217 + $0x8] sm:$0xf]
    %v4221 = vld [vmem:[%s4217 + $0xc] sm:$0xf]
    %s4222 = scalar_lea.vmem %s11, 1
    %v4223 = vld [vmem:[%s4222] sm:$0x1]
    %s4224 = scalar_lea.vmem %s12, 32
    %v4225 = vld [vmem:[%s4224] sm:$0xf]
    %v4226 = vld [vmem:[%s4224 + $0x4] sm:$0xf]
    %v4227 = vld [vmem:[%s4224 + $0x8] sm:$0xf]
    %v4228 = vld [vmem:[%s4224 + $0xc] sm:$0xf]
    %v4229 = vld [vmem:[%s4224 + $0x10] sm:$0xf]
    %v4230 = vld [vmem:[%s4224 + $0x14] sm:$0xf]
    %v4231 = vld [vmem:[%s4224 + $0x18] sm:$0xf]
    %v4232 = vld [vmem:[%s4224 + $0x1c] sm:$0xf]
    %s4233 = scalar_lea.vmem %s13, 1
    %v4234 = vld [vmem:[%s4233] sm:$0x1]
    %s4235 = scalar_lea.vmem %s14, 1
    %v4236 = vld [vmem:[%s4235] sm:$0x1]
    %s4237 = scalar_lea.vmem %s15, 1
    %v4238 = vld [vmem:[%s4237] sm:$0x1]
    %v4239 = vpack.c.bf16 %v4192, %v4191
    %v4240 = vpack.c.bf16 %v4194, %v4193
    %v4241 = vpack.c.bf16 %v4196, %v4195
    %v4242 = vpack.c.bf16 %v4198, %v4197
    %v4244 = vlaneseq
    %v4245 = vshrl.u32 %v4244, 7
    %v4246 = vsub.s32 0, %v4245
    %v4247 = vrot.slane %v4205, %v4246
    %v4253 = vunpack.c.l.b16 %v4200
    %v4254 = vunpack.c.l.b16 %v4201
    %v4255 = vunpack.c.l.b16 %v4202
    %v4256 = vunpack.c.l.b16 %v4203
    %v4257 = vpack.c.b16 %v4254, %v4253
    %v4258 = vpack.c.b16 %v4256, %v4255
    %v4262 = vsel %vm215, %v4239, 0
    %v4265 = vsel %vm215, %v4240, 0
    %v4268 = vsel %vm215, %v4241, 0
    %v4271 = vsel %vm215, %v4242, 0
    %4273 = vmatprep.subr.bf16.mxu0 0
    %4274 = vmatpush1.bf16.msra.mxu0 0
    %4275 = vmatprep.subr.bf16.mxu0 0
    %4276 = vmatpush1.bf16.msra.mxu0 0
    %4277 = vmatprep.subr.bf16.mxu0 0
    %4278 = vmatpush1.bf16.msra.mxu0 0
    %4279 = vmatprep.subr.bf16.mxu0 0
    %4280 = vmatpush1.bf16.msra.mxu0 0
    %4281 = vmatprep.subr.bf16.mxu0 0
    %4282 = vmatpush1.bf16.msra.mxu0 0
    %4283 = vmatprep.subr.bf16.mxu0 0
    %4284 = vmatpush1.bf16.msra.mxu0 0
    %4285 = vmatprep.subr.bf16.mxu0 0
    %4286 = vmatpush1.bf16.msra.mxu0 %v4258
    %4287 = vmatprep.subr.bf16.mxu0 0
    %4288 = vmatpush1.bf16.msra.mxu0 %v4257
    %4289 = vmatprep.subr.bf16.mxu0 0
    %4290 = vmatpush2.bf16.msra.mxu0 0
    %4291 = vmatprep.subr.bf16.mxu0 0
    %4292 = vmatpush2.bf16.msra.mxu0 0
    %4293 = vmatprep.subr.bf16.mxu0 0
    %4294 = vmatpush2.bf16.msra.mxu0 0
    %4295 = vmatprep.subr.bf16.mxu0 0
    %4296 = vmatpush2.bf16.msra.mxu0 0
    %4297 = vmatprep.subr.bf16.mxu0 0
    %4298 = vmatpush2.bf16.msra.mxu0 0
    %4299 = vmatprep.subr.bf16.mxu0 0
    %4300 = vmatpush2.bf16.msra.mxu0 0
    %4301 = vmatprep.subr.bf16.mxu0 0
    %4302 = vmatpush2.bf16.msra.mxu0 0
    %4303 = vmatprep.subr.bf16.mxu0 0
    %4304 = vmatpush2.bf16.msra.mxu0 0
    %4305 = vmatprep.mubr.bf16.mxu0 0
    %4306 = vmatmul.mubr.bf16.gmra.mxu0 %v4262
    %v4307 = vpop.f32.mrf.mxu0
    %v4308 = vadd.f32 %v4247, %v4307
    %v4309 = vpop.f32.mrf.mxu0
    %v4310 = vpop.f32.mrf.mxu0
    %v4311 = vadd.f32 %v4247, %v4310
    %v4312 = vpop.f32.mrf.mxu0
    %4313 = vmatprep.mubr.bf16.mxu0 0
    %4314 = vmatmul.mubr.bf16.gmra.mxu0 %v4265
    %v4315 = vpop.f32.mrf.mxu0
    %v4316 = vadd.f32 %v4247, %v4315
    %v4317 = vpop.f32.mrf.mxu0
    %v4318 = vpop.f32.mrf.mxu0
    %v4319 = vadd.f32 %v4247, %v4318
    %v4320 = vpop.f32.mrf.mxu0
    %4321 = vmatprep.mubr.bf16.mxu0 0
    %4322 = vmatmul.mubr.bf16.gmra.mxu0 %v4268
    %v4323 = vpop.f32.mrf.mxu0
    %v4324 = vadd.f32 %v4247, %v4323
    %v4325 = vpop.f32.mrf.mxu0
    %v4326 = vpop.f32.mrf.mxu0
    %v4327 = vadd.f32 %v4247, %v4326
    %v4328 = vpop.f32.mrf.mxu0
    %4329 = vmatprep.mubr.bf16.mxu0 0
    %4330 = vmatmul.mubr.bf16.gmra.mxu0 %v4271
    %v4331 = vpop.f32.mrf.mxu0
    %v4332 = vadd.f32 %v4247, %v4331
    %v4333 = vpop.f32.mrf.mxu0
    %v4334 = vpop.f32.mrf.mxu0
    %v4335 = vadd.f32 %v4247, %v4334
    %v4336 = vpop.f32.mrf.mxu0
    %4337 = vdwg.mxu0
    %v4346 = vcombine.high %v4308, %v4308
    %v4348 = vunpack.c.l.s4 1966171168
    %v4349 = vunpack.c.0.s8 %v4348
    %v4350 = vlaneseq
    %v4351 = vshrl.u32 %v4350, 7
    %v4352 = vsub.s32 %v4349, %v4351
    %v4353 = vrot.slane %v4308, %v4352
    %v4355 = vunpack.c.l.s4 1966171168
    %v4356 = vunpack.c.0.s8 %v4355
    %v4357 = vlaneseq
    %v4358 = vshrl.u32 %v4357, 7
    %v4359 = vsub.s32 %v4356, %v4358
    %v4360 = vrot.slane %v4346, %v4359
    %v4361 = vcombine.high %v4353, %v4353
    %v4362 = vcombine.high %v4360, %v4360
    %v4364 = vunpack.c.l.s4 1966171168
    %v4365 = vunpack.c.0.s8 %v4364
    %v4366 = vlaneseq
    %v4367 = vshrl.u32 %v4366, 7
    %v4368 = vsub.s32 %v4365, %v4367
    %v4369 = vrot.slane %v4353, %v4368
    %v4371 = vunpack.c.l.s4 1966171168
    %v4372 = vunpack.c.0.s8 %v4371
    %v4373 = vlaneseq
    %v4374 = vshrl.u32 %v4373, 7
    %v4375 = vsub.s32 %v4372, %v4374
    %v4376 = vrot.slane %v4360, %v4375
    %v4378 = vunpack.c.l.s4 1966171168
    %v4379 = vunpack.c.0.s8 %v4378
    %v4380 = vlaneseq
    %v4381 = vshrl.u32 %v4380, 7
    %v4382 = vsub.s32 %v4379, %v4381
    %v4383 = vrot.slane %v4361, %v4382
    %v4385 = vunpack.c.l.s4 1966171168
    %v4386 = vunpack.c.0.s8 %v4385
    %v4387 = vlaneseq
    %v4388 = vshrl.u32 %v4387, 7
    %v4389 = vsub.s32 %v4386, %v4388
    %v4390 = vrot.slane %v4362, %v4389
    %v4391 = vcombine.high %v4369, %v4369
    %v4392 = vcombine.high %v4376, %v4376
    %v4393 = vcombine.high %v4383, %v4383
    %v4394 = vcombine.high %v4390, %v4390
    %v4395 = vcombine.high %v4311, %v4311
    %v4397 = vunpack.c.l.s4 1966171168
    %v4398 = vunpack.c.0.s8 %v4397
    %v4399 = vlaneseq
    %v4400 = vshrl.u32 %v4399, 7
    %v4401 = vsub.s32 %v4398, %v4400
    %v4402 = vrot.slane %v4311, %v4401
    %v4404 = vunpack.c.l.s4 1966171168
    %v4405 = vunpack.c.0.s8 %v4404
    %v4406 = vlaneseq
    %v4407 = vshrl.u32 %v4406, 7
    %v4408 = vsub.s32 %v4405, %v4407
    %v4409 = vrot.slane %v4395, %v4408
    %v4410 = vcombine.high %v4402, %v4402
    %v4411 = vcombine.high %v4409, %v4409
    %v4413 = vunpack.c.l.s4 1966171168
    %v4414 = vunpack.c.0.s8 %v4413
    %v4415 = vlaneseq
    %v4416 = vshrl.u32 %v4415, 7
    %v4417 = vsub.s32 %v4414, %v4416
    %v4418 = vrot.slane %v4402, %v4417
    %v4420 = vunpack.c.l.s4 1966171168
    %v4421 = vunpack.c.0.s8 %v4420
    %v4422 = vlaneseq
    %v4423 = vshrl.u32 %v4422, 7
    %v4424 = vsub.s32 %v4421, %v4423
    %v4425 = vrot.slane %v4409, %v4424
    %v4427 = vunpack.c.l.s4 1966171168
    %v4428 = vunpack.c.0.s8 %v4427
    %v4429 = vlaneseq
    %v4430 = vshrl.u32 %v4429, 7
    %v4431 = vsub.s32 %v4428, %v4430
    %v4432 = vrot.slane %v4410, %v4431
    %v4434 = vunpack.c.l.s4 1966171168
    %v4435 = vunpack.c.0.s8 %v4434
    %v4436 = vlaneseq
    %v4437 = vshrl.u32 %v4436, 7
    %v4438 = vsub.s32 %v4435, %v4437
    %v4439 = vrot.slane %v4411, %v4438
    %v4440 = vcombine.high %v4418, %v4418
    %v4441 = vcombine.high %v4425, %v4425
    %v4442 = vcombine.high %v4432, %v4432
    %v4443 = vcombine.high %v4439, %v4439
    %v4444 = vcombine.high %v4316, %v4316
    %v4446 = vunpack.c.l.s4 1966171168
    %v4447 = vunpack.c.0.s8 %v4446
    %v4448 = vlaneseq
    %v4449 = vshrl.u32 %v4448, 7
    %v4450 = vsub.s32 %v4447, %v4449
    %v4451 = vrot.slane %v4316, %v4450
    %v4453 = vunpack.c.l.s4 1966171168
    %v4454 = vunpack.c.0.s8 %v4453
    %v4455 = vlaneseq
    %v4456 = vshrl.u32 %v4455, 7
    %v4457 = vsub.s32 %v4454, %v4456
    %v4458 = vrot.slane %v4444, %v4457
    %v4459 = vcombine.high %v4451, %v4451
    %v4460 = vcombine.high %v4458, %v4458
    %v4462 = vunpack.c.l.s4 1966171168
    %v4463 = vunpack.c.0.s8 %v4462
    %v4464 = vlaneseq
    %v4465 = vshrl.u32 %v4464, 7
    %v4466 = vsub.s32 %v4463, %v4465
    %v4467 = vrot.slane %v4451, %v4466
    %v4469 = vunpack.c.l.s4 1966171168
    %v4470 = vunpack.c.0.s8 %v4469
    %v4471 = vlaneseq
    %v4472 = vshrl.u32 %v4471, 7
    %v4473 = vsub.s32 %v4470, %v4472
    %v4474 = vrot.slane %v4458, %v4473
    %v4476 = vunpack.c.l.s4 1966171168
    %v4477 = vunpack.c.0.s8 %v4476
    %v4478 = vlaneseq
    %v4479 = vshrl.u32 %v4478, 7
    %v4480 = vsub.s32 %v4477, %v4479
    %v4481 = vrot.slane %v4459, %v4480
    %v4483 = vunpack.c.l.s4 1966171168
    %v4484 = vunpack.c.0.s8 %v4483
    %v4485 = vlaneseq
    %v4486 = vshrl.u32 %v4485, 7
    %v4487 = vsub.s32 %v4484, %v4486
    %v4488 = vrot.slane %v4460, %v4487
    %v4489 = vcombine.high %v4467, %v4467
    %v4490 = vcombine.high %v4474, %v4474
    %v4491 = vcombine.high %v4481, %v4481
    %v4492 = vcombine.high %v4488, %v4488
    %v4493 = vcombine.high %v4319, %v4319
    %v4495 = vunpack.c.l.s4 1966171168
    %v4496 = vunpack.c.0.s8 %v4495
    %v4497 = vlaneseq
    %v4498 = vshrl.u32 %v4497, 7
    %v4499 = vsub.s32 %v4496, %v4498
    %v4500 = vrot.slane %v4319, %v4499
    %v4502 = vunpack.c.l.s4 1966171168
    %v4503 = vunpack.c.0.s8 %v4502
    %v4504 = vlaneseq
    %v4505 = vshrl.u32 %v4504, 7
    %v4506 = vsub.s32 %v4503, %v4505
    %v4507 = vrot.slane %v4493, %v4506
    %v4508 = vcombine.high %v4500, %v4500
    %v4509 = vcombine.high %v4507, %v4507
    %v4511 = vunpack.c.l.s4 1966171168
    %v4512 = vunpack.c.0.s8 %v4511
    %v4513 = vlaneseq
    %v4514 = vshrl.u32 %v4513, 7
    %v4515 = vsub.s32 %v4512, %v4514
    %v4516 = vrot.slane %v4500, %v4515
    %v4518 = vunpack.c.l.s4 1966171168
    %v4519 = vunpack.c.0.s8 %v4518
    %v4520 = vlaneseq
    %v4521 = vshrl.u32 %v4520, 7
    %v4522 = vsub.s32 %v4519, %v4521
    %v4523 = vrot.slane %v4507, %v4522
    %v4525 = vunpack.c.l.s4 1966171168
    %v4526 = vunpack.c.0.s8 %v4525
    %v4527 = vlaneseq
    %v4528 = vshrl.u32 %v4527, 7
    %v4529 = vsub.s32 %v4526, %v4528
    %v4530 = vrot.slane %v4508, %v4529
    %v4532 = vunpack.c.l.s4 1966171168
    %v4533 = vunpack.c.0.s8 %v4532
    %v4534 = vlaneseq
    %v4535 = vshrl.u32 %v4534, 7
    %v4536 = vsub.s32 %v4533, %v4535
    %v4537 = vrot.slane %v4509, %v4536
    %v4538 = vcombine.high %v4516, %v4516
    %v4539 = vcombine.high %v4523, %v4523
    %v4540 = vcombine.high %v4530, %v4530
    %v4541 = vcombine.high %v4537, %v4537
    %v4542 = vcombine.high %v4324, %v4324
    %v4544 = vunpack.c.l.s4 1966171168
    %v4545 = vunpack.c.0.s8 %v4544
    %v4546 = vlaneseq
    %v4547 = vshrl.u32 %v4546, 7
    %v4548 = vsub.s32 %v4545, %v4547
    %v4549 = vrot.slane %v4324, %v4548
    %v4551 = vunpack.c.l.s4 1966171168
    %v4552 = vunpack.c.0.s8 %v4551
    %v4553 = vlaneseq
    %v4554 = vshrl.u32 %v4553, 7
    %v4555 = vsub.s32 %v4552, %v4554
    %v4556 = vrot.slane %v4542, %v4555
    %v4557 = vcombine.high %v4549, %v4549
    %v4558 = vcombine.high %v4556, %v4556
    %v4560 = vunpack.c.l.s4 1966171168
    %v4561 = vunpack.c.0.s8 %v4560
    %v4562 = vlaneseq
    %v4563 = vshrl.u32 %v4562, 7
    %v4564 = vsub.s32 %v4561, %v4563
    %v4565 = vrot.slane %v4549, %v4564
    %v4567 = vunpack.c.l.s4 1966171168
    %v4568 = vunpack.c.0.s8 %v4567
    %v4569 = vlaneseq
    %v4570 = vshrl.u32 %v4569, 7
    %v4571 = vsub.s32 %v4568, %v4570
    %v4572 = vrot.slane %v4556, %v4571
    %v4574 = vunpack.c.l.s4 1966171168
    %v4575 = vunpack.c.0.s8 %v4574
    %v4576 = vlaneseq
    %v4577 = vshrl.u32 %v4576, 7
    %v4578 = vsub.s32 %v4575, %v4577
    %v4579 = vrot.slane %v4557, %v4578
    %v4581 = vunpack.c.l.s4 1966171168
    %v4582 = vunpack.c.0.s8 %v4581
    %v4583 = vlaneseq
    %v4584 = vshrl.u32 %v4583, 7
    %v4585 = vsub.s32 %v4582, %v4584
    %v4586 = vrot.slane %v4558, %v4585
    %v4587 = vcombine.high %v4565, %v4565
    %v4588 = vcombine.high %v4572, %v4572
    %v4589 = vcombine.high %v4579, %v4579
    %v4590 = vcombine.high %v4586, %v4586
    %v4591 = vcombine.high %v4327, %v4327
    %v4593 = vunpack.c.l.s4 1966171168
    %v4594 = vunpack.c.0.s8 %v4593
    %v4595 = vlaneseq
    %v4596 = vshrl.u32 %v4595, 7
    %v4597 = vsub.s32 %v4594, %v4596
    %v4598 = vrot.slane %v4327, %v4597
    %v4600 = vunpack.c.l.s4 1966171168
    %v4601 = vunpack.c.0.s8 %v4600
    %v4602 = vlaneseq
    %v4603 = vshrl.u32 %v4602, 7
    %v4604 = vsub.s32 %v4601, %v4603
    %v4605 = vrot.slane %v4591, %v4604
    %v4606 = vcombine.high %v4598, %v4598
    %v4607 = vcombine.high %v4605, %v4605
    %v4609 = vunpack.c.l.s4 1966171168
    %v4610 = vunpack.c.0.s8 %v4609
    %v4611 = vlaneseq
    %v4612 = vshrl.u32 %v4611, 7
    %v4613 = vsub.s32 %v4610, %v4612
    %v4614 = vrot.slane %v4598, %v4613
    %v4616 = vunpack.c.l.s4 1966171168
    %v4617 = vunpack.c.0.s8 %v4616
    %v4618 = vlaneseq
    %v4619 = vshrl.u32 %v4618, 7
    %v4620 = vsub.s32 %v4617, %v4619
    %v4621 = vrot.slane %v4605, %v4620
    %v4623 = vunpack.c.l.s4 1966171168
    %v4624 = vunpack.c.0.s8 %v4623
    %v4625 = vlaneseq
    %v4626 = vshrl.u32 %v4625, 7
    %v4627 = vsub.s32 %v4624, %v4626
    %v4628 = vrot.slane %v4606, %v4627
    %v4630 = vunpack.c.l.s4 1966171168
    %v4631 = vunpack.c.0.s8 %v4630
    %v4632 = vlaneseq
    %v4633 = vshrl.u32 %v4632, 7
    %v4634 = vsub.s32 %v4631, %v4633
    %v4635 = vrot.slane %v4607, %v4634
    %v4636 = vcombine.high %v4614, %v4614
    %v4637 = vcombine.high %v4621, %v4621
    %v4638 = vcombine.high %v4628, %v4628
    %v4639 = vcombine.high %v4635, %v4635
    %v4640 = vcombine.high %v4332, %v4332
    %v4642 = vunpack.c.l.s4 1966171168
    %v4643 = vunpack.c.0.s8 %v4642
    %v4644 = vlaneseq
    %v4645 = vshrl.u32 %v4644, 7
    %v4646 = vsub.s32 %v4643, %v4645
    %v4647 = vrot.slane %v4332, %v4646
    %v4649 = vunpack.c.l.s4 1966171168
    %v4650 = vunpack.c.0.s8 %v4649
    %v4651 = vlaneseq
    %v4652 = vshrl.u32 %v4651, 7
    %v4653 = vsub.s32 %v4650, %v4652
    %v4654 = vrot.slane %v4640, %v4653
    %v4655 = vcombine.high %v4647, %v4647
    %v4656 = vcombine.high %v4654, %v4654
    %v4658 = vunpack.c.l.s4 1966171168
    %v4659 = vunpack.c.0.s8 %v4658
    %v4660 = vlaneseq
    %v4661 = vshrl.u32 %v4660, 7
    %v4662 = vsub.s32 %v4659, %v4661
    %v4663 = vrot.slane %v4647, %v4662
    %v4665 = vunpack.c.l.s4 1966171168
    %v4666 = vunpack.c.0.s8 %v4665
    %v4667 = vlaneseq
    %v4668 = vshrl.u32 %v4667, 7
    %v4669 = vsub.s32 %v4666, %v4668
    %v4670 = vrot.slane %v4654, %v4669
    %v4672 = vunpack.c.l.s4 1966171168
    %v4673 = vunpack.c.0.s8 %v4672
    %v4674 = vlaneseq
    %v4675 = vshrl.u32 %v4674, 7
    %v4676 = vsub.s32 %v4673, %v4675
    %v4677 = vrot.slane %v4655, %v4676
    %v4679 = vunpack.c.l.s4 1966171168
    %v4680 = vunpack.c.0.s8 %v4679
    %v4681 = vlaneseq
    %v4682 = vshrl.u32 %v4681, 7
    %v4683 = vsub.s32 %v4680, %v4682
    %v4684 = vrot.slane %v4656, %v4683
    %v4685 = vcombine.high %v4663, %v4663
    %v4686 = vcombine.high %v4670, %v4670
    %v4687 = vcombine.high %v4677, %v4677
    %v4688 = vcombine.high %v4684, %v4684
    %v4689 = vcombine.high %v4335, %v4335
    %v4691 = vunpack.c.l.s4 1966171168
    %v4692 = vunpack.c.0.s8 %v4691
    %v4693 = vlaneseq
    %v4694 = vshrl.u32 %v4693, 7
    %v4695 = vsub.s32 %v4692, %v4694
    %v4696 = vrot.slane %v4335, %v4695
    %v4698 = vunpack.c.l.s4 1966171168
    %v4699 = vunpack.c.0.s8 %v4698
    %v4700 = vlaneseq
    %v4701 = vshrl.u32 %v4700, 7
    %v4702 = vsub.s32 %v4699, %v4701
    %v4703 = vrot.slane %v4689, %v4702
    %v4704 = vcombine.high %v4696, %v4696
    %v4705 = vcombine.high %v4703, %v4703
    %v4707 = vunpack.c.l.s4 1966171168
    %v4708 = vunpack.c.0.s8 %v4707
    %v4709 = vlaneseq
    %v4710 = vshrl.u32 %v4709, 7
    %v4711 = vsub.s32 %v4708, %v4710
    %v4712 = vrot.slane %v4696, %v4711
    %v4714 = vunpack.c.l.s4 1966171168
    %v4715 = vunpack.c.0.s8 %v4714
    %v4716 = vlaneseq
    %v4717 = vshrl.u32 %v4716, 7
    %v4718 = vsub.s32 %v4715, %v4717
    %v4719 = vrot.slane %v4703, %v4718
    %v4721 = vunpack.c.l.s4 1966171168
    %v4722 = vunpack.c.0.s8 %v4721
    %v4723 = vlaneseq
    %v4724 = vshrl.u32 %v4723, 7
    %v4725 = vsub.s32 %v4722, %v4724
    %v4726 = vrot.slane %v4704, %v4725
    %v4728 = vunpack.c.l.s4 1966171168
    %v4729 = vunpack.c.0.s8 %v4728
    %v4730 = vlaneseq
    %v4731 = vshrl.u32 %v4730, 7
    %v4732 = vsub.s32 %v4729, %v4731
    %v4733 = vrot.slane %v4705, %v4732
    %v4734 = vcombine.high %v4712, %v4712
    %v4735 = vcombine.high %v4719, %v4719
    %v4736 = vcombine.high %v4726, %v4726
    %v4737 = vcombine.high %v4733, %v4733
    %v4738 = vlaneseq
    %v4739 = vshrl.u32 %v4738, 7
    %v4740 = vsub.s32 0, %v4739
    %v4741 = vrot.slane %v4369, %v4740
    %v4742 = vlaneseq
    %v4743 = vshrl.u32 %v4742, 7
    %v4744 = vsub.s32 0, %v4743
    %v4745 = vrot.slane %v4383, %v4744
    %v4746 = vlaneseq
    %v4747 = vshrl.u32 %v4746, 7
    %v4748 = vsub.s32 0, %v4747
    %v4749 = vrot.slane %v4391, %v4748
    %v4750 = vlaneseq
    %v4751 = vshrl.u32 %v4750, 7
    %v4752 = vsub.s32 0, %v4751
    %v4753 = vrot.slane %v4393, %v4752
    %v4754 = vlaneseq
    %v4755 = vshrl.u32 %v4754, 7
    %v4756 = vsub.s32 0, %v4755
    %v4757 = vrot.slane %v4376, %v4756
    %v4758 = vlaneseq
    %v4759 = vshrl.u32 %v4758, 7
    %v4760 = vsub.s32 0, %v4759
    %v4761 = vrot.slane %v4390, %v4760
    %v4762 = vlaneseq
    %v4763 = vshrl.u32 %v4762, 7
    %v4764 = vsub.s32 0, %v4763
    %v4765 = vrot.slane %v4392, %v4764
    %v4766 = vlaneseq
    %v4767 = vshrl.u32 %v4766, 7
    %v4768 = vsub.s32 0, %v4767
    %v4769 = vrot.slane %v4394, %v4768
    %v4770 = vlaneseq
    %v4771 = vshrl.u32 %v4770, 7
    %v4772 = vsub.s32 0, %v4771
    %v4773 = vrot.slane %v4418, %v4772
    %v4774 = vlaneseq
    %v4775 = vshrl.u32 %v4774, 7
    %v4776 = vsub.s32 0, %v4775
    %v4777 = vrot.slane %v4432, %v4776
    %v4778 = vlaneseq
    %v4779 = vshrl.u32 %v4778, 7
    %v4780 = vsub.s32 0, %v4779
    %v4781 = vrot.slane %v4440, %v4780
    %v4782 = vlaneseq
    %v4783 = vshrl.u32 %v4782, 7
    %v4784 = vsub.s32 0, %v4783
    %v4785 = vrot.slane %v4442, %v4784
    %v4786 = vlaneseq
    %v4787 = vshrl.u32 %v4786, 7
    %v4788 = vsub.s32 0, %v4787
    %v4789 = vrot.slane %v4425, %v4788
    %v4790 = vlaneseq
    %v4791 = vshrl.u32 %v4790, 7
    %v4792 = vsub.s32 0, %v4791
    %v4793 = vrot.slane %v4439, %v4792
    %v4794 = vlaneseq
    %v4795 = vshrl.u32 %v4794, 7
    %v4796 = vsub.s32 0, %v4795
    %v4797 = vrot.slane %v4441, %v4796
    %v4798 = vlaneseq
    %v4799 = vshrl.u32 %v4798, 7
    %v4800 = vsub.s32 0, %v4799
    %v4801 = vrot.slane %v4443, %v4800
    %v4802 = vlaneseq
    %v4803 = vshrl.u32 %v4802, 7
    %v4804 = vsub.s32 0, %v4803
    %v4805 = vrot.slane %v4467, %v4804
    %v4806 = vlaneseq
    %v4807 = vshrl.u32 %v4806, 7
    %v4808 = vsub.s32 0, %v4807
    %v4809 = vrot.slane %v4481, %v4808
    %v4810 = vlaneseq
    %v4811 = vshrl.u32 %v4810, 7
    %v4812 = vsub.s32 0, %v4811
    %v4813 = vrot.slane %v4489, %v4812
    %v4814 = vlaneseq
    %v4815 = vshrl.u32 %v4814, 7
    %v4816 = vsub.s32 0, %v4815
    %v4817 = vrot.slane %v4491, %v4816
    %v4818 = vlaneseq
    %v4819 = vshrl.u32 %v4818, 7
    %v4820 = vsub.s32 0, %v4819
    %v4821 = vrot.slane %v4474, %v4820
    %v4822 = vlaneseq
    %v4823 = vshrl.u32 %v4822, 7
    %v4824 = vsub.s32 0, %v4823
    %v4825 = vrot.slane %v4488, %v4824
    %v4826 = vlaneseq
    %v4827 = vshrl.u32 %v4826, 7
    %v4828 = vsub.s32 0, %v4827
    %v4829 = vrot.slane %v4490, %v4828
    %v4830 = vlaneseq
    %v4831 = vshrl.u32 %v4830, 7
    %v4832 = vsub.s32 0, %v4831
    %v4833 = vrot.slane %v4492, %v4832
    %v4834 = vlaneseq
    %v4835 = vshrl.u32 %v4834, 7
    %v4836 = vsub.s32 0, %v4835
    %v4837 = vrot.slane %v4516, %v4836
    %v4838 = vlaneseq
    %v4839 = vshrl.u32 %v4838, 7
    %v4840 = vsub.s32 0, %v4839
    %v4841 = vrot.slane %v4530, %v4840
    %v4842 = vlaneseq
    %v4843 = vshrl.u32 %v4842, 7
    %v4844 = vsub.s32 0, %v4843
    %v4845 = vrot.slane %v4538, %v4844
    %v4846 = vlaneseq
    %v4847 = vshrl.u32 %v4846, 7
    %v4848 = vsub.s32 0, %v4847
    %v4849 = vrot.slane %v4540, %v4848
    %v4850 = vlaneseq
    %v4851 = vshrl.u32 %v4850, 7
    %v4852 = vsub.s32 0, %v4851
    %v4853 = vrot.slane %v4523, %v4852
    %v4854 = vlaneseq
    %v4855 = vshrl.u32 %v4854, 7
    %v4856 = vsub.s32 0, %v4855
    %v4857 = vrot.slane %v4537, %v4856
    %v4858 = vlaneseq
    %v4859 = vshrl.u32 %v4858, 7
    %v4860 = vsub.s32 0, %v4859
    %v4861 = vrot.slane %v4539, %v4860
    %v4862 = vlaneseq
    %v4863 = vshrl.u32 %v4862, 7
    %v4864 = vsub.s32 0, %v4863
    %v4865 = vrot.slane %v4541, %v4864
    %v4866 = vlaneseq
    %v4867 = vshrl.u32 %v4866, 7
    %v4868 = vsub.s32 0, %v4867
    %v4869 = vrot.slane %v4565, %v4868
    %v4870 = vlaneseq
    %v4871 = vshrl.u32 %v4870, 7
    %v4872 = vsub.s32 0, %v4871
    %v4873 = vrot.slane %v4579, %v4872
    %v4874 = vlaneseq
    %v4875 = vshrl.u32 %v4874, 7
    %v4876 = vsub.s32 0, %v4875
    %v4877 = vrot.slane %v4587, %v4876
    %v4878 = vlaneseq
    %v4879 = vshrl.u32 %v4878, 7
    %v4880 = vsub.s32 0, %v4879
    %v4881 = vrot.slane %v4589, %v4880
    %v4882 = vlaneseq
    %v4883 = vshrl.u32 %v4882, 7
    %v4884 = vsub.s32 0, %v4883
    %v4885 = vrot.slane %v4572, %v4884
    %v4886 = vlaneseq
    %v4887 = vshrl.u32 %v4886, 7
    %v4888 = vsub.s32 0, %v4887
    %v4889 = vrot.slane %v4586, %v4888
    %v4890 = vlaneseq
    %v4891 = vshrl.u32 %v4890, 7
    %v4892 = vsub.s32 0, %v4891
    %v4893 = vrot.slane %v4588, %v4892
    %v4894 = vlaneseq
    %v4895 = vshrl.u32 %v4894, 7
    %v4896 = vsub.s32 0, %v4895
    %v4897 = vrot.slane %v4590, %v4896
    %v4898 = vlaneseq
    %v4899 = vshrl.u32 %v4898, 7
    %v4900 = vsub.s32 0, %v4899
    %v4901 = vrot.slane %v4614, %v4900
    %v4902 = vlaneseq
    %v4903 = vshrl.u32 %v4902, 7
    %v4904 = vsub.s32 0, %v4903
    %v4905 = vrot.slane %v4628, %v4904
    %v4906 = vlaneseq
    %v4907 = vshrl.u32 %v4906, 7
    %v4908 = vsub.s32 0, %v4907
    %v4909 = vrot.slane %v4636, %v4908
    %v4910 = vlaneseq
    %v4911 = vshrl.u32 %v4910, 7
    %v4912 = vsub.s32 0, %v4911
    %v4913 = vrot.slane %v4638, %v4912
    %v4914 = vlaneseq
    %v4915 = vshrl.u32 %v4914, 7
    %v4916 = vsub.s32 0, %v4915
    %v4917 = vrot.slane %v4621, %v4916
    %v4918 = vlaneseq
    %v4919 = vshrl.u32 %v4918, 7
    %v4920 = vsub.s32 0, %v4919
    %v4921 = vrot.slane %v4635, %v4920
    %v4922 = vlaneseq
    %v4923 = vshrl.u32 %v4922, 7
    %v4924 = vsub.s32 0, %v4923
    %v4925 = vrot.slane %v4637, %v4924
    %v4926 = vlaneseq
    %v4927 = vshrl.u32 %v4926, 7
    %v4928 = vsub.s32 0, %v4927
    %v4929 = vrot.slane %v4639, %v4928
    %v4930 = vlaneseq
    %v4931 = vshrl.u32 %v4930, 7
    %v4932 = vsub.s32 0, %v4931
    %v4933 = vrot.slane %v4663, %v4932
    %v4934 = vlaneseq
    %v4935 = vshrl.u32 %v4934, 7
    %v4936 = vsub.s32 0, %v4935
    %v4937 = vrot.slane %v4677, %v4936
    %v4938 = vlaneseq
    %v4939 = vshrl.u32 %v4938, 7
    %v4940 = vsub.s32 0, %v4939
    %v4941 = vrot.slane %v4685, %v4940
    %v4942 = vlaneseq
    %v4943 = vshrl.u32 %v4942, 7
    %v4944 = vsub.s32 0, %v4943
    %v4945 = vrot.slane %v4687, %v4944
    %v4946 = vlaneseq
    %v4947 = vshrl.u32 %v4946, 7
    %v4948 = vsub.s32 0, %v4947
    %v4949 = vrot.slane %v4670, %v4948
    %v4950 = vlaneseq
    %v4951 = vshrl.u32 %v4950, 7
    %v4952 = vsub.s32 0, %v4951
    %v4953 = vrot.slane %v4684, %v4952
    %v4954 = vlaneseq
    %v4955 = vshrl.u32 %v4954, 7
    %v4956 = vsub.s32 0, %v4955
    %v4957 = vrot.slane %v4686, %v4956
    %v4958 = vlaneseq
    %v4959 = vshrl.u32 %v4958, 7
    %v4960 = vsub.s32 0, %v4959
    %v4961 = vrot.slane %v4688, %v4960
    %v4962 = vlaneseq
    %v4963 = vshrl.u32 %v4962, 7
    %v4964 = vsub.s32 0, %v4963
    %v4965 = vrot.slane %v4712, %v4964
    %v4966 = vlaneseq
    %v4967 = vshrl.u32 %v4966, 7
    %v4968 = vsub.s32 0, %v4967
    %v4969 = vrot.slane %v4726, %v4968
    %v4970 = vlaneseq
    %v4971 = vshrl.u32 %v4970, 7
    %v4972 = vsub.s32 0, %v4971
    %v4973 = vrot.slane %v4734, %v4972
    %v4974 = vlaneseq
    %v4975 = vshrl.u32 %v4974, 7
    %v4976 = vsub.s32 0, %v4975
    %v4977 = vrot.slane %v4736, %v4976
    %v4978 = vlaneseq
    %v4979 = vshrl.u32 %v4978, 7
    %v4980 = vsub.s32 0, %v4979
    %v4981 = vrot.slane %v4719, %v4980
    %v4982 = vlaneseq
    %v4983 = vshrl.u32 %v4982, 7
    %v4984 = vsub.s32 0, %v4983
    %v4985 = vrot.slane %v4733, %v4984
    %v4986 = vlaneseq
    %v4987 = vshrl.u32 %v4986, 7
    %v4988 = vsub.s32 0, %v4987
    %v4989 = vrot.slane %v4735, %v4988
    %v4990 = vlaneseq
    %v4991 = vshrl.u32 %v4990, 7
    %v4992 = vsub.s32 0, %v4991
    %v4993 = vrot.slane %v4737, %v4992
    %5058 = vrot.lane.b32.xlu0 %v4308, 96
    %v5059 = vpop.permute.xlu0 %5058
    %5060 = vrot.lane.b32.xlu0 %v4311, 96
    %v5061 = vpop.permute.xlu0 %5060
    %5062 = vrot.lane.b32.xlu0 %v4316, 96
    %v5063 = vpop.permute.xlu0 %5062
    %5064 = vrot.lane.b32.xlu0 %v4319, 96
    %v5065 = vpop.permute.xlu0 %5064
    %5066 = vrot.lane.b32.xlu0 %v4324, 96
    %v5067 = vpop.permute.xlu0 %5066
    %5068 = vrot.lane.b32.xlu0 %v4327, 96
    %v5069 = vpop.permute.xlu0 %5068
    %5070 = vrot.lane.b32.xlu0 %v4332, 96
    %v5071 = vpop.permute.xlu0 %5070
    %5072 = vrot.lane.b32.xlu0 %v4335, 96
    %v5073 = vpop.permute.xlu0 %5072
    %v5082 = vmul.f32 %v4741, %v5059
    %v5083 = vmul.f32 %v4745, %v5059
    %v5084 = vmul.f32 %v4749, %v5059
    %v5085 = vmul.f32 %v4753, %v5059
    %v5086 = vmul.f32 %v4757, %v5059
    %v5087 = vmul.f32 %v4761, %v5059
    %v5088 = vmul.f32 %v4765, %v5059
    %v5089 = vmul.f32 %v4769, %v5059
    %v5090 = vmul.f32 %v4773, %v5061
    %v5091 = vmul.f32 %v4777, %v5061
    %v5092 = vmul.f32 %v4781, %v5061
    %v5093 = vmul.f32 %v4785, %v5061
    %v5094 = vmul.f32 %v4789, %v5061
    %v5095 = vmul.f32 %v4793, %v5061
    %v5096 = vmul.f32 %v4797, %v5061
    %v5097 = vmul.f32 %v4801, %v5061
    %v5098 = vmul.f32 %v4805, %v5063
    %v5099 = vmul.f32 %v4809, %v5063
    %v5100 = vmul.f32 %v4813, %v5063
    %v5101 = vmul.f32 %v4817, %v5063
    %v5102 = vmul.f32 %v4821, %v5063
    %v5103 = vmul.f32 %v4825, %v5063
    %v5104 = vmul.f32 %v4829, %v5063
    %v5105 = vmul.f32 %v4833, %v5063
    %v5106 = vmul.f32 %v4837, %v5065
    %v5107 = vmul.f32 %v4841, %v5065
    %v5108 = vmul.f32 %v4845, %v5065
    %v5109 = vmul.f32 %v4849, %v5065
    %v5110 = vmul.f32 %v4853, %v5065
    %v5111 = vmul.f32 %v4857, %v5065
    %v5112 = vmul.f32 %v4861, %v5065
    %v5113 = vmul.f32 %v4865, %v5065
    %v5114 = vmul.f32 %v4869, %v5067
    %v5115 = vmul.f32 %v4873, %v5067
    %v5116 = vmul.f32 %v4877, %v5067
    %v5117 = vmul.f32 %v4881, %v5067
    %v5118 = vmul.f32 %v4885, %v5067
    %v5119 = vmul.f32 %v4889, %v5067
    %v5120 = vmul.f32 %v4893, %v5067
    %v5121 = vmul.f32 %v4897, %v5067
    %v5122 = vmul.f32 %v4901, %v5069
    %v5123 = vmul.f32 %v4905, %v5069
    %v5124 = vmul.f32 %v4909, %v5069
    %v5125 = vmul.f32 %v4913, %v5069
    %v5126 = vmul.f32 %v4917, %v5069
    %v5127 = vmul.f32 %v4921, %v5069
    %v5128 = vmul.f32 %v4925, %v5069
    %v5129 = vmul.f32 %v4929, %v5069
    %v5130 = vmul.f32 %v4933, %v5071
    %v5131 = vmul.f32 %v4937, %v5071
    %v5132 = vmul.f32 %v4941, %v5071
    %v5133 = vmul.f32 %v4945, %v5071
    %v5134 = vmul.f32 %v4949, %v5071
    %v5135 = vmul.f32 %v4953, %v5071
    %v5136 = vmul.f32 %v4957, %v5071
    %v5137 = vmul.f32 %v4961, %v5071
    %v5138 = vmul.f32 %v4965, %v5073
    %v5139 = vmul.f32 %v4969, %v5073
    %v5140 = vmul.f32 %v4973, %v5073
    %v5141 = vmul.f32 %v4977, %v5073
    %v5142 = vmul.f32 %v4981, %v5073
    %v5143 = vmul.f32 %v4985, %v5073
    %v5144 = vmul.f32 %v4989, %v5073
    %v5145 = vmul.f32 %v4993, %v5073
    %v5146 = vpack.c.bf16 %v5083, %v5082
    %v5147 = vpack.c.bf16 %v5085, %v5084
    %v5148 = vpack.c.bf16 %v5087, %v5086
    %v5149 = vpack.c.bf16 %v5089, %v5088
    %v5150 = vpack.c.bf16 %v5091, %v5090
    %v5151 = vpack.c.bf16 %v5093, %v5092
    %v5152 = vpack.c.bf16 %v5095, %v5094
    %v5153 = vpack.c.bf16 %v5097, %v5096
    %v5154 = vpack.c.bf16 %v5099, %v5098
    %v5155 = vpack.c.bf16 %v5101, %v5100
    %v5156 = vpack.c.bf16 %v5103, %v5102
    %v5157 = vpack.c.bf16 %v5105, %v5104
    %v5158 = vpack.c.bf16 %v5107, %v5106
    %v5159 = vpack.c.bf16 %v5109, %v5108
    %v5160 = vpack.c.bf16 %v5111, %v5110
    %v5161 = vpack.c.bf16 %v5113, %v5112
    %v5162 = vpack.c.bf16 %v5115, %v5114
    %v5163 = vpack.c.bf16 %v5117, %v5116
    %v5164 = vpack.c.bf16 %v5119, %v5118
    %v5165 = vpack.c.bf16 %v5121, %v5120
    %v5166 = vpack.c.bf16 %v5123, %v5122
    %v5167 = vpack.c.bf16 %v5125, %v5124
    %v5168 = vpack.c.bf16 %v5127, %v5126
    %v5169 = vpack.c.bf16 %v5129, %v5128
    %v5170 = vpack.c.bf16 %v5131, %v5130
    %v5171 = vpack.c.bf16 %v5133, %v5132
    %v5172 = vpack.c.bf16 %v5135, %v5134
    %v5173 = vpack.c.bf16 %v5137, %v5136
    %v5174 = vpack.c.bf16 %v5139, %v5138
    %v5175 = vpack.c.bf16 %v5141, %v5140
    %v5176 = vpack.c.bf16 %v5143, %v5142
    %v5177 = vpack.c.bf16 %v5145, %v5144
    %v5179 = vsel %vm215, %v5146, 0
    %v5182 = vsel %vm215, %v5147, 0
    %v5185 = vsel %vm215, %v5148, 0
    %v5188 = vsel %vm215, %v5149, 0
    %v5191 = vsel %vm215, %v5150, 0
    %v5194 = vsel %vm215, %v5151, 0
    %v5197 = vsel %vm215, %v5152, 0
    %v5200 = vsel %vm215, %v5153, 0
    %v5203 = vsel %vm215, %v5154, 0
    %v5206 = vsel %vm215, %v5155, 0
    %v5209 = vsel %vm215, %v5156, 0
    %v5212 = vsel %vm215, %v5157, 0
    %v5215 = vsel %vm215, %v5158, 0
    %v5218 = vsel %vm215, %v5159, 0
    %v5221 = vsel %vm215, %v5160, 0
    %v5224 = vsel %vm215, %v5161, 0
    %v5227 = vsel %vm215, %v5162, 0
    %v5230 = vsel %vm215, %v5163, 0
    %v5233 = vsel %vm215, %v5164, 0
    %v5236 = vsel %vm215, %v5165, 0
    %v5239 = vsel %vm215, %v5166, 0
    %v5242 = vsel %vm215, %v5167, 0
    %v5245 = vsel %vm215, %v5168, 0
    %v5248 = vsel %vm215, %v5169, 0
    %v5251 = vsel %vm215, %v5170, 0
    %v5254 = vsel %vm215, %v5171, 0
    %v5257 = vsel %vm215, %v5172, 0
    %v5260 = vsel %vm215, %v5173, 0
    %v5263 = vsel %vm215, %v5174, 0
    %v5266 = vsel %vm215, %v5175, 0
    %v5269 = vsel %vm215, %v5176, 0
    %v5272 = vsel %vm215, %v5177, 0
    %5274 = vmatprep.subr.bf16.mxu0 0
    %5275 = vmatpush1.bf16.msra.mxu0 0
    %5276 = vmatprep.subr.bf16.mxu0 0
    %5277 = vmatpush1.bf16.msra.mxu0 0
    %5278 = vmatprep.subr.bf16.mxu0 0
    %5279 = vmatpush1.bf16.msra.mxu0 0
    %5280 = vmatprep.subr.bf16.mxu0 0
    %5281 = vmatpush1.bf16.msra.mxu0 0
    %5282 = vmatprep.subr.bf16.mxu0 0
    %5283 = vmatpush1.bf16.msra.mxu0 0
    %5284 = vmatprep.subr.bf16.mxu0 0
    %5285 = vmatpush1.bf16.msra.mxu0 0
    %5286 = vmatprep.subr.bf16.mxu0 0
    %5287 = vmatpush1.bf16.msra.mxu0 %v1142
    %5288 = vmatprep.subr.bf16.mxu0 0
    %5289 = vmatpush1.bf16.msra.mxu0 %v1141
    %5290 = vmatprep.subr.bf16.mxu0 0
    %5291 = vmatpush2.bf16.msra.mxu0 0
    %5292 = vmatprep.subr.bf16.mxu0 0
    %5293 = vmatpush2.bf16.msra.mxu0 0
    %5294 = vmatprep.subr.bf16.mxu0 0
    %5295 = vmatpush2.bf16.msra.mxu0 0
    %5296 = vmatprep.subr.bf16.mxu0 0
    %5297 = vmatpush2.bf16.msra.mxu0 0
    %5298 = vmatprep.subr.bf16.mxu0 0
    %5299 = vmatpush2.bf16.msra.mxu0 0
    %5300 = vmatprep.subr.bf16.mxu0 0
    %5301 = vmatpush2.bf16.msra.mxu0 0
    %5302 = vmatprep.subr.bf16.mxu0 0
    %5303 = vmatpush2.bf16.msra.mxu0 0
    %5304 = vmatprep.subr.bf16.mxu0 0
    %5305 = vmatpush2.bf16.msra.mxu0 0
    %5306 = vmatprep.mubr.bf16.mxu0 0
    %5307 = vmatmul.mubr.bf16.gmra.mxu0 %v5179
    %v5308 = vpop.f32.mrf.mxu0
    %v5309 = vadd.f32 0.0, %v5308
    %v5310 = vpop.f32.mrf.mxu0
    %v5311 = vpop.f32.mrf.mxu0
    %v5312 = vadd.f32 0.0, %v5311
    %v5313 = vpop.f32.mrf.mxu0
    %5314 = vmatprep.mubr.bf16.mxu0 0
    %5315 = vmatmul.mubr.bf16.gmra.mxu0 %v5182
    %v5316 = vpop.f32.mrf.mxu0
    %v5317 = vadd.f32 0.0, %v5316
    %v5318 = vpop.f32.mrf.mxu0
    %v5319 = vpop.f32.mrf.mxu0
    %v5320 = vadd.f32 0.0, %v5319
    %v5321 = vpop.f32.mrf.mxu0
    %5322 = vmatprep.mubr.bf16.mxu0 0
    %5323 = vmatmul.mubr.bf16.gmra.mxu0 %v5185
    %v5324 = vpop.f32.mrf.mxu0
    %v5325 = vadd.f32 0.0, %v5324
    %v5326 = vpop.f32.mrf.mxu0
    %v5327 = vpop.f32.mrf.mxu0
    %v5328 = vadd.f32 0.0, %v5327
    %v5329 = vpop.f32.mrf.mxu0
    %5330 = vmatprep.mubr.bf16.mxu0 0
    %5331 = vmatmul.mubr.bf16.gmra.mxu0 %v5188
    %v5332 = vpop.f32.mrf.mxu0
    %v5333 = vadd.f32 0.0, %v5332
    %v5334 = vpop.f32.mrf.mxu0
    %v5335 = vpop.f32.mrf.mxu0
    %v5336 = vadd.f32 0.0, %v5335
    %v5337 = vpop.f32.mrf.mxu0
    %5338 = vmatprep.mubr.bf16.mxu0 0
    %5339 = vmatmul.mubr.bf16.gmra.mxu0 %v5191
    %v5340 = vpop.f32.mrf.mxu0
    %v5341 = vadd.f32 0.0, %v5340
    %v5342 = vpop.f32.mrf.mxu0
    %v5343 = vpop.f32.mrf.mxu0
    %v5344 = vadd.f32 0.0, %v5343
    %v5345 = vpop.f32.mrf.mxu0
    %5346 = vmatprep.mubr.bf16.mxu0 0
    %5347 = vmatmul.mubr.bf16.gmra.mxu0 %v5194
    %v5348 = vpop.f32.mrf.mxu0
    %v5349 = vadd.f32 0.0, %v5348
    %v5350 = vpop.f32.mrf.mxu0
    %v5351 = vpop.f32.mrf.mxu0
    %v5352 = vadd.f32 0.0, %v5351
    %v5353 = vpop.f32.mrf.mxu0
    %5354 = vmatprep.mubr.bf16.mxu0 0
    %5355 = vmatmul.mubr.bf16.gmra.mxu0 %v5197
    %v5356 = vpop.f32.mrf.mxu0
    %v5357 = vadd.f32 0.0, %v5356
    %v5358 = vpop.f32.mrf.mxu0
    %v5359 = vpop.f32.mrf.mxu0
    %v5360 = vadd.f32 0.0, %v5359
    %v5361 = vpop.f32.mrf.mxu0
    %5362 = vmatprep.mubr.bf16.mxu0 0
    %5363 = vmatmul.mubr.bf16.gmra.mxu0 %v5200
    %v5364 = vpop.f32.mrf.mxu0
    %v5365 = vadd.f32 0.0, %v5364
    %v5366 = vpop.f32.mrf.mxu0
    %v5367 = vpop.f32.mrf.mxu0
    %v5368 = vadd.f32 0.0, %v5367
    %v5369 = vpop.f32.mrf.mxu0
    %5370 = vmatprep.mubr.bf16.mxu0 0
    %5371 = vmatmul.mubr.bf16.gmra.mxu0 %v5203
    %v5372 = vpop.f32.mrf.mxu0
    %v5373 = vadd.f32 0.0, %v5372
    %v5374 = vpop.f32.mrf.mxu0
    %v5375 = vpop.f32.mrf.mxu0
    %v5376 = vadd.f32 0.0, %v5375
    %v5377 = vpop.f32.mrf.mxu0
    %5378 = vmatprep.mubr.bf16.mxu0 0
    %5379 = vmatmul.mubr.bf16.gmra.mxu0 %v5206
    %v5380 = vpop.f32.mrf.mxu0
    %v5381 = vadd.f32 0.0, %v5380
    %v5382 = vpop.f32.mrf.mxu0
    %v5383 = vpop.f32.mrf.mxu0
    %v5384 = vadd.f32 0.0, %v5383
    %v5385 = vpop.f32.mrf.mxu0
    %5386 = vmatprep.mubr.bf16.mxu0 0
    %5387 = vmatmul.mubr.bf16.gmra.mxu0 %v5209
    %v5388 = vpop.f32.mrf.mxu0
    %v5389 = vadd.f32 0.0, %v5388
    %v5390 = vpop.f32.mrf.mxu0
    %v5391 = vpop.f32.mrf.mxu0
    %v5392 = vadd.f32 0.0, %v5391
    %v5393 = vpop.f32.mrf.mxu0
    %5394 = vmatprep.mubr.bf16.mxu0 0
    %5395 = vmatmul.mubr.bf16.gmra.mxu0 %v5212
    %v5396 = vpop.f32.mrf.mxu0
    %v5397 = vadd.f32 0.0, %v5396
    %v5398 = vpop.f32.mrf.mxu0
    %v5399 = vpop.f32.mrf.mxu0
    %v5400 = vadd.f32 0.0, %v5399
    %v5401 = vpop.f32.mrf.mxu0
    %5402 = vmatprep.mubr.bf16.mxu0 0
    %5403 = vmatmul.mubr.bf16.gmra.mxu0 %v5215
    %v5404 = vpop.f32.mrf.mxu0
    %v5405 = vadd.f32 0.0, %v5404
    %v5406 = vpop.f32.mrf.mxu0
    %v5407 = vpop.f32.mrf.mxu0
    %v5408 = vadd.f32 0.0, %v5407
    %v5409 = vpop.f32.mrf.mxu0
    %5410 = vmatprep.mubr.bf16.mxu0 0
    %5411 = vmatmul.mubr.bf16.gmra.mxu0 %v5218
    %v5412 = vpop.f32.mrf.mxu0
    %v5413 = vadd.f32 0.0, %v5412
    %v5414 = vpop.f32.mrf.mxu0
    %v5415 = vpop.f32.mrf.mxu0
    %v5416 = vadd.f32 0.0, %v5415
    %v5417 = vpop.f32.mrf.mxu0
    %5418 = vmatprep.mubr.bf16.mxu0 0
    %5419 = vmatmul.mubr.bf16.gmra.mxu0 %v5221
    %v5420 = vpop.f32.mrf.mxu0
    %v5421 = vadd.f32 0.0, %v5420
    %v5422 = vpop.f32.mrf.mxu0
    %v5423 = vpop.f32.mrf.mxu0
    %v5424 = vadd.f32 0.0, %v5423
    %v5425 = vpop.f32.mrf.mxu0
    %5426 = vmatprep.mubr.bf16.mxu0 0
    %5427 = vmatmul.mubr.bf16.gmra.mxu0 %v5224
    %v5428 = vpop.f32.mrf.mxu0
    %v5429 = vadd.f32 0.0, %v5428
    %v5430 = vpop.f32.mrf.mxu0
    %v5431 = vpop.f32.mrf.mxu0
    %v5432 = vadd.f32 0.0, %v5431
    %v5433 = vpop.f32.mrf.mxu0
    %5434 = vmatprep.mubr.bf16.mxu0 0
    %5435 = vmatmul.mubr.bf16.gmra.mxu0 %v5227
    %v5436 = vpop.f32.mrf.mxu0
    %v5437 = vadd.f32 0.0, %v5436
    %v5438 = vpop.f32.mrf.mxu0
    %v5439 = vpop.f32.mrf.mxu0
    %v5440 = vadd.f32 0.0, %v5439
    %v5441 = vpop.f32.mrf.mxu0
    %5442 = vmatprep.mubr.bf16.mxu0 0
    %5443 = vmatmul.mubr.bf16.gmra.mxu0 %v5230
    %v5444 = vpop.f32.mrf.mxu0
    %v5445 = vadd.f32 0.0, %v5444
    %v5446 = vpop.f32.mrf.mxu0
    %v5447 = vpop.f32.mrf.mxu0
    %v5448 = vadd.f32 0.0, %v5447
    %v5449 = vpop.f32.mrf.mxu0
    %5450 = vmatprep.mubr.bf16.mxu0 0
    %5451 = vmatmul.mubr.bf16.gmra.mxu0 %v5233
    %v5452 = vpop.f32.mrf.mxu0
    %v5453 = vadd.f32 0.0, %v5452
    %v5454 = vpop.f32.mrf.mxu0
    %v5455 = vpop.f32.mrf.mxu0
    %v5456 = vadd.f32 0.0, %v5455
    %v5457 = vpop.f32.mrf.mxu0
    %5458 = vmatprep.mubr.bf16.mxu0 0
    %5459 = vmatmul.mubr.bf16.gmra.mxu0 %v5236
    %v5460 = vpop.f32.mrf.mxu0
    %v5461 = vadd.f32 0.0, %v5460
    %v5462 = vpop.f32.mrf.mxu0
    %v5463 = vpop.f32.mrf.mxu0
    %v5464 = vadd.f32 0.0, %v5463
    %v5465 = vpop.f32.mrf.mxu0
    %5466 = vmatprep.mubr.bf16.mxu0 0
    %5467 = vmatmul.mubr.bf16.gmra.mxu0 %v5239
    %v5468 = vpop.f32.mrf.mxu0
    %v5469 = vadd.f32 0.0, %v5468
    %v5470 = vpop.f32.mrf.mxu0
    %v5471 = vpop.f32.mrf.mxu0
    %v5472 = vadd.f32 0.0, %v5471
    %v5473 = vpop.f32.mrf.mxu0
    %5474 = vmatprep.mubr.bf16.mxu0 0
    %5475 = vmatmul.mubr.bf16.gmra.mxu0 %v5242
    %v5476 = vpop.f32.mrf.mxu0
    %v5477 = vadd.f32 0.0, %v5476
    %v5478 = vpop.f32.mrf.mxu0
    %v5479 = vpop.f32.mrf.mxu0
    %v5480 = vadd.f32 0.0, %v5479
    %v5481 = vpop.f32.mrf.mxu0
    %5482 = vmatprep.mubr.bf16.mxu0 0
    %5483 = vmatmul.mubr.bf16.gmra.mxu0 %v5245
    %v5484 = vpop.f32.mrf.mxu0
    %v5485 = vadd.f32 0.0, %v5484
    %v5486 = vpop.f32.mrf.mxu0
    %v5487 = vpop.f32.mrf.mxu0
    %v5488 = vadd.f32 0.0, %v5487
    %v5489 = vpop.f32.mrf.mxu0
    %5490 = vmatprep.mubr.bf16.mxu0 0
    %5491 = vmatmul.mubr.bf16.gmra.mxu0 %v5248
    %v5492 = vpop.f32.mrf.mxu0
    %v5493 = vadd.f32 0.0, %v5492
    %v5494 = vpop.f32.mrf.mxu0
    %v5495 = vpop.f32.mrf.mxu0
    %v5496 = vadd.f32 0.0, %v5495
    %v5497 = vpop.f32.mrf.mxu0
    %5498 = vmatprep.mubr.bf16.mxu0 0
    %5499 = vmatmul.mubr.bf16.gmra.mxu0 %v5251
    %v5500 = vpop.f32.mrf.mxu0
    %v5501 = vadd.f32 0.0, %v5500
    %v5502 = vpop.f32.mrf.mxu0
    %v5503 = vpop.f32.mrf.mxu0
    %v5504 = vadd.f32 0.0, %v5503
    %v5505 = vpop.f32.mrf.mxu0
    %5506 = vmatprep.mubr.bf16.mxu0 0
    %5507 = vmatmul.mubr.bf16.gmra.mxu0 %v5254
    %v5508 = vpop.f32.mrf.mxu0
    %v5509 = vadd.f32 0.0, %v5508
    %v5510 = vpop.f32.mrf.mxu0
    %v5511 = vpop.f32.mrf.mxu0
    %v5512 = vadd.f32 0.0, %v5511
    %v5513 = vpop.f32.mrf.mxu0
    %5514 = vmatprep.mubr.bf16.mxu0 0
    %5515 = vmatmul.mubr.bf16.gmra.mxu0 %v5257
    %v5516 = vpop.f32.mrf.mxu0
    %v5517 = vadd.f32 0.0, %v5516
    %v5518 = vpop.f32.mrf.mxu0
    %v5519 = vpop.f32.mrf.mxu0
    %v5520 = vadd.f32 0.0, %v5519
    %v5521 = vpop.f32.mrf.mxu0
    %5522 = vmatprep.mubr.bf16.mxu0 0
    %5523 = vmatmul.mubr.bf16.gmra.mxu0 %v5260
    %v5524 = vpop.f32.mrf.mxu0
    %v5525 = vadd.f32 0.0, %v5524
    %v5526 = vpop.f32.mrf.mxu0
    %v5527 = vpop.f32.mrf.mxu0
    %v5528 = vadd.f32 0.0, %v5527
    %v5529 = vpop.f32.mrf.mxu0
    %5530 = vmatprep.mubr.bf16.mxu0 0
    %5531 = vmatmul.mubr.bf16.gmra.mxu0 %v5263
    %v5532 = vpop.f32.mrf.mxu0
    %v5533 = vadd.f32 0.0, %v5532
    %v5534 = vpop.f32.mrf.mxu0
    %v5535 = vpop.f32.mrf.mxu0
    %v5536 = vadd.f32 0.0, %v5535
    %v5537 = vpop.f32.mrf.mxu0
    %5538 = vmatprep.mubr.bf16.mxu0 0
    %5539 = vmatmul.mubr.bf16.gmra.mxu0 %v5266
    %v5540 = vpop.f32.mrf.mxu0
    %v5541 = vadd.f32 0.0, %v5540
    %v5542 = vpop.f32.mrf.mxu0
    %v5543 = vpop.f32.mrf.mxu0
    %v5544 = vadd.f32 0.0, %v5543
    %v5545 = vpop.f32.mrf.mxu0
    %5546 = vmatprep.mubr.bf16.mxu0 0
    %5547 = vmatmul.mubr.bf16.gmra.mxu0 %v5269
    %v5548 = vpop.f32.mrf.mxu0
    %v5549 = vadd.f32 0.0, %v5548
    %v5550 = vpop.f32.mrf.mxu0
    %v5551 = vpop.f32.mrf.mxu0
    %v5552 = vadd.f32 0.0, %v5551
    %v5553 = vpop.f32.mrf.mxu0
    %5554 = vmatprep.mubr.bf16.mxu0 0
    %5555 = vmatmul.mubr.bf16.gmra.mxu0 %v5272
    %v5556 = vpop.f32.mrf.mxu0
    %v5557 = vadd.f32 0.0, %v5556
    %v5558 = vpop.f32.mrf.mxu0
    %v5559 = vpop.f32.mrf.mxu0
    %v5560 = vadd.f32 0.0, %v5559
    %v5561 = vpop.f32.mrf.mxu0
    %5562 = vdwg.mxu0
    %v5563 = vmul.f32 %v5309, 0.35355338
    %v5564 = vmul.f32 %v5312, 0.35355338
    %v5565 = vmul.f32 %v5317, 0.35355338
    %v5566 = vmul.f32 %v5320, 0.35355338
    %v5567 = vmul.f32 %v5325, 0.35355338
    %v5568 = vmul.f32 %v5328, 0.35355338
    %v5569 = vmul.f32 %v5333, 0.35355338
    %v5570 = vmul.f32 %v5336, 0.35355338
    %v5571 = vmul.f32 %v5341, 0.35355338
    %v5572 = vmul.f32 %v5344, 0.35355338
    %v5573 = vmul.f32 %v5349, 0.35355338
    %v5574 = vmul.f32 %v5352, 0.35355338
    %v5575 = vmul.f32 %v5357, 0.35355338
    %v5576 = vmul.f32 %v5360, 0.35355338
    %v5577 = vmul.f32 %v5365, 0.35355338
    %v5578 = vmul.f32 %v5368, 0.35355338
    %v5579 = vmul.f32 %v5373, 0.35355338
    %v5580 = vmul.f32 %v5376, 0.35355338
    %v5581 = vmul.f32 %v5381, 0.35355338
    %v5582 = vmul.f32 %v5384, 0.35355338
    %v5583 = vmul.f32 %v5389, 0.35355338
    %v5584 = vmul.f32 %v5392, 0.35355338
    %v5585 = vmul.f32 %v5397, 0.35355338
    %v5586 = vmul.f32 %v5400, 0.35355338
    %v5587 = vmul.f32 %v5405, 0.35355338
    %v5588 = vmul.f32 %v5408, 0.35355338
    %v5589 = vmul.f32 %v5413, 0.35355338
    %v5590 = vmul.f32 %v5416, 0.35355338
    %v5591 = vmul.f32 %v5421, 0.35355338
    %v5592 = vmul.f32 %v5424, 0.35355338
    %v5593 = vmul.f32 %v5429, 0.35355338
    %v5594 = vmul.f32 %v5432, 0.35355338
    %v5595 = vmul.f32 %v5437, 0.35355338
    %v5596 = vmul.f32 %v5440, 0.35355338
    %v5597 = vmul.f32 %v5445, 0.35355338
    %v5598 = vmul.f32 %v5448, 0.35355338
    %v5599 = vmul.f32 %v5453, 0.35355338
    %v5600 = vmul.f32 %v5456, 0.35355338
    %v5601 = vmul.f32 %v5461, 0.35355338
    %v5602 = vmul.f32 %v5464, 0.35355338
    %v5603 = vmul.f32 %v5469, 0.35355338
    %v5604 = vmul.f32 %v5472, 0.35355338
    %v5605 = vmul.f32 %v5477, 0.35355338
    %v5606 = vmul.f32 %v5480, 0.35355338
    %v5607 = vmul.f32 %v5485, 0.35355338
    %v5608 = vmul.f32 %v5488, 0.35355338
    %v5609 = vmul.f32 %v5493, 0.35355338
    %v5610 = vmul.f32 %v5496, 0.35355338
    %v5611 = vmul.f32 %v5501, 0.35355338
    %v5612 = vmul.f32 %v5504, 0.35355338
    %v5613 = vmul.f32 %v5509, 0.35355338
    %v5614 = vmul.f32 %v5512, 0.35355338
    %v5615 = vmul.f32 %v5517, 0.35355338
    %v5616 = vmul.f32 %v5520, 0.35355338
    %v5617 = vmul.f32 %v5525, 0.35355338
    %v5618 = vmul.f32 %v5528, 0.35355338
    %v5619 = vmul.f32 %v5533, 0.35355338
    %v5620 = vmul.f32 %v5536, 0.35355338
    %v5621 = vmul.f32 %v5541, 0.35355338
    %v5622 = vmul.f32 %v5544, 0.35355338
    %v5623 = vmul.f32 %v5549, 0.35355338
    %v5624 = vmul.f32 %v5552, 0.35355338
    %v5625 = vmul.f32 %v5557, 0.35355338
    %v5626 = vmul.f32 %v5560, 0.35355338
    %v5627 = vadd.f32 %v5563, %v1530
    %v5628 = vadd.f32 %v5564, %v1531
    %v5629 = vadd.f32 %v5565, %v1532
    %v5630 = vadd.f32 %v5566, %v1533
    %v5631 = vadd.f32 %v5567, %v1534
    %v5632 = vadd.f32 %v5568, %v1535
    %v5633 = vadd.f32 %v5569, %v1536
    %v5634 = vadd.f32 %v5570, %v1537
    %v5635 = vadd.f32 %v5571, %v1538
    %v5636 = vadd.f32 %v5572, %v1539
    %v5637 = vadd.f32 %v5573, %v1540
    %v5638 = vadd.f32 %v5574, %v1541
    %v5639 = vadd.f32 %v5575, %v1542
    %v5640 = vadd.f32 %v5576, %v1543
    %v5641 = vadd.f32 %v5577, %v1544
    %v5642 = vadd.f32 %v5578, %v1545
    %v5643 = vadd.f32 %v5579, %v1546
    %v5644 = vadd.f32 %v5580, %v1547
    %v5645 = vadd.f32 %v5581, %v1548
    %v5646 = vadd.f32 %v5582, %v1549
    %v5647 = vadd.f32 %v5583, %v1550
    %v5648 = vadd.f32 %v5584, %v1551
    %v5649 = vadd.f32 %v5585, %v1552
    %v5650 = vadd.f32 %v5586, %v1553
    %v5651 = vadd.f32 %v5587, %v1554
    %v5652 = vadd.f32 %v5588, %v1555
    %v5653 = vadd.f32 %v5589, %v1556
    %v5654 = vadd.f32 %v5590, %v1557
    %v5655 = vadd.f32 %v5591, %v1558
    %v5656 = vadd.f32 %v5592, %v1559
    %v5657 = vadd.f32 %v5593, %v1560
    %v5658 = vadd.f32 %v5594, %v1561
    %v5659 = vadd.f32 %v5595, %v1562
    %v5660 = vadd.f32 %v5596, %v1563
    %v5661 = vadd.f32 %v5597, %v1564
    %v5662 = vadd.f32 %v5598, %v1565
    %v5663 = vadd.f32 %v5599, %v1566
    %v5664 = vadd.f32 %v5600, %v1567
    %v5665 = vadd.f32 %v5601, %v1568
    %v5666 = vadd.f32 %v5602, %v1569
    %v5667 = vadd.f32 %v5603, %v1570
    %v5668 = vadd.f32 %v5604, %v1571
    %v5669 = vadd.f32 %v5605, %v1572
    %v5670 = vadd.f32 %v5606, %v1573
    %v5671 = vadd.f32 %v5607, %v1574
    %v5672 = vadd.f32 %v5608, %v1575
    %v5673 = vadd.f32 %v5609, %v1576
    %v5674 = vadd.f32 %v5610, %v1577
    %v5675 = vadd.f32 %v5611, %v1578
    %v5676 = vadd.f32 %v5612, %v1579
    %v5677 = vadd.f32 %v5613, %v1580
    %v5678 = vadd.f32 %v5614, %v1581
    %v5679 = vadd.f32 %v5615, %v1582
    %v5680 = vadd.f32 %v5616, %v1583
    %v5681 = vadd.f32 %v5617, %v1584
    %v5682 = vadd.f32 %v5618, %v1585
    %v5683 = vadd.f32 %v5619, %v1586
    %v5684 = vadd.f32 %v5620, %v1587
    %v5685 = vadd.f32 %v5621, %v1588
    %v5686 = vadd.f32 %v5622, %v1589
    %v5687 = vadd.f32 %v5623, %v1590
    %v5688 = vadd.f32 %v5624, %v1591
    %v5689 = vadd.f32 %v5625, %v1592
    %v5690 = vadd.f32 %v5626, %v1593
    %v5691 = vsel %vm215, %v5627, -inf
    %v5692 = vrot.slane %v5691, 4
    %v5693 = vmax.f32 %v5691, %v5692
    %v5694 = vrot.slane %v5693, 2
    %v5695 = vmax.f32 %v5693, %v5694
    %v5696 = vrot.slane %v5695, 1
    %v5697 = vmax.f32 %v5695, %v5696
    %v5698 = vsel %vm215, %v5628, -inf
    %v5699 = vrot.slane %v5698, 4
    %v5700 = vmax.f32 %v5698, %v5699
    %v5701 = vrot.slane %v5700, 2
    %v5702 = vmax.f32 %v5700, %v5701
    %v5703 = vrot.slane %v5702, 1
    %v5704 = vmax.f32 %v5702, %v5703
    %v5705 = vsel %vm215, %v5629, -inf
    %v5706 = vrot.slane %v5705, 4
    %v5707 = vmax.f32 %v5705, %v5706
    %v5708 = vrot.slane %v5707, 2
    %v5709 = vmax.f32 %v5707, %v5708
    %v5710 = vrot.slane %v5709, 1
    %v5711 = vmax.f32 %v5709, %v5710
    %v5712 = vsel %vm215, %v5630, -inf
    %v5713 = vrot.slane %v5712, 4
    %v5714 = vmax.f32 %v5712, %v5713
    %v5715 = vrot.slane %v5714, 2
    %v5716 = vmax.f32 %v5714, %v5715
    %v5717 = vrot.slane %v5716, 1
    %v5718 = vmax.f32 %v5716, %v5717
    %v5719 = vsel %vm215, %v5631, -inf
    %v5720 = vrot.slane %v5719, 4
    %v5721 = vmax.f32 %v5719, %v5720
    %v5722 = vrot.slane %v5721, 2
    %v5723 = vmax.f32 %v5721, %v5722
    %v5724 = vrot.slane %v5723, 1
    %v5725 = vmax.f32 %v5723, %v5724
    %v5726 = vsel %vm215, %v5632, -inf
    %v5727 = vrot.slane %v5726, 4
    %v5728 = vmax.f32 %v5726, %v5727
    %v5729 = vrot.slane %v5728, 2
    %v5730 = vmax.f32 %v5728, %v5729
    %v5731 = vrot.slane %v5730, 1
    %v5732 = vmax.f32 %v5730, %v5731
    %v5733 = vsel %vm215, %v5633, -inf
    %v5734 = vrot.slane %v5733, 4
    %v5735 = vmax.f32 %v5733, %v5734
    %v5736 = vrot.slane %v5735, 2
    %v5737 = vmax.f32 %v5735, %v5736
    %v5738 = vrot.slane %v5737, 1
    %v5739 = vmax.f32 %v5737, %v5738
    %v5740 = vsel %vm215, %v5634, -inf
    %v5741 = vrot.slane %v5740, 4
    %v5742 = vmax.f32 %v5740, %v5741
    %v5743 = vrot.slane %v5742, 2
    %v5744 = vmax.f32 %v5742, %v5743
    %v5745 = vrot.slane %v5744, 1
    %v5746 = vmax.f32 %v5744, %v5745
    %v5747 = vsel %vm215, %v5635, -inf
    %v5748 = vrot.slane %v5747, 4
    %v5749 = vmax.f32 %v5747, %v5748
    %v5750 = vrot.slane %v5749, 2
    %v5751 = vmax.f32 %v5749, %v5750
    %v5752 = vrot.slane %v5751, 1
    %v5753 = vmax.f32 %v5751, %v5752
    %v5754 = vsel %vm215, %v5636, -inf
    %v5755 = vrot.slane %v5754, 4
    %v5756 = vmax.f32 %v5754, %v5755
    %v5757 = vrot.slane %v5756, 2
    %v5758 = vmax.f32 %v5756, %v5757
    %v5759 = vrot.slane %v5758, 1
    %v5760 = vmax.f32 %v5758, %v5759
    %v5761 = vsel %vm215, %v5637, -inf
    %v5762 = vrot.slane %v5761, 4
    %v5763 = vmax.f32 %v5761, %v5762
    %v5764 = vrot.slane %v5763, 2
    %v5765 = vmax.f32 %v5763, %v5764
    %v5766 = vrot.slane %v5765, 1
    %v5767 = vmax.f32 %v5765, %v5766
    %v5768 = vsel %vm215, %v5638, -inf
    %v5769 = vrot.slane %v5768, 4
    %v5770 = vmax.f32 %v5768, %v5769
    %v5771 = vrot.slane %v5770, 2
    %v5772 = vmax.f32 %v5770, %v5771
    %v5773 = vrot.slane %v5772, 1
    %v5774 = vmax.f32 %v5772, %v5773
    %v5775 = vsel %vm215, %v5639, -inf
    %v5776 = vrot.slane %v5775, 4
    %v5777 = vmax.f32 %v5775, %v5776
    %v5778 = vrot.slane %v5777, 2
    %v5779 = vmax.f32 %v5777, %v5778
    %v5780 = vrot.slane %v5779, 1
    %v5781 = vmax.f32 %v5779, %v5780
    %v5782 = vsel %vm215, %v5640, -inf
    %v5783 = vrot.slane %v5782, 4
    %v5784 = vmax.f32 %v5782, %v5783
    %v5785 = vrot.slane %v5784, 2
    %v5786 = vmax.f32 %v5784, %v5785
    %v5787 = vrot.slane %v5786, 1
    %v5788 = vmax.f32 %v5786, %v5787
    %v5789 = vsel %vm215, %v5641, -inf
    %v5790 = vrot.slane %v5789, 4
    %v5791 = vmax.f32 %v5789, %v5790
    %v5792 = vrot.slane %v5791, 2
    %v5793 = vmax.f32 %v5791, %v5792
    %v5794 = vrot.slane %v5793, 1
    %v5795 = vmax.f32 %v5793, %v5794
    %v5796 = vsel %vm215, %v5642, -inf
    %v5797 = vrot.slane %v5796, 4
    %v5798 = vmax.f32 %v5796, %v5797
    %v5799 = vrot.slane %v5798, 2
    %v5800 = vmax.f32 %v5798, %v5799
    %v5801 = vrot.slane %v5800, 1
    %v5802 = vmax.f32 %v5800, %v5801
    %v5803 = vsel %vm215, %v5643, -inf
    %v5804 = vrot.slane %v5803, 4
    %v5805 = vmax.f32 %v5803, %v5804
    %v5806 = vrot.slane %v5805, 2
    %v5807 = vmax.f32 %v5805, %v5806
    %v5808 = vrot.slane %v5807, 1
    %v5809 = vmax.f32 %v5807, %v5808
    %v5810 = vsel %vm215, %v5644, -inf
    %v5811 = vrot.slane %v5810, 4
    %v5812 = vmax.f32 %v5810, %v5811
    %v5813 = vrot.slane %v5812, 2
    %v5814 = vmax.f32 %v5812, %v5813
    %v5815 = vrot.slane %v5814, 1
    %v5816 = vmax.f32 %v5814, %v5815
    %v5817 = vsel %vm215, %v5645, -inf
    %v5818 = vrot.slane %v5817, 4
    %v5819 = vmax.f32 %v5817, %v5818
    %v5820 = vrot.slane %v5819, 2
    %v5821 = vmax.f32 %v5819, %v5820
    %v5822 = vrot.slane %v5821, 1
    %v5823 = vmax.f32 %v5821, %v5822
    %v5824 = vsel %vm215, %v5646, -inf
    %v5825 = vrot.slane %v5824, 4
    %v5826 = vmax.f32 %v5824, %v5825
    %v5827 = vrot.slane %v5826, 2
    %v5828 = vmax.f32 %v5826, %v5827
    %v5829 = vrot.slane %v5828, 1
    %v5830 = vmax.f32 %v5828, %v5829
    %v5831 = vsel %vm215, %v5647, -inf
    %v5832 = vrot.slane %v5831, 4
    %v5833 = vmax.f32 %v5831, %v5832
    %v5834 = vrot.slane %v5833, 2
    %v5835 = vmax.f32 %v5833, %v5834
    %v5836 = vrot.slane %v5835, 1
    %v5837 = vmax.f32 %v5835, %v5836
    %v5838 = vsel %vm215, %v5648, -inf
    %v5839 = vrot.slane %v5838, 4
    %v5840 = vmax.f32 %v5838, %v5839
    %v5841 = vrot.slane %v5840, 2
    %v5842 = vmax.f32 %v5840, %v5841
    %v5843 = vrot.slane %v5842, 1
    %v5844 = vmax.f32 %v5842, %v5843
    %v5845 = vsel %vm215, %v5649, -inf
    %v5846 = vrot.slane %v5845, 4
    %v5847 = vmax.f32 %v5845, %v5846
    %v5848 = vrot.slane %v5847, 2
    %v5849 = vmax.f32 %v5847, %v5848
    %v5850 = vrot.slane %v5849, 1
    %v5851 = vmax.f32 %v5849, %v5850
    %v5852 = vsel %vm215, %v5650, -inf
    %v5853 = vrot.slane %v5852, 4
    %v5854 = vmax.f32 %v5852, %v5853
    %v5855 = vrot.slane %v5854, 2
    %v5856 = vmax.f32 %v5854, %v5855
    %v5857 = vrot.slane %v5856, 1
    %v5858 = vmax.f32 %v5856, %v5857
    %v5859 = vsel %vm215, %v5651, -inf
    %v5860 = vrot.slane %v5859, 4
    %v5861 = vmax.f32 %v5859, %v5860
    %v5862 = vrot.slane %v5861, 2
    %v5863 = vmax.f32 %v5861, %v5862
    %v5864 = vrot.slane %v5863, 1
    %v5865 = vmax.f32 %v5863, %v5864
    %v5866 = vsel %vm215, %v5652, -inf
    %v5867 = vrot.slane %v5866, 4
    %v5868 = vmax.f32 %v5866, %v5867
    %v5869 = vrot.slane %v5868, 2
    %v5870 = vmax.f32 %v5868, %v5869
    %v5871 = vrot.slane %v5870, 1
    %v5872 = vmax.f32 %v5870, %v5871
    %v5873 = vsel %vm215, %v5653, -inf
    %v5874 = vrot.slane %v5873, 4
    %v5875 = vmax.f32 %v5873, %v5874
    %v5876 = vrot.slane %v5875, 2
    %v5877 = vmax.f32 %v5875, %v5876
    %v5878 = vrot.slane %v5877, 1
    %v5879 = vmax.f32 %v5877, %v5878
    %v5880 = vsel %vm215, %v5654, -inf
    %v5881 = vrot.slane %v5880, 4
    %v5882 = vmax.f32 %v5880, %v5881
    %v5883 = vrot.slane %v5882, 2
    %v5884 = vmax.f32 %v5882, %v5883
    %v5885 = vrot.slane %v5884, 1
    %v5886 = vmax.f32 %v5884, %v5885
    %v5887 = vsel %vm215, %v5655, -inf
    %v5888 = vrot.slane %v5887, 4
    %v5889 = vmax.f32 %v5887, %v5888
    %v5890 = vrot.slane %v5889, 2
    %v5891 = vmax.f32 %v5889, %v5890
    %v5892 = vrot.slane %v5891, 1
    %v5893 = vmax.f32 %v5891, %v5892
    %v5894 = vsel %vm215, %v5656, -inf
    %v5895 = vrot.slane %v5894, 4
    %v5896 = vmax.f32 %v5894, %v5895
    %v5897 = vrot.slane %v5896, 2
    %v5898 = vmax.f32 %v5896, %v5897
    %v5899 = vrot.slane %v5898, 1
    %v5900 = vmax.f32 %v5898, %v5899
    %v5901 = vsel %vm215, %v5657, -inf
    %v5902 = vrot.slane %v5901, 4
    %v5903 = vmax.f32 %v5901, %v5902
    %v5904 = vrot.slane %v5903, 2
    %v5905 = vmax.f32 %v5903, %v5904
    %v5906 = vrot.slane %v5905, 1
    %v5907 = vmax.f32 %v5905, %v5906
    %v5908 = vsel %vm215, %v5658, -inf
    %v5909 = vrot.slane %v5908, 4
    %v5910 = vmax.f32 %v5908, %v5909
    %v5911 = vrot.slane %v5910, 2
    %v5912 = vmax.f32 %v5910, %v5911
    %v5913 = vrot.slane %v5912, 1
    %v5914 = vmax.f32 %v5912, %v5913
    %v5915 = vsel %vm215, %v5659, -inf
    %v5916 = vrot.slane %v5915, 4
    %v5917 = vmax.f32 %v5915, %v5916
    %v5918 = vrot.slane %v5917, 2
    %v5919 = vmax.f32 %v5917, %v5918
    %v5920 = vrot.slane %v5919, 1
    %v5921 = vmax.f32 %v5919, %v5920
    %v5922 = vsel %vm215, %v5660, -inf
    %v5923 = vrot.slane %v5922, 4
    %v5924 = vmax.f32 %v5922, %v5923
    %v5925 = vrot.slane %v5924, 2
    %v5926 = vmax.f32 %v5924, %v5925
    %v5927 = vrot.slane %v5926, 1
    %v5928 = vmax.f32 %v5926, %v5927
    %v5929 = vsel %vm215, %v5661, -inf
    %v5930 = vrot.slane %v5929, 4
    %v5931 = vmax.f32 %v5929, %v5930
    %v5932 = vrot.slane %v5931, 2
    %v5933 = vmax.f32 %v5931, %v5932
    %v5934 = vrot.slane %v5933, 1
    %v5935 = vmax.f32 %v5933, %v5934
    %v5936 = vsel %vm215, %v5662, -inf
    %v5937 = vrot.slane %v5936, 4
    %v5938 = vmax.f32 %v5936, %v5937
    %v5939 = vrot.slane %v5938, 2
    %v5940 = vmax.f32 %v5938, %v5939
    %v5941 = vrot.slane %v5940, 1
    %v5942 = vmax.f32 %v5940, %v5941
    %v5943 = vsel %vm215, %v5663, -inf
    %v5944 = vrot.slane %v5943, 4
    %v5945 = vmax.f32 %v5943, %v5944
    %v5946 = vrot.slane %v5945, 2
    %v5947 = vmax.f32 %v5945, %v5946
    %v5948 = vrot.slane %v5947, 1
    %v5949 = vmax.f32 %v5947, %v5948
    %v5950 = vsel %vm215, %v5664, -inf
    %v5951 = vrot.slane %v5950, 4
    %v5952 = vmax.f32 %v5950, %v5951
    %v5953 = vrot.slane %v5952, 2
    %v5954 = vmax.f32 %v5952, %v5953
    %v5955 = vrot.slane %v5954, 1
    %v5956 = vmax.f32 %v5954, %v5955
    %v5957 = vsel %vm215, %v5665, -inf
    %v5958 = vrot.slane %v5957, 4
    %v5959 = vmax.f32 %v5957, %v5958
    %v5960 = vrot.slane %v5959, 2
    %v5961 = vmax.f32 %v5959, %v5960
    %v5962 = vrot.slane %v5961, 1
    %v5963 = vmax.f32 %v5961, %v5962
    %v5964 = vsel %vm215, %v5666, -inf
    %v5965 = vrot.slane %v5964, 4
    %v5966 = vmax.f32 %v5964, %v5965
    %v5967 = vrot.slane %v5966, 2
    %v5968 = vmax.f32 %v5966, %v5967
    %v5969 = vrot.slane %v5968, 1
    %v5970 = vmax.f32 %v5968, %v5969
    %v5971 = vsel %vm215, %v5667, -inf
    %v5972 = vrot.slane %v5971, 4
    %v5973 = vmax.f32 %v5971, %v5972
    %v5974 = vrot.slane %v5973, 2
    %v5975 = vmax.f32 %v5973, %v5974
    %v5976 = vrot.slane %v5975, 1
    %v5977 = vmax.f32 %v5975, %v5976
    %v5978 = vsel %vm215, %v5668, -inf
    %v5979 = vrot.slane %v5978, 4
    %v5980 = vmax.f32 %v5978, %v5979
    %v5981 = vrot.slane %v5980, 2
    %v5982 = vmax.f32 %v5980, %v5981
    %v5983 = vrot.slane %v5982, 1
    %v5984 = vmax.f32 %v5982, %v5983
    %v5985 = vsel %vm215, %v5669, -inf
    %v5986 = vrot.slane %v5985, 4
    %v5987 = vmax.f32 %v5985, %v5986
    %v5988 = vrot.slane %v5987, 2
    %v5989 = vmax.f32 %v5987, %v5988
    %v5990 = vrot.slane %v5989, 1
    %v5991 = vmax.f32 %v5989, %v5990
    %v5992 = vsel %vm215, %v5670, -inf
    %v5993 = vrot.slane %v5992, 4
    %v5994 = vmax.f32 %v5992, %v5993
    %v5995 = vrot.slane %v5994, 2
    %v5996 = vmax.f32 %v5994, %v5995
    %v5997 = vrot.slane %v5996, 1
    %v5998 = vmax.f32 %v5996, %v5997
    %v5999 = vsel %vm215, %v5671, -inf
    %v6000 = vrot.slane %v5999, 4
    %v6001 = vmax.f32 %v5999, %v6000
    %v6002 = vrot.slane %v6001, 2
    %v6003 = vmax.f32 %v6001, %v6002
    %v6004 = vrot.slane %v6003, 1
    %v6005 = vmax.f32 %v6003, %v6004
    %v6006 = vsel %vm215, %v5672, -inf
    %v6007 = vrot.slane %v6006, 4
    %v6008 = vmax.f32 %v6006, %v6007
    %v6009 = vrot.slane %v6008, 2
    %v6010 = vmax.f32 %v6008, %v6009
    %v6011 = vrot.slane %v6010, 1
    %v6012 = vmax.f32 %v6010, %v6011
    %v6013 = vsel %vm215, %v5673, -inf
    %v6014 = vrot.slane %v6013, 4
    %v6015 = vmax.f32 %v6013, %v6014
    %v6016 = vrot.slane %v6015, 2
    %v6017 = vmax.f32 %v6015, %v6016
    %v6018 = vrot.slane %v6017, 1
    %v6019 = vmax.f32 %v6017, %v6018
    %v6020 = vsel %vm215, %v5674, -inf
    %v6021 = vrot.slane %v6020, 4
    %v6022 = vmax.f32 %v6020, %v6021
    %v6023 = vrot.slane %v6022, 2
    %v6024 = vmax.f32 %v6022, %v6023
    %v6025 = vrot.slane %v6024, 1
    %v6026 = vmax.f32 %v6024, %v6025
    %v6027 = vsel %vm215, %v5675, -inf
    %v6028 = vrot.slane %v6027, 4
    %v6029 = vmax.f32 %v6027, %v6028
    %v6030 = vrot.slane %v6029, 2
    %v6031 = vmax.f32 %v6029, %v6030
    %v6032 = vrot.slane %v6031, 1
    %v6033 = vmax.f32 %v6031, %v6032
    %v6034 = vsel %vm215, %v5676, -inf
    %v6035 = vrot.slane %v6034, 4
    %v6036 = vmax.f32 %v6034, %v6035
    %v6037 = vrot.slane %v6036, 2
    %v6038 = vmax.f32 %v6036, %v6037
    %v6039 = vrot.slane %v6038, 1
    %v6040 = vmax.f32 %v6038, %v6039
    %v6041 = vsel %vm215, %v5677, -inf
    %v6042 = vrot.slane %v6041, 4
    %v6043 = vmax.f32 %v6041, %v6042
    %v6044 = vrot.slane %v6043, 2
    %v6045 = vmax.f32 %v6043, %v6044
    %v6046 = vrot.slane %v6045, 1
    %v6047 = vmax.f32 %v6045, %v6046
    %v6048 = vsel %vm215, %v5678, -inf
    %v6049 = vrot.slane %v6048, 4
    %v6050 = vmax.f32 %v6048, %v6049
    %v6051 = vrot.slane %v6050, 2
    %v6052 = vmax.f32 %v6050, %v6051
    %v6053 = vrot.slane %v6052, 1
    %v6054 = vmax.f32 %v6052, %v6053
    %v6055 = vsel %vm215, %v5679, -inf
    %v6056 = vrot.slane %v6055, 4
    %v6057 = vmax.f32 %v6055, %v6056
    %v6058 = vrot.slane %v6057, 2
    %v6059 = vmax.f32 %v6057, %v6058
    %v6060 = vrot.slane %v6059, 1
    %v6061 = vmax.f32 %v6059, %v6060
    %v6062 = vsel %vm215, %v5680, -inf
    %v6063 = vrot.slane %v6062, 4
    %v6064 = vmax.f32 %v6062, %v6063
    %v6065 = vrot.slane %v6064, 2
    %v6066 = vmax.f32 %v6064, %v6065
    %v6067 = vrot.slane %v6066, 1
    %v6068 = vmax.f32 %v6066, %v6067
    %v6069 = vsel %vm215, %v5681, -inf
    %v6070 = vrot.slane %v6069, 4
    %v6071 = vmax.f32 %v6069, %v6070
    %v6072 = vrot.slane %v6071, 2
    %v6073 = vmax.f32 %v6071, %v6072
    %v6074 = vrot.slane %v6073, 1
    %v6075 = vmax.f32 %v6073, %v6074
    %v6076 = vsel %vm215, %v5682, -inf
    %v6077 = vrot.slane %v6076, 4
    %v6078 = vmax.f32 %v6076, %v6077
    %v6079 = vrot.slane %v6078, 2
    %v6080 = vmax.f32 %v6078, %v6079
    %v6081 = vrot.slane %v6080, 1
    %v6082 = vmax.f32 %v6080, %v6081
    %v6083 = vsel %vm215, %v5683, -inf
    %v6084 = vrot.slane %v6083, 4
    %v6085 = vmax.f32 %v6083, %v6084
    %v6086 = vrot.slane %v6085, 2
    %v6087 = vmax.f32 %v6085, %v6086
    %v6088 = vrot.slane %v6087, 1
    %v6089 = vmax.f32 %v6087, %v6088
    %v6090 = vsel %vm215, %v5684, -inf
    %v6091 = vrot.slane %v6090, 4
    %v6092 = vmax.f32 %v6090, %v6091
    %v6093 = vrot.slane %v6092, 2
    %v6094 = vmax.f32 %v6092, %v6093
    %v6095 = vrot.slane %v6094, 1
    %v6096 = vmax.f32 %v6094, %v6095
    %v6097 = vsel %vm215, %v5685, -inf
    %v6098 = vrot.slane %v6097, 4
    %v6099 = vmax.f32 %v6097, %v6098
    %v6100 = vrot.slane %v6099, 2
    %v6101 = vmax.f32 %v6099, %v6100
    %v6102 = vrot.slane %v6101, 1
    %v6103 = vmax.f32 %v6101, %v6102
    %v6104 = vsel %vm215, %v5686, -inf
    %v6105 = vrot.slane %v6104, 4
    %v6106 = vmax.f32 %v6104, %v6105
    %v6107 = vrot.slane %v6106, 2
    %v6108 = vmax.f32 %v6106, %v6107
    %v6109 = vrot.slane %v6108, 1
    %v6110 = vmax.f32 %v6108, %v6109
    %v6111 = vsel %vm215, %v5687, -inf
    %v6112 = vrot.slane %v6111, 4
    %v6113 = vmax.f32 %v6111, %v6112
    %v6114 = vrot.slane %v6113, 2
    %v6115 = vmax.f32 %v6113, %v6114
    %v6116 = vrot.slane %v6115, 1
    %v6117 = vmax.f32 %v6115, %v6116
    %v6118 = vsel %vm215, %v5688, -inf
    %v6119 = vrot.slane %v6118, 4
    %v6120 = vmax.f32 %v6118, %v6119
    %v6121 = vrot.slane %v6120, 2
    %v6122 = vmax.f32 %v6120, %v6121
    %v6123 = vrot.slane %v6122, 1
    %v6124 = vmax.f32 %v6122, %v6123
    %v6125 = vsel %vm215, %v5689, -inf
    %v6126 = vrot.slane %v6125, 4
    %v6127 = vmax.f32 %v6125, %v6126
    %v6128 = vrot.slane %v6127, 2
    %v6129 = vmax.f32 %v6127, %v6128
    %v6130 = vrot.slane %v6129, 1
    %v6131 = vmax.f32 %v6129, %v6130
    %v6132 = vsel %vm215, %v5690, -inf
    %v6133 = vrot.slane %v6132, 4
    %v6134 = vmax.f32 %v6132, %v6133
    %v6135 = vrot.slane %v6134, 2
    %v6136 = vmax.f32 %v6134, %v6135
    %v6137 = vrot.slane %v6136, 1
    %v6138 = vmax.f32 %v6136, %v6137
    %v6139 = vsub.f32 %v5627, %v5697
    %v6140 = vsub.f32 %v5628, %v5704
    %v6141 = vsub.f32 %v5629, %v5711
    %v6142 = vsub.f32 %v5630, %v5718
    %v6143 = vsub.f32 %v5631, %v5725
    %v6144 = vsub.f32 %v5632, %v5732
    %v6145 = vsub.f32 %v5633, %v5739
    %v6146 = vsub.f32 %v5634, %v5746
    %v6147 = vsub.f32 %v5635, %v5753
    %v6148 = vsub.f32 %v5636, %v5760
    %v6149 = vsub.f32 %v5637, %v5767
    %v6150 = vsub.f32 %v5638, %v5774
    %v6151 = vsub.f32 %v5639, %v5781
    %v6152 = vsub.f32 %v5640, %v5788
    %v6153 = vsub.f32 %v5641, %v5795
    %v6154 = vsub.f32 %v5642, %v5802
    %v6155 = vsub.f32 %v5643, %v5809
    %v6156 = vsub.f32 %v5644, %v5816
    %v6157 = vsub.f32 %v5645, %v5823
    %v6158 = vsub.f32 %v5646, %v5830
    %v6159 = vsub.f32 %v5647, %v5837
    %v6160 = vsub.f32 %v5648, %v5844
    %v6161 = vsub.f32 %v5649, %v5851
    %v6162 = vsub.f32 %v5650, %v5858
    %v6163 = vsub.f32 %v5651, %v5865
    %v6164 = vsub.f32 %v5652, %v5872
    %v6165 = vsub.f32 %v5653, %v5879
    %v6166 = vsub.f32 %v5654, %v5886
    %v6167 = vsub.f32 %v5655, %v5893
    %v6168 = vsub.f32 %v5656, %v5900
    %v6169 = vsub.f32 %v5657, %v5907
    %v6170 = vsub.f32 %v5658, %v5914
    %v6171 = vsub.f32 %v5659, %v5921
    %v6172 = vsub.f32 %v5660, %v5928
    %v6173 = vsub.f32 %v5661, %v5935
    %v6174 = vsub.f32 %v5662, %v5942
    %v6175 = vsub.f32 %v5663, %v5949
    %v6176 = vsub.f32 %v5664, %v5956
    %v6177 = vsub.f32 %v5665, %v5963
    %v6178 = vsub.f32 %v5666, %v5970
    %v6179 = vsub.f32 %v5667, %v5977
    %v6180 = vsub.f32 %v5668, %v5984
    %v6181 = vsub.f32 %v5669, %v5991
    %v6182 = vsub.f32 %v5670, %v5998
    %v6183 = vsub.f32 %v5671, %v6005
    %v6184 = vsub.f32 %v5672, %v6012
    %v6185 = vsub.f32 %v5673, %v6019
    %v6186 = vsub.f32 %v5674, %v6026
    %v6187 = vsub.f32 %v5675, %v6033
    %v6188 = vsub.f32 %v5676, %v6040
    %v6189 = vsub.f32 %v5677, %v6047
    %v6190 = vsub.f32 %v5678, %v6054
    %v6191 = vsub.f32 %v5679, %v6061
    %v6192 = vsub.f32 %v5680, %v6068
    %v6193 = vsub.f32 %v5681, %v6075
    %v6194 = vsub.f32 %v5682, %v6082
    %v6195 = vsub.f32 %v5683, %v6089
    %v6196 = vsub.f32 %v5684, %v6096
    %v6197 = vsub.f32 %v5685, %v6103
    %v6198 = vsub.f32 %v5686, %v6110
    %v6199 = vsub.f32 %v5687, %v6117
    %v6200 = vsub.f32 %v5688, %v6124
    %v6201 = vsub.f32 %v5689, %v6131
    %v6202 = vsub.f32 %v5690, %v6138
    %v6203 = vmul.f32 %v6139, 1.442695
    %v6204 = vpow.pop %v6203
    %v6205 = vmul.f32 %v6140, 1.442695
    %v6206 = vpow.pop %v6205
    %v6207 = vmul.f32 %v6141, 1.442695
    %v6208 = vpow.pop %v6207
    %v6209 = vmul.f32 %v6142, 1.442695
    %v6210 = vpow.pop %v6209
    %v6211 = vmul.f32 %v6143, 1.442695
    %v6212 = vpow.pop %v6211
    %v6213 = vmul.f32 %v6144, 1.442695
    %v6214 = vpow.pop %v6213
    %v6215 = vmul.f32 %v6145, 1.442695
    %v6216 = vpow.pop %v6215
    %v6217 = vmul.f32 %v6146, 1.442695
    %v6218 = vpow.pop %v6217
    %v6219 = vmul.f32 %v6147, 1.442695
    %v6220 = vpow.pop %v6219
    %v6221 = vmul.f32 %v6148, 1.442695
    %v6222 = vpow.pop %v6221
    %v6223 = vmul.f32 %v6149, 1.442695
    %v6224 = vpow.pop %v6223
    %v6225 = vmul.f32 %v6150, 1.442695
    %v6226 = vpow.pop %v6225
    %v6227 = vmul.f32 %v6151, 1.442695
    %v6228 = vpow.pop %v6227
    %v6229 = vmul.f32 %v6152, 1.442695
    %v6230 = vpow.pop %v6229
    %v6231 = vmul.f32 %v6153, 1.442695
    %v6232 = vpow.pop %v6231
    %v6233 = vmul.f32 %v6154, 1.442695
    %v6234 = vpow.pop %v6233
    %v6235 = vmul.f32 %v6155, 1.442695
    %v6236 = vpow.pop %v6235
    %v6237 = vmul.f32 %v6156, 1.442695
    %v6238 = vpow.pop %v6237
    %v6239 = vmul.f32 %v6157, 1.442695
    %v6240 = vpow.pop %v6239
    %v6241 = vmul.f32 %v6158, 1.442695
    %v6242 = vpow.pop %v6241
    %v6243 = vmul.f32 %v6159, 1.442695
    %v6244 = vpow.pop %v6243
    %v6245 = vmul.f32 %v6160, 1.442695
    %v6246 = vpow.pop %v6245
    %v6247 = vmul.f32 %v6161, 1.442695
    %v6248 = vpow.pop %v6247
    %v6249 = vmul.f32 %v6162, 1.442695
    %v6250 = vpow.pop %v6249
    %v6251 = vmul.f32 %v6163, 1.442695
    %v6252 = vpow.pop %v6251
    %v6253 = vmul.f32 %v6164, 1.442695
    %v6254 = vpow.pop %v6253
    %v6255 = vmul.f32 %v6165, 1.442695
    %v6256 = vpow.pop %v6255
    %v6257 = vmul.f32 %v6166, 1.442695
    %v6258 = vpow.pop %v6257
    %v6259 = vmul.f32 %v6167, 1.442695
    %v6260 = vpow.pop %v6259
    %v6261 = vmul.f32 %v6168, 1.442695
    %v6262 = vpow.pop %v6261
    %v6263 = vmul.f32 %v6169, 1.442695
    %v6264 = vpow.pop %v6263
    %v6265 = vmul.f32 %v6170, 1.442695
    %v6266 = vpow.pop %v6265
    %v6267 = vmul.f32 %v6171, 1.442695
    %v6268 = vpow.pop %v6267
    %v6269 = vmul.f32 %v6172, 1.442695
    %v6270 = vpow.pop %v6269
    %v6271 = vmul.f32 %v6173, 1.442695
    %v6272 = vpow.pop %v6271
    %v6273 = vmul.f32 %v6174, 1.442695
    %v6274 = vpow.pop %v6273
    %v6275 = vmul.f32 %v6175, 1.442695
    %v6276 = vpow.pop %v6275
    %v6277 = vmul.f32 %v6176, 1.442695
    %v6278 = vpow.pop %v6277
    %v6279 = vmul.f32 %v6177, 1.442695
    %v6280 = vpow.pop %v6279
    %v6281 = vmul.f32 %v6178, 1.442695
    %v6282 = vpow.pop %v6281
    %v6283 = vmul.f32 %v6179, 1.442695
    %v6284 = vpow.pop %v6283
    %v6285 = vmul.f32 %v6180, 1.442695
    %v6286 = vpow.pop %v6285
    %v6287 = vmul.f32 %v6181, 1.442695
    %v6288 = vpow.pop %v6287
    %v6289 = vmul.f32 %v6182, 1.442695
    %v6290 = vpow.pop %v6289
    %v6291 = vmul.f32 %v6183, 1.442695
    %v6292 = vpow.pop %v6291
    %v6293 = vmul.f32 %v6184, 1.442695
    %v6294 = vpow.pop %v6293
    %v6295 = vmul.f32 %v6185, 1.442695
    %v6296 = vpow.pop %v6295
    %v6297 = vmul.f32 %v6186, 1.442695
    %v6298 = vpow.pop %v6297
    %v6299 = vmul.f32 %v6187, 1.442695
    %v6300 = vpow.pop %v6299
    %v6301 = vmul.f32 %v6188, 1.442695
    %v6302 = vpow.pop %v6301
    %v6303 = vmul.f32 %v6189, 1.442695
    %v6304 = vpow.pop %v6303
    %v6305 = vmul.f32 %v6190, 1.442695
    %v6306 = vpow.pop %v6305
    %v6307 = vmul.f32 %v6191, 1.442695
    %v6308 = vpow.pop %v6307
    %v6309 = vmul.f32 %v6192, 1.442695
    %v6310 = vpow.pop %v6309
    %v6311 = vmul.f32 %v6193, 1.442695
    %v6312 = vpow.pop %v6311
    %v6313 = vmul.f32 %v6194, 1.442695
    %v6314 = vpow.pop %v6313
    %v6315 = vmul.f32 %v6195, 1.442695
    %v6316 = vpow.pop %v6315
    %v6317 = vmul.f32 %v6196, 1.442695
    %v6318 = vpow.pop %v6317
    %v6319 = vmul.f32 %v6197, 1.442695
    %v6320 = vpow.pop %v6319
    %v6321 = vmul.f32 %v6198, 1.442695
    %v6322 = vpow.pop %v6321
    %v6323 = vmul.f32 %v6199, 1.442695
    %v6324 = vpow.pop %v6323
    %v6325 = vmul.f32 %v6200, 1.442695
    %v6326 = vpow.pop %v6325
    %v6327 = vmul.f32 %v6201, 1.442695
    %v6328 = vpow.pop %v6327
    %v6329 = vmul.f32 %v6202, 1.442695
    %v6330 = vpow.pop %v6329
    %v6331 = vsel %vm215, %v6204, 0.0
    %v6332 = vrot.slane %v6331, 4
    %v6333 = vadd.f32 %v6331, %v6332
    %v6334 = vrot.slane %v6333, 2
    %v6335 = vadd.f32 %v6333, %v6334
    %v6336 = vrot.slane %v6335, 1
    %v6337 = vadd.f32 %v6335, %v6336
    %v6338 = vsel %vm215, %v6206, 0.0
    %v6339 = vrot.slane %v6338, 4
    %v6340 = vadd.f32 %v6338, %v6339
    %v6341 = vrot.slane %v6340, 2
    %v6342 = vadd.f32 %v6340, %v6341
    %v6343 = vrot.slane %v6342, 1
    %v6344 = vadd.f32 %v6342, %v6343
    %v6345 = vsel %vm215, %v6208, 0.0
    %v6346 = vrot.slane %v6345, 4
    %v6347 = vadd.f32 %v6345, %v6346
    %v6348 = vrot.slane %v6347, 2
    %v6349 = vadd.f32 %v6347, %v6348
    %v6350 = vrot.slane %v6349, 1
    %v6351 = vadd.f32 %v6349, %v6350
    %v6352 = vsel %vm215, %v6210, 0.0
    %v6353 = vrot.slane %v6352, 4
    %v6354 = vadd.f32 %v6352, %v6353
    %v6355 = vrot.slane %v6354, 2
    %v6356 = vadd.f32 %v6354, %v6355
    %v6357 = vrot.slane %v6356, 1
    %v6358 = vadd.f32 %v6356, %v6357
    %v6359 = vsel %vm215, %v6212, 0.0
    %v6360 = vrot.slane %v6359, 4
    %v6361 = vadd.f32 %v6359, %v6360
    %v6362 = vrot.slane %v6361, 2
    %v6363 = vadd.f32 %v6361, %v6362
    %v6364 = vrot.slane %v6363, 1
    %v6365 = vadd.f32 %v6363, %v6364
    %v6366 = vsel %vm215, %v6214, 0.0
    %v6367 = vrot.slane %v6366, 4
    %v6368 = vadd.f32 %v6366, %v6367
    %v6369 = vrot.slane %v6368, 2
    %v6370 = vadd.f32 %v6368, %v6369
    %v6371 = vrot.slane %v6370, 1
    %v6372 = vadd.f32 %v6370, %v6371
    %v6373 = vsel %vm215, %v6216, 0.0
    %v6374 = vrot.slane %v6373, 4
    %v6375 = vadd.f32 %v6373, %v6374
    %v6376 = vrot.slane %v6375, 2
    %v6377 = vadd.f32 %v6375, %v6376
    %v6378 = vrot.slane %v6377, 1
    %v6379 = vadd.f32 %v6377, %v6378
    %v6380 = vsel %vm215, %v6218, 0.0
    %v6381 = vrot.slane %v6380, 4
    %v6382 = vadd.f32 %v6380, %v6381
    %v6383 = vrot.slane %v6382, 2
    %v6384 = vadd.f32 %v6382, %v6383
    %v6385 = vrot.slane %v6384, 1
    %v6386 = vadd.f32 %v6384, %v6385
    %v6387 = vsel %vm215, %v6220, 0.0
    %v6388 = vrot.slane %v6387, 4
    %v6389 = vadd.f32 %v6387, %v6388
    %v6390 = vrot.slane %v6389, 2
    %v6391 = vadd.f32 %v6389, %v6390
    %v6392 = vrot.slane %v6391, 1
    %v6393 = vadd.f32 %v6391, %v6392
    %v6394 = vsel %vm215, %v6222, 0.0
    %v6395 = vrot.slane %v6394, 4
    %v6396 = vadd.f32 %v6394, %v6395
    %v6397 = vrot.slane %v6396, 2
    %v6398 = vadd.f32 %v6396, %v6397
    %v6399 = vrot.slane %v6398, 1
    %v6400 = vadd.f32 %v6398, %v6399
    %v6401 = vsel %vm215, %v6224, 0.0
    %v6402 = vrot.slane %v6401, 4
    %v6403 = vadd.f32 %v6401, %v6402
    %v6404 = vrot.slane %v6403, 2
    %v6405 = vadd.f32 %v6403, %v6404
    %v6406 = vrot.slane %v6405, 1
    %v6407 = vadd.f32 %v6405, %v6406
    %v6408 = vsel %vm215, %v6226, 0.0
    %v6409 = vrot.slane %v6408, 4
    %v6410 = vadd.f32 %v6408, %v6409
    %v6411 = vrot.slane %v6410, 2
    %v6412 = vadd.f32 %v6410, %v6411
    %v6413 = vrot.slane %v6412, 1
    %v6414 = vadd.f32 %v6412, %v6413
    %v6415 = vsel %vm215, %v6228, 0.0
    %v6416 = vrot.slane %v6415, 4
    %v6417 = vadd.f32 %v6415, %v6416
    %v6418 = vrot.slane %v6417, 2
    %v6419 = vadd.f32 %v6417, %v6418
    %v6420 = vrot.slane %v6419, 1
    %v6421 = vadd.f32 %v6419, %v6420
    %v6422 = vsel %vm215, %v6230, 0.0
    %v6423 = vrot.slane %v6422, 4
    %v6424 = vadd.f32 %v6422, %v6423
    %v6425 = vrot.slane %v6424, 2
    %v6426 = vadd.f32 %v6424, %v6425
    %v6427 = vrot.slane %v6426, 1
    %v6428 = vadd.f32 %v6426, %v6427
    %v6429 = vsel %vm215, %v6232, 0.0
    %v6430 = vrot.slane %v6429, 4
    %v6431 = vadd.f32 %v6429, %v6430
    %v6432 = vrot.slane %v6431, 2
    %v6433 = vadd.f32 %v6431, %v6432
    %v6434 = vrot.slane %v6433, 1
    %v6435 = vadd.f32 %v6433, %v6434
    %v6436 = vsel %vm215, %v6234, 0.0
    %v6437 = vrot.slane %v6436, 4
    %v6438 = vadd.f32 %v6436, %v6437
    %v6439 = vrot.slane %v6438, 2
    %v6440 = vadd.f32 %v6438, %v6439
    %v6441 = vrot.slane %v6440, 1
    %v6442 = vadd.f32 %v6440, %v6441
    %v6443 = vsel %vm215, %v6236, 0.0
    %v6444 = vrot.slane %v6443, 4
    %v6445 = vadd.f32 %v6443, %v6444
    %v6446 = vrot.slane %v6445, 2
    %v6447 = vadd.f32 %v6445, %v6446
    %v6448 = vrot.slane %v6447, 1
    %v6449 = vadd.f32 %v6447, %v6448
    %v6450 = vsel %vm215, %v6238, 0.0
    %v6451 = vrot.slane %v6450, 4
    %v6452 = vadd.f32 %v6450, %v6451
    %v6453 = vrot.slane %v6452, 2
    %v6454 = vadd.f32 %v6452, %v6453
    %v6455 = vrot.slane %v6454, 1
    %v6456 = vadd.f32 %v6454, %v6455
    %v6457 = vsel %vm215, %v6240, 0.0
    %v6458 = vrot.slane %v6457, 4
    %v6459 = vadd.f32 %v6457, %v6458
    %v6460 = vrot.slane %v6459, 2
    %v6461 = vadd.f32 %v6459, %v6460
    %v6462 = vrot.slane %v6461, 1
    %v6463 = vadd.f32 %v6461, %v6462
    %v6464 = vsel %vm215, %v6242, 0.0
    %v6465 = vrot.slane %v6464, 4
    %v6466 = vadd.f32 %v6464, %v6465
    %v6467 = vrot.slane %v6466, 2
    %v6468 = vadd.f32 %v6466, %v6467
    %v6469 = vrot.slane %v6468, 1
    %v6470 = vadd.f32 %v6468, %v6469
    %v6471 = vsel %vm215, %v6244, 0.0
    %v6472 = vrot.slane %v6471, 4
    %v6473 = vadd.f32 %v6471, %v6472
    %v6474 = vrot.slane %v6473, 2
    %v6475 = vadd.f32 %v6473, %v6474
    %v6476 = vrot.slane %v6475, 1
    %v6477 = vadd.f32 %v6475, %v6476
    %v6478 = vsel %vm215, %v6246, 0.0
    %v6479 = vrot.slane %v6478, 4
    %v6480 = vadd.f32 %v6478, %v6479
    %v6481 = vrot.slane %v6480, 2
    %v6482 = vadd.f32 %v6480, %v6481
    %v6483 = vrot.slane %v6482, 1
    %v6484 = vadd.f32 %v6482, %v6483
    %v6485 = vsel %vm215, %v6248, 0.0
    %v6486 = vrot.slane %v6485, 4
    %v6487 = vadd.f32 %v6485, %v6486
    %v6488 = vrot.slane %v6487, 2
    %v6489 = vadd.f32 %v6487, %v6488
    %v6490 = vrot.slane %v6489, 1
    %v6491 = vadd.f32 %v6489, %v6490
    %v6492 = vsel %vm215, %v6250, 0.0
    %v6493 = vrot.slane %v6492, 4
    %v6494 = vadd.f32 %v6492, %v6493
    %v6495 = vrot.slane %v6494, 2
    %v6496 = vadd.f32 %v6494, %v6495
    %v6497 = vrot.slane %v6496, 1
    %v6498 = vadd.f32 %v6496, %v6497
    %v6499 = vsel %vm215, %v6252, 0.0
    %v6500 = vrot.slane %v6499, 4
    %v6501 = vadd.f32 %v6499, %v6500
    %v6502 = vrot.slane %v6501, 2
    %v6503 = vadd.f32 %v6501, %v6502
    %v6504 = vrot.slane %v6503, 1
    %v6505 = vadd.f32 %v6503, %v6504
    %v6506 = vsel %vm215, %v6254, 0.0
    %v6507 = vrot.slane %v6506, 4
    %v6508 = vadd.f32 %v6506, %v6507
    %v6509 = vrot.slane %v6508, 2
    %v6510 = vadd.f32 %v6508, %v6509
    %v6511 = vrot.slane %v6510, 1
    %v6512 = vadd.f32 %v6510, %v6511
    %v6513 = vsel %vm215, %v6256, 0.0
    %v6514 = vrot.slane %v6513, 4
    %v6515 = vadd.f32 %v6513, %v6514
    %v6516 = vrot.slane %v6515, 2
    %v6517 = vadd.f32 %v6515, %v6516
    %v6518 = vrot.slane %v6517, 1
    %v6519 = vadd.f32 %v6517, %v6518
    %v6520 = vsel %vm215, %v6258, 0.0
    %v6521 = vrot.slane %v6520, 4
    %v6522 = vadd.f32 %v6520, %v6521
    %v6523 = vrot.slane %v6522, 2
    %v6524 = vadd.f32 %v6522, %v6523
    %v6525 = vrot.slane %v6524, 1
    %v6526 = vadd.f32 %v6524, %v6525
    %v6527 = vsel %vm215, %v6260, 0.0
    %v6528 = vrot.slane %v6527, 4
    %v6529 = vadd.f32 %v6527, %v6528
    %v6530 = vrot.slane %v6529, 2
    %v6531 = vadd.f32 %v6529, %v6530
    %v6532 = vrot.slane %v6531, 1
    %v6533 = vadd.f32 %v6531, %v6532
    %v6534 = vsel %vm215, %v6262, 0.0
    %v6535 = vrot.slane %v6534, 4
    %v6536 = vadd.f32 %v6534, %v6535
    %v6537 = vrot.slane %v6536, 2
    %v6538 = vadd.f32 %v6536, %v6537
    %v6539 = vrot.slane %v6538, 1
    %v6540 = vadd.f32 %v6538, %v6539
    %v6541 = vsel %vm215, %v6264, 0.0
    %v6542 = vrot.slane %v6541, 4
    %v6543 = vadd.f32 %v6541, %v6542
    %v6544 = vrot.slane %v6543, 2
    %v6545 = vadd.f32 %v6543, %v6544
    %v6546 = vrot.slane %v6545, 1
    %v6547 = vadd.f32 %v6545, %v6546
    %v6548 = vsel %vm215, %v6266, 0.0
    %v6549 = vrot.slane %v6548, 4
    %v6550 = vadd.f32 %v6548, %v6549
    %v6551 = vrot.slane %v6550, 2
    %v6552 = vadd.f32 %v6550, %v6551
    %v6553 = vrot.slane %v6552, 1
    %v6554 = vadd.f32 %v6552, %v6553
    %v6555 = vsel %vm215, %v6268, 0.0
    %v6556 = vrot.slane %v6555, 4
    %v6557 = vadd.f32 %v6555, %v6556
    %v6558 = vrot.slane %v6557, 2
    %v6559 = vadd.f32 %v6557, %v6558
    %v6560 = vrot.slane %v6559, 1
    %v6561 = vadd.f32 %v6559, %v6560
    %v6562 = vsel %vm215, %v6270, 0.0
    %v6563 = vrot.slane %v6562, 4
    %v6564 = vadd.f32 %v6562, %v6563
    %v6565 = vrot.slane %v6564, 2
    %v6566 = vadd.f32 %v6564, %v6565
    %v6567 = vrot.slane %v6566, 1
    %v6568 = vadd.f32 %v6566, %v6567
    %v6569 = vsel %vm215, %v6272, 0.0
    %v6570 = vrot.slane %v6569, 4
    %v6571 = vadd.f32 %v6569, %v6570
    %v6572 = vrot.slane %v6571, 2
    %v6573 = vadd.f32 %v6571, %v6572
    %v6574 = vrot.slane %v6573, 1
    %v6575 = vadd.f32 %v6573, %v6574
    %v6576 = vsel %vm215, %v6274, 0.0
    %v6577 = vrot.slane %v6576, 4
    %v6578 = vadd.f32 %v6576, %v6577
    %v6579 = vrot.slane %v6578, 2
    %v6580 = vadd.f32 %v6578, %v6579
    %v6581 = vrot.slane %v6580, 1
    %v6582 = vadd.f32 %v6580, %v6581
    %v6583 = vsel %vm215, %v6276, 0.0
    %v6584 = vrot.slane %v6583, 4
    %v6585 = vadd.f32 %v6583, %v6584
    %v6586 = vrot.slane %v6585, 2
    %v6587 = vadd.f32 %v6585, %v6586
    %v6588 = vrot.slane %v6587, 1
    %v6589 = vadd.f32 %v6587, %v6588
    %v6590 = vsel %vm215, %v6278, 0.0
    %v6591 = vrot.slane %v6590, 4
    %v6592 = vadd.f32 %v6590, %v6591
    %v6593 = vrot.slane %v6592, 2
    %v6594 = vadd.f32 %v6592, %v6593
    %v6595 = vrot.slane %v6594, 1
    %v6596 = vadd.f32 %v6594, %v6595
    %v6597 = vsel %vm215, %v6280, 0.0
    %v6598 = vrot.slane %v6597, 4
    %v6599 = vadd.f32 %v6597, %v6598
    %v6600 = vrot.slane %v6599, 2
    %v6601 = vadd.f32 %v6599, %v6600
    %v6602 = vrot.slane %v6601, 1
    %v6603 = vadd.f32 %v6601, %v6602
    %v6604 = vsel %vm215, %v6282, 0.0
    %v6605 = vrot.slane %v6604, 4
    %v6606 = vadd.f32 %v6604, %v6605
    %v6607 = vrot.slane %v6606, 2
    %v6608 = vadd.f32 %v6606, %v6607
    %v6609 = vrot.slane %v6608, 1
    %v6610 = vadd.f32 %v6608, %v6609
    %v6611 = vsel %vm215, %v6284, 0.0
    %v6612 = vrot.slane %v6611, 4
    %v6613 = vadd.f32 %v6611, %v6612
    %v6614 = vrot.slane %v6613, 2
    %v6615 = vadd.f32 %v6613, %v6614
    %v6616 = vrot.slane %v6615, 1
    %v6617 = vadd.f32 %v6615, %v6616
    %v6618 = vsel %vm215, %v6286, 0.0
    %v6619 = vrot.slane %v6618, 4
    %v6620 = vadd.f32 %v6618, %v6619
    %v6621 = vrot.slane %v6620, 2
    %v6622 = vadd.f32 %v6620, %v6621
    %v6623 = vrot.slane %v6622, 1
    %v6624 = vadd.f32 %v6622, %v6623
    %v6625 = vsel %vm215, %v6288, 0.0
    %v6626 = vrot.slane %v6625, 4
    %v6627 = vadd.f32 %v6625, %v6626
    %v6628 = vrot.slane %v6627, 2
    %v6629 = vadd.f32 %v6627, %v6628
    %v6630 = vrot.slane %v6629, 1
    %v6631 = vadd.f32 %v6629, %v6630
    %v6632 = vsel %vm215, %v6290, 0.0
    %v6633 = vrot.slane %v6632, 4
    %v6634 = vadd.f32 %v6632, %v6633
    %v6635 = vrot.slane %v6634, 2
    %v6636 = vadd.f32 %v6634, %v6635
    %v6637 = vrot.slane %v6636, 1
    %v6638 = vadd.f32 %v6636, %v6637
    %v6639 = vsel %vm215, %v6292, 0.0
    %v6640 = vrot.slane %v6639, 4
    %v6641 = vadd.f32 %v6639, %v6640
    %v6642 = vrot.slane %v6641, 2
    %v6643 = vadd.f32 %v6641, %v6642
    %v6644 = vrot.slane %v6643, 1
    %v6645 = vadd.f32 %v6643, %v6644
    %v6646 = vsel %vm215, %v6294, 0.0
    %v6647 = vrot.slane %v6646, 4
    %v6648 = vadd.f32 %v6646, %v6647
    %v6649 = vrot.slane %v6648, 2
    %v6650 = vadd.f32 %v6648, %v6649
    %v6651 = vrot.slane %v6650, 1
    %v6652 = vadd.f32 %v6650, %v6651
    %v6653 = vsel %vm215, %v6296, 0.0
    %v6654 = vrot.slane %v6653, 4
    %v6655 = vadd.f32 %v6653, %v6654
    %v6656 = vrot.slane %v6655, 2
    %v6657 = vadd.f32 %v6655, %v6656
    %v6658 = vrot.slane %v6657, 1
    %v6659 = vadd.f32 %v6657, %v6658
    %v6660 = vsel %vm215, %v6298, 0.0
    %v6661 = vrot.slane %v6660, 4
    %v6662 = vadd.f32 %v6660, %v6661
    %v6663 = vrot.slane %v6662, 2
    %v6664 = vadd.f32 %v6662, %v6663
    %v6665 = vrot.slane %v6664, 1
    %v6666 = vadd.f32 %v6664, %v6665
    %v6667 = vsel %vm215, %v6300, 0.0
    %v6668 = vrot.slane %v6667, 4
    %v6669 = vadd.f32 %v6667, %v6668
    %v6670 = vrot.slane %v6669, 2
    %v6671 = vadd.f32 %v6669, %v6670
    %v6672 = vrot.slane %v6671, 1
    %v6673 = vadd.f32 %v6671, %v6672
    %v6674 = vsel %vm215, %v6302, 0.0
    %v6675 = vrot.slane %v6674, 4
    %v6676 = vadd.f32 %v6674, %v6675
    %v6677 = vrot.slane %v6676, 2
    %v6678 = vadd.f32 %v6676, %v6677
    %v6679 = vrot.slane %v6678, 1
    %v6680 = vadd.f32 %v6678, %v6679
    %v6681 = vsel %vm215, %v6304, 0.0
    %v6682 = vrot.slane %v6681, 4
    %v6683 = vadd.f32 %v6681, %v6682
    %v6684 = vrot.slane %v6683, 2
    %v6685 = vadd.f32 %v6683, %v6684
    %v6686 = vrot.slane %v6685, 1
    %v6687 = vadd.f32 %v6685, %v6686
    %v6688 = vsel %vm215, %v6306, 0.0
    %v6689 = vrot.slane %v6688, 4
    %v6690 = vadd.f32 %v6688, %v6689
    %v6691 = vrot.slane %v6690, 2
    %v6692 = vadd.f32 %v6690, %v6691
    %v6693 = vrot.slane %v6692, 1
    %v6694 = vadd.f32 %v6692, %v6693
    %v6695 = vsel %vm215, %v6308, 0.0
    %v6696 = vrot.slane %v6695, 4
    %v6697 = vadd.f32 %v6695, %v6696
    %v6698 = vrot.slane %v6697, 2
    %v6699 = vadd.f32 %v6697, %v6698
    %v6700 = vrot.slane %v6699, 1
    %v6701 = vadd.f32 %v6699, %v6700
    %v6702 = vsel %vm215, %v6310, 0.0
    %v6703 = vrot.slane %v6702, 4
    %v6704 = vadd.f32 %v6702, %v6703
    %v6705 = vrot.slane %v6704, 2
    %v6706 = vadd.f32 %v6704, %v6705
    %v6707 = vrot.slane %v6706, 1
    %v6708 = vadd.f32 %v6706, %v6707
    %v6709 = vsel %vm215, %v6312, 0.0
    %v6710 = vrot.slane %v6709, 4
    %v6711 = vadd.f32 %v6709, %v6710
    %v6712 = vrot.slane %v6711, 2
    %v6713 = vadd.f32 %v6711, %v6712
    %v6714 = vrot.slane %v6713, 1
    %v6715 = vadd.f32 %v6713, %v6714
    %v6716 = vsel %vm215, %v6314, 0.0
    %v6717 = vrot.slane %v6716, 4
    %v6718 = vadd.f32 %v6716, %v6717
    %v6719 = vrot.slane %v6718, 2
    %v6720 = vadd.f32 %v6718, %v6719
    %v6721 = vrot.slane %v6720, 1
    %v6722 = vadd.f32 %v6720, %v6721
    %v6723 = vsel %vm215, %v6316, 0.0
    %v6724 = vrot.slane %v6723, 4
    %v6725 = vadd.f32 %v6723, %v6724
    %v6726 = vrot.slane %v6725, 2
    %v6727 = vadd.f32 %v6725, %v6726
    %v6728 = vrot.slane %v6727, 1
    %v6729 = vadd.f32 %v6727, %v6728
    %v6730 = vsel %vm215, %v6318, 0.0
    %v6731 = vrot.slane %v6730, 4
    %v6732 = vadd.f32 %v6730, %v6731
    %v6733 = vrot.slane %v6732, 2
    %v6734 = vadd.f32 %v6732, %v6733
    %v6735 = vrot.slane %v6734, 1
    %v6736 = vadd.f32 %v6734, %v6735
    %v6737 = vsel %vm215, %v6320, 0.0
    %v6738 = vrot.slane %v6737, 4
    %v6739 = vadd.f32 %v6737, %v6738
    %v6740 = vrot.slane %v6739, 2
    %v6741 = vadd.f32 %v6739, %v6740
    %v6742 = vrot.slane %v6741, 1
    %v6743 = vadd.f32 %v6741, %v6742
    %v6744 = vsel %vm215, %v6322, 0.0
    %v6745 = vrot.slane %v6744, 4
    %v6746 = vadd.f32 %v6744, %v6745
    %v6747 = vrot.slane %v6746, 2
    %v6748 = vadd.f32 %v6746, %v6747
    %v6749 = vrot.slane %v6748, 1
    %v6750 = vadd.f32 %v6748, %v6749
    %v6751 = vsel %vm215, %v6324, 0.0
    %v6752 = vrot.slane %v6751, 4
    %v6753 = vadd.f32 %v6751, %v6752
    %v6754 = vrot.slane %v6753, 2
    %v6755 = vadd.f32 %v6753, %v6754
    %v6756 = vrot.slane %v6755, 1
    %v6757 = vadd.f32 %v6755, %v6756
    %v6758 = vsel %vm215, %v6326, 0.0
    %v6759 = vrot.slane %v6758, 4
    %v6760 = vadd.f32 %v6758, %v6759
    %v6761 = vrot.slane %v6760, 2
    %v6762 = vadd.f32 %v6760, %v6761
    %v6763 = vrot.slane %v6762, 1
    %v6764 = vadd.f32 %v6762, %v6763
    %v6765 = vsel %vm215, %v6328, 0.0
    %v6766 = vrot.slane %v6765, 4
    %v6767 = vadd.f32 %v6765, %v6766
    %v6768 = vrot.slane %v6767, 2
    %v6769 = vadd.f32 %v6767, %v6768
    %v6770 = vrot.slane %v6769, 1
    %v6771 = vadd.f32 %v6769, %v6770
    %v6772 = vsel %vm215, %v6330, 0.0
    %v6773 = vrot.slane %v6772, 4
    %v6774 = vadd.f32 %v6772, %v6773
    %v6775 = vrot.slane %v6774, 2
    %v6776 = vadd.f32 %v6774, %v6775
    %v6777 = vrot.slane %v6776, 1
    %v6778 = vadd.f32 %v6776, %v6777
    %v6779 = vrcp.pop %v6337
    %v6780 = vrcp.pop %v6344
    %v6781 = vrcp.pop %v6351
    %v6782 = vrcp.pop %v6358
    %v6783 = vrcp.pop %v6365
    %v6784 = vrcp.pop %v6372
    %v6785 = vrcp.pop %v6379
    %v6786 = vrcp.pop %v6386
    %v6787 = vrcp.pop %v6393
    %v6788 = vrcp.pop %v6400
    %v6789 = vrcp.pop %v6407
    %v6790 = vrcp.pop %v6414
    %v6791 = vrcp.pop %v6421
    %v6792 = vrcp.pop %v6428
    %v6793 = vrcp.pop %v6435
    %v6794 = vrcp.pop %v6442
    %v6795 = vrcp.pop %v6449
    %v6796 = vrcp.pop %v6456
    %v6797 = vrcp.pop %v6463
    %v6798 = vrcp.pop %v6470
    %v6799 = vrcp.pop %v6477
    %v6800 = vrcp.pop %v6484
    %v6801 = vrcp.pop %v6491
    %v6802 = vrcp.pop %v6498
    %v6803 = vrcp.pop %v6505
    %v6804 = vrcp.pop %v6512
    %v6805 = vrcp.pop %v6519
    %v6806 = vrcp.pop %v6526
    %v6807 = vrcp.pop %v6533
    %v6808 = vrcp.pop %v6540
    %v6809 = vrcp.pop %v6547
    %v6810 = vrcp.pop %v6554
    %v6811 = vrcp.pop %v6561
    %v6812 = vrcp.pop %v6568
    %v6813 = vrcp.pop %v6575
    %v6814 = vrcp.pop %v6582
    %v6815 = vrcp.pop %v6589
    %v6816 = vrcp.pop %v6596
    %v6817 = vrcp.pop %v6603
    %v6818 = vrcp.pop %v6610
    %v6819 = vrcp.pop %v6617
    %v6820 = vrcp.pop %v6624
    %v6821 = vrcp.pop %v6631
    %v6822 = vrcp.pop %v6638
    %v6823 = vrcp.pop %v6645
    %v6824 = vrcp.pop %v6652
    %v6825 = vrcp.pop %v6659
    %v6826 = vrcp.pop %v6666
    %v6827 = vrcp.pop %v6673
    %v6828 = vrcp.pop %v6680
    %v6829 = vrcp.pop %v6687
    %v6830 = vrcp.pop %v6694
    %v6831 = vrcp.pop %v6701
    %v6832 = vrcp.pop %v6708
    %v6833 = vrcp.pop %v6715
    %v6834 = vrcp.pop %v6722
    %v6835 = vrcp.pop %v6729
    %v6836 = vrcp.pop %v6736
    %v6837 = vrcp.pop %v6743
    %v6838 = vrcp.pop %v6750
    %v6839 = vrcp.pop %v6757
    %v6840 = vrcp.pop %v6764
    %v6841 = vrcp.pop %v6771
    %v6842 = vrcp.pop %v6778
    %v6843 = vmul.f32 %v6204, %v6779
    %v6844 = vmul.f32 %v6206, %v6780
    %v6845 = vmul.f32 %v6208, %v6781
    %v6846 = vmul.f32 %v6210, %v6782
    %v6847 = vmul.f32 %v6212, %v6783
    %v6848 = vmul.f32 %v6214, %v6784
    %v6849 = vmul.f32 %v6216, %v6785
    %v6850 = vmul.f32 %v6218, %v6786
    %v6851 = vmul.f32 %v6220, %v6787
    %v6852 = vmul.f32 %v6222, %v6788
    %v6853 = vmul.f32 %v6224, %v6789
    %v6854 = vmul.f32 %v6226, %v6790
    %v6855 = vmul.f32 %v6228, %v6791
    %v6856 = vmul.f32 %v6230, %v6792
    %v6857 = vmul.f32 %v6232, %v6793
    %v6858 = vmul.f32 %v6234, %v6794
    %v6859 = vmul.f32 %v6236, %v6795
    %v6860 = vmul.f32 %v6238, %v6796
    %v6861 = vmul.f32 %v6240, %v6797
    %v6862 = vmul.f32 %v6242, %v6798
    %v6863 = vmul.f32 %v6244, %v6799
    %v6864 = vmul.f32 %v6246, %v6800
    %v6865 = vmul.f32 %v6248, %v6801
    %v6866 = vmul.f32 %v6250, %v6802
    %v6867 = vmul.f32 %v6252, %v6803
    %v6868 = vmul.f32 %v6254, %v6804
    %v6869 = vmul.f32 %v6256, %v6805
    %v6870 = vmul.f32 %v6258, %v6806
    %v6871 = vmul.f32 %v6260, %v6807
    %v6872 = vmul.f32 %v6262, %v6808
    %v6873 = vmul.f32 %v6264, %v6809
    %v6874 = vmul.f32 %v6266, %v6810
    %v6875 = vmul.f32 %v6268, %v6811
    %v6876 = vmul.f32 %v6270, %v6812
    %v6877 = vmul.f32 %v6272, %v6813
    %v6878 = vmul.f32 %v6274, %v6814
    %v6879 = vmul.f32 %v6276, %v6815
    %v6880 = vmul.f32 %v6278, %v6816
    %v6881 = vmul.f32 %v6280, %v6817
    %v6882 = vmul.f32 %v6282, %v6818
    %v6883 = vmul.f32 %v6284, %v6819
    %v6884 = vmul.f32 %v6286, %v6820
    %v6885 = vmul.f32 %v6288, %v6821
    %v6886 = vmul.f32 %v6290, %v6822
    %v6887 = vmul.f32 %v6292, %v6823
    %v6888 = vmul.f32 %v6294, %v6824
    %v6889 = vmul.f32 %v6296, %v6825
    %v6890 = vmul.f32 %v6298, %v6826
    %v6891 = vmul.f32 %v6300, %v6827
    %v6892 = vmul.f32 %v6302, %v6828
    %v6893 = vmul.f32 %v6304, %v6829
    %v6894 = vmul.f32 %v6306, %v6830
    %v6895 = vmul.f32 %v6308, %v6831
    %v6896 = vmul.f32 %v6310, %v6832
    %v6897 = vmul.f32 %v6312, %v6833
    %v6898 = vmul.f32 %v6314, %v6834
    %v6899 = vmul.f32 %v6316, %v6835
    %v6900 = vmul.f32 %v6318, %v6836
    %v6901 = vmul.f32 %v6320, %v6837
    %v6902 = vmul.f32 %v6322, %v6838
    %v6903 = vmul.f32 %v6324, %v6839
    %v6904 = vmul.f32 %v6326, %v6840
    %v6905 = vmul.f32 %v6328, %v6841
    %v6906 = vmul.f32 %v6330, %v6842
    %6907 = vrot.lane.b32.xlu0 %v4308, 64
    %v6908 = vpop.permute.xlu0 %6907
    %6909 = vrot.lane.b32.xlu0 %v4311, 64
    %v6910 = vpop.permute.xlu0 %6909
    %6911 = vrot.lane.b32.xlu0 %v4316, 64
    %v6912 = vpop.permute.xlu0 %6911
    %6913 = vrot.lane.b32.xlu0 %v4319, 64
    %v6914 = vpop.permute.xlu0 %6913
    %6915 = vrot.lane.b32.xlu0 %v4324, 64
    %v6916 = vpop.permute.xlu0 %6915
    %6917 = vrot.lane.b32.xlu0 %v4327, 64
    %v6918 = vpop.permute.xlu0 %6917
    %6919 = vrot.lane.b32.xlu0 %v4332, 64
    %v6920 = vpop.permute.xlu0 %6919
    %6921 = vrot.lane.b32.xlu0 %v4335, 64
    %v6922 = vpop.permute.xlu0 %6921
    %v6931 = vmul.f32 %v6843, %v6908
    %v6932 = vmul.f32 %v6844, %v6908
    %v6933 = vmul.f32 %v6845, %v6908
    %v6934 = vmul.f32 %v6846, %v6908
    %v6935 = vmul.f32 %v6847, %v6908
    %v6936 = vmul.f32 %v6848, %v6908
    %v6937 = vmul.f32 %v6849, %v6908
    %v6938 = vmul.f32 %v6850, %v6908
    %v6939 = vmul.f32 %v6851, %v6910
    %v6940 = vmul.f32 %v6852, %v6910
    %v6941 = vmul.f32 %v6853, %v6910
    %v6942 = vmul.f32 %v6854, %v6910
    %v6943 = vmul.f32 %v6855, %v6910
    %v6944 = vmul.f32 %v6856, %v6910
    %v6945 = vmul.f32 %v6857, %v6910
    %v6946 = vmul.f32 %v6858, %v6910
    %v6947 = vmul.f32 %v6859, %v6912
    %v6948 = vmul.f32 %v6860, %v6912
    %v6949 = vmul.f32 %v6861, %v6912
    %v6950 = vmul.f32 %v6862, %v6912
    %v6951 = vmul.f32 %v6863, %v6912
    %v6952 = vmul.f32 %v6864, %v6912
    %v6953 = vmul.f32 %v6865, %v6912
    %v6954 = vmul.f32 %v6866, %v6912
    %v6955 = vmul.f32 %v6867, %v6914
    %v6956 = vmul.f32 %v6868, %v6914
    %v6957 = vmul.f32 %v6869, %v6914
    %v6958 = vmul.f32 %v6870, %v6914
    %v6959 = vmul.f32 %v6871, %v6914
    %v6960 = vmul.f32 %v6872, %v6914
    %v6961 = vmul.f32 %v6873, %v6914
    %v6962 = vmul.f32 %v6874, %v6914
    %v6963 = vmul.f32 %v6875, %v6916
    %v6964 = vmul.f32 %v6876, %v6916
    %v6965 = vmul.f32 %v6877, %v6916
    %v6966 = vmul.f32 %v6878, %v6916
    %v6967 = vmul.f32 %v6879, %v6916
    %v6968 = vmul.f32 %v6880, %v6916
    %v6969 = vmul.f32 %v6881, %v6916
    %v6970 = vmul.f32 %v6882, %v6916
    %v6971 = vmul.f32 %v6883, %v6918
    %v6972 = vmul.f32 %v6884, %v6918
    %v6973 = vmul.f32 %v6885, %v6918
    %v6974 = vmul.f32 %v6886, %v6918
    %v6975 = vmul.f32 %v6887, %v6918
    %v6976 = vmul.f32 %v6888, %v6918
    %v6977 = vmul.f32 %v6889, %v6918
    %v6978 = vmul.f32 %v6890, %v6918
    %v6979 = vmul.f32 %v6891, %v6920
    %v6980 = vmul.f32 %v6892, %v6920
    %v6981 = vmul.f32 %v6893, %v6920
    %v6982 = vmul.f32 %v6894, %v6920
    %v6983 = vmul.f32 %v6895, %v6920
    %v6984 = vmul.f32 %v6896, %v6920
    %v6985 = vmul.f32 %v6897, %v6920
    %v6986 = vmul.f32 %v6898, %v6920
    %v6987 = vmul.f32 %v6899, %v6922
    %v6988 = vmul.f32 %v6900, %v6922
    %v6989 = vmul.f32 %v6901, %v6922
    %v6990 = vmul.f32 %v6902, %v6922
    %v6991 = vmul.f32 %v6903, %v6922
    %v6992 = vmul.f32 %v6904, %v6922
    %v6993 = vmul.f32 %v6905, %v6922
    %v6994 = vmul.f32 %v6906, %v6922
    %v6995 = vsel %vm215, %v6931, 0.0
    %v6996 = vrot.slane %v6995, 4
    %v6997 = vadd.f32 %v6995, %v6996
    %v6998 = vrot.slane %v6997, 2
    %v6999 = vadd.f32 %v6997, %v6998
    %v7000 = vrot.slane %v6999, 1
    %v7001 = vadd.f32 %v6999, %v7000
    %v7002 = vsel %vm215, %v6932, 0.0
    %v7003 = vrot.slane %v7002, 4
    %v7004 = vadd.f32 %v7002, %v7003
    %v7005 = vrot.slane %v7004, 2
    %v7006 = vadd.f32 %v7004, %v7005
    %v7007 = vrot.slane %v7006, 1
    %v7008 = vadd.f32 %v7006, %v7007
    %v7009 = vsel %vm215, %v6933, 0.0
    %v7010 = vrot.slane %v7009, 4
    %v7011 = vadd.f32 %v7009, %v7010
    %v7012 = vrot.slane %v7011, 2
    %v7013 = vadd.f32 %v7011, %v7012
    %v7014 = vrot.slane %v7013, 1
    %v7015 = vadd.f32 %v7013, %v7014
    %v7016 = vsel %vm215, %v6934, 0.0
    %v7017 = vrot.slane %v7016, 4
    %v7018 = vadd.f32 %v7016, %v7017
    %v7019 = vrot.slane %v7018, 2
    %v7020 = vadd.f32 %v7018, %v7019
    %v7021 = vrot.slane %v7020, 1
    %v7022 = vadd.f32 %v7020, %v7021
    %v7023 = vsel %vm215, %v6935, 0.0
    %v7024 = vrot.slane %v7023, 4
    %v7025 = vadd.f32 %v7023, %v7024
    %v7026 = vrot.slane %v7025, 2
    %v7027 = vadd.f32 %v7025, %v7026
    %v7028 = vrot.slane %v7027, 1
    %v7029 = vadd.f32 %v7027, %v7028
    %v7030 = vsel %vm215, %v6936, 0.0
    %v7031 = vrot.slane %v7030, 4
    %v7032 = vadd.f32 %v7030, %v7031
    %v7033 = vrot.slane %v7032, 2
    %v7034 = vadd.f32 %v7032, %v7033
    %v7035 = vrot.slane %v7034, 1
    %v7036 = vadd.f32 %v7034, %v7035
    %v7037 = vsel %vm215, %v6937, 0.0
    %v7038 = vrot.slane %v7037, 4
    %v7039 = vadd.f32 %v7037, %v7038
    %v7040 = vrot.slane %v7039, 2
    %v7041 = vadd.f32 %v7039, %v7040
    %v7042 = vrot.slane %v7041, 1
    %v7043 = vadd.f32 %v7041, %v7042
    %v7044 = vsel %vm215, %v6938, 0.0
    %v7045 = vrot.slane %v7044, 4
    %v7046 = vadd.f32 %v7044, %v7045
    %v7047 = vrot.slane %v7046, 2
    %v7048 = vadd.f32 %v7046, %v7047
    %v7049 = vrot.slane %v7048, 1
    %v7050 = vadd.f32 %v7048, %v7049
    %v7051 = vsel %vm215, %v6939, 0.0
    %v7052 = vrot.slane %v7051, 4
    %v7053 = vadd.f32 %v7051, %v7052
    %v7054 = vrot.slane %v7053, 2
    %v7055 = vadd.f32 %v7053, %v7054
    %v7056 = vrot.slane %v7055, 1
    %v7057 = vadd.f32 %v7055, %v7056
    %v7058 = vsel %vm215, %v6940, 0.0
    %v7059 = vrot.slane %v7058, 4
    %v7060 = vadd.f32 %v7058, %v7059
    %v7061 = vrot.slane %v7060, 2
    %v7062 = vadd.f32 %v7060, %v7061
    %v7063 = vrot.slane %v7062, 1
    %v7064 = vadd.f32 %v7062, %v7063
    %v7065 = vsel %vm215, %v6941, 0.0
    %v7066 = vrot.slane %v7065, 4
    %v7067 = vadd.f32 %v7065, %v7066
    %v7068 = vrot.slane %v7067, 2
    %v7069 = vadd.f32 %v7067, %v7068
    %v7070 = vrot.slane %v7069, 1
    %v7071 = vadd.f32 %v7069, %v7070
    %v7072 = vsel %vm215, %v6942, 0.0
    %v7073 = vrot.slane %v7072, 4
    %v7074 = vadd.f32 %v7072, %v7073
    %v7075 = vrot.slane %v7074, 2
    %v7076 = vadd.f32 %v7074, %v7075
    %v7077 = vrot.slane %v7076, 1
    %v7078 = vadd.f32 %v7076, %v7077
    %v7079 = vsel %vm215, %v6943, 0.0
    %v7080 = vrot.slane %v7079, 4
    %v7081 = vadd.f32 %v7079, %v7080
    %v7082 = vrot.slane %v7081, 2
    %v7083 = vadd.f32 %v7081, %v7082
    %v7084 = vrot.slane %v7083, 1
    %v7085 = vadd.f32 %v7083, %v7084
    %v7086 = vsel %vm215, %v6944, 0.0
    %v7087 = vrot.slane %v7086, 4
    %v7088 = vadd.f32 %v7086, %v7087
    %v7089 = vrot.slane %v7088, 2
    %v7090 = vadd.f32 %v7088, %v7089
    %v7091 = vrot.slane %v7090, 1
    %v7092 = vadd.f32 %v7090, %v7091
    %v7093 = vsel %vm215, %v6945, 0.0
    %v7094 = vrot.slane %v7093, 4
    %v7095 = vadd.f32 %v7093, %v7094
    %v7096 = vrot.slane %v7095, 2
    %v7097 = vadd.f32 %v7095, %v7096
    %v7098 = vrot.slane %v7097, 1
    %v7099 = vadd.f32 %v7097, %v7098
    %v7100 = vsel %vm215, %v6946, 0.0
    %v7101 = vrot.slane %v7100, 4
    %v7102 = vadd.f32 %v7100, %v7101
    %v7103 = vrot.slane %v7102, 2
    %v7104 = vadd.f32 %v7102, %v7103
    %v7105 = vrot.slane %v7104, 1
    %v7106 = vadd.f32 %v7104, %v7105
    %v7107 = vsel %vm215, %v6947, 0.0
    %v7108 = vrot.slane %v7107, 4
    %v7109 = vadd.f32 %v7107, %v7108
    %v7110 = vrot.slane %v7109, 2
    %v7111 = vadd.f32 %v7109, %v7110
    %v7112 = vrot.slane %v7111, 1
    %v7113 = vadd.f32 %v7111, %v7112
    %v7114 = vsel %vm215, %v6948, 0.0
    %v7115 = vrot.slane %v7114, 4
    %v7116 = vadd.f32 %v7114, %v7115
    %v7117 = vrot.slane %v7116, 2
    %v7118 = vadd.f32 %v7116, %v7117
    %v7119 = vrot.slane %v7118, 1
    %v7120 = vadd.f32 %v7118, %v7119
    %v7121 = vsel %vm215, %v6949, 0.0
    %v7122 = vrot.slane %v7121, 4
    %v7123 = vadd.f32 %v7121, %v7122
    %v7124 = vrot.slane %v7123, 2
    %v7125 = vadd.f32 %v7123, %v7124
    %v7126 = vrot.slane %v7125, 1
    %v7127 = vadd.f32 %v7125, %v7126
    %v7128 = vsel %vm215, %v6950, 0.0
    %v7129 = vrot.slane %v7128, 4
    %v7130 = vadd.f32 %v7128, %v7129
    %v7131 = vrot.slane %v7130, 2
    %v7132 = vadd.f32 %v7130, %v7131
    %v7133 = vrot.slane %v7132, 1
    %v7134 = vadd.f32 %v7132, %v7133
    %v7135 = vsel %vm215, %v6951, 0.0
    %v7136 = vrot.slane %v7135, 4
    %v7137 = vadd.f32 %v7135, %v7136
    %v7138 = vrot.slane %v7137, 2
    %v7139 = vadd.f32 %v7137, %v7138
    %v7140 = vrot.slane %v7139, 1
    %v7141 = vadd.f32 %v7139, %v7140
    %v7142 = vsel %vm215, %v6952, 0.0
    %v7143 = vrot.slane %v7142, 4
    %v7144 = vadd.f32 %v7142, %v7143
    %v7145 = vrot.slane %v7144, 2
    %v7146 = vadd.f32 %v7144, %v7145
    %v7147 = vrot.slane %v7146, 1
    %v7148 = vadd.f32 %v7146, %v7147
    %v7149 = vsel %vm215, %v6953, 0.0
    %v7150 = vrot.slane %v7149, 4
    %v7151 = vadd.f32 %v7149, %v7150
    %v7152 = vrot.slane %v7151, 2
    %v7153 = vadd.f32 %v7151, %v7152
    %v7154 = vrot.slane %v7153, 1
    %v7155 = vadd.f32 %v7153, %v7154
    %v7156 = vsel %vm215, %v6954, 0.0
    %v7157 = vrot.slane %v7156, 4
    %v7158 = vadd.f32 %v7156, %v7157
    %v7159 = vrot.slane %v7158, 2
    %v7160 = vadd.f32 %v7158, %v7159
    %v7161 = vrot.slane %v7160, 1
    %v7162 = vadd.f32 %v7160, %v7161
    %v7163 = vsel %vm215, %v6955, 0.0
    %v7164 = vrot.slane %v7163, 4
    %v7165 = vadd.f32 %v7163, %v7164
    %v7166 = vrot.slane %v7165, 2
    %v7167 = vadd.f32 %v7165, %v7166
    %v7168 = vrot.slane %v7167, 1
    %v7169 = vadd.f32 %v7167, %v7168
    %v7170 = vsel %vm215, %v6956, 0.0
    %v7171 = vrot.slane %v7170, 4
    %v7172 = vadd.f32 %v7170, %v7171
    %v7173 = vrot.slane %v7172, 2
    %v7174 = vadd.f32 %v7172, %v7173
    %v7175 = vrot.slane %v7174, 1
    %v7176 = vadd.f32 %v7174, %v7175
    %v7177 = vsel %vm215, %v6957, 0.0
    %v7178 = vrot.slane %v7177, 4
    %v7179 = vadd.f32 %v7177, %v7178
    %v7180 = vrot.slane %v7179, 2
    %v7181 = vadd.f32 %v7179, %v7180
    %v7182 = vrot.slane %v7181, 1
    %v7183 = vadd.f32 %v7181, %v7182
    %v7184 = vsel %vm215, %v6958, 0.0
    %v7185 = vrot.slane %v7184, 4
    %v7186 = vadd.f32 %v7184, %v7185
    %v7187 = vrot.slane %v7186, 2
    %v7188 = vadd.f32 %v7186, %v7187
    %v7189 = vrot.slane %v7188, 1
    %v7190 = vadd.f32 %v7188, %v7189
    %v7191 = vsel %vm215, %v6959, 0.0
    %v7192 = vrot.slane %v7191, 4
    %v7193 = vadd.f32 %v7191, %v7192
    %v7194 = vrot.slane %v7193, 2
    %v7195 = vadd.f32 %v7193, %v7194
    %v7196 = vrot.slane %v7195, 1
    %v7197 = vadd.f32 %v7195, %v7196
    %v7198 = vsel %vm215, %v6960, 0.0
    %v7199 = vrot.slane %v7198, 4
    %v7200 = vadd.f32 %v7198, %v7199
    %v7201 = vrot.slane %v7200, 2
    %v7202 = vadd.f32 %v7200, %v7201
    %v7203 = vrot.slane %v7202, 1
    %v7204 = vadd.f32 %v7202, %v7203
    %v7205 = vsel %vm215, %v6961, 0.0
    %v7206 = vrot.slane %v7205, 4
    %v7207 = vadd.f32 %v7205, %v7206
    %v7208 = vrot.slane %v7207, 2
    %v7209 = vadd.f32 %v7207, %v7208
    %v7210 = vrot.slane %v7209, 1
    %v7211 = vadd.f32 %v7209, %v7210
    %v7212 = vsel %vm215, %v6962, 0.0
    %v7213 = vrot.slane %v7212, 4
    %v7214 = vadd.f32 %v7212, %v7213
    %v7215 = vrot.slane %v7214, 2
    %v7216 = vadd.f32 %v7214, %v7215
    %v7217 = vrot.slane %v7216, 1
    %v7218 = vadd.f32 %v7216, %v7217
    %v7219 = vsel %vm215, %v6963, 0.0
    %v7220 = vrot.slane %v7219, 4
    %v7221 = vadd.f32 %v7219, %v7220
    %v7222 = vrot.slane %v7221, 2
    %v7223 = vadd.f32 %v7221, %v7222
    %v7224 = vrot.slane %v7223, 1
    %v7225 = vadd.f32 %v7223, %v7224
    %v7226 = vsel %vm215, %v6964, 0.0
    %v7227 = vrot.slane %v7226, 4
    %v7228 = vadd.f32 %v7226, %v7227
    %v7229 = vrot.slane %v7228, 2
    %v7230 = vadd.f32 %v7228, %v7229
    %v7231 = vrot.slane %v7230, 1
    %v7232 = vadd.f32 %v7230, %v7231
    %v7233 = vsel %vm215, %v6965, 0.0
    %v7234 = vrot.slane %v7233, 4
    %v7235 = vadd.f32 %v7233, %v7234
    %v7236 = vrot.slane %v7235, 2
    %v7237 = vadd.f32 %v7235, %v7236
    %v7238 = vrot.slane %v7237, 1
    %v7239 = vadd.f32 %v7237, %v7238
    %v7240 = vsel %vm215, %v6966, 0.0
    %v7241 = vrot.slane %v7240, 4
    %v7242 = vadd.f32 %v7240, %v7241
    %v7243 = vrot.slane %v7242, 2
    %v7244 = vadd.f32 %v7242, %v7243
    %v7245 = vrot.slane %v7244, 1
    %v7246 = vadd.f32 %v7244, %v7245
    %v7247 = vsel %vm215, %v6967, 0.0
    %v7248 = vrot.slane %v7247, 4
    %v7249 = vadd.f32 %v7247, %v7248
    %v7250 = vrot.slane %v7249, 2
    %v7251 = vadd.f32 %v7249, %v7250
    %v7252 = vrot.slane %v7251, 1
    %v7253 = vadd.f32 %v7251, %v7252
    %v7254 = vsel %vm215, %v6968, 0.0
    %v7255 = vrot.slane %v7254, 4
    %v7256 = vadd.f32 %v7254, %v7255
    %v7257 = vrot.slane %v7256, 2
    %v7258 = vadd.f32 %v7256, %v7257
    %v7259 = vrot.slane %v7258, 1
    %v7260 = vadd.f32 %v7258, %v7259
    %v7261 = vsel %vm215, %v6969, 0.0
    %v7262 = vrot.slane %v7261, 4
    %v7263 = vadd.f32 %v7261, %v7262
    %v7264 = vrot.slane %v7263, 2
    %v7265 = vadd.f32 %v7263, %v7264
    %v7266 = vrot.slane %v7265, 1
    %v7267 = vadd.f32 %v7265, %v7266
    %v7268 = vsel %vm215, %v6970, 0.0
    %v7269 = vrot.slane %v7268, 4
    %v7270 = vadd.f32 %v7268, %v7269
    %v7271 = vrot.slane %v7270, 2
    %v7272 = vadd.f32 %v7270, %v7271
    %v7273 = vrot.slane %v7272, 1
    %v7274 = vadd.f32 %v7272, %v7273
    %v7275 = vsel %vm215, %v6971, 0.0
    %v7276 = vrot.slane %v7275, 4
    %v7277 = vadd.f32 %v7275, %v7276
    %v7278 = vrot.slane %v7277, 2
    %v7279 = vadd.f32 %v7277, %v7278
    %v7280 = vrot.slane %v7279, 1
    %v7281 = vadd.f32 %v7279, %v7280
    %v7282 = vsel %vm215, %v6972, 0.0
    %v7283 = vrot.slane %v7282, 4
    %v7284 = vadd.f32 %v7282, %v7283
    %v7285 = vrot.slane %v7284, 2
    %v7286 = vadd.f32 %v7284, %v7285
    %v7287 = vrot.slane %v7286, 1
    %v7288 = vadd.f32 %v7286, %v7287
    %v7289 = vsel %vm215, %v6973, 0.0
    %v7290 = vrot.slane %v7289, 4
    %v7291 = vadd.f32 %v7289, %v7290
    %v7292 = vrot.slane %v7291, 2
    %v7293 = vadd.f32 %v7291, %v7292
    %v7294 = vrot.slane %v7293, 1
    %v7295 = vadd.f32 %v7293, %v7294
    %v7296 = vsel %vm215, %v6974, 0.0
    %v7297 = vrot.slane %v7296, 4
    %v7298 = vadd.f32 %v7296, %v7297
    %v7299 = vrot.slane %v7298, 2
    %v7300 = vadd.f32 %v7298, %v7299
    %v7301 = vrot.slane %v7300, 1
    %v7302 = vadd.f32 %v7300, %v7301
    %v7303 = vsel %vm215, %v6975, 0.0
    %v7304 = vrot.slane %v7303, 4
    %v7305 = vadd.f32 %v7303, %v7304
    %v7306 = vrot.slane %v7305, 2
    %v7307 = vadd.f32 %v7305, %v7306
    %v7308 = vrot.slane %v7307, 1
    %v7309 = vadd.f32 %v7307, %v7308
    %v7310 = vsel %vm215, %v6976, 0.0
    %v7311 = vrot.slane %v7310, 4
    %v7312 = vadd.f32 %v7310, %v7311
    %v7313 = vrot.slane %v7312, 2
    %v7314 = vadd.f32 %v7312, %v7313
    %v7315 = vrot.slane %v7314, 1
    %v7316 = vadd.f32 %v7314, %v7315
    %v7317 = vsel %vm215, %v6977, 0.0
    %v7318 = vrot.slane %v7317, 4
    %v7319 = vadd.f32 %v7317, %v7318
    %v7320 = vrot.slane %v7319, 2
    %v7321 = vadd.f32 %v7319, %v7320
    %v7322 = vrot.slane %v7321, 1
    %v7323 = vadd.f32 %v7321, %v7322
    %v7324 = vsel %vm215, %v6978, 0.0
    %v7325 = vrot.slane %v7324, 4
    %v7326 = vadd.f32 %v7324, %v7325
    %v7327 = vrot.slane %v7326, 2
    %v7328 = vadd.f32 %v7326, %v7327
    %v7329 = vrot.slane %v7328, 1
    %v7330 = vadd.f32 %v7328, %v7329
    %v7331 = vsel %vm215, %v6979, 0.0
    %v7332 = vrot.slane %v7331, 4
    %v7333 = vadd.f32 %v7331, %v7332
    %v7334 = vrot.slane %v7333, 2
    %v7335 = vadd.f32 %v7333, %v7334
    %v7336 = vrot.slane %v7335, 1
    %v7337 = vadd.f32 %v7335, %v7336
    %v7338 = vsel %vm215, %v6980, 0.0
    %v7339 = vrot.slane %v7338, 4
    %v7340 = vadd.f32 %v7338, %v7339
    %v7341 = vrot.slane %v7340, 2
    %v7342 = vadd.f32 %v7340, %v7341
    %v7343 = vrot.slane %v7342, 1
    %v7344 = vadd.f32 %v7342, %v7343
    %v7345 = vsel %vm215, %v6981, 0.0
    %v7346 = vrot.slane %v7345, 4
    %v7347 = vadd.f32 %v7345, %v7346
    %v7348 = vrot.slane %v7347, 2
    %v7349 = vadd.f32 %v7347, %v7348
    %v7350 = vrot.slane %v7349, 1
    %v7351 = vadd.f32 %v7349, %v7350
    %v7352 = vsel %vm215, %v6982, 0.0
    %v7353 = vrot.slane %v7352, 4
    %v7354 = vadd.f32 %v7352, %v7353
    %v7355 = vrot.slane %v7354, 2
    %v7356 = vadd.f32 %v7354, %v7355
    %v7357 = vrot.slane %v7356, 1
    %v7358 = vadd.f32 %v7356, %v7357
    %v7359 = vsel %vm215, %v6983, 0.0
    %v7360 = vrot.slane %v7359, 4
    %v7361 = vadd.f32 %v7359, %v7360
    %v7362 = vrot.slane %v7361, 2
    %v7363 = vadd.f32 %v7361, %v7362
    %v7364 = vrot.slane %v7363, 1
    %v7365 = vadd.f32 %v7363, %v7364
    %v7366 = vsel %vm215, %v6984, 0.0
    %v7367 = vrot.slane %v7366, 4
    %v7368 = vadd.f32 %v7366, %v7367
    %v7369 = vrot.slane %v7368, 2
    %v7370 = vadd.f32 %v7368, %v7369
    %v7371 = vrot.slane %v7370, 1
    %v7372 = vadd.f32 %v7370, %v7371
    %v7373 = vsel %vm215, %v6985, 0.0
    %v7374 = vrot.slane %v7373, 4
    %v7375 = vadd.f32 %v7373, %v7374
    %v7376 = vrot.slane %v7375, 2
    %v7377 = vadd.f32 %v7375, %v7376
    %v7378 = vrot.slane %v7377, 1
    %v7379 = vadd.f32 %v7377, %v7378
    %v7380 = vsel %vm215, %v6986, 0.0
    %v7381 = vrot.slane %v7380, 4
    %v7382 = vadd.f32 %v7380, %v7381
    %v7383 = vrot.slane %v7382, 2
    %v7384 = vadd.f32 %v7382, %v7383
    %v7385 = vrot.slane %v7384, 1
    %v7386 = vadd.f32 %v7384, %v7385
    %v7387 = vsel %vm215, %v6987, 0.0
    %v7388 = vrot.slane %v7387, 4
    %v7389 = vadd.f32 %v7387, %v7388
    %v7390 = vrot.slane %v7389, 2
    %v7391 = vadd.f32 %v7389, %v7390
    %v7392 = vrot.slane %v7391, 1
    %v7393 = vadd.f32 %v7391, %v7392
    %v7394 = vsel %vm215, %v6988, 0.0
    %v7395 = vrot.slane %v7394, 4
    %v7396 = vadd.f32 %v7394, %v7395
    %v7397 = vrot.slane %v7396, 2
    %v7398 = vadd.f32 %v7396, %v7397
    %v7399 = vrot.slane %v7398, 1
    %v7400 = vadd.f32 %v7398, %v7399
    %v7401 = vsel %vm215, %v6989, 0.0
    %v7402 = vrot.slane %v7401, 4
    %v7403 = vadd.f32 %v7401, %v7402
    %v7404 = vrot.slane %v7403, 2
    %v7405 = vadd.f32 %v7403, %v7404
    %v7406 = vrot.slane %v7405, 1
    %v7407 = vadd.f32 %v7405, %v7406
    %v7408 = vsel %vm215, %v6990, 0.0
    %v7409 = vrot.slane %v7408, 4
    %v7410 = vadd.f32 %v7408, %v7409
    %v7411 = vrot.slane %v7410, 2
    %v7412 = vadd.f32 %v7410, %v7411
    %v7413 = vrot.slane %v7412, 1
    %v7414 = vadd.f32 %v7412, %v7413
    %v7415 = vsel %vm215, %v6991, 0.0
    %v7416 = vrot.slane %v7415, 4
    %v7417 = vadd.f32 %v7415, %v7416
    %v7418 = vrot.slane %v7417, 2
    %v7419 = vadd.f32 %v7417, %v7418
    %v7420 = vrot.slane %v7419, 1
    %v7421 = vadd.f32 %v7419, %v7420
    %v7422 = vsel %vm215, %v6992, 0.0
    %v7423 = vrot.slane %v7422, 4
    %v7424 = vadd.f32 %v7422, %v7423
    %v7425 = vrot.slane %v7424, 2
    %v7426 = vadd.f32 %v7424, %v7425
    %v7427 = vrot.slane %v7426, 1
    %v7428 = vadd.f32 %v7426, %v7427
    %v7429 = vsel %vm215, %v6993, 0.0
    %v7430 = vrot.slane %v7429, 4
    %v7431 = vadd.f32 %v7429, %v7430
    %v7432 = vrot.slane %v7431, 2
    %v7433 = vadd.f32 %v7431, %v7432
    %v7434 = vrot.slane %v7433, 1
    %v7435 = vadd.f32 %v7433, %v7434
    %v7436 = vsel %vm215, %v6994, 0.0
    %v7437 = vrot.slane %v7436, 4
    %v7438 = vadd.f32 %v7436, %v7437
    %v7439 = vrot.slane %v7438, 2
    %v7440 = vadd.f32 %v7438, %v7439
    %v7441 = vrot.slane %v7440, 1
    %v7442 = vadd.f32 %v7440, %v7441
    %v7443 = vpack.c.bf16 %v7001, %v7001
    %v7444 = vpack.c.bf16 %v7008, %v7008
    %v7445 = vpack.c.bf16 %v7015, %v7015
    %v7446 = vpack.c.bf16 %v7022, %v7022
    %v7447 = vpack.c.bf16 %v7029, %v7029
    %v7448 = vpack.c.bf16 %v7036, %v7036
    %v7449 = vpack.c.bf16 %v7043, %v7043
    %v7450 = vpack.c.bf16 %v7050, %v7050
    %v7451 = vpack.c.bf16 %v7057, %v7057
    %v7452 = vpack.c.bf16 %v7064, %v7064
    %v7453 = vpack.c.bf16 %v7071, %v7071
    %v7454 = vpack.c.bf16 %v7078, %v7078
    %v7455 = vpack.c.bf16 %v7085, %v7085
    %v7456 = vpack.c.bf16 %v7092, %v7092
    %v7457 = vpack.c.bf16 %v7099, %v7099
    %v7458 = vpack.c.bf16 %v7106, %v7106
    %v7459 = vpack.c.bf16 %v7113, %v7113
    %v7460 = vpack.c.bf16 %v7120, %v7120
    %v7461 = vpack.c.bf16 %v7127, %v7127
    %v7462 = vpack.c.bf16 %v7134, %v7134
    %v7463 = vpack.c.bf16 %v7141, %v7141
    %v7464 = vpack.c.bf16 %v7148, %v7148
    %v7465 = vpack.c.bf16 %v7155, %v7155
    %v7466 = vpack.c.bf16 %v7162, %v7162
    %v7467 = vpack.c.bf16 %v7169, %v7169
    %v7468 = vpack.c.bf16 %v7176, %v7176
    %v7469 = vpack.c.bf16 %v7183, %v7183
    %v7470 = vpack.c.bf16 %v7190, %v7190
    %v7471 = vpack.c.bf16 %v7197, %v7197
    %v7472 = vpack.c.bf16 %v7204, %v7204
    %v7473 = vpack.c.bf16 %v7211, %v7211
    %v7474 = vpack.c.bf16 %v7218, %v7218
    %v7475 = vpack.c.bf16 %v7225, %v7225
    %v7476 = vpack.c.bf16 %v7232, %v7232
    %v7477 = vpack.c.bf16 %v7239, %v7239
    %v7478 = vpack.c.bf16 %v7246, %v7246
    %v7479 = vpack.c.bf16 %v7253, %v7253
    %v7480 = vpack.c.bf16 %v7260, %v7260
    %v7481 = vpack.c.bf16 %v7267, %v7267
    %v7482 = vpack.c.bf16 %v7274, %v7274
    %v7483 = vpack.c.bf16 %v7281, %v7281
    %v7484 = vpack.c.bf16 %v7288, %v7288
    %v7485 = vpack.c.bf16 %v7295, %v7295
    %v7486 = vpack.c.bf16 %v7302, %v7302
    %v7487 = vpack.c.bf16 %v7309, %v7309
    %v7488 = vpack.c.bf16 %v7316, %v7316
    %v7489 = vpack.c.bf16 %v7323, %v7323
    %v7490 = vpack.c.bf16 %v7330, %v7330
    %v7491 = vpack.c.bf16 %v7337, %v7337
    %v7492 = vpack.c.bf16 %v7344, %v7344
    %v7493 = vpack.c.bf16 %v7351, %v7351
    %v7494 = vpack.c.bf16 %v7358, %v7358
    %v7495 = vpack.c.bf16 %v7365, %v7365
    %v7496 = vpack.c.bf16 %v7372, %v7372
    %v7497 = vpack.c.bf16 %v7379, %v7379
    %v7498 = vpack.c.bf16 %v7386, %v7386
    %v7499 = vpack.c.bf16 %v7393, %v7393
    %v7500 = vpack.c.bf16 %v7400, %v7400
    %v7501 = vpack.c.bf16 %v7407, %v7407
    %v7502 = vpack.c.bf16 %v7414, %v7414
    %v7503 = vpack.c.bf16 %v7421, %v7421
    %v7504 = vpack.c.bf16 %v7428, %v7428
    %v7505 = vpack.c.bf16 %v7435, %v7435
    %v7506 = vpack.c.bf16 %v7442, %v7442
    %v7508 = vlaneseq
    %v7509 = vshrl.u32 %v7508, 7
    %v7510 = vsub.s32 0, %v7509
    %v7511 = vrot.slane %v4212, %v7510
    %v7577 = vunpack.c.l.b16 %v7443
    %v7578 = vunpack.c.l.b16 %v7444
    %v7579 = vunpack.c.l.b16 %v7445
    %v7580 = vunpack.c.l.b16 %v7446
    %v7581 = vunpack.c.l.b16 %v7447
    %v7582 = vunpack.c.l.b16 %v7448
    %v7583 = vunpack.c.l.b16 %v7449
    %v7584 = vunpack.c.l.b16 %v7450
    %v7585 = vunpack.c.l.b16 %v7451
    %v7586 = vunpack.c.l.b16 %v7452
    %v7587 = vunpack.c.l.b16 %v7453
    %v7588 = vunpack.c.l.b16 %v7454
    %v7589 = vunpack.c.l.b16 %v7455
    %v7590 = vunpack.c.l.b16 %v7456
    %v7591 = vunpack.c.l.b16 %v7457
    %v7592 = vunpack.c.l.b16 %v7458
    %v7593 = vunpack.c.l.b16 %v7459
    %v7594 = vunpack.c.l.b16 %v7460
    %v7595 = vunpack.c.l.b16 %v7461
    %v7596 = vunpack.c.l.b16 %v7462
    %v7597 = vunpack.c.l.b16 %v7463
    %v7598 = vunpack.c.l.b16 %v7464
    %v7599 = vunpack.c.l.b16 %v7465
    %v7600 = vunpack.c.l.b16 %v7466
    %v7601 = vunpack.c.l.b16 %v7467
    %v7602 = vunpack.c.l.b16 %v7468
    %v7603 = vunpack.c.l.b16 %v7469
    %v7604 = vunpack.c.l.b16 %v7470
    %v7605 = vunpack.c.l.b16 %v7471
    %v7606 = vunpack.c.l.b16 %v7472
    %v7607 = vunpack.c.l.b16 %v7473
    %v7608 = vunpack.c.l.b16 %v7474
    %v7609 = vunpack.c.l.b16 %v7475
    %v7610 = vunpack.c.l.b16 %v7476
    %v7611 = vunpack.c.l.b16 %v7477
    %v7612 = vunpack.c.l.b16 %v7478
    %v7613 = vunpack.c.l.b16 %v7479
    %v7614 = vunpack.c.l.b16 %v7480
    %v7615 = vunpack.c.l.b16 %v7481
    %v7616 = vunpack.c.l.b16 %v7482
    %v7617 = vunpack.c.l.b16 %v7483
    %v7618 = vunpack.c.l.b16 %v7484
    %v7619 = vunpack.c.l.b16 %v7485
    %v7620 = vunpack.c.l.b16 %v7486
    %v7621 = vunpack.c.l.b16 %v7487
    %v7622 = vunpack.c.l.b16 %v7488
    %v7623 = vunpack.c.l.b16 %v7489
    %v7624 = vunpack.c.l.b16 %v7490
    %v7625 = vunpack.c.l.b16 %v7491
    %v7626 = vunpack.c.l.b16 %v7492
    %v7627 = vunpack.c.l.b16 %v7493
    %v7628 = vunpack.c.l.b16 %v7494
    %v7629 = vunpack.c.l.b16 %v7495
    %v7630 = vunpack.c.l.b16 %v7496
    %v7631 = vunpack.c.l.b16 %v7497
    %v7632 = vunpack.c.l.b16 %v7498
    %v7633 = vunpack.c.l.b16 %v7499
    %v7634 = vunpack.c.l.b16 %v7500
    %v7635 = vunpack.c.l.b16 %v7501
    %v7636 = vunpack.c.l.b16 %v7502
    %v7637 = vunpack.c.l.b16 %v7503
    %v7638 = vunpack.c.l.b16 %v7504
    %v7639 = vunpack.c.l.b16 %v7505
    %v7640 = vunpack.c.l.b16 %v7506
    %v7641 = vsel %vm3544, %v7578, %v7577
    %v7642 = vsel %vm3546, %v7579, %v7641
    %v7643 = vsel %vm3548, %v7580, %v7642
    %v7644 = vsel %vm3550, %v7581, %v7643
    %v7645 = vsel %vm3552, %v7582, %v7644
    %v7646 = vsel %vm3554, %v7583, %v7645
    %v7647 = vsel %vm3556, %v7584, %v7646
    %v7648 = vsel %vm3544, %v7586, %v7585
    %v7649 = vsel %vm3546, %v7587, %v7648
    %v7650 = vsel %vm3548, %v7588, %v7649
    %v7651 = vsel %vm3550, %v7589, %v7650
    %v7652 = vsel %vm3552, %v7590, %v7651
    %v7653 = vsel %vm3554, %v7591, %v7652
    %v7654 = vsel %vm3556, %v7592, %v7653
    %v7655 = vsel %vm3544, %v7594, %v7593
    %v7656 = vsel %vm3546, %v7595, %v7655
    %v7657 = vsel %vm3548, %v7596, %v7656
    %v7658 = vsel %vm3550, %v7597, %v7657
    %v7659 = vsel %vm3552, %v7598, %v7658
    %v7660 = vsel %vm3554, %v7599, %v7659
    %v7661 = vsel %vm3556, %v7600, %v7660
    %v7662 = vsel %vm3544, %v7602, %v7601
    %v7663 = vsel %vm3546, %v7603, %v7662
    %v7664 = vsel %vm3548, %v7604, %v7663
    %v7665 = vsel %vm3550, %v7605, %v7664
    %v7666 = vsel %vm3552, %v7606, %v7665
    %v7667 = vsel %vm3554, %v7607, %v7666
    %v7668 = vsel %vm3556, %v7608, %v7667
    %v7669 = vsel %vm3544, %v7610, %v7609
    %v7670 = vsel %vm3546, %v7611, %v7669
    %v7671 = vsel %vm3548, %v7612, %v7670
    %v7672 = vsel %vm3550, %v7613, %v7671
    %v7673 = vsel %vm3552, %v7614, %v7672
    %v7674 = vsel %vm3554, %v7615, %v7673
    %v7675 = vsel %vm3556, %v7616, %v7674
    %v7676 = vsel %vm3544, %v7618, %v7617
    %v7677 = vsel %vm3546, %v7619, %v7676
    %v7678 = vsel %vm3548, %v7620, %v7677
    %v7679 = vsel %vm3550, %v7621, %v7678
    %v7680 = vsel %vm3552, %v7622, %v7679
    %v7681 = vsel %vm3554, %v7623, %v7680
    %v7682 = vsel %vm3556, %v7624, %v7681
    %v7683 = vsel %vm3544, %v7626, %v7625
    %v7684 = vsel %vm3546, %v7627, %v7683
    %v7685 = vsel %vm3548, %v7628, %v7684
    %v7686 = vsel %vm3550, %v7629, %v7685
    %v7687 = vsel %vm3552, %v7630, %v7686
    %v7688 = vsel %vm3554, %v7631, %v7687
    %v7689 = vsel %vm3556, %v7632, %v7688
    %v7690 = vsel %vm3544, %v7634, %v7633
    %v7691 = vsel %vm3546, %v7635, %v7690
    %v7692 = vsel %vm3548, %v7636, %v7691
    %v7693 = vsel %vm3550, %v7637, %v7692
    %v7694 = vsel %vm3552, %v7638, %v7693
    %v7695 = vsel %vm3554, %v7639, %v7694
    %v7696 = vsel %vm3556, %v7640, %v7695
    %v7697 = vpack.c.b16 %v7654, %v7647
    %v7698 = vpack.c.b16 %v7668, %v7661
    %v7699 = vpack.c.b16 %v7682, %v7675
    %v7700 = vpack.c.b16 %v7696, %v7689
    %v7705 = vunpack.c.l.b16 %v4207
    %v7706 = vunpack.c.l.b16 %v4208
    %v7707 = vunpack.c.l.b16 %v4209
    %v7708 = vunpack.c.l.b16 %v4210
    %v7709 = vpack.c.b16 %v7706, %v7705
    %v7710 = vpack.c.b16 %v7708, %v7707
    %v7714 = vsel %vm215, %v7697, 0
    %v7717 = vsel %vm215, %v7698, 0
    %v7720 = vsel %vm215, %v7699, 0
    %v7723 = vsel %vm215, %v7700, 0
    %7725 = vmatprep.subr.bf16.mxu0 0
    %7726 = vmatpush1.bf16.msra.mxu0 0
    %7727 = vmatprep.subr.bf16.mxu0 0
    %7728 = vmatpush1.bf16.msra.mxu0 0
    %7729 = vmatprep.subr.bf16.mxu0 0
    %7730 = vmatpush1.bf16.msra.mxu0 0
    %7731 = vmatprep.subr.bf16.mxu0 0
    %7732 = vmatpush1.bf16.msra.mxu0 0
    %7733 = vmatprep.subr.bf16.mxu0 0
    %7734 = vmatpush1.bf16.msra.mxu0 0
    %7735 = vmatprep.subr.bf16.mxu0 0
    %7736 = vmatpush1.bf16.msra.mxu0 0
    %7737 = vmatprep.subr.bf16.mxu0 0
    %7738 = vmatpush1.bf16.msra.mxu0 %v7710
    %7739 = vmatprep.subr.bf16.mxu0 0
    %7740 = vmatpush1.bf16.msra.mxu0 %v7709
    %7741 = vmatprep.subr.bf16.mxu0 0
    %7742 = vmatpush2.bf16.msra.mxu0 0
    %7743 = vmatprep.subr.bf16.mxu0 0
    %7744 = vmatpush2.bf16.msra.mxu0 0
    %7745 = vmatprep.subr.bf16.mxu0 0
    %7746 = vmatpush2.bf16.msra.mxu0 0
    %7747 = vmatprep.subr.bf16.mxu0 0
    %7748 = vmatpush2.bf16.msra.mxu0 0
    %7749 = vmatprep.subr.bf16.mxu0 0
    %7750 = vmatpush2.bf16.msra.mxu0 0
    %7751 = vmatprep.subr.bf16.mxu0 0
    %7752 = vmatpush2.bf16.msra.mxu0 0
    %7753 = vmatprep.subr.bf16.mxu0 0
    %7754 = vmatpush2.bf16.msra.mxu0 0
    %7755 = vmatprep.subr.bf16.mxu0 0
    %7756 = vmatpush2.bf16.msra.mxu0 0
    %7757 = vmatprep.mubr.bf16.mxu0 0
    %7758 = vmatmul.mubr.bf16.gmra.mxu0 %v7714
    %v7759 = vpop.f32.mrf.mxu0
    %v7760 = vadd.f32 %v7511, %v7759
    %v7761 = vpop.f32.mrf.mxu0
    %v7762 = vpop.f32.mrf.mxu0
    %v7763 = vadd.f32 %v7511, %v7762
    %v7764 = vpop.f32.mrf.mxu0
    %7765 = vmatprep.mubr.bf16.mxu0 0
    %7766 = vmatmul.mubr.bf16.gmra.mxu0 %v7717
    %v7767 = vpop.f32.mrf.mxu0
    %v7768 = vadd.f32 %v7511, %v7767
    %v7769 = vpop.f32.mrf.mxu0
    %v7770 = vpop.f32.mrf.mxu0
    %v7771 = vadd.f32 %v7511, %v7770
    %v7772 = vpop.f32.mrf.mxu0
    %7773 = vmatprep.mubr.bf16.mxu0 0
    %7774 = vmatmul.mubr.bf16.gmra.mxu0 %v7720
    %v7775 = vpop.f32.mrf.mxu0
    %v7776 = vadd.f32 %v7511, %v7775
    %v7777 = vpop.f32.mrf.mxu0
    %v7778 = vpop.f32.mrf.mxu0
    %v7779 = vadd.f32 %v7511, %v7778
    %v7780 = vpop.f32.mrf.mxu0
    %7781 = vmatprep.mubr.bf16.mxu0 0
    %7782 = vmatmul.mubr.bf16.gmra.mxu0 %v7723
    %v7783 = vpop.f32.mrf.mxu0
    %v7784 = vadd.f32 %v7511, %v7783
    %v7785 = vpop.f32.mrf.mxu0
    %v7786 = vpop.f32.mrf.mxu0
    %v7787 = vadd.f32 %v7511, %v7786
    %v7788 = vpop.f32.mrf.mxu0
    %7789 = vdwg.mxu0
    %v7790 = vadd.f32 %v4191, %v7760
    %v7791 = vadd.f32 %v4192, %v7763
    %v7792 = vadd.f32 %v4193, %v7768
    %v7793 = vadd.f32 %v4194, %v7771
    %v7794 = vadd.f32 %v4195, %v7776
    %v7795 = vadd.f32 %v4196, %v7779
    %v7796 = vadd.f32 %v4197, %v7784
    %v7797 = vadd.f32 %v4198, %v7787
    %v7798 = vsel %vm215, %v7790, 0.0
    %v7799 = vsel %vm215, %v7791, 0.0
    %v7800 = vadd.f32 %v7798, %v7799
    %v7801 = vsel %vm215, %v7792, 0.0
    %v7802 = vadd.f32 %v7800, %v7801
    %v7803 = vsel %vm215, %v7793, 0.0
    %v7804 = vadd.f32 %v7802, %v7803
    %v7805 = vsel %vm215, %v7794, 0.0
    %v7806 = vadd.f32 %v7804, %v7805
    %v7807 = vsel %vm215, %v7795, 0.0
    %v7808 = vadd.f32 %v7806, %v7807
    %v7809 = vsel %vm215, %v7796, 0.0
    %v7810 = vadd.f32 %v7808, %v7809
    %v7811 = vsel %vm215, %v7797, 0.0
    %v7812 = vadd.f32 %v7810, %v7811
    %v7813 = vrot.slane %v7812, 4
    %v7814 = vadd.f32 %v7812, %v7813
    %v7815 = vrot.slane %v7814, 2
    %v7816 = vadd.f32 %v7814, %v7815
    %v7817 = vrot.slane %v7816, 1
    %v7818 = vadd.f32 %v7816, %v7817
    %v7819 = vmul.f32 %v7790, %v7790
    %v7820 = vmul.f32 %v7791, %v7791
    %v7821 = vmul.f32 %v7792, %v7792
    %v7822 = vmul.f32 %v7793, %v7793
    %v7823 = vmul.f32 %v7794, %v7794
    %v7824 = vmul.f32 %v7795, %v7795
    %v7825 = vmul.f32 %v7796, %v7796
    %v7826 = vmul.f32 %v7797, %v7797
    %v7827 = vsel %vm215, %v7819, 0.0
    %v7828 = vsel %vm215, %v7820, 0.0
    %v7829 = vadd.f32 %v7827, %v7828
    %v7830 = vsel %vm215, %v7821, 0.0
    %v7831 = vadd.f32 %v7829, %v7830
    %v7832 = vsel %vm215, %v7822, 0.0
    %v7833 = vadd.f32 %v7831, %v7832
    %v7834 = vsel %vm215, %v7823, 0.0
    %v7835 = vadd.f32 %v7833, %v7834
    %v7836 = vsel %vm215, %v7824, 0.0
    %v7837 = vadd.f32 %v7835, %v7836
    %v7838 = vsel %vm215, %v7825, 0.0
    %v7839 = vadd.f32 %v7837, %v7838
    %v7840 = vsel %vm215, %v7826, 0.0
    %v7841 = vadd.f32 %v7839, %v7840
    %v7842 = vrot.slane %v7841, 4
    %v7843 = vadd.f32 %v7841, %v7842
    %v7844 = vrot.slane %v7843, 2
    %v7845 = vadd.f32 %v7843, %v7844
    %v7846 = vrot.slane %v7845, 1
    %v7847 = vadd.f32 %v7845, %v7846
    %v7848 = vmul.f32 %v7818, 0.015625
    %v7849 = vmul.f32 %v7847, 0.015625
    %v7850 = vmul.f32 %v7848, %v7848
    %v7851 = vsub.f32 %v7849, %v7850
    %v7852 = vsub.f32 %v7790, %v7848
    %v7853 = vsub.f32 %v7791, %v7848
    %v7854 = vsub.f32 %v7792, %v7848
    %v7855 = vsub.f32 %v7793, %v7848
    %v7856 = vsub.f32 %v7794, %v7848
    %v7857 = vsub.f32 %v7795, %v7848
    %v7858 = vsub.f32 %v7796, %v7848
    %v7859 = vsub.f32 %v7797, %v7848
    %v7860 = vadd.f32 %v7851, 1e-05
    %v7861 = vrsqrt.pop %v7860
    %v7862 = vmul.f32 %v7852, %v7861
    %v7863 = vmul.f32 %v7853, %v7861
    %v7864 = vmul.f32 %v7854, %v7861
    %v7865 = vmul.f32 %v7855, %v7861
    %v7866 = vmul.f32 %v7856, %v7861
    %v7867 = vmul.f32 %v7857, %v7861
    %v7868 = vmul.f32 %v7858, %v7861
    %v7869 = vmul.f32 %v7859, %v7861
    %v7871 = vlaneseq
    %v7872 = vshrl.u32 %v7871, 7
    %v7873 = vsub.s32 0, %v7872
    %v7874 = vrot.slane %v4214, %v7873
    %v7876 = vmul.f32 %v7862, %v7874
    %v7877 = vmul.f32 %v7863, %v7874
    %v7878 = vmul.f32 %v7864, %v7874
    %v7879 = vmul.f32 %v7865, %v7874
    %v7880 = vmul.f32 %v7866, %v7874
    %v7881 = vmul.f32 %v7867, %v7874
    %v7882 = vmul.f32 %v7868, %v7874
    %v7883 = vmul.f32 %v7869, %v7874
    %v7885 = vlaneseq
    %v7886 = vshrl.u32 %v7885, 7
    %v7887 = vsub.s32 0, %v7886
    %v7888 = vrot.slane %v4216, %v7887
    %v7890 = vadd.f32 %v7876, %v7888
    %v7891 = vadd.f32 %v7877, %v7888
    %v7892 = vadd.f32 %v7878, %v7888
    %v7893 = vadd.f32 %v7879, %v7888
    %v7894 = vadd.f32 %v7880, %v7888
    %v7895 = vadd.f32 %v7881, %v7888
    %v7896 = vadd.f32 %v7882, %v7888
    %v7897 = vadd.f32 %v7883, %v7888
    %v7898 = vpack.c.bf16 %v7891, %v7890
    %v7899 = vpack.c.bf16 %v7893, %v7892
    %v7900 = vpack.c.bf16 %v7895, %v7894
    %v7901 = vpack.c.bf16 %v7897, %v7896
    %v7903 = vlaneseq
    %v7904 = vshrl.u32 %v7903, 7
    %v7905 = vsub.s32 0, %v7904
    %v7906 = vrot.slane %v4223, %v7905
    %v7912 = vunpack.c.l.b16 %v4218
    %v7913 = vunpack.c.l.b16 %v4219
    %v7914 = vunpack.c.l.b16 %v4220
    %v7915 = vunpack.c.l.b16 %v4221
    %v7916 = vpack.c.b16 %v7913, %v7912
    %v7917 = vpack.c.b16 %v7915, %v7914
    %v7921 = vsel %vm215, %v7898, 0
    %v7924 = vsel %vm215, %v7899, 0
    %v7927 = vsel %vm215, %v7900, 0
    %v7930 = vsel %vm215, %v7901, 0
    %7932 = vmatprep.subr.bf16.mxu0 0
    %7933 = vmatpush1.bf16.msra.mxu0 0
    %7934 = vmatprep.subr.bf16.mxu0 0
    %7935 = vmatpush1.bf16.msra.mxu0 0
    %7936 = vmatprep.subr.bf16.mxu0 0
    %7937 = vmatpush1.bf16.msra.mxu0 0
    %7938 = vmatprep.subr.bf16.mxu0 0
    %7939 = vmatpush1.bf16.msra.mxu0 0
    %7940 = vmatprep.subr.bf16.mxu0 0
    %7941 = vmatpush1.bf16.msra.mxu0 0
    %7942 = vmatprep.subr.bf16.mxu0 0
    %7943 = vmatpush1.bf16.msra.mxu0 0
    %7944 = vmatprep.subr.bf16.mxu0 0
    %7945 = vmatpush1.bf16.msra.mxu0 %v7917
    %7946 = vmatprep.subr.bf16.mxu0 0
    %7947 = vmatpush1.bf16.msra.mxu0 %v7916
    %7948 = vmatprep.subr.bf16.mxu0 0
    %7949 = vmatpush2.bf16.msra.mxu0 0
    %7950 = vmatprep.subr.bf16.mxu0 0
    %7951 = vmatpush2.bf16.msra.mxu0 0
    %7952 = vmatprep.subr.bf16.mxu0 0
    %7953 = vmatpush2.bf16.msra.mxu0 0
    %7954 = vmatprep.subr.bf16.mxu0 0
    %7955 = vmatpush2.bf16.msra.mxu0 0
    %7956 = vmatprep.subr.bf16.mxu0 0
    %7957 = vmatpush2.bf16.msra.mxu0 0
    %7958 = vmatprep.subr.bf16.mxu0 0
    %7959 = vmatpush2.bf16.msra.mxu0 0
    %7960 = vmatprep.subr.bf16.mxu0 0
    %7961 = vmatpush2.bf16.msra.mxu0 0
    %7962 = vmatprep.subr.bf16.mxu0 0
    %7963 = vmatpush2.bf16.msra.mxu0 0
    %7964 = vmatprep.mubr.bf16.mxu0 0
    %7965 = vmatmul.mubr.bf16.gmra.mxu0 %v7921
    %v7966 = vpop.f32.mrf.mxu0
    %v7967 = vadd.f32 %v7906, %v7966
    %v7968 = vpop.f32.mrf.mxu0
    %v7969 = vpop.f32.mrf.mxu0
    %v7970 = vadd.f32 %v7906, %v7969
    %v7971 = vpop.f32.mrf.mxu0
    %7972 = vmatprep.mubr.bf16.mxu0 0
    %7973 = vmatmul.mubr.bf16.gmra.mxu0 %v7924
    %v7974 = vpop.f32.mrf.mxu0
    %v7975 = vadd.f32 %v7906, %v7974
    %v7976 = vpop.f32.mrf.mxu0
    %v7977 = vpop.f32.mrf.mxu0
    %v7978 = vadd.f32 %v7906, %v7977
    %v7979 = vpop.f32.mrf.mxu0
    %7980 = vmatprep.mubr.bf16.mxu0 0
    %7981 = vmatmul.mubr.bf16.gmra.mxu0 %v7927
    %v7982 = vpop.f32.mrf.mxu0
    %v7983 = vadd.f32 %v7906, %v7982
    %v7984 = vpop.f32.mrf.mxu0
    %v7985 = vpop.f32.mrf.mxu0
    %v7986 = vadd.f32 %v7906, %v7985
    %v7987 = vpop.f32.mrf.mxu0
    %7988 = vmatprep.mubr.bf16.mxu0 0
    %7989 = vmatmul.mubr.bf16.gmra.mxu0 %v7930
    %v7990 = vpop.f32.mrf.mxu0
    %v7991 = vadd.f32 %v7906, %v7990
    %v7992 = vpop.f32.mrf.mxu0
    %v7993 = vpop.f32.mrf.mxu0
    %v7994 = vadd.f32 %v7906, %v7993
    %v7995 = vpop.f32.mrf.mxu0
    %7996 = vdwg.mxu0
    %v7997 = vmul.f32 %v7967, 0.5
    %v7998 = vmul.f32 %v7970, 0.5
    %v7999 = vmul.f32 %v7975, 0.5
    %v8000 = vmul.f32 %v7978, 0.5
    %v8001 = vmul.f32 %v7983, 0.5
    %v8002 = vmul.f32 %v7986, 0.5
    %v8003 = vmul.f32 %v7991, 0.5
    %v8004 = vmul.f32 %v7994, 0.5
    %v8005 = vmul.f32 %v7967, 0.044715
    %v8006 = vmul.f32 %v7970, 0.044715
    %v8007 = vmul.f32 %v7975, 0.044715
    %v8008 = vmul.f32 %v7978, 0.044715
    %v8009 = vmul.f32 %v7983, 0.044715
    %v8010 = vmul.f32 %v7986, 0.044715
    %v8011 = vmul.f32 %v7991, 0.044715
    %v8012 = vmul.f32 %v7994, 0.044715
    %v8013 = vmul.f32 %v8005, %v7967
    %v8014 = vmul.f32 %v8006, %v7970
    %v8015 = vmul.f32 %v8007, %v7975
    %v8016 = vmul.f32 %v8008, %v7978
    %v8017 = vmul.f32 %v8009, %v7983
    %v8018 = vmul.f32 %v8010, %v7986
    %v8019 = vmul.f32 %v8011, %v7991
    %v8020 = vmul.f32 %v8012, %v7994
    %v8021 = vmul.f32 %v8013, %v7967
    %v8022 = vmul.f32 %v8014, %v7970
    %v8023 = vmul.f32 %v8015, %v7975
    %v8024 = vmul.f32 %v8016, %v7978
    %v8025 = vmul.f32 %v8017, %v7983
    %v8026 = vmul.f32 %v8018, %v7986
    %v8027 = vmul.f32 %v8019, %v7991
    %v8028 = vmul.f32 %v8020, %v7994
    %v8029 = vadd.f32 %v7967, %v8021
    %v8030 = vadd.f32 %v7970, %v8022
    %v8031 = vadd.f32 %v7975, %v8023
    %v8032 = vadd.f32 %v7978, %v8024
    %v8033 = vadd.f32 %v7983, %v8025
    %v8034 = vadd.f32 %v7986, %v8026
    %v8035 = vadd.f32 %v7991, %v8027
    %v8036 = vadd.f32 %v7994, %v8028
    %v8037 = vmul.f32 %v8029, 0.7978846
    %v8038 = vmul.f32 %v8030, 0.7978846
    %v8039 = vmul.f32 %v8031, 0.7978846
    %v8040 = vmul.f32 %v8032, 0.7978846
    %v8041 = vmul.f32 %v8033, 0.7978846
    %v8042 = vmul.f32 %v8034, 0.7978846
    %v8043 = vmul.f32 %v8035, 0.7978846
    %v8044 = vmul.f32 %v8036, 0.7978846
    %v8045 = vtanh.pop %v8037
    %v8046 = vtanh.pop %v8038
    %v8047 = vtanh.pop %v8039
    %v8048 = vtanh.pop %v8040
    %v8049 = vtanh.pop %v8041
    %v8050 = vtanh.pop %v8042
    %v8051 = vtanh.pop %v8043
    %v8052 = vtanh.pop %v8044
    %v8053 = vadd.f32 %v8045, 1.0
    %v8054 = vadd.f32 %v8046, 1.0
    %v8055 = vadd.f32 %v8047, 1.0
    %v8056 = vadd.f32 %v8048, 1.0
    %v8057 = vadd.f32 %v8049, 1.0
    %v8058 = vadd.f32 %v8050, 1.0
    %v8059 = vadd.f32 %v8051, 1.0
    %v8060 = vadd.f32 %v8052, 1.0
    %v8061 = vmul.f32 %v7997, %v8053
    %v8062 = vmul.f32 %v7998, %v8054
    %v8063 = vmul.f32 %v7999, %v8055
    %v8064 = vmul.f32 %v8000, %v8056
    %v8065 = vmul.f32 %v8001, %v8057
    %v8066 = vmul.f32 %v8002, %v8058
    %v8067 = vmul.f32 %v8003, %v8059
    %v8068 = vmul.f32 %v8004, %v8060
    %v8069 = vpack.c.bf16 %v8062, %v8061
    %v8070 = vpack.c.bf16 %v8064, %v8063
    %v8071 = vpack.c.bf16 %v8066, %v8065
    %v8072 = vpack.c.bf16 %v8068, %v8067
    %v8074 = vlaneseq
    %v8075 = vshrl.u32 %v8074, 7
    %v8076 = vsub.s32 0, %v8075
    %v8077 = vrot.slane %v4234, %v8076
    %v8087 = vunpack.c.l.b16 %v4225
    %v8088 = vunpack.c.l.b16 %v4226
    %v8089 = vunpack.c.l.b16 %v4227
    %v8090 = vunpack.c.l.b16 %v4228
    %v8091 = vunpack.c.l.b16 %v4229
    %v8092 = vunpack.c.l.b16 %v4230
    %v8093 = vunpack.c.l.b16 %v4231
    %v8094 = vunpack.c.l.b16 %v4232
    %v8095 = vpack.c.b16 %v8088, %v8087
    %v8096 = vpack.c.b16 %v8090, %v8089
    %v8097 = vpack.c.b16 %v8092, %v8091
    %v8098 = vpack.c.b16 %v8094, %v8093
    %v8104 = vsel %vm4013, %v8069, 0
    %v8107 = vsel %vm4013, %v8070, 0
    %v8110 = vsel %vm4013, %v8071, 0
    %v8113 = vsel %vm4013, %v8072, 0
    %8115 = vmatprep.subr.bf16.mxu0 0
    %8116 = vmatpush1.bf16.msra.mxu0 0
    %8117 = vmatprep.subr.bf16.mxu0 0
    %8118 = vmatpush1.bf16.msra.mxu0 0
    %8119 = vmatprep.subr.bf16.mxu0 0
    %8120 = vmatpush1.bf16.msra.mxu0 0
    %8121 = vmatprep.subr.bf16.mxu0 0
    %8122 = vmatpush1.bf16.msra.mxu0 0
    %8123 = vmatprep.subr.bf16.mxu0 0
    %8124 = vmatpush1.bf16.msra.mxu0 %v8098
    %8125 = vmatprep.subr.bf16.mxu0 0
    %8126 = vmatpush1.bf16.msra.mxu0 %v8097
    %8127 = vmatprep.subr.bf16.mxu0 0
    %8128 = vmatpush1.bf16.msra.mxu0 %v8096
    %8129 = vmatprep.subr.bf16.mxu0 0
    %8130 = vmatpush1.bf16.msra.mxu0 %v8095
    %8131 = vmatprep.subr.bf16.mxu0 0
    %8132 = vmatpush2.bf16.msra.mxu0 0
    %8133 = vmatprep.subr.bf16.mxu0 0
    %8134 = vmatpush2.bf16.msra.mxu0 0
    %8135 = vmatprep.subr.bf16.mxu0 0
    %8136 = vmatpush2.bf16.msra.mxu0 0
    %8137 = vmatprep.subr.bf16.mxu0 0
    %8138 = vmatpush2.bf16.msra.mxu0 0
    %8139 = vmatprep.subr.bf16.mxu0 0
    %8140 = vmatpush2.bf16.msra.mxu0 0
    %8141 = vmatprep.subr.bf16.mxu0 0
    %8142 = vmatpush2.bf16.msra.mxu0 0
    %8143 = vmatprep.subr.bf16.mxu0 0
    %8144 = vmatpush2.bf16.msra.mxu0 0
    %8145 = vmatprep.subr.bf16.mxu0 0
    %8146 = vmatpush2.bf16.msra.mxu0 0
    %8147 = vmatprep.mubr.bf16.mxu0 0
    %8148 = vmatmul.mubr.bf16.gmra.mxu0 %v8104
    %v8149 = vpop.f32.mrf.mxu0
    %v8150 = vadd.f32 %v8077, %v8149
    %v8151 = vpop.f32.mrf.mxu0
    %v8152 = vpop.f32.mrf.mxu0
    %v8153 = vadd.f32 %v8077, %v8152
    %v8154 = vpop.f32.mrf.mxu0
    %8155 = vmatprep.mubr.bf16.mxu0 0
    %8156 = vmatmul.mubr.bf16.gmra.mxu0 %v8107
    %v8157 = vpop.f32.mrf.mxu0
    %v8158 = vadd.f32 %v8077, %v8157
    %v8159 = vpop.f32.mrf.mxu0
    %v8160 = vpop.f32.mrf.mxu0
    %v8161 = vadd.f32 %v8077, %v8160
    %v8162 = vpop.f32.mrf.mxu0
    %8163 = vmatprep.mubr.bf16.mxu0 0
    %8164 = vmatmul.mubr.bf16.gmra.mxu0 %v8110
    %v8165 = vpop.f32.mrf.mxu0
    %v8166 = vadd.f32 %v8077, %v8165
    %v8167 = vpop.f32.mrf.mxu0
    %v8168 = vpop.f32.mrf.mxu0
    %v8169 = vadd.f32 %v8077, %v8168
    %v8170 = vpop.f32.mrf.mxu0
    %8171 = vmatprep.mubr.bf16.mxu0 0
    %8172 = vmatmul.mubr.bf16.gmra.mxu0 %v8113
    %v8173 = vpop.f32.mrf.mxu0
    %v8174 = vadd.f32 %v8077, %v8173
    %v8175 = vpop.f32.mrf.mxu0
    %v8176 = vpop.f32.mrf.mxu0
    %v8177 = vadd.f32 %v8077, %v8176
    %v8178 = vpop.f32.mrf.mxu0
    %8179 = vdwg.mxu0
    %v8180 = vadd.f32 %v7890, %v8150
    %v8181 = vadd.f32 %v7891, %v8153
    %v8182 = vadd.f32 %v7892, %v8158
    %v8183 = vadd.f32 %v7893, %v8161
    %v8184 = vadd.f32 %v7894, %v8166
    %v8185 = vadd.f32 %v7895, %v8169
    %v8186 = vadd.f32 %v7896, %v8174
    %v8187 = vadd.f32 %v7897, %v8177
    %v8188 = vsel %vm215, %v8180, 0.0
    %v8189 = vsel %vm215, %v8181, 0.0
    %v8190 = vadd.f32 %v8188, %v8189
    %v8191 = vsel %vm215, %v8182, 0.0
    %v8192 = vadd.f32 %v8190, %v8191
    %v8193 = vsel %vm215, %v8183, 0.0
    %v8194 = vadd.f32 %v8192, %v8193
    %v8195 = vsel %vm215, %v8184, 0.0
    %v8196 = vadd.f32 %v8194, %v8195
    %v8197 = vsel %vm215, %v8185, 0.0
    %v8198 = vadd.f32 %v8196, %v8197
    %v8199 = vsel %vm215, %v8186, 0.0
    %v8200 = vadd.f32 %v8198, %v8199
    %v8201 = vsel %vm215, %v8187, 0.0
    %v8202 = vadd.f32 %v8200, %v8201
    %v8203 = vrot.slane %v8202, 4
    %v8204 = vadd.f32 %v8202, %v8203
    %v8205 = vrot.slane %v8204, 2
    %v8206 = vadd.f32 %v8204, %v8205
    %v8207 = vrot.slane %v8206, 1
    %v8208 = vadd.f32 %v8206, %v8207
    %v8209 = vmul.f32 %v8180, %v8180
    %v8210 = vmul.f32 %v8181, %v8181
    %v8211 = vmul.f32 %v8182, %v8182
    %v8212 = vmul.f32 %v8183, %v8183
    %v8213 = vmul.f32 %v8184, %v8184
    %v8214 = vmul.f32 %v8185, %v8185
    %v8215 = vmul.f32 %v8186, %v8186
    %v8216 = vmul.f32 %v8187, %v8187
    %v8217 = vsel %vm215, %v8209, 0.0
    %v8218 = vsel %vm215, %v8210, 0.0
    %v8219 = vadd.f32 %v8217, %v8218
    %v8220 = vsel %vm215, %v8211, 0.0
    %v8221 = vadd.f32 %v8219, %v8220
    %v8222 = vsel %vm215, %v8212, 0.0
    %v8223 = vadd.f32 %v8221, %v8222
    %v8224 = vsel %vm215, %v8213, 0.0
    %v8225 = vadd.f32 %v8223, %v8224
    %v8226 = vsel %vm215, %v8214, 0.0
    %v8227 = vadd.f32 %v8225, %v8226
    %v8228 = vsel %vm215, %v8215, 0.0
    %v8229 = vadd.f32 %v8227, %v8228
    %v8230 = vsel %vm215, %v8216, 0.0
    %v8231 = vadd.f32 %v8229, %v8230
    %v8232 = vrot.slane %v8231, 4
    %v8233 = vadd.f32 %v8231, %v8232
    %v8234 = vrot.slane %v8233, 2
    %v8235 = vadd.f32 %v8233, %v8234
    %v8236 = vrot.slane %v8235, 1
    %v8237 = vadd.f32 %v8235, %v8236
    %v8238 = vmul.f32 %v8208, 0.015625
    %v8239 = vmul.f32 %v8237, 0.015625
    %v8240 = vmul.f32 %v8238, %v8238
    %v8241 = vsub.f32 %v8239, %v8240
    %v8242 = vsub.f32 %v8180, %v8238
    %v8243 = vsub.f32 %v8181, %v8238
    %v8244 = vsub.f32 %v8182, %v8238
    %v8245 = vsub.f32 %v8183, %v8238
    %v8246 = vsub.f32 %v8184, %v8238
    %v8247 = vsub.f32 %v8185, %v8238
    %v8248 = vsub.f32 %v8186, %v8238
    %v8249 = vsub.f32 %v8187, %v8238
    %v8250 = vadd.f32 %v8241, 1e-05
    %v8251 = vrsqrt.pop %v8250
    %v8252 = vmul.f32 %v8242, %v8251
    %v8253 = vmul.f32 %v8243, %v8251
    %v8254 = vmul.f32 %v8244, %v8251
    %v8255 = vmul.f32 %v8245, %v8251
    %v8256 = vmul.f32 %v8246, %v8251
    %v8257 = vmul.f32 %v8247, %v8251
    %v8258 = vmul.f32 %v8248, %v8251
    %v8259 = vmul.f32 %v8249, %v8251
    %v8261 = vlaneseq
    %v8262 = vshrl.u32 %v8261, 7
    %v8263 = vsub.s32 0, %v8262
    %v8264 = vrot.slane %v4236, %v8263
    %v8266 = vmul.f32 %v8252, %v8264
    %v8267 = vmul.f32 %v8253, %v8264
    %v8268 = vmul.f32 %v8254, %v8264
    %v8269 = vmul.f32 %v8255, %v8264
    %v8270 = vmul.f32 %v8256, %v8264
    %v8271 = vmul.f32 %v8257, %v8264
    %v8272 = vmul.f32 %v8258, %v8264
    %v8273 = vmul.f32 %v8259, %v8264
    %v8275 = vlaneseq
    %v8276 = vshrl.u32 %v8275, 7
    %v8277 = vsub.s32 0, %v8276
    %v8278 = vrot.slane %v4238, %v8277
    %v8280 = vadd.f32 %v8266, %v8278
    %v8281 = vadd.f32 %v8267, %v8278
    %v8282 = vadd.f32 %v8268, %v8278
    %v8283 = vadd.f32 %v8269, %v8278
    %v8284 = vadd.f32 %v8270, %v8278
    %v8285 = vadd.f32 %v8271, %v8278
    %v8286 = vadd.f32 %v8272, %v8278
    %v8287 = vadd.f32 %v8273, %v8278
    %8288 = vst.msk [vmem:[#allocation2] sm:$0xff] %vm215, %v8280
    %8289 = vst.msk [vmem:[#allocation2 + $0x8] sm:$0xff] %vm215, %v8281
    %8290 = vst.msk [vmem:[#allocation2 + $0x10] sm:$0xff] %vm215, %v8282
    %8291 = vst.msk [vmem:[#allocation2 + $0x18] sm:$0xff] %vm215, %v8283
    %8292 = vst.msk [vmem:[#allocation2 + $0x20] sm:$0xff] %vm215, %v8284
    %8293 = vst.msk [vmem:[#allocation2 + $0x28] sm:$0xff] %vm215, %v8285
    %8294 = vst.msk [vmem:[#allocation2 + $0x30] sm:$0xff] %vm215, %v8286
    %8295 = vst.msk [vmem:[#allocation2 + $0x38] sm:$0xff] %vm215, %v8287
    // Predicated region
    $region66: #{patchtst_encoder_forward.1} parent=1 // pred_check
      _
    $region67: #{patchtst_encoder_forward.1} parent=1 // pred_check_branch
      %8297 = sbr.rel (0) target = $region69
    $region68: #{patchtst_encoder_forward.1} parent=1 // pred_region
      %s8299 = ssub.s32 1024, 1024
      %8300 = vsyncadd [#allocation3], %s8299
      %s8301 = sshll.u32 [#allocation2], 4
      %s8302 = int_to_ptr.vmem [resolvable:$true] %s8301
      %8307 = dma.vmem_to_hbm [thread:$0]  %s8302, 1024, %s16, [#allocation3], 128, 128, 8
    $region69: #{patchtst_encoder_forward.1} parent=1 // pred_fallthru
      _
    // Predicated region
    $region70: #{patchtst_encoder_forward.1} parent=1 // pred_check
      _
    $region71: #{patchtst_encoder_forward.1} parent=1 // pred_check_branch
      %8309 = sbr.rel (0) target = $region73
    $region72: #{patchtst_encoder_forward.1} parent=1 // pred_region
      %8310 = dma.done [#allocation3], 1024
    $region73: #{patchtst_encoder_forward.1} parent=1 // pred_fallthru
      _
    %8311 = vsyncpa [#allocation3], 1

</llo_original>
